<compile_context>
chip_gen: v7x
topology: tpu7x:2x2x1
jax: 0.10.0
libtpu: 0.0.40
codegen_flags: <defaults>
</compile_context>

<pallas_src>
import jax
import jax.numpy as jnp
from jax.experimental import pallas as pl
from jax.experimental.pallas import tpu as pltpu

IN_FEATURES = 244     # 244_features_noneaugmented.csv
OUT_FEATURES = 15     # num_durations = 15 -> LogisticHazard out_features
H1, H2, H3 = 1000, 500, 100
BN_EPS = 1e-5

# Lane-padded dims.
D_IN_P, H1_P, H2_P, H3_P, OUT_P = 256, 1024, 512, 128, 128
TILE_N = 256          # batch tile: >= MXU height on v5e/v6e/v7x


def _survnet_kernel(x_ref, cols_ref,
                    w1_ref, b1_ref,
                    w2a_ref, w2b_ref, b2_ref,
                    w3_ref, b3_ref,
                    w4_ref, b4_ref,
                    o_ref):
    x = x_ref[...]                      # (TILE_N, 256) bf16
    cols = cols_ref[...]                # (TILE_N, 4)   f32

    # fc1 -> ReLU   (BN1 affine is folded into w2a/b2)
    h1 = jnp.dot(x, w1_ref[...], preferred_element_type=jnp.float32) + b1_ref[...]
    h1 = jnp.maximum(h1, 0.0)

    # fc2: h1 @ W2a' on the MXU + rank-4 VPU update for the 4 concat columns
    h2 = jnp.dot(h1.astype(jnp.bfloat16), w2a_ref[...],
                 preferred_element_type=jnp.float32)
    w2b = w2b_ref[...]                  # (4, 512) f32
    h2 = (h2
          + cols[:, 0:1] * w2b[0:1, :]
          + cols[:, 1:2] * w2b[1:2, :]
          + cols[:, 2:3] * w2b[2:3, :]
          + cols[:, 3:4] * w2b[3:4, :]
          + b2_ref[...])
    h2 = jnp.maximum(h2, 0.0)           # (BN2 folded into w3/b3)

    # fc3 -> ReLU   (BN3 folded into w4/b4)
    h3 = jnp.dot(h2.astype(jnp.bfloat16), w3_ref[...],
                 preferred_element_type=jnp.float32) + b3_ref[...]
    h3 = jnp.maximum(h3, 0.0)

    # fc4 (logits over the 15 discrete hazard durations; padded to 128 lanes)
    o_ref[...] = (jnp.dot(h3.astype(jnp.bfloat16), w4_ref[...],
                          preferred_element_type=jnp.float32) + b4_ref[...])


def prepare_params(params):
    """One-time host-side prep: transpose, BN fold, lane padding, bf16 cast."""
    def bn_fold(gamma, beta, rmean, rvar):
        scale = gamma / jnp.sqrt(rvar + BN_EPS)
        shift = beta - rmean * scale
        return scale, shift

    s1, t1 = bn_fold(*params["bn1"])
    s2, t2 = bn_fold(*params["bn2"])
    s3, t3 = bn_fold(*params["bn3"])

    # PyTorch Linear weights are (out, in) -> transpose to (in, out).
    w1 = params["w1"].T                         # (244, 1000)
    w2 = params["w2"].T                         # (1004, 500)
    w2a, w2b = w2[:H1, :], w2[H1:, :]           # (1000, 500), (4, 500)
    w3 = params["w3"].T                         # (500, 100)
    w4 = params["w4"].T                         # (100, 15)
    b1, b2, b3, b4 = params["b1"], params["b2"], params["b3"], params["b4"]

    # Fold BN affine of layer k (post-ReLU, pre-dropout=identity) into layer k+1.
    w2a_f = w2a * s1[:, None]
    b2_f = b2 + t1 @ w2a
    w3_f = w3 * s2[:, None]
    b3_f = b3 + t2 @ w3
    w4_f = w4 * s3[:, None]
    b4_f = b4 + t3 @ w4

    def pad2(a, r, c):
        return jnp.pad(a, ((0, r - a.shape[0]), (0, c - a.shape[1])))

    def pad1(a, c):
        return jnp.pad(a, (0, c - a.shape[0]))

    return {
        "w1":  pad2(w1, D_IN_P, H1_P).astype(jnp.bfloat16),
        "b1":  pad1(b1, H1_P)[None, :].astype(jnp.float32),
        "w2a": pad2(w2a_f, H1_P, H2_P).astype(jnp.bfloat16),
        "w2b": pad2(w2b, 4, H2_P).astype(jnp.float32),
        "b2":  pad1(b2_f, H2_P)[None, :].astype(jnp.float32),
        "w3":  pad2(w3_f, H2_P, H3_P).astype(jnp.bfloat16),
        "b3":  pad1(b3_f, H3_P)[None, :].astype(jnp.float32),
        "w4":  pad2(w4_f, H3_P, OUT_P).astype(jnp.bfloat16),
        "b4":  pad1(b4_f, OUT_P)[None, :].astype(jnp.float32),
    }


def survnet_2_4_forward(imfeat, col1, col2, col3, col4, prepared):
    """imfeat: (N, 244) f32; col{1..4}: (N, 1) f32. Returns (N, 15) f32."""
    n = imfeat.shape[0]
    n_pad = pl.cdiv(n, TILE_N) * TILE_N

    cols = jnp.concatenate([col1, col2, col3, col4], axis=1).astype(jnp.float32)
    cols = jnp.pad(cols, ((0, n_pad - n), (0, 0)))
    x = jnp.pad(imfeat, ((0, n_pad - n), (0, D_IN_P - IN_FEATURES)))
    x = x.astype(jnp.bfloat16)

    tile_map = lambda i: (i, 0)     # batch-tiled operands
    const_map = lambda i: (0, 0)    # weights/biases stay VMEM-resident

    flops = 2 * n_pad * (D_IN_P * H1_P + H1_P * H2_P + H2_P * H3_P + H3_P * OUT_P)
    bytes_accessed = int(sum(v.size * v.dtype.itemsize for v in prepared.values())
                         + x.size * 2 + cols.size * 4 + n_pad * OUT_P * 4)
    cost = pl.CostEstimate(flops=flops, transcendentals=0,
                           bytes_accessed=bytes_accessed)

    out = pl.pallas_call(
        _survnet_kernel,
        out_shape=jax.ShapeDtypeStruct((n_pad, OUT_P), jnp.float32),
        grid=(n_pad // TILE_N,),
        in_specs=[
            pl.BlockSpec((TILE_N, D_IN_P), tile_map),     # x
            pl.BlockSpec((TILE_N, 4), tile_map),          # cols
            pl.BlockSpec((D_IN_P, H1_P), const_map),      # w1
            pl.BlockSpec((1, H1_P), const_map),           # b1
            pl.BlockSpec((H1_P, H2_P), const_map),        # w2a
            pl.BlockSpec((4, H2_P), const_map),           # w2b
            pl.BlockSpec((1, H2_P), const_map),           # b2
            pl.BlockSpec((H2_P, H3_P), const_map),        # w3
            pl.BlockSpec((1, H3_P), const_map),           # b3
            pl.BlockSpec((H3_P, OUT_P), const_map),       # w4
            pl.BlockSpec((1, OUT_P), const_map),          # b4
        ],
        out_specs=pl.BlockSpec((TILE_N, OUT_P), tile_map),
        compiler_params=pltpu.CompilerParams(
            dimension_semantics=("parallel",),
            vmem_limit_bytes=48 << 20,    # headroom on v7x's 64 MiB VMEM
        ),
        cost_estimate=cost,
    )(x, cols,
      prepared["w1"], prepared["b1"],
      prepared["w2a"], prepared["w2b"], prepared["b2"],
      prepared["w3"], prepared["b3"],
      prepared["w4"], prepared["b4"])

    return out[:n, :OUT_FEATURES]


def init_params(key):
    """Deterministic synthetic parameters with the shapes from __init__."""
    ks = jax.random.split(key, 20)

    def lin(kw, kb, out_f, in_f):
        bound = 1.0 / jnp.sqrt(jnp.float32(in_f))
        w = jax.random.uniform(kw, (out_f, in_f), jnp.float32, -bound, bound)
        b = jax.random.uniform(kb, (out_f,), jnp.float32, -bound, bound)
        return w, b

    def bn(kg, kb, km, kv, feats):
        gamma = 1.0 + 0.1 * jax.random.normal(kg, (feats,), jnp.float32)
        beta = 0.1 * jax.random.normal(kb, (feats,), jnp.float32)
        rmean = 0.1 * jax.random.normal(km, (feats,), jnp.float32)
        rvar = 1.0 + 0.1 * jax.random.uniform(kv, (feats,), jnp.float32)
        return gamma, beta, rmean, rvar

    w1, b1 = lin(ks[0], ks[1], H1, IN_FEATURES)
    w2, b2 = lin(ks[2], ks[3], H2, H1 + 4)
    w3, b3 = lin(ks[4], ks[5], H3, H2)
    w4, b4 = lin(ks[6], ks[7], OUT_FEATURES, H3)
    return {
        "w1": w1, "b1": b1, "w2": w2, "b2": b2,
        "w3": w3, "b3": b3, "w4": w4, "b4": b4,
        "bn1": bn(ks[8], ks[9], ks[10], ks[11], H1),
        "bn2": bn(ks[12], ks[13], ks[14], ks[15], H2),
        "bn3": bn(ks[16], ks[17], ks[18], ks[19], H3),
    }


def reference_forward(imfeat, col1, col2, col3, col4, params):
    """Pure-JAX f32 reference mirroring the PyTorch eval-mode forward."""
    def bn(x, gamma, beta, rmean, rvar):
        return (x - rmean) / jnp.sqrt(rvar + BN_EPS) * gamma + beta

    x = jnp.maximum(imfeat @ params["w1"].T + params["b1"], 0.0)
    x = bn(x, *params["bn1"])
    x = jnp.concatenate([x, col1, col2, col3, col4], axis=1)
    x = jnp.maximum(x @ params["w2"].T + params["b2"], 0.0)
    x = bn(x, *params["bn2"])
    x = jnp.maximum(x @ params["w3"].T + params["b3"], 0.0)
    x = bn(x, *params["bn3"])
    return x @ params["w4"].T + params["b4"]


if __name__ == "__main__":
    key = jax.random.PRNGKey(0)
    kp, kx, k1, k2, k3, k4 = jax.random.split(key, 6)

    batch = 8
    params = init_params(kp)
    prepared = prepare_params(params)           # one-time host-side prep

    imfeat = jax.random.normal(kx, (batch, IN_FEATURES), jnp.float32)
    col1 = jax.random.normal(k1, (batch, 1), jnp.float32)
    col2 = jax.random.normal(k2, (batch, 1), jnp.float32)
    col3 = jax.random.normal(k3, (batch, 1), jnp.float32)
    col4 = jax.random.normal(k4, (batch, 1), jnp.float32)

    fwd = jax.jit(survnet_2_4_forward)
    out = fwd(imfeat, col1, col2, col3, col4, prepared)
    out = jax.block_until_ready(out)

    ref = reference_forward(imfeat, col1, col2, col3, col4, params)
    assert out.shape == (batch, OUT_FEATURES)
    # bf16 matmuls (f32 accumulation) vs f32 reference -> relaxed tolerance.
    err = jnp.max(jnp.abs(out - ref))
    tol = 5e-3 + 5e-2 * jnp.max(jnp.abs(ref))
    assert err < tol, f"mismatch vs reference: max_abs_err={err}, tol={tol}"
    print("KERNEL_OK")
</pallas_src>

<mosaic_0001>
module attributes {stable_mosaic.version = 11 : i64} {
  func.func @_survnet_kernel(%arg0: i32, %arg1: memref<256x256xbf16, #tpu.memory_space<vmem>>, %arg2: memref<256x4xf32, #tpu.memory_space<vmem>>, %arg3: memref<256x1024xbf16, #tpu.memory_space<vmem>>, %arg4: memref<1x1024xf32, #tpu.memory_space<vmem>>, %arg5: memref<1024x512xbf16, #tpu.memory_space<vmem>>, %arg6: memref<4x512xf32, #tpu.memory_space<vmem>>, %arg7: memref<1x512xf32, #tpu.memory_space<vmem>>, %arg8: memref<512x128xbf16, #tpu.memory_space<vmem>>, %arg9: memref<1x128xf32, #tpu.memory_space<vmem>>, %arg10: memref<128x128xbf16, #tpu.memory_space<vmem>>, %arg11: memref<1x128xf32, #tpu.memory_space<vmem>>, %arg12: memref<256x128xf32, #tpu.memory_space<vmem>>) attributes {dimension_semantics = [#tpu.dimension_semantics<parallel>], iteration_bounds = array<i64: 1>, scalar_prefetch = 0 : i64, scratch_operands = 0 : i64, tpu.core_type = #tpu.core_type<tc>, window_params = [{transform_indices = @transform_0, window_bounds = array<i64: 256, 256>}, {transform_indices = @transform_1, window_bounds = array<i64: 256, 4>}, {pipeline_mode = #tpu.pipeline_mode<synchronous>, transform_indices = @transform_2, window_bounds = array<i64: 256, 1024>}, {pipeline_mode = #tpu.pipeline_mode<synchronous>, transform_indices = @transform_3, window_bounds = array<i64: 1, 1024>}, {pipeline_mode = #tpu.pipeline_mode<synchronous>, transform_indices = @transform_4, window_bounds = array<i64: 1024, 512>}, {pipeline_mode = #tpu.pipeline_mode<synchronous>, transform_indices = @transform_5, window_bounds = array<i64: 4, 512>}, {pipeline_mode = #tpu.pipeline_mode<synchronous>, transform_indices = @transform_6, window_bounds = array<i64: 1, 512>}, {pipeline_mode = #tpu.pipeline_mode<synchronous>, transform_indices = @transform_7, window_bounds = array<i64: 512, 128>}, {pipeline_mode = #tpu.pipeline_mode<synchronous>, transform_indices = @transform_8, window_bounds = array<i64: 1, 128>}, {pipeline_mode = #tpu.pipeline_mode<synchronous>, transform_indices = @transform_9, window_bounds = array<i64: 128, 128>}, {pipeline_mode = #tpu.pipeline_mode<synchronous>, transform_indices = @transform_10, window_bounds = array<i64: 1, 128>}, {transform_indices = @transform_11, window_bounds = array<i64: 256, 128>}]} {
    %c0 = arith.constant 0 : index
    %c0_0 = arith.constant 0 : index
    %0 = vector.load %arg1[%c0, %c0_0] : memref<256x256xbf16, #tpu.memory_space<vmem>>, vector<256x256xbf16>
    %c0_1 = arith.constant 0 : index
    %c0_2 = arith.constant 0 : index
    %1 = vector.load %arg2[%c0_1, %c0_2] : memref<256x4xf32, #tpu.memory_space<vmem>>, vector<256x4xf32>
    %c0_3 = arith.constant 0 : index
    %c0_4 = arith.constant 0 : index
    %2 = vector.load %arg3[%c0_3, %c0_4] : memref<256x1024xbf16, #tpu.memory_space<vmem>>, vector<256x1024xbf16>
    %cst = arith.constant dense<0.000000e+00> : vector<256x1024xf32>
    %3 = tpu.matmul %0, %2, %cst {dimension_numbers = #tpu.dot_dimension_numbers<[1], [0], [0], [1], [0, 0, 1, 1], [], []>} : vector<256x256xbf16>, vector<256x1024xbf16>, vector<256x1024xf32> -> vector<256x1024xf32>
    %c0_5 = arith.constant 0 : index
    %c0_6 = arith.constant 0 : index
    %4 = vector.load %arg4[%c0_5, %c0_6] : memref<1x1024xf32, #tpu.memory_space<vmem>>, vector<1x1024xf32>
    %5 = vector.broadcast %4 : vector<1x1024xf32> to vector<256x1024xf32>
    %6 = arith.addf %3, %5 : vector<256x1024xf32>
    %cst_7 = arith.constant 0.000000e+00 : f32
    %7 = vector.broadcast %cst_7 : f32 to vector<256x1024xf32>
    %8 = arith.maximumf %6, %7 : vector<256x1024xf32>
    %9 = arith.truncf %8 : vector<256x1024xf32> to vector<256x1024xbf16>
    %c0_8 = arith.constant 0 : index
    %c0_9 = arith.constant 0 : index
    %10 = vector.load %arg5[%c0_8, %c0_9] : memref<1024x512xbf16, #tpu.memory_space<vmem>>, vector<1024x512xbf16>
    %cst_10 = arith.constant dense<0.000000e+00> : vector<256x512xf32>
    %11 = tpu.matmul %9, %10, %cst_10 {dimension_numbers = #tpu.dot_dimension_numbers<[1], [0], [0], [1], [0, 0, 1, 1], [], []>} : vector<256x1024xbf16>, vector<1024x512xbf16>, vector<256x512xf32> -> vector<256x512xf32>
    %c0_11 = arith.constant 0 : index
    %c0_12 = arith.constant 0 : index
    %12 = vector.load %arg6[%c0_11, %c0_12] : memref<4x512xf32, #tpu.memory_space<vmem>>, vector<4x512xf32>
    %13 = vector.extract_strided_slice %1 {offsets = [0, 0], sizes = [256, 1], strides = [1, 1]} : vector<256x4xf32> to vector<256x1xf32>
    %14 = vector.extract_strided_slice %12 {offsets = [0, 0], sizes = [1, 512], strides = [1, 1]} : vector<4x512xf32> to vector<1x512xf32>
    %15 = vector.broadcast %13 : vector<256x1xf32> to vector<256x512xf32>
    %16 = vector.broadcast %14 : vector<1x512xf32> to vector<256x512xf32>
    %17 = arith.mulf %15, %16 : vector<256x512xf32>
    %18 = arith.addf %11, %17 : vector<256x512xf32>
    %19 = vector.extract_strided_slice %1 {offsets = [0, 1], sizes = [256, 1], strides = [1, 1]} : vector<256x4xf32> to vector<256x1xf32>
    %20 = vector.extract_strided_slice %12 {offsets = [1, 0], sizes = [1, 512], strides = [1, 1]} : vector<4x512xf32> to vector<1x512xf32>
    %21 = vector.broadcast %19 : vector<256x1xf32> to vector<256x512xf32>
    %22 = vector.broadcast %20 : vector<1x512xf32> to vector<256x512xf32>
    %23 = arith.mulf %21, %22 : vector<256x512xf32>
    %24 = arith.addf %18, %23 : vector<256x512xf32>
    %25 = vector.extract_strided_slice %1 {offsets = [0, 2], sizes = [256, 1], strides = [1, 1]} : vector<256x4xf32> to vector<256x1xf32>
    %26 = vector.extract_strided_slice %12 {offsets = [2, 0], sizes = [1, 512], strides = [1, 1]} : vector<4x512xf32> to vector<1x512xf32>
    %27 = vector.broadcast %25 : vector<256x1xf32> to vector<256x512xf32>
    %28 = vector.broadcast %26 : vector<1x512xf32> to vector<256x512xf32>
    %29 = arith.mulf %27, %28 : vector<256x512xf32>
    %30 = arith.addf %24, %29 : vector<256x512xf32>
    %31 = vector.extract_strided_slice %1 {offsets = [0, 3], sizes = [256, 1], strides = [1, 1]} : vector<256x4xf32> to vector<256x1xf32>
    %32 = vector.extract_strided_slice %12 {offsets = [3, 0], sizes = [1, 512], strides = [1, 1]} : vector<4x512xf32> to vector<1x512xf32>
    %33 = vector.broadcast %31 : vector<256x1xf32> to vector<256x512xf32>
    %34 = vector.broadcast %32 : vector<1x512xf32> to vector<256x512xf32>
    %35 = arith.mulf %33, %34 : vector<256x512xf32>
    %36 = arith.addf %30, %35 : vector<256x512xf32>
    %c0_13 = arith.constant 0 : index
    %c0_14 = arith.constant 0 : index
    %37 = vector.load %arg7[%c0_13, %c0_14] : memref<1x512xf32, #tpu.memory_space<vmem>>, vector<1x512xf32>
    %38 = vector.broadcast %37 : vector<1x512xf32> to vector<256x512xf32>
    %39 = arith.addf %36, %38 : vector<256x512xf32>
    %cst_15 = arith.constant 0.000000e+00 : f32
    %40 = vector.broadcast %cst_15 : f32 to vector<256x512xf32>
    %41 = arith.maximumf %39, %40 : vector<256x512xf32>
    %42 = arith.truncf %41 : vector<256x512xf32> to vector<256x512xbf16>
    %c0_16 = arith.constant 0 : index
    %c0_17 = arith.constant 0 : index
    %43 = vector.load %arg8[%c0_16, %c0_17] : memref<512x128xbf16, #tpu.memory_space<vmem>>, vector<512x128xbf16>
    %cst_18 = arith.constant dense<0.000000e+00> : vector<256x128xf32>
    %44 = tpu.matmul %42, %43, %cst_18 {dimension_numbers = #tpu.dot_dimension_numbers<[1], [0], [0], [1], [0, 0, 1, 1], [], []>} : vector<256x512xbf16>, vector<512x128xbf16>, vector<256x128xf32> -> vector<256x128xf32>
    %c0_19 = arith.constant 0 : index
    %c0_20 = arith.constant 0 : index
    %45 = vector.load %arg9[%c0_19, %c0_20] : memref<1x128xf32, #tpu.memory_space<vmem>>, vector<1x128xf32>
    %46 = vector.broadcast %45 : vector<1x128xf32> to vector<256x128xf32>
    %47 = arith.addf %44, %46 : vector<256x128xf32>
    %cst_21 = arith.constant 0.000000e+00 : f32
    %48 = vector.broadcast %cst_21 : f32 to vector<256x128xf32>
    %49 = arith.maximumf %47, %48 : vector<256x128xf32>
    %50 = arith.truncf %49 : vector<256x128xf32> to vector<256x128xbf16>
    %c0_22 = arith.constant 0 : index
    %c0_23 = arith.constant 0 : index
    %51 = vector.load %arg10[%c0_22, %c0_23] : memref<128x128xbf16, #tpu.memory_space<vmem>>, vector<128x128xbf16>
    %cst_24 = arith.constant dense<0.000000e+00> : vector<256x128xf32>
    %52 = tpu.matmul %50, %51, %cst_24 {dimension_numbers = #tpu.dot_dimension_numbers<[1], [0], [0], [1], [0, 0, 1, 1], [], []>} : vector<256x128xbf16>, vector<128x128xbf16>, vector<256x128xf32> -> vector<256x128xf32>
    %c0_25 = arith.constant 0 : index
    %c0_26 = arith.constant 0 : index
    %53 = vector.load %arg11[%c0_25, %c0_26] : memref<1x128xf32, #tpu.memory_space<vmem>>, vector<1x128xf32>
    %54 = vector.broadcast %53 : vector<1x128xf32> to vector<256x128xf32>
    %55 = arith.addf %52, %54 : vector<256x128xf32>
    %c0_27 = arith.constant 0 : index
    %c0_28 = arith.constant 0 : index
    %56 = vector.load %arg12[%c0_27, %c0_28] : memref<256x128xf32, #tpu.memory_space<vmem>>, vector<256x128xf32>
    tpu.vector_store %arg12[%c0_27, %c0_28], %55 {strides = array<i32>} : memref<256x128xf32, #tpu.memory_space<vmem>>, vector<256x128xf32>,
    return
  }
  func.func @transform_0(%arg0: i32) -> (i32, i32) {
    %c0_i32 = arith.constant 0 : i32
    %c0_i32_0 = arith.constant 0 : i32
    return %arg0, %c0_i32 : i32, i32
  }
  func.func @transform_1(%arg0: i32) -> (i32, i32) {
    %c0_i32 = arith.constant 0 : i32
    %c0_i32_0 = arith.constant 0 : i32
    return %arg0, %c0_i32 : i32, i32
  }
  func.func @transform_2(%arg0: i32) -> (i32, i32) {
    %c0_i32 = arith.constant 0 : i32
    %c0_i32_0 = arith.constant 0 : i32
    %c0_i32_1 = arith.constant 0 : i32
    return %c0_i32, %c0_i32_0 : i32, i32
  }
  func.func @transform_3(%arg0: i32) -> (i32, i32) {
    %c0_i32 = arith.constant 0 : i32
    %c0_i32_0 = arith.constant 0 : i32
    %c0_i32_1 = arith.constant 0 : i32
    return %c0_i32, %c0_i32_0 : i32, i32
  }
  func.func @transform_4(%arg0: i32) -> (i32, i32) {
    %c0_i32 = arith.constant 0 : i32
    %c0_i32_0 = arith.constant 0 : i32
    %c0_i32_1 = arith.constant 0 : i32
    return %c0_i32, %c0_i32_0 : i32, i32
  }
  func.func @transform_5(%arg0: i32) -> (i32, i32) {
    %c0_i32 = arith.constant 0 : i32
    %c0_i32_0 = arith.constant 0 : i32
    %c0_i32_1 = arith.constant 0 : i32
    return %c0_i32, %c0_i32_0 : i32, i32
  }
  func.func @transform_6(%arg0: i32) -> (i32, i32) {
    %c0_i32 = arith.constant 0 : i32
    %c0_i32_0 = arith.constant 0 : i32
    %c0_i32_1 = arith.constant 0 : i32
    return %c0_i32, %c0_i32_0 : i32, i32
  }
  func.func @transform_7(%arg0: i32) -> (i32, i32) {
    %c0_i32 = arith.constant 0 : i32
    %c0_i32_0 = arith.constant 0 : i32
    %c0_i32_1 = arith.constant 0 : i32
    return %c0_i32, %c0_i32_0 : i32, i32
  }
  func.func @transform_8(%arg0: i32) -> (i32, i32) {
    %c0_i32 = arith.constant 0 : i32
    %c0_i32_0 = arith.constant 0 : i32
    %c0_i32_1 = arith.constant 0 : i32
    return %c0_i32, %c0_i32_0 : i32, i32
  }
  func.func @transform_9(%arg0: i32) -> (i32, i32) {
    %c0_i32 = arith.constant 0 : i32
    %c0_i32_0 = arith.constant 0 : i32
    %c0_i32_1 = arith.constant 0 : i32
    return %c0_i32, %c0_i32_0 : i32, i32
  }
  func.func @transform_10(%arg0: i32) -> (i32, i32) {
    %c0_i32 = arith.constant 0 : i32
    %c0_i32_0 = arith.constant 0 : i32
    %c0_i32_1 = arith.constant 0 : i32
    return %c0_i32, %c0_i32_0 : i32, i32
  }
  func.func @transform_11(%arg0: i32) -> (i32, i32) {
    %c0_i32 = arith.constant 0 : i32
    %c0_i32_0 = arith.constant 0 : i32
    return %arg0, %c0_i32 : i32, i32
  }
}

</mosaic_0001>

<llo_original>
// kernel: survnet_2_4_forward.1
$region0: #{survnet_2_4_forward.1}
  #allocation0 [shape = 'u32[]', space=smem, size = 0x4, offset = 0x4, fixed_abs, tag = 'smem constant byte address 0x4 - core index']
  #allocation1 [shape = 'u32[144,128]{1,0:T(1,128)}', space=vmem, size = 0x12000, scoped, tag = 'internal scratch']
  %s0 = inlined_call_operand.vmem [shape: bf16[256,256], index: 0, kind: input, shape index: {}]
  %s1 = inlined_call_operand.vmem [shape: f32[256,4], index: 1, kind: input, shape index: {}]
  %s2 = inlined_call_operand.hbm [shape: bf16[256,1024], index: 2, kind: input, shape index: {}]
  %s3 = inlined_call_operand.vmem [shape: f32[1,1024], index: 3, kind: input, shape index: {}]
  %s4 = inlined_call_operand.hbm [shape: bf16[1024,512], index: 4, kind: input, shape index: {}]
  %s5 = inlined_call_operand.vmem [shape: f32[4,512], index: 5, kind: input, shape index: {}]
  %s6 = inlined_call_operand.vmem [shape: f32[1,512], index: 6, kind: input, shape index: {}]
  %s7 = inlined_call_operand.vmem [shape: bf16[512,128], index: 7, kind: input, shape index: {}]
  %s8 = inlined_call_operand.vmem [shape: f32[1,128], index: 8, kind: input, shape index: {}]
  %s9 = inlined_call_operand.vmem [shape: bf16[128,128], index: 9, kind: input, shape index: {}]
  %s10 = inlined_call_operand.vmem [shape: f32[1,128], index: 10, kind: input, shape index: {}]
  %s11 = inlined_call_operand.vmem [shape: f32[256,128], index: 11, kind: output, shape index: {}]
  %s12 = sld [smem:[#allocation0]]
  $region62: #{survnet_2_4_forward.1} parent=0
    _
  %s14 = ssub.s32 1, %s12
  %s15 = scalar_select 0, %s14, %s12
  $region1: #{survnet_2_4_forward.1} parent=0
    #allocation2 [shape = 'u8[524288]{0}', space=vmem, size = 0x80000, scoped, tag = 'input window, operand 2, single buffered']
    #allocation3 [shape = 's32[1]{0}', space=sflag, size = 0x4, scoped, tag = 'scoped memory for survnet_2_4_forward.1']
    #allocation4 [shape = 'u8[1048576]{0}', space=vmem, size = 0x100000, scoped, tag = 'input window, operand 4, single buffered']
    #allocation5 [shape = 's32[1]{0}', space=sflag, size = 0x4, scoped, tag = 'scoped memory for survnet_2_4_forward.1']
    %16 = vsyncpa [#allocation3], 0
    %17 = vsyncpa [#allocation5], 0
    // Predicated region
    $region2: #{survnet_2_4_forward.1} parent=1 // pred_check
      _
    $region3: #{survnet_2_4_forward.1} parent=1 // pred_check_branch
      %19 = sbr.rel (0) target = $region5
    $region4: #{survnet_2_4_forward.1} parent=1 // pred_region
      _
    $region5: #{survnet_2_4_forward.1} parent=1 // pred_fallthru
      _
    // Predicated region
    $region6: #{survnet_2_4_forward.1} parent=1 // pred_check
      _
    $region7: #{survnet_2_4_forward.1} parent=1 // pred_check_branch
      %21 = sbr.rel (0) target = $region9
    $region8: #{survnet_2_4_forward.1} parent=1 // pred_region
      _
    $region9: #{survnet_2_4_forward.1} parent=1 // pred_fallthru
      _
    // Predicated region
    $region10: #{survnet_2_4_forward.1} parent=1 // pred_check
      _
    $region11: #{survnet_2_4_forward.1} parent=1 // pred_check_branch
      %23 = sbr.rel (0) target = $region13
    $region12: #{survnet_2_4_forward.1} parent=1 // pred_region
      %s25 = ssub.s32 16384, 16384
      %26 = vsyncadd [#allocation3], %s25
      %s27 = sshll.u32 [#allocation2], 4
      %s28 = int_to_ptr.vmem [resolvable:$true] %s27
      %33 = dma.hbm_to_vmem [thread:$0]  %s2, 16384, %s28, [#allocation3], 512, 512, 32
    $region13: #{survnet_2_4_forward.1} parent=1 // pred_fallthru
      _
    // Predicated region
    $region14: #{survnet_2_4_forward.1} parent=1 // pred_check
      _
    $region15: #{survnet_2_4_forward.1} parent=1 // pred_check_branch
      %35 = sbr.rel (0) target = $region17
    $region16: #{survnet_2_4_forward.1} parent=1 // pred_region
      _
    $region17: #{survnet_2_4_forward.1} parent=1 // pred_fallthru
      _
    // Predicated region
    $region18: #{survnet_2_4_forward.1} parent=1 // pred_check
      _
    $region19: #{survnet_2_4_forward.1} parent=1 // pred_check_branch
      %37 = sbr.rel (0) target = $region21
    $region20: #{survnet_2_4_forward.1} parent=1 // pred_region
      %s39 = ssub.s32 32768, 32768
      %40 = vsyncadd [#allocation5], %s39
      %s41 = sshll.u32 [#allocation4], 4
      %s42 = int_to_ptr.vmem [resolvable:$true] %s41
      %47 = dma.hbm_to_vmem [thread:$0]  %s4, 32768, %s42, [#allocation5], 256, 256, 16
    $region21: #{survnet_2_4_forward.1} parent=1 // pred_fallthru
      _
    // Predicated region
    $region22: #{survnet_2_4_forward.1} parent=1 // pred_check
      _
    $region23: #{survnet_2_4_forward.1} parent=1 // pred_check_branch
      %49 = sbr.rel (0) target = $region25
    $region24: #{survnet_2_4_forward.1} parent=1 // pred_region
      _
    $region25: #{survnet_2_4_forward.1} parent=1 // pred_fallthru
      _
    // Predicated region
    $region26: #{survnet_2_4_forward.1} parent=1 // pred_check
      _
    $region27: #{survnet_2_4_forward.1} parent=1 // pred_check_branch
      %51 = sbr.rel (0) target = $region29
    $region28: #{survnet_2_4_forward.1} parent=1 // pred_region
      _
    $region29: #{survnet_2_4_forward.1} parent=1 // pred_fallthru
      _
    // Predicated region
    $region30: #{survnet_2_4_forward.1} parent=1 // pred_check
      _
    $region31: #{survnet_2_4_forward.1} parent=1 // pred_check_branch
      %53 = sbr.rel (0) target = $region33
    $region32: #{survnet_2_4_forward.1} parent=1 // pred_region
      _
    $region33: #{survnet_2_4_forward.1} parent=1 // pred_fallthru
      _
    // Predicated region
    $region34: #{survnet_2_4_forward.1} parent=1 // pred_check
      _
    $region35: #{survnet_2_4_forward.1} parent=1 // pred_check_branch
      %55 = sbr.rel (0) target = $region37
    $region36: #{survnet_2_4_forward.1} parent=1 // pred_region
      _
    $region37: #{survnet_2_4_forward.1} parent=1 // pred_fallthru
      _
    // Predicated region
    $region38: #{survnet_2_4_forward.1} parent=1 // pred_check
      _
    $region39: #{survnet_2_4_forward.1} parent=1 // pred_check_branch
      %57 = sbr.rel (0) target = $region41
    $region40: #{survnet_2_4_forward.1} parent=1 // pred_region
      _
    $region41: #{survnet_2_4_forward.1} parent=1 // pred_fallthru
      _
    // Predicated region
    $region42: #{survnet_2_4_forward.1} parent=1 // pred_check
      _
    $region43: #{survnet_2_4_forward.1} parent=1 // pred_check_branch
      %59 = sbr.rel (0) target = $region45
    $region44: #{survnet_2_4_forward.1} parent=1 // pred_region
      _
    $region45: #{survnet_2_4_forward.1} parent=1 // pred_fallthru
      _
    // Predicated region
    $region46: #{survnet_2_4_forward.1} parent=1 // pred_check
      _
    $region47: #{survnet_2_4_forward.1} parent=1 // pred_check_branch
      %61 = sbr.rel (0) target = $region49
    $region48: #{survnet_2_4_forward.1} parent=1 // pred_region
      %62 = dma.done [#allocation3], 16384
    $region49: #{survnet_2_4_forward.1} parent=1 // pred_fallthru
      _
    // Predicated region
    $region50: #{survnet_2_4_forward.1} parent=1 // pred_check
      _
    $region51: #{survnet_2_4_forward.1} parent=1 // pred_check_branch
      %64 = sbr.rel (0) target = $region53
    $region52: #{survnet_2_4_forward.1} parent=1 // pred_region
      %65 = dma.done [#allocation5], 32768
    $region53: #{survnet_2_4_forward.1} parent=1 // pred_fallthru
      _
    %v67 = vld [vmem:[%s0] sm:$0xff]
    %v68 = vld [vmem:[%s0 + $0x8] sm:$0xff]
    %v69 = vld [vmem:[%s0 + $0x10] sm:$0xff]
    %v70 = vld [vmem:[%s0 + $0x18] sm:$0xff]
    %v71 = vld [vmem:[%s0 + $0x20] sm:$0xff]
    %v72 = vld [vmem:[%s0 + $0x28] sm:$0xff]
    %v73 = vld [vmem:[%s0 + $0x30] sm:$0xff]
    %v74 = vld [vmem:[%s0 + $0x38] sm:$0xff]
    %v75 = vld [vmem:[%s0 + $0x40] sm:$0xff]
    %v76 = vld [vmem:[%s0 + $0x48] sm:$0xff]
    %v77 = vld [vmem:[%s0 + $0x50] sm:$0xff]
    %v78 = vld [vmem:[%s0 + $0x58] sm:$0xff]
    %v79 = vld [vmem:[%s0 + $0x60] sm:$0xff]
    %v80 = vld [vmem:[%s0 + $0x68] sm:$0xff]
    %v81 = vld [vmem:[%s0 + $0x70] sm:$0xff]
    %v82 = vld [vmem:[%s0 + $0x78] sm:$0xff]
    %v83 = vld [vmem:[%s0 + $0x80] sm:$0xff]
    %v84 = vld [vmem:[%s0 + $0x88] sm:$0xff]
    %v85 = vld [vmem:[%s0 + $0x90] sm:$0xff]
    %v86 = vld [vmem:[%s0 + $0x98] sm:$0xff]
    %v87 = vld [vmem:[%s0 + $0xa0] sm:$0xff]
    %v88 = vld [vmem:[%s0 + $0xa8] sm:$0xff]
    %v89 = vld [vmem:[%s0 + $0xb0] sm:$0xff]
    %v90 = vld [vmem:[%s0 + $0xb8] sm:$0xff]
    %v91 = vld [vmem:[%s0 + $0xc0] sm:$0xff]
    %v92 = vld [vmem:[%s0 + $0xc8] sm:$0xff]
    %v93 = vld [vmem:[%s0 + $0xd0] sm:$0xff]
    %v94 = vld [vmem:[%s0 + $0xd8] sm:$0xff]
    %v95 = vld [vmem:[%s0 + $0xe0] sm:$0xff]
    %v96 = vld [vmem:[%s0 + $0xe8] sm:$0xff]
    %v97 = vld [vmem:[%s0 + $0xf0] sm:$0xff]
    %v98 = vld [vmem:[%s0 + $0xf8] sm:$0xff]
    %v99 = vld [vmem:[%s1] sm:$0xff]
    %v100 = vld [vmem:[%s1 + $0x8] sm:$0xff]
    %v101 = vld [vmem:[%s1 + $0x10] sm:$0xff]
    %v102 = vld [vmem:[%s1 + $0x18] sm:$0xff]
    %v103 = vld [vmem:[%s1 + $0x20] sm:$0xff]
    %v104 = vld [vmem:[%s1 + $0x28] sm:$0xff]
    %v105 = vld [vmem:[%s1 + $0x30] sm:$0xff]
    %v106 = vld [vmem:[%s1 + $0x38] sm:$0xff]
    %v107 = vld [vmem:[%s1 + $0x40] sm:$0xff]
    %v108 = vld [vmem:[%s1 + $0x48] sm:$0xff]
    %v109 = vld [vmem:[%s1 + $0x50] sm:$0xff]
    %v110 = vld [vmem:[%s1 + $0x58] sm:$0xff]
    %v111 = vld [vmem:[%s1 + $0x60] sm:$0xff]
    %v112 = vld [vmem:[%s1 + $0x68] sm:$0xff]
    %v113 = vld [vmem:[%s1 + $0x70] sm:$0xff]
    %v114 = vld [vmem:[%s1 + $0x78] sm:$0xff]
    %v115 = vld [vmem:[%s1 + $0x80] sm:$0xff]
    %v116 = vld [vmem:[%s1 + $0x88] sm:$0xff]
    %v117 = vld [vmem:[%s1 + $0x90] sm:$0xff]
    %v118 = vld [vmem:[%s1 + $0x98] sm:$0xff]
    %v119 = vld [vmem:[%s1 + $0xa0] sm:$0xff]
    %v120 = vld [vmem:[%s1 + $0xa8] sm:$0xff]
    %v121 = vld [vmem:[%s1 + $0xb0] sm:$0xff]
    %v122 = vld [vmem:[%s1 + $0xb8] sm:$0xff]
    %v123 = vld [vmem:[%s1 + $0xc0] sm:$0xff]
    %v124 = vld [vmem:[%s1 + $0xc8] sm:$0xff]
    %v125 = vld [vmem:[%s1 + $0xd0] sm:$0xff]
    %v126 = vld [vmem:[%s1 + $0xd8] sm:$0xff]
    %v127 = vld [vmem:[%s1 + $0xe0] sm:$0xff]
    %v128 = vld [vmem:[%s1 + $0xe8] sm:$0xff]
    %v129 = vld [vmem:[%s1 + $0xf0] sm:$0xff]
    %v130 = vld [vmem:[%s1 + $0xf8] sm:$0xff]
    %v131 = vld [vmem:[#allocation2] sm:$0xff]
    %v132 = vld [vmem:[#allocation2 + $0x8] sm:$0xff]
    %v133 = vld [vmem:[#allocation2 + $0x10] sm:$0xff]
    %v134 = vld [vmem:[#allocation2 + $0x18] sm:$0xff]
    %v135 = vld [vmem:[#allocation2 + $0x20] sm:$0xff]
    %v136 = vld [vmem:[#allocation2 + $0x28] sm:$0xff]
    %v137 = vld [vmem:[#allocation2 + $0x30] sm:$0xff]
    %v138 = vld [vmem:[#allocation2 + $0x38] sm:$0xff]
    %v139 = vld [vmem:[#allocation2 + $0x40] sm:$0xff]
    %v140 = vld [vmem:[#allocation2 + $0x48] sm:$0xff]
    %v141 = vld [vmem:[#allocation2 + $0x50] sm:$0xff]
    %v142 = vld [vmem:[#allocation2 + $0x58] sm:$0xff]
    %v143 = vld [vmem:[#allocation2 + $0x60] sm:$0xff]
    %v144 = vld [vmem:[#allocation2 + $0x68] sm:$0xff]
    %v145 = vld [vmem:[#allocation2 + $0x70] sm:$0xff]
    %v146 = vld [vmem:[#allocation2 + $0x78] sm:$0xff]
    %v147 = vld [vmem:[#allocation2 + $0x80] sm:$0xff]
    %v148 = vld [vmem:[#allocation2 + $0x88] sm:$0xff]
    %v149 = vld [vmem:[#allocation2 + $0x90] sm:$0xff]
    %v150 = vld [vmem:[#allocation2 + $0x98] sm:$0xff]
    %v151 = vld [vmem:[#allocation2 + $0xa0] sm:$0xff]
    %v152 = vld [vmem:[#allocation2 + $0xa8] sm:$0xff]
    %v153 = vld [vmem:[#allocation2 + $0xb0] sm:$0xff]
    %v154 = vld [vmem:[#allocation2 + $0xb8] sm:$0xff]
    %v155 = vld [vmem:[#allocation2 + $0xc0] sm:$0xff]
    %v156 = vld [vmem:[#allocation2 + $0xc8] sm:$0xff]
    %v157 = vld [vmem:[#allocation2 + $0xd0] sm:$0xff]
    %v158 = vld [vmem:[#allocation2 + $0xd8] sm:$0xff]
    %v159 = vld [vmem:[#allocation2 + $0xe0] sm:$0xff]
    %v160 = vld [vmem:[#allocation2 + $0xe8] sm:$0xff]
    %v161 = vld [vmem:[#allocation2 + $0xf0] sm:$0xff]
    %v162 = vld [vmem:[#allocation2 + $0xf8] sm:$0xff]
    %v163 = vld [vmem:[#allocation2 + $0x100] sm:$0xff]
    %v164 = vld [vmem:[#allocation2 + $0x108] sm:$0xff]
    %v165 = vld [vmem:[#allocation2 + $0x110] sm:$0xff]
    %v166 = vld [vmem:[#allocation2 + $0x118] sm:$0xff]
    %v167 = vld [vmem:[#allocation2 + $0x120] sm:$0xff]
    %v168 = vld [vmem:[#allocation2 + $0x128] sm:$0xff]
    %v169 = vld [vmem:[#allocation2 + $0x130] sm:$0xff]
    %v170 = vld [vmem:[#allocation2 + $0x138] sm:$0xff]
    %v171 = vld [vmem:[#allocation2 + $0x140] sm:$0xff]
    %v172 = vld [vmem:[#allocation2 + $0x148] sm:$0xff]
    %v173 = vld [vmem:[#allocation2 + $0x150] sm:$0xff]
    %v174 = vld [vmem:[#allocation2 + $0x158] sm:$0xff]
    %v175 = vld [vmem:[#allocation2 + $0x160] sm:$0xff]
    %v176 = vld [vmem:[#allocation2 + $0x168] sm:$0xff]
    %v177 = vld [vmem:[#allocation2 + $0x170] sm:$0xff]
    %v178 = vld [vmem:[#allocation2 + $0x178] sm:$0xff]
    %v179 = vld [vmem:[#allocation2 + $0x180] sm:$0xff]
    %v180 = vld [vmem:[#allocation2 + $0x188] sm:$0xff]
    %v181 = vld [vmem:[#allocation2 + $0x190] sm:$0xff]
    %v182 = vld [vmem:[#allocation2 + $0x198] sm:$0xff]
    %v183 = vld [vmem:[#allocation2 + $0x1a0] sm:$0xff]
    %v184 = vld [vmem:[#allocation2 + $0x1a8] sm:$0xff]
    %v185 = vld [vmem:[#allocation2 + $0x1b0] sm:$0xff]
    %v186 = vld [vmem:[#allocation2 + $0x1b8] sm:$0xff]
    %v187 = vld [vmem:[#allocation2 + $0x1c0] sm:$0xff]
    %v188 = vld [vmem:[#allocation2 + $0x1c8] sm:$0xff]
    %v189 = vld [vmem:[#allocation2 + $0x1d0] sm:$0xff]
    %v190 = vld [vmem:[#allocation2 + $0x1d8] sm:$0xff]
    %v191 = vld [vmem:[#allocation2 + $0x1e0] sm:$0xff]
    %v192 = vld [vmem:[#allocation2 + $0x1e8] sm:$0xff]
    %v193 = vld [vmem:[#allocation2 + $0x1f0] sm:$0xff]
    %v194 = vld [vmem:[#allocation2 + $0x1f8] sm:$0xff]
    %v195 = vld [vmem:[#allocation2 + $0x200] sm:$0xff]
    %v196 = vld [vmem:[#allocation2 + $0x208] sm:$0xff]
    %v197 = vld [vmem:[#allocation2 + $0x210] sm:$0xff]
    %v198 = vld [vmem:[#allocation2 + $0x218] sm:$0xff]
    %v199 = vld [vmem:[#allocation2 + $0x220] sm:$0xff]
    %v200 = vld [vmem:[#allocation2 + $0x228] sm:$0xff]
    %v201 = vld [vmem:[#allocation2 + $0x230] sm:$0xff]
    %v202 = vld [vmem:[#allocation2 + $0x238] sm:$0xff]
    %v203 = vld [vmem:[#allocation2 + $0x240] sm:$0xff]
    %v204 = vld [vmem:[#allocation2 + $0x248] sm:$0xff]
    %v205 = vld [vmem:[#allocation2 + $0x250] sm:$0xff]
    %v206 = vld [vmem:[#allocation2 + $0x258] sm:$0xff]
    %v207 = vld [vmem:[#allocation2 + $0x260] sm:$0xff]
    %v208 = vld [vmem:[#allocation2 + $0x268] sm:$0xff]
    %v209 = vld [vmem:[#allocation2 + $0x270] sm:$0xff]
    %v210 = vld [vmem:[#allocation2 + $0x278] sm:$0xff]
    %v211 = vld [vmem:[#allocation2 + $0x280] sm:$0xff]
    %v212 = vld [vmem:[#allocation2 + $0x288] sm:$0xff]
    %v213 = vld [vmem:[#allocation2 + $0x290] sm:$0xff]
    %v214 = vld [vmem:[#allocation2 + $0x298] sm:$0xff]
    %v215 = vld [vmem:[#allocation2 + $0x2a0] sm:$0xff]
    %v216 = vld [vmem:[#allocation2 + $0x2a8] sm:$0xff]
    %v217 = vld [vmem:[#allocation2 + $0x2b0] sm:$0xff]
    %v218 = vld [vmem:[#allocation2 + $0x2b8] sm:$0xff]
    %v219 = vld [vmem:[#allocation2 + $0x2c0] sm:$0xff]
    %v220 = vld [vmem:[#allocation2 + $0x2c8] sm:$0xff]
    %v221 = vld [vmem:[#allocation2 + $0x2d0] sm:$0xff]
    %v222 = vld [vmem:[#allocation2 + $0x2d8] sm:$0xff]
    %v223 = vld [vmem:[#allocation2 + $0x2e0] sm:$0xff]
    %v224 = vld [vmem:[#allocation2 + $0x2e8] sm:$0xff]
    %v225 = vld [vmem:[#allocation2 + $0x2f0] sm:$0xff]
    %v226 = vld [vmem:[#allocation2 + $0x2f8] sm:$0xff]
    %v227 = vld [vmem:[#allocation2 + $0x300] sm:$0xff]
    %v228 = vld [vmem:[#allocation2 + $0x308] sm:$0xff]
    %v229 = vld [vmem:[#allocation2 + $0x310] sm:$0xff]
    %v230 = vld [vmem:[#allocation2 + $0x318] sm:$0xff]
    %v231 = vld [vmem:[#allocation2 + $0x320] sm:$0xff]
    %v232 = vld [vmem:[#allocation2 + $0x328] sm:$0xff]
    %v233 = vld [vmem:[#allocation2 + $0x330] sm:$0xff]
    %v234 = vld [vmem:[#allocation2 + $0x338] sm:$0xff]
    %v235 = vld [vmem:[#allocation2 + $0x340] sm:$0xff]
    %v236 = vld [vmem:[#allocation2 + $0x348] sm:$0xff]
    %v237 = vld [vmem:[#allocation2 + $0x350] sm:$0xff]
    %v238 = vld [vmem:[#allocation2 + $0x358] sm:$0xff]
    %v239 = vld [vmem:[#allocation2 + $0x360] sm:$0xff]
    %v240 = vld [vmem:[#allocation2 + $0x368] sm:$0xff]
    %v241 = vld [vmem:[#allocation2 + $0x370] sm:$0xff]
    %v242 = vld [vmem:[#allocation2 + $0x378] sm:$0xff]
    %v243 = vld [vmem:[#allocation2 + $0x380] sm:$0xff]
    %v244 = vld [vmem:[#allocation2 + $0x388] sm:$0xff]
    %v245 = vld [vmem:[#allocation2 + $0x390] sm:$0xff]
    %v246 = vld [vmem:[#allocation2 + $0x398] sm:$0xff]
    %v247 = vld [vmem:[#allocation2 + $0x3a0] sm:$0xff]
    %v248 = vld [vmem:[#allocation2 + $0x3a8] sm:$0xff]
    %v249 = vld [vmem:[#allocation2 + $0x3b0] sm:$0xff]
    %v250 = vld [vmem:[#allocation2 + $0x3b8] sm:$0xff]
    %v251 = vld [vmem:[#allocation2 + $0x3c0] sm:$0xff]
    %v252 = vld [vmem:[#allocation2 + $0x3c8] sm:$0xff]
    %v253 = vld [vmem:[#allocation2 + $0x3d0] sm:$0xff]
    %v254 = vld [vmem:[#allocation2 + $0x3d8] sm:$0xff]
    %v255 = vld [vmem:[#allocation2 + $0x3e0] sm:$0xff]
    %v256 = vld [vmem:[#allocation2 + $0x3e8] sm:$0xff]
    %v257 = vld [vmem:[#allocation2 + $0x3f0] sm:$0xff]
    %v258 = vld [vmem:[#allocation2 + $0x3f8] sm:$0xff]
    %v259 = vld [vmem:[%s3] sm:$0xff]
    %v261 = vlaneseq
    %v262 = vshrl.u32 %v261, 7
    %v263 = vsub.s32 0, %v262
    %v264 = vrot.slane %v259, %v263
    %v265 = vlaneseq
    %v266 = vshrl.u32 %v265, 7
    %v267 = vsub.s32 1, %v266
    %v268 = vrot.slane %v259, %v267
    %v269 = vlaneseq
    %v270 = vshrl.u32 %v269, 7
    %v271 = vsub.s32 2, %v270
    %v272 = vrot.slane %v259, %v271
    %v273 = vlaneseq
    %v274 = vshrl.u32 %v273, 7
    %v275 = vsub.s32 3, %v274
    %v276 = vrot.slane %v259, %v275
    %v277 = vlaneseq
    %v278 = vshrl.u32 %v277, 7
    %v279 = vsub.s32 4, %v278
    %v280 = vrot.slane %v259, %v279
    %v281 = vlaneseq
    %v282 = vshrl.u32 %v281, 7
    %v283 = vsub.s32 5, %v282
    %v284 = vrot.slane %v259, %v283
    %v285 = vlaneseq
    %v286 = vshrl.u32 %v285, 7
    %v287 = vsub.s32 6, %v286
    %v288 = vrot.slane %v259, %v287
    %v289 = vlaneseq
    %v290 = vshrl.u32 %v289, 7
    %v291 = vsub.s32 7, %v290
    %v292 = vrot.slane %v259, %v291
    %v333 = vunpack.c.l.b16 %v67
    %v334 = vunpack.c.h.b16 %v67
    %v335 = vunpack.c.l.b16 %v68
    %v336 = vunpack.c.h.b16 %v68
    %v337 = vunpack.c.l.b16 %v69
    %v338 = vunpack.c.h.b16 %v69
    %v339 = vunpack.c.l.b16 %v70
    %v340 = vunpack.c.h.b16 %v70
    %v341 = vunpack.c.l.b16 %v71
    %v342 = vunpack.c.h.b16 %v71
    %v343 = vunpack.c.l.b16 %v72
    %v344 = vunpack.c.h.b16 %v72
    %v345 = vunpack.c.l.b16 %v73
    %v346 = vunpack.c.h.b16 %v73
    %v347 = vunpack.c.l.b16 %v74
    %v348 = vunpack.c.h.b16 %v74
    %v349 = vunpack.c.l.b16 %v75
    %v350 = vunpack.c.h.b16 %v75
    %v351 = vunpack.c.l.b16 %v76
    %v352 = vunpack.c.h.b16 %v76
    %v353 = vunpack.c.l.b16 %v77
    %v354 = vunpack.c.h.b16 %v77
    %v355 = vunpack.c.l.b16 %v78
    %v356 = vunpack.c.h.b16 %v78
    %v357 = vunpack.c.l.b16 %v79
    %v358 = vunpack.c.h.b16 %v79
    %v359 = vunpack.c.l.b16 %v80
    %v360 = vunpack.c.h.b16 %v80
    %v361 = vunpack.c.l.b16 %v81
    %v362 = vunpack.c.h.b16 %v81
    %v363 = vunpack.c.l.b16 %v82
    %v364 = vunpack.c.h.b16 %v82
    %v365 = vunpack.c.l.b16 %v83
    %v366 = vunpack.c.h.b16 %v83
    %v367 = vunpack.c.l.b16 %v84
    %v368 = vunpack.c.h.b16 %v84
    %v369 = vunpack.c.l.b16 %v85
    %v370 = vunpack.c.h.b16 %v85
    %v371 = vunpack.c.l.b16 %v86
    %v372 = vunpack.c.h.b16 %v86
    %v373 = vunpack.c.l.b16 %v87
    %v374 = vunpack.c.h.b16 %v87
    %v375 = vunpack.c.l.b16 %v88
    %v376 = vunpack.c.h.b16 %v88
    %v377 = vunpack.c.l.b16 %v89
    %v378 = vunpack.c.h.b16 %v89
    %v379 = vunpack.c.l.b16 %v90
    %v380 = vunpack.c.h.b16 %v90
    %v381 = vunpack.c.l.b16 %v91
    %v382 = vunpack.c.h.b16 %v91
    %v383 = vunpack.c.l.b16 %v92
    %v384 = vunpack.c.h.b16 %v92
    %v385 = vunpack.c.l.b16 %v93
    %v386 = vunpack.c.h.b16 %v93
    %v387 = vunpack.c.l.b16 %v94
    %v388 = vunpack.c.h.b16 %v94
    %v389 = vunpack.c.l.b16 %v95
    %v390 = vunpack.c.h.b16 %v95
    %v391 = vunpack.c.l.b16 %v96
    %v392 = vunpack.c.h.b16 %v96
    %v393 = vunpack.c.l.b16 %v97
    %v394 = vunpack.c.h.b16 %v97
    %v395 = vunpack.c.l.b16 %v98
    %v396 = vunpack.c.h.b16 %v98
    %v397 = vpack.c.b16 %v335, %v333
    %v398 = vpack.c.b16 %v336, %v334
    %v399 = vpack.c.b16 %v339, %v337
    %v400 = vpack.c.b16 %v340, %v338
    %v401 = vpack.c.b16 %v343, %v341
    %v402 = vpack.c.b16 %v344, %v342
    %v403 = vpack.c.b16 %v347, %v345
    %v404 = vpack.c.b16 %v348, %v346
    %v405 = vpack.c.b16 %v351, %v349
    %v406 = vpack.c.b16 %v352, %v350
    %v407 = vpack.c.b16 %v355, %v353
    %v408 = vpack.c.b16 %v356, %v354
    %v409 = vpack.c.b16 %v359, %v357
    %v410 = vpack.c.b16 %v360, %v358
    %v411 = vpack.c.b16 %v363, %v361
    %v412 = vpack.c.b16 %v364, %v362
    %v413 = vpack.c.b16 %v367, %v365
    %v414 = vpack.c.b16 %v368, %v366
    %v415 = vpack.c.b16 %v371, %v369
    %v416 = vpack.c.b16 %v372, %v370
    %v417 = vpack.c.b16 %v375, %v373
    %v418 = vpack.c.b16 %v376, %v374
    %v419 = vpack.c.b16 %v379, %v377
    %v420 = vpack.c.b16 %v380, %v378
    %v421 = vpack.c.b16 %v383, %v381
    %v422 = vpack.c.b16 %v384, %v382
    %v423 = vpack.c.b16 %v387, %v385
    %v424 = vpack.c.b16 %v388, %v386
    %v425 = vpack.c.b16 %v391, %v389
    %v426 = vpack.c.b16 %v392, %v390
    %v427 = vpack.c.b16 %v395, %v393
    %v428 = vpack.c.b16 %v396, %v394
    %v589 = vunpack.c.l.b16 %v131
    %v590 = vunpack.c.h.b16 %v131
    %v591 = vunpack.c.l.b16 %v132
    %v592 = vunpack.c.h.b16 %v132
    %v593 = vunpack.c.l.b16 %v133
    %v594 = vunpack.c.h.b16 %v133
    %v595 = vunpack.c.l.b16 %v134
    %v596 = vunpack.c.h.b16 %v134
    %v597 = vunpack.c.l.b16 %v135
    %v598 = vunpack.c.h.b16 %v135
    %v599 = vunpack.c.l.b16 %v136
    %v600 = vunpack.c.h.b16 %v136
    %v601 = vunpack.c.l.b16 %v137
    %v602 = vunpack.c.h.b16 %v137
    %v603 = vunpack.c.l.b16 %v138
    %v604 = vunpack.c.h.b16 %v138
    %v605 = vunpack.c.l.b16 %v139
    %v606 = vunpack.c.h.b16 %v139
    %v607 = vunpack.c.l.b16 %v140
    %v608 = vunpack.c.h.b16 %v140
    %v609 = vunpack.c.l.b16 %v141
    %v610 = vunpack.c.h.b16 %v141
    %v611 = vunpack.c.l.b16 %v142
    %v612 = vunpack.c.h.b16 %v142
    %v613 = vunpack.c.l.b16 %v143
    %v614 = vunpack.c.h.b16 %v143
    %v615 = vunpack.c.l.b16 %v144
    %v616 = vunpack.c.h.b16 %v144
    %v617 = vunpack.c.l.b16 %v145
    %v618 = vunpack.c.h.b16 %v145
    %v619 = vunpack.c.l.b16 %v146
    %v620 = vunpack.c.h.b16 %v146
    %v621 = vunpack.c.l.b16 %v147
    %v622 = vunpack.c.h.b16 %v147
    %v623 = vunpack.c.l.b16 %v148
    %v624 = vunpack.c.h.b16 %v148
    %v625 = vunpack.c.l.b16 %v149
    %v626 = vunpack.c.h.b16 %v149
    %v627 = vunpack.c.l.b16 %v150
    %v628 = vunpack.c.h.b16 %v150
    %v629 = vunpack.c.l.b16 %v151
    %v630 = vunpack.c.h.b16 %v151
    %v631 = vunpack.c.l.b16 %v152
    %v632 = vunpack.c.h.b16 %v152
    %v633 = vunpack.c.l.b16 %v153
    %v634 = vunpack.c.h.b16 %v153
    %v635 = vunpack.c.l.b16 %v154
    %v636 = vunpack.c.h.b16 %v154
    %v637 = vunpack.c.l.b16 %v155
    %v638 = vunpack.c.h.b16 %v155
    %v639 = vunpack.c.l.b16 %v156
    %v640 = vunpack.c.h.b16 %v156
    %v641 = vunpack.c.l.b16 %v157
    %v642 = vunpack.c.h.b16 %v157
    %v643 = vunpack.c.l.b16 %v158
    %v644 = vunpack.c.h.b16 %v158
    %v645 = vunpack.c.l.b16 %v159
    %v646 = vunpack.c.h.b16 %v159
    %v647 = vunpack.c.l.b16 %v160
    %v648 = vunpack.c.h.b16 %v160
    %v649 = vunpack.c.l.b16 %v161
    %v650 = vunpack.c.h.b16 %v161
    %v651 = vunpack.c.l.b16 %v162
    %v652 = vunpack.c.h.b16 %v162
    %v653 = vunpack.c.l.b16 %v163
    %v654 = vunpack.c.h.b16 %v163
    %v655 = vunpack.c.l.b16 %v164
    %v656 = vunpack.c.h.b16 %v164
    %v657 = vunpack.c.l.b16 %v165
    %v658 = vunpack.c.h.b16 %v165
    %v659 = vunpack.c.l.b16 %v166
    %v660 = vunpack.c.h.b16 %v166
    %v661 = vunpack.c.l.b16 %v167
    %v662 = vunpack.c.h.b16 %v167
    %v663 = vunpack.c.l.b16 %v168
    %v664 = vunpack.c.h.b16 %v168
    %v665 = vunpack.c.l.b16 %v169
    %v666 = vunpack.c.h.b16 %v169
    %v667 = vunpack.c.l.b16 %v170
    %v668 = vunpack.c.h.b16 %v170
    %v669 = vunpack.c.l.b16 %v171
    %v670 = vunpack.c.h.b16 %v171
    %v671 = vunpack.c.l.b16 %v172
    %v672 = vunpack.c.h.b16 %v172
    %v673 = vunpack.c.l.b16 %v173
    %v674 = vunpack.c.h.b16 %v173
    %v675 = vunpack.c.l.b16 %v174
    %v676 = vunpack.c.h.b16 %v174
    %v677 = vunpack.c.l.b16 %v175
    %v678 = vunpack.c.h.b16 %v175
    %v679 = vunpack.c.l.b16 %v176
    %v680 = vunpack.c.h.b16 %v176
    %v681 = vunpack.c.l.b16 %v177
    %v682 = vunpack.c.h.b16 %v177
    %v683 = vunpack.c.l.b16 %v178
    %v684 = vunpack.c.h.b16 %v178
    %v685 = vunpack.c.l.b16 %v179
    %v686 = vunpack.c.h.b16 %v179
    %v687 = vunpack.c.l.b16 %v180
    %v688 = vunpack.c.h.b16 %v180
    %v689 = vunpack.c.l.b16 %v181
    %v690 = vunpack.c.h.b16 %v181
    %v691 = vunpack.c.l.b16 %v182
    %v692 = vunpack.c.h.b16 %v182
    %v693 = vunpack.c.l.b16 %v183
    %v694 = vunpack.c.h.b16 %v183
    %v695 = vunpack.c.l.b16 %v184
    %v696 = vunpack.c.h.b16 %v184
    %v697 = vunpack.c.l.b16 %v185
    %v698 = vunpack.c.h.b16 %v185
    %v699 = vunpack.c.l.b16 %v186
    %v700 = vunpack.c.h.b16 %v186
    %v701 = vunpack.c.l.b16 %v187
    %v702 = vunpack.c.h.b16 %v187
    %v703 = vunpack.c.l.b16 %v188
    %v704 = vunpack.c.h.b16 %v188
    %v705 = vunpack.c.l.b16 %v189
    %v706 = vunpack.c.h.b16 %v189
    %v707 = vunpack.c.l.b16 %v190
    %v708 = vunpack.c.h.b16 %v190
    %v709 = vunpack.c.l.b16 %v191
    %v710 = vunpack.c.h.b16 %v191
    %v711 = vunpack.c.l.b16 %v192
    %v712 = vunpack.c.h.b16 %v192
    %v713 = vunpack.c.l.b16 %v193
    %v714 = vunpack.c.h.b16 %v193
    %v715 = vunpack.c.l.b16 %v194
    %v716 = vunpack.c.h.b16 %v194
    %v717 = vunpack.c.l.b16 %v195
    %v718 = vunpack.c.h.b16 %v195
    %v719 = vunpack.c.l.b16 %v196
    %v720 = vunpack.c.h.b16 %v196
    %v721 = vunpack.c.l.b16 %v197
    %v722 = vunpack.c.h.b16 %v197
    %v723 = vunpack.c.l.b16 %v198
    %v724 = vunpack.c.h.b16 %v198
    %v725 = vunpack.c.l.b16 %v199
    %v726 = vunpack.c.h.b16 %v199
    %v727 = vunpack.c.l.b16 %v200
    %v728 = vunpack.c.h.b16 %v200
    %v729 = vunpack.c.l.b16 %v201
    %v730 = vunpack.c.h.b16 %v201
    %v731 = vunpack.c.l.b16 %v202
    %v732 = vunpack.c.h.b16 %v202
    %v733 = vunpack.c.l.b16 %v203
    %v734 = vunpack.c.h.b16 %v203
    %v735 = vunpack.c.l.b16 %v204
    %v736 = vunpack.c.h.b16 %v204
    %v737 = vunpack.c.l.b16 %v205
    %v738 = vunpack.c.h.b16 %v205
    %v739 = vunpack.c.l.b16 %v206
    %v740 = vunpack.c.h.b16 %v206
    %v741 = vunpack.c.l.b16 %v207
    %v742 = vunpack.c.h.b16 %v207
    %v743 = vunpack.c.l.b16 %v208
    %v744 = vunpack.c.h.b16 %v208
    %v745 = vunpack.c.l.b16 %v209
    %v746 = vunpack.c.h.b16 %v209
    %v747 = vunpack.c.l.b16 %v210
    %v748 = vunpack.c.h.b16 %v210
    %v749 = vunpack.c.l.b16 %v211
    %v750 = vunpack.c.h.b16 %v211
    %v751 = vunpack.c.l.b16 %v212
    %v752 = vunpack.c.h.b16 %v212
    %v753 = vunpack.c.l.b16 %v213
    %v754 = vunpack.c.h.b16 %v213
    %v755 = vunpack.c.l.b16 %v214
    %v756 = vunpack.c.h.b16 %v214
    %v757 = vunpack.c.l.b16 %v215
    %v758 = vunpack.c.h.b16 %v215
    %v759 = vunpack.c.l.b16 %v216
    %v760 = vunpack.c.h.b16 %v216
    %v761 = vunpack.c.l.b16 %v217
    %v762 = vunpack.c.h.b16 %v217
    %v763 = vunpack.c.l.b16 %v218
    %v764 = vunpack.c.h.b16 %v218
    %v765 = vunpack.c.l.b16 %v219
    %v766 = vunpack.c.h.b16 %v219
    %v767 = vunpack.c.l.b16 %v220
    %v768 = vunpack.c.h.b16 %v220
    %v769 = vunpack.c.l.b16 %v221
    %v770 = vunpack.c.h.b16 %v221
    %v771 = vunpack.c.l.b16 %v222
    %v772 = vunpack.c.h.b16 %v222
    %v773 = vunpack.c.l.b16 %v223
    %v774 = vunpack.c.h.b16 %v223
    %v775 = vunpack.c.l.b16 %v224
    %v776 = vunpack.c.h.b16 %v224
    %v777 = vunpack.c.l.b16 %v225
    %v778 = vunpack.c.h.b16 %v225
    %v779 = vunpack.c.l.b16 %v226
    %v780 = vunpack.c.h.b16 %v226
    %v781 = vunpack.c.l.b16 %v227
    %v782 = vunpack.c.h.b16 %v227
    %v783 = vunpack.c.l.b16 %v228
    %v784 = vunpack.c.h.b16 %v228
    %v785 = vunpack.c.l.b16 %v229
    %v786 = vunpack.c.h.b16 %v229
    %v787 = vunpack.c.l.b16 %v230
    %v788 = vunpack.c.h.b16 %v230
    %v789 = vunpack.c.l.b16 %v231
    %v790 = vunpack.c.h.b16 %v231
    %v791 = vunpack.c.l.b16 %v232
    %v792 = vunpack.c.h.b16 %v232
    %v793 = vunpack.c.l.b16 %v233
    %v794 = vunpack.c.h.b16 %v233
    %v795 = vunpack.c.l.b16 %v234
    %v796 = vunpack.c.h.b16 %v234
    %v797 = vunpack.c.l.b16 %v235
    %v798 = vunpack.c.h.b16 %v235
    %v799 = vunpack.c.l.b16 %v236
    %v800 = vunpack.c.h.b16 %v236
    %v801 = vunpack.c.l.b16 %v237
    %v802 = vunpack.c.h.b16 %v237
    %v803 = vunpack.c.l.b16 %v238
    %v804 = vunpack.c.h.b16 %v238
    %v805 = vunpack.c.l.b16 %v239
    %v806 = vunpack.c.h.b16 %v239
    %v807 = vunpack.c.l.b16 %v240
    %v808 = vunpack.c.h.b16 %v240
    %v809 = vunpack.c.l.b16 %v241
    %v810 = vunpack.c.h.b16 %v241
    %v811 = vunpack.c.l.b16 %v242
    %v812 = vunpack.c.h.b16 %v242
    %v813 = vunpack.c.l.b16 %v243
    %v814 = vunpack.c.h.b16 %v243
    %v815 = vunpack.c.l.b16 %v244
    %v816 = vunpack.c.h.b16 %v244
    %v817 = vunpack.c.l.b16 %v245
    %v818 = vunpack.c.h.b16 %v245
    %v819 = vunpack.c.l.b16 %v246
    %v820 = vunpack.c.h.b16 %v246
    %v821 = vunpack.c.l.b16 %v247
    %v822 = vunpack.c.h.b16 %v247
    %v823 = vunpack.c.l.b16 %v248
    %v824 = vunpack.c.h.b16 %v248
    %v825 = vunpack.c.l.b16 %v249
    %v826 = vunpack.c.h.b16 %v249
    %v827 = vunpack.c.l.b16 %v250
    %v828 = vunpack.c.h.b16 %v250
    %v829 = vunpack.c.l.b16 %v251
    %v830 = vunpack.c.h.b16 %v251
    %v831 = vunpack.c.l.b16 %v252
    %v832 = vunpack.c.h.b16 %v252
    %v833 = vunpack.c.l.b16 %v253
    %v834 = vunpack.c.h.b16 %v253
    %v835 = vunpack.c.l.b16 %v254
    %v836 = vunpack.c.h.b16 %v254
    %v837 = vunpack.c.l.b16 %v255
    %v838 = vunpack.c.h.b16 %v255
    %v839 = vunpack.c.l.b16 %v256
    %v840 = vunpack.c.h.b16 %v256
    %v841 = vunpack.c.l.b16 %v257
    %v842 = vunpack.c.h.b16 %v257
    %v843 = vunpack.c.l.b16 %v258
    %v844 = vunpack.c.h.b16 %v258
    %v845 = vpack.c.b16 %v597, %v589
    %v846 = vpack.c.b16 %v598, %v590
    %v847 = vpack.c.b16 %v599, %v591
    %v848 = vpack.c.b16 %v600, %v592
    %v849 = vpack.c.b16 %v601, %v593
    %v850 = vpack.c.b16 %v602, %v594
    %v851 = vpack.c.b16 %v603, %v595
    %v852 = vpack.c.b16 %v604, %v596
    %v853 = vpack.c.b16 %v613, %v605
    %v854 = vpack.c.b16 %v614, %v606
    %v855 = vpack.c.b16 %v615, %v607
    %v856 = vpack.c.b16 %v616, %v608
    %v857 = vpack.c.b16 %v617, %v609
    %v858 = vpack.c.b16 %v618, %v610
    %v859 = vpack.c.b16 %v619, %v611
    %v860 = vpack.c.b16 %v620, %v612
    %v861 = vpack.c.b16 %v629, %v621
    %v862 = vpack.c.b16 %v630, %v622
    %v863 = vpack.c.b16 %v631, %v623
    %v864 = vpack.c.b16 %v632, %v624
    %v865 = vpack.c.b16 %v633, %v625
    %v866 = vpack.c.b16 %v634, %v626
    %v867 = vpack.c.b16 %v635, %v627
    %v868 = vpack.c.b16 %v636, %v628
    %v869 = vpack.c.b16 %v645, %v637
    %v870 = vpack.c.b16 %v646, %v638
    %v871 = vpack.c.b16 %v647, %v639
    %v872 = vpack.c.b16 %v648, %v640
    %v873 = vpack.c.b16 %v649, %v641
    %v874 = vpack.c.b16 %v650, %v642
    %v875 = vpack.c.b16 %v651, %v643
    %v876 = vpack.c.b16 %v652, %v644
    %v877 = vpack.c.b16 %v661, %v653
    %v878 = vpack.c.b16 %v662, %v654
    %v879 = vpack.c.b16 %v663, %v655
    %v880 = vpack.c.b16 %v664, %v656
    %v881 = vpack.c.b16 %v665, %v657
    %v882 = vpack.c.b16 %v666, %v658
    %v883 = vpack.c.b16 %v667, %v659
    %v884 = vpack.c.b16 %v668, %v660
    %v885 = vpack.c.b16 %v677, %v669
    %v886 = vpack.c.b16 %v678, %v670
    %v887 = vpack.c.b16 %v679, %v671
    %v888 = vpack.c.b16 %v680, %v672
    %v889 = vpack.c.b16 %v681, %v673
    %v890 = vpack.c.b16 %v682, %v674
    %v891 = vpack.c.b16 %v683, %v675
    %v892 = vpack.c.b16 %v684, %v676
    %v893 = vpack.c.b16 %v693, %v685
    %v894 = vpack.c.b16 %v694, %v686
    %v895 = vpack.c.b16 %v695, %v687
    %v896 = vpack.c.b16 %v696, %v688
    %v897 = vpack.c.b16 %v697, %v689
    %v898 = vpack.c.b16 %v698, %v690
    %v899 = vpack.c.b16 %v699, %v691
    %v900 = vpack.c.b16 %v700, %v692
    %v901 = vpack.c.b16 %v709, %v701
    %v902 = vpack.c.b16 %v710, %v702
    %v903 = vpack.c.b16 %v711, %v703
    %v904 = vpack.c.b16 %v712, %v704
    %v905 = vpack.c.b16 %v713, %v705
    %v906 = vpack.c.b16 %v714, %v706
    %v907 = vpack.c.b16 %v715, %v707
    %v908 = vpack.c.b16 %v716, %v708
    %v909 = vpack.c.b16 %v725, %v717
    %v910 = vpack.c.b16 %v726, %v718
    %v911 = vpack.c.b16 %v727, %v719
    %v912 = vpack.c.b16 %v728, %v720
    %v913 = vpack.c.b16 %v729, %v721
    %v914 = vpack.c.b16 %v730, %v722
    %v915 = vpack.c.b16 %v731, %v723
    %v916 = vpack.c.b16 %v732, %v724
    %v917 = vpack.c.b16 %v741, %v733
    %v918 = vpack.c.b16 %v742, %v734
    %v919 = vpack.c.b16 %v743, %v735
    %v920 = vpack.c.b16 %v744, %v736
    %v921 = vpack.c.b16 %v745, %v737
    %v922 = vpack.c.b16 %v746, %v738
    %v923 = vpack.c.b16 %v747, %v739
    %v924 = vpack.c.b16 %v748, %v740
    %v925 = vpack.c.b16 %v757, %v749
    %v926 = vpack.c.b16 %v758, %v750
    %v927 = vpack.c.b16 %v759, %v751
    %v928 = vpack.c.b16 %v760, %v752
    %v929 = vpack.c.b16 %v761, %v753
    %v930 = vpack.c.b16 %v762, %v754
    %v931 = vpack.c.b16 %v763, %v755
    %v932 = vpack.c.b16 %v764, %v756
    %v933 = vpack.c.b16 %v773, %v765
    %v934 = vpack.c.b16 %v774, %v766
    %v935 = vpack.c.b16 %v775, %v767
    %v936 = vpack.c.b16 %v776, %v768
    %v937 = vpack.c.b16 %v777, %v769
    %v938 = vpack.c.b16 %v778, %v770
    %v939 = vpack.c.b16 %v779, %v771
    %v940 = vpack.c.b16 %v780, %v772
    %v941 = vpack.c.b16 %v789, %v781
    %v942 = vpack.c.b16 %v790, %v782
    %v943 = vpack.c.b16 %v791, %v783
    %v944 = vpack.c.b16 %v792, %v784
    %v945 = vpack.c.b16 %v793, %v785
    %v946 = vpack.c.b16 %v794, %v786
    %v947 = vpack.c.b16 %v795, %v787
    %v948 = vpack.c.b16 %v796, %v788
    %v949 = vpack.c.b16 %v805, %v797
    %v950 = vpack.c.b16 %v806, %v798
    %v951 = vpack.c.b16 %v807, %v799
    %v952 = vpack.c.b16 %v808, %v800
    %v953 = vpack.c.b16 %v809, %v801
    %v954 = vpack.c.b16 %v810, %v802
    %v955 = vpack.c.b16 %v811, %v803
    %v956 = vpack.c.b16 %v812, %v804
    %v957 = vpack.c.b16 %v821, %v813
    %v958 = vpack.c.b16 %v822, %v814
    %v959 = vpack.c.b16 %v823, %v815
    %v960 = vpack.c.b16 %v824, %v816
    %v961 = vpack.c.b16 %v825, %v817
    %v962 = vpack.c.b16 %v826, %v818
    %v963 = vpack.c.b16 %v827, %v819
    %v964 = vpack.c.b16 %v828, %v820
    %v965 = vpack.c.b16 %v837, %v829
    %v966 = vpack.c.b16 %v838, %v830
    %v967 = vpack.c.b16 %v839, %v831
    %v968 = vpack.c.b16 %v840, %v832
    %v969 = vpack.c.b16 %v841, %v833
    %v970 = vpack.c.b16 %v842, %v834
    %v971 = vpack.c.b16 %v843, %v835
    %v972 = vpack.c.b16 %v844, %v836
    %1101 = vmatprep.subr.bf16.mxu0 %v846
    %1102 = vmatpush1.bf16.msra.mxu0 %v845
    %1103 = vmatprep.subr.bf16.mxu0 %v854
    %1104 = vmatpush1.bf16.msra.mxu0 %v853
    %1105 = vmatprep.subr.bf16.mxu0 %v862
    %1106 = vmatpush1.bf16.msra.mxu0 %v861
    %1107 = vmatprep.subr.bf16.mxu0 %v870
    %1108 = vmatpush1.bf16.msra.mxu0 %v869
    %1109 = vmatprep.subr.bf16.mxu0 %v878
    %1110 = vmatpush1.bf16.msra.mxu0 %v877
    %1111 = vmatprep.subr.bf16.mxu0 %v886
    %1112 = vmatpush1.bf16.msra.mxu0 %v885
    %1113 = vmatprep.subr.bf16.mxu0 %v894
    %1114 = vmatpush1.bf16.msra.mxu0 %v893
    %1115 = vmatprep.subr.bf16.mxu0 %v902
    %1116 = vmatpush1.bf16.msra.mxu0 %v901
    %1117 = vmatprep.subr.bf16.mxu0 %v910
    %1118 = vmatpush1.bf16.msra.mxu0 %v909
    %1119 = vmatprep.subr.bf16.mxu0 %v918
    %1120 = vmatpush1.bf16.msra.mxu0 %v917
    %1121 = vmatprep.subr.bf16.mxu0 %v926
    %1122 = vmatpush1.bf16.msra.mxu0 %v925
    %1123 = vmatprep.subr.bf16.mxu0 %v934
    %1124 = vmatpush1.bf16.msra.mxu0 %v933
    %1125 = vmatprep.subr.bf16.mxu0 %v942
    %1126 = vmatpush1.bf16.msra.mxu0 %v941
    %1127 = vmatprep.subr.bf16.mxu0 %v950
    %1128 = vmatpush1.bf16.msra.mxu0 %v949
    %1129 = vmatprep.subr.bf16.mxu0 %v958
    %1130 = vmatpush1.bf16.msra.mxu0 %v957
    %1131 = vmatprep.subr.bf16.mxu0 %v966
    %1132 = vmatpush1.bf16.msra.mxu0 %v965
    %1133 = vmatprep.mubr.bf16.mxu0 %v398
    %1134 = vmatmul.mubr.bf16.gmra.mrb[0].mxu0 %v397
    %v1135 = vpop.f32.mrb[0].mxu0
    %v1136 = vadd.f32 %v264, %v1135
    %v1137 = vpop.f32.mrb[0].mxu0
    %v1138 = vadd.f32 %v268, %v1137
    %v1139 = vpop.f32.mrb[0].mxu0
    %v1140 = vadd.f32 %v264, %v1139
    %v1141 = vpop.f32.mrb[0].mxu0
    %v1142 = vadd.f32 %v268, %v1141
    %1143 = vmatprep.mubr.bf16.mxu0 %v400
    %1144 = vmatmul.mubr.bf16.gmra.mrb[0].mxu0 %v399
    %v1145 = vpop.f32.mrb[0].mxu0
    %v1146 = vadd.f32 %v264, %v1145
    %v1147 = vpop.f32.mrb[0].mxu0
    %v1148 = vadd.f32 %v268, %v1147
    %v1149 = vpop.f32.mrb[0].mxu0
    %v1150 = vadd.f32 %v264, %v1149
    %v1151 = vpop.f32.mrb[0].mxu0
    %v1152 = vadd.f32 %v268, %v1151
    %1153 = vmatprep.mubr.bf16.mxu0 %v402
    %1154 = vmatmul.mubr.bf16.gmra.mrb[0].mxu0 %v401
    %v1155 = vpop.f32.mrb[0].mxu0
    %v1156 = vadd.f32 %v264, %v1155
    %v1157 = vpop.f32.mrb[0].mxu0
    %v1158 = vadd.f32 %v268, %v1157
    %v1159 = vpop.f32.mrb[0].mxu0
    %v1160 = vadd.f32 %v264, %v1159
    %v1161 = vpop.f32.mrb[0].mxu0
    %v1162 = vadd.f32 %v268, %v1161
    %1163 = vmatprep.mubr.bf16.mxu0 %v404
    %1164 = vmatmul.mubr.bf16.gmra.mrb[0].mxu0 %v403
    %v1165 = vpop.f32.mrb[0].mxu0
    %v1166 = vadd.f32 %v264, %v1165
    %v1167 = vpop.f32.mrb[0].mxu0
    %v1168 = vadd.f32 %v268, %v1167
    %v1169 = vpop.f32.mrb[0].mxu0
    %v1170 = vadd.f32 %v264, %v1169
    %v1171 = vpop.f32.mrb[0].mxu0
    %v1172 = vadd.f32 %v268, %v1171
    %1173 = vmatprep.mubr.bf16.mxu0 %v406
    %1174 = vmatmul.mubr.bf16.gmra.mrb[0].mxu0 %v405
    %v1175 = vpop.f32.mrb[0].mxu0
    %v1176 = vadd.f32 %v264, %v1175
    %v1177 = vpop.f32.mrb[0].mxu0
    %v1178 = vadd.f32 %v268, %v1177
    %v1179 = vpop.f32.mrb[0].mxu0
    %v1180 = vadd.f32 %v264, %v1179
    %v1181 = vpop.f32.mrb[0].mxu0
    %v1182 = vadd.f32 %v268, %v1181
    %1183 = vmatprep.mubr.bf16.mxu0 %v408
    %1184 = vmatmul.mubr.bf16.gmra.mrb[0].mxu0 %v407
    %v1185 = vpop.f32.mrb[0].mxu0
    %v1186 = vadd.f32 %v264, %v1185
    %v1187 = vpop.f32.mrb[0].mxu0
    %v1188 = vadd.f32 %v268, %v1187
    %v1189 = vpop.f32.mrb[0].mxu0
    %v1190 = vadd.f32 %v264, %v1189
    %v1191 = vpop.f32.mrb[0].mxu0
    %v1192 = vadd.f32 %v268, %v1191
    %1193 = vmatprep.mubr.bf16.mxu0 %v410
    %1194 = vmatmul.mubr.bf16.gmra.mrb[0].mxu0 %v409
    %v1195 = vpop.f32.mrb[0].mxu0
    %v1196 = vadd.f32 %v264, %v1195
    %v1197 = vpop.f32.mrb[0].mxu0
    %v1198 = vadd.f32 %v268, %v1197
    %v1199 = vpop.f32.mrb[0].mxu0
    %v1200 = vadd.f32 %v264, %v1199
    %v1201 = vpop.f32.mrb[0].mxu0
    %v1202 = vadd.f32 %v268, %v1201
    %1203 = vmatprep.mubr.bf16.mxu0 %v412
    %1204 = vmatmul.mubr.bf16.gmra.mrb[0].mxu0 %v411
    %v1205 = vpop.f32.mrb[0].mxu0
    %v1206 = vadd.f32 %v264, %v1205
    %v1207 = vpop.f32.mrb[0].mxu0
    %v1208 = vadd.f32 %v268, %v1207
    %v1209 = vpop.f32.mrb[0].mxu0
    %v1210 = vadd.f32 %v264, %v1209
    %v1211 = vpop.f32.mrb[0].mxu0
    %v1212 = vadd.f32 %v268, %v1211
    %1213 = vmatprep.mubr.bf16.mxu0 %v414
    %1214 = vmatmul.mubr.bf16.gmra.mrb[0].mxu0 %v413
    %v1215 = vpop.f32.mrb[0].mxu0
    %v1216 = vadd.f32 %v264, %v1215
    %v1217 = vpop.f32.mrb[0].mxu0
    %v1218 = vadd.f32 %v268, %v1217
    %v1219 = vpop.f32.mrb[0].mxu0
    %v1220 = vadd.f32 %v264, %v1219
    %v1221 = vpop.f32.mrb[0].mxu0
    %v1222 = vadd.f32 %v268, %v1221
    %1223 = vmatprep.mubr.bf16.mxu0 %v416
    %1224 = vmatmul.mubr.bf16.gmra.mrb[0].mxu0 %v415
    %v1225 = vpop.f32.mrb[0].mxu0
    %v1226 = vadd.f32 %v264, %v1225
    %v1227 = vpop.f32.mrb[0].mxu0
    %v1228 = vadd.f32 %v268, %v1227
    %v1229 = vpop.f32.mrb[0].mxu0
    %v1230 = vadd.f32 %v264, %v1229
    %v1231 = vpop.f32.mrb[0].mxu0
    %v1232 = vadd.f32 %v268, %v1231
    %1233 = vmatprep.mubr.bf16.mxu0 %v418
    %1234 = vmatmul.mubr.bf16.gmra.mrb[0].mxu0 %v417
    %v1235 = vpop.f32.mrb[0].mxu0
    %v1236 = vadd.f32 %v264, %v1235
    %v1237 = vpop.f32.mrb[0].mxu0
    %v1238 = vadd.f32 %v268, %v1237
    %v1239 = vpop.f32.mrb[0].mxu0
    %v1240 = vadd.f32 %v264, %v1239
    %v1241 = vpop.f32.mrb[0].mxu0
    %v1242 = vadd.f32 %v268, %v1241
    %1243 = vmatprep.mubr.bf16.mxu0 %v420
    %1244 = vmatmul.mubr.bf16.gmra.mrb[0].mxu0 %v419
    %v1245 = vpop.f32.mrb[0].mxu0
    %v1246 = vadd.f32 %v264, %v1245
    %v1247 = vpop.f32.mrb[0].mxu0
    %v1248 = vadd.f32 %v268, %v1247
    %v1249 = vpop.f32.mrb[0].mxu0
    %v1250 = vadd.f32 %v264, %v1249
    %v1251 = vpop.f32.mrb[0].mxu0
    %v1252 = vadd.f32 %v268, %v1251
    %1253 = vmatprep.mubr.bf16.mxu0 %v422
    %1254 = vmatmul.mubr.bf16.gmra.mrb[0].mxu0 %v421
    %v1255 = vpop.f32.mrb[0].mxu0
    %v1256 = vadd.f32 %v264, %v1255
    %v1257 = vpop.f32.mrb[0].mxu0
    %v1258 = vadd.f32 %v268, %v1257
    %v1259 = vpop.f32.mrb[0].mxu0
    %v1260 = vadd.f32 %v264, %v1259
    %v1261 = vpop.f32.mrb[0].mxu0
    %v1262 = vadd.f32 %v268, %v1261
    %1263 = vmatprep.mubr.bf16.mxu0 %v424
    %1264 = vmatmul.mubr.bf16.gmra.mrb[0].mxu0 %v423
    %v1265 = vpop.f32.mrb[0].mxu0
    %v1266 = vadd.f32 %v264, %v1265
    %v1267 = vpop.f32.mrb[0].mxu0
    %v1268 = vadd.f32 %v268, %v1267
    %v1269 = vpop.f32.mrb[0].mxu0
    %v1270 = vadd.f32 %v264, %v1269
    %v1271 = vpop.f32.mrb[0].mxu0
    %v1272 = vadd.f32 %v268, %v1271
    %1273 = vmatprep.mubr.bf16.mxu0 %v426
    %1274 = vmatmul.mubr.bf16.gmra.mrb[0].mxu0 %v425
    %v1275 = vpop.f32.mrb[0].mxu0
    %v1276 = vadd.f32 %v264, %v1275
    %v1277 = vpop.f32.mrb[0].mxu0
    %v1278 = vadd.f32 %v268, %v1277
    %v1279 = vpop.f32.mrb[0].mxu0
    %v1280 = vadd.f32 %v264, %v1279
    %v1281 = vpop.f32.mrb[0].mxu0
    %v1282 = vadd.f32 %v268, %v1281
    %1283 = vmatprep.mubr.bf16.mxu0 %v428
    %1284 = vmatmul.mubr.bf16.gmra.mrb[0].mxu0 %v427
    %v1285 = vpop.f32.mrb[0].mxu0
    %v1286 = vadd.f32 %v264, %v1285
    %v1287 = vpop.f32.mrb[0].mxu0
    %v1288 = vadd.f32 %v268, %v1287
    %v1289 = vpop.f32.mrb[0].mxu0
    %v1290 = vadd.f32 %v264, %v1289
    %v1291 = vpop.f32.mrb[0].mxu0
    %v1292 = vadd.f32 %v268, %v1291
    %1293 = vdwg.mxu0
    %1294 = vmatprep.subr.bf16.mxu0 %v848
    %1295 = vmatpush1.bf16.msra.mxu0 %v847
    %1296 = vmatprep.subr.bf16.mxu0 %v856
    %1297 = vmatpush1.bf16.msra.mxu0 %v855
    %1298 = vmatprep.subr.bf16.mxu0 %v864
    %1299 = vmatpush1.bf16.msra.mxu0 %v863
    %1300 = vmatprep.subr.bf16.mxu0 %v872
    %1301 = vmatpush1.bf16.msra.mxu0 %v871
    %1302 = vmatprep.subr.bf16.mxu0 %v880
    %1303 = vmatpush1.bf16.msra.mxu0 %v879
    %1304 = vmatprep.subr.bf16.mxu0 %v888
    %1305 = vmatpush1.bf16.msra.mxu0 %v887
    %1306 = vmatprep.subr.bf16.mxu0 %v896
    %1307 = vmatpush1.bf16.msra.mxu0 %v895
    %1308 = vmatprep.subr.bf16.mxu0 %v904
    %1309 = vmatpush1.bf16.msra.mxu0 %v903
    %1310 = vmatprep.subr.bf16.mxu0 %v912
    %1311 = vmatpush1.bf16.msra.mxu0 %v911
    %1312 = vmatprep.subr.bf16.mxu0 %v920
    %1313 = vmatpush1.bf16.msra.mxu0 %v919
    %1314 = vmatprep.subr.bf16.mxu0 %v928
    %1315 = vmatpush1.bf16.msra.mxu0 %v927
    %1316 = vmatprep.subr.bf16.mxu0 %v936
    %1317 = vmatpush1.bf16.msra.mxu0 %v935
    %1318 = vmatprep.subr.bf16.mxu0 %v944
    %1319 = vmatpush1.bf16.msra.mxu0 %v943
    %1320 = vmatprep.subr.bf16.mxu0 %v952
    %1321 = vmatpush1.bf16.msra.mxu0 %v951
    %1322 = vmatprep.subr.bf16.mxu0 %v960
    %1323 = vmatpush1.bf16.msra.mxu0 %v959
    %1324 = vmatprep.subr.bf16.mxu0 %v968
    %1325 = vmatpush1.bf16.msra.mxu0 %v967
    %1326 = vmatprep.mubr.bf16.mxu0 %v398
    %1327 = vmatmul.mubr.bf16.gmra.mrb[0].mxu0 %v397
    %v1328 = vpop.f32.mrb[0].mxu0
    %v1329 = vadd.f32 %v272, %v1328
    %v1330 = vpop.f32.mrb[0].mxu0
    %v1331 = vadd.f32 %v276, %v1330
    %v1332 = vpop.f32.mrb[0].mxu0
    %v1333 = vadd.f32 %v272, %v1332
    %v1334 = vpop.f32.mrb[0].mxu0
    %v1335 = vadd.f32 %v276, %v1334
    %1336 = vmatprep.mubr.bf16.mxu0 %v400
    %1337 = vmatmul.mubr.bf16.gmra.mrb[0].mxu0 %v399
    %v1338 = vpop.f32.mrb[0].mxu0
    %v1339 = vadd.f32 %v272, %v1338
    %v1340 = vpop.f32.mrb[0].mxu0
    %v1341 = vadd.f32 %v276, %v1340
    %v1342 = vpop.f32.mrb[0].mxu0
    %v1343 = vadd.f32 %v272, %v1342
    %v1344 = vpop.f32.mrb[0].mxu0
    %v1345 = vadd.f32 %v276, %v1344
    %1346 = vmatprep.mubr.bf16.mxu0 %v402
    %1347 = vmatmul.mubr.bf16.gmra.mrb[0].mxu0 %v401
    %v1348 = vpop.f32.mrb[0].mxu0
    %v1349 = vadd.f32 %v272, %v1348
    %v1350 = vpop.f32.mrb[0].mxu0
    %v1351 = vadd.f32 %v276, %v1350
    %v1352 = vpop.f32.mrb[0].mxu0
    %v1353 = vadd.f32 %v272, %v1352
    %v1354 = vpop.f32.mrb[0].mxu0
    %v1355 = vadd.f32 %v276, %v1354
    %1356 = vmatprep.mubr.bf16.mxu0 %v404
    %1357 = vmatmul.mubr.bf16.gmra.mrb[0].mxu0 %v403
    %v1358 = vpop.f32.mrb[0].mxu0
    %v1359 = vadd.f32 %v272, %v1358
    %v1360 = vpop.f32.mrb[0].mxu0
    %v1361 = vadd.f32 %v276, %v1360
    %v1362 = vpop.f32.mrb[0].mxu0
    %v1363 = vadd.f32 %v272, %v1362
    %v1364 = vpop.f32.mrb[0].mxu0
    %v1365 = vadd.f32 %v276, %v1364
    %1366 = vmatprep.mubr.bf16.mxu0 %v406
    %1367 = vmatmul.mubr.bf16.gmra.mrb[0].mxu0 %v405
    %v1368 = vpop.f32.mrb[0].mxu0
    %v1369 = vadd.f32 %v272, %v1368
    %v1370 = vpop.f32.mrb[0].mxu0
    %v1371 = vadd.f32 %v276, %v1370
    %v1372 = vpop.f32.mrb[0].mxu0
    %v1373 = vadd.f32 %v272, %v1372
    %v1374 = vpop.f32.mrb[0].mxu0
    %v1375 = vadd.f32 %v276, %v1374
    %1376 = vmatprep.mubr.bf16.mxu0 %v408
    %1377 = vmatmul.mubr.bf16.gmra.mrb[0].mxu0 %v407
    %v1378 = vpop.f32.mrb[0].mxu0
    %v1379 = vadd.f32 %v272, %v1378
    %v1380 = vpop.f32.mrb[0].mxu0
    %v1381 = vadd.f32 %v276, %v1380
    %v1382 = vpop.f32.mrb[0].mxu0
    %v1383 = vadd.f32 %v272, %v1382
    %v1384 = vpop.f32.mrb[0].mxu0
    %v1385 = vadd.f32 %v276, %v1384
    %1386 = vmatprep.mubr.bf16.mxu0 %v410
    %1387 = vmatmul.mubr.bf16.gmra.mrb[0].mxu0 %v409
    %v1388 = vpop.f32.mrb[0].mxu0
    %v1389 = vadd.f32 %v272, %v1388
    %v1390 = vpop.f32.mrb[0].mxu0
    %v1391 = vadd.f32 %v276, %v1390
    %v1392 = vpop.f32.mrb[0].mxu0
    %v1393 = vadd.f32 %v272, %v1392
    %v1394 = vpop.f32.mrb[0].mxu0
    %v1395 = vadd.f32 %v276, %v1394
    %1396 = vmatprep.mubr.bf16.mxu0 %v412
    %1397 = vmatmul.mubr.bf16.gmra.mrb[0].mxu0 %v411
    %v1398 = vpop.f32.mrb[0].mxu0
    %v1399 = vadd.f32 %v272, %v1398
    %v1400 = vpop.f32.mrb[0].mxu0
    %v1401 = vadd.f32 %v276, %v1400
    %v1402 = vpop.f32.mrb[0].mxu0
    %v1403 = vadd.f32 %v272, %v1402
    %v1404 = vpop.f32.mrb[0].mxu0
    %v1405 = vadd.f32 %v276, %v1404
    %1406 = vmatprep.mubr.bf16.mxu0 %v414
    %1407 = vmatmul.mubr.bf16.gmra.mrb[0].mxu0 %v413
    %v1408 = vpop.f32.mrb[0].mxu0
    %v1409 = vadd.f32 %v272, %v1408
    %v1410 = vpop.f32.mrb[0].mxu0
    %v1411 = vadd.f32 %v276, %v1410
    %v1412 = vpop.f32.mrb[0].mxu0
    %v1413 = vadd.f32 %v272, %v1412
    %v1414 = vpop.f32.mrb[0].mxu0
    %v1415 = vadd.f32 %v276, %v1414
    %1416 = vmatprep.mubr.bf16.mxu0 %v416
    %1417 = vmatmul.mubr.bf16.gmra.mrb[0].mxu0 %v415
    %v1418 = vpop.f32.mrb[0].mxu0
    %v1419 = vadd.f32 %v272, %v1418
    %v1420 = vpop.f32.mrb[0].mxu0
    %v1421 = vadd.f32 %v276, %v1420
    %v1422 = vpop.f32.mrb[0].mxu0
    %v1423 = vadd.f32 %v272, %v1422
    %v1424 = vpop.f32.mrb[0].mxu0
    %v1425 = vadd.f32 %v276, %v1424
    %1426 = vmatprep.mubr.bf16.mxu0 %v418
    %1427 = vmatmul.mubr.bf16.gmra.mrb[0].mxu0 %v417
    %v1428 = vpop.f32.mrb[0].mxu0
    %v1429 = vadd.f32 %v272, %v1428
    %v1430 = vpop.f32.mrb[0].mxu0
    %v1431 = vadd.f32 %v276, %v1430
    %v1432 = vpop.f32.mrb[0].mxu0
    %v1433 = vadd.f32 %v272, %v1432
    %v1434 = vpop.f32.mrb[0].mxu0
    %v1435 = vadd.f32 %v276, %v1434
    %1436 = vmatprep.mubr.bf16.mxu0 %v420
    %1437 = vmatmul.mubr.bf16.gmra.mrb[0].mxu0 %v419
    %v1438 = vpop.f32.mrb[0].mxu0
    %v1439 = vadd.f32 %v272, %v1438
    %v1440 = vpop.f32.mrb[0].mxu0
    %v1441 = vadd.f32 %v276, %v1440
    %v1442 = vpop.f32.mrb[0].mxu0
    %v1443 = vadd.f32 %v272, %v1442
    %v1444 = vpop.f32.mrb[0].mxu0
    %v1445 = vadd.f32 %v276, %v1444
    %1446 = vmatprep.mubr.bf16.mxu0 %v422
    %1447 = vmatmul.mubr.bf16.gmra.mrb[0].mxu0 %v421
    %v1448 = vpop.f32.mrb[0].mxu0
    %v1449 = vadd.f32 %v272, %v1448
    %v1450 = vpop.f32.mrb[0].mxu0
    %v1451 = vadd.f32 %v276, %v1450
    %v1452 = vpop.f32.mrb[0].mxu0
    %v1453 = vadd.f32 %v272, %v1452
    %v1454 = vpop.f32.mrb[0].mxu0
    %v1455 = vadd.f32 %v276, %v1454
    %1456 = vmatprep.mubr.bf16.mxu0 %v424
    %1457 = vmatmul.mubr.bf16.gmra.mrb[0].mxu0 %v423
    %v1458 = vpop.f32.mrb[0].mxu0
    %v1459 = vadd.f32 %v272, %v1458
    %v1460 = vpop.f32.mrb[0].mxu0
    %v1461 = vadd.f32 %v276, %v1460
    %v1462 = vpop.f32.mrb[0].mxu0
    %v1463 = vadd.f32 %v272, %v1462
    %v1464 = vpop.f32.mrb[0].mxu0
    %v1465 = vadd.f32 %v276, %v1464
    %1466 = vmatprep.mubr.bf16.mxu0 %v426
    %1467 = vmatmul.mubr.bf16.gmra.mrb[0].mxu0 %v425
    %v1468 = vpop.f32.mrb[0].mxu0
    %v1469 = vadd.f32 %v272, %v1468
    %v1470 = vpop.f32.mrb[0].mxu0
    %v1471 = vadd.f32 %v276, %v1470
    %v1472 = vpop.f32.mrb[0].mxu0
    %v1473 = vadd.f32 %v272, %v1472
    %v1474 = vpop.f32.mrb[0].mxu0
    %v1475 = vadd.f32 %v276, %v1474
    %1476 = vmatprep.mubr.bf16.mxu0 %v428
    %1477 = vmatmul.mubr.bf16.gmra.mrb[0].mxu0 %v427
    %v1478 = vpop.f32.mrb[0].mxu0
    %v1479 = vadd.f32 %v272, %v1478
    %v1480 = vpop.f32.mrb[0].mxu0
    %v1481 = vadd.f32 %v276, %v1480
    %v1482 = vpop.f32.mrb[0].mxu0
    %v1483 = vadd.f32 %v272, %v1482
    %v1484 = vpop.f32.mrb[0].mxu0
    %v1485 = vadd.f32 %v276, %v1484
    %1486 = vdwg.mxu0
    %1487 = vmatprep.subr.bf16.mxu0 %v850
    %1488 = vmatpush1.bf16.msra.mxu0 %v849
    %1489 = vmatprep.subr.bf16.mxu0 %v858
    %1490 = vmatpush1.bf16.msra.mxu0 %v857
    %1491 = vmatprep.subr.bf16.mxu0 %v866
    %1492 = vmatpush1.bf16.msra.mxu0 %v865
    %1493 = vmatprep.subr.bf16.mxu0 %v874
    %1494 = vmatpush1.bf16.msra.mxu0 %v873
    %1495 = vmatprep.subr.bf16.mxu0 %v882
    %1496 = vmatpush1.bf16.msra.mxu0 %v881
    %1497 = vmatprep.subr.bf16.mxu0 %v890
    %1498 = vmatpush1.bf16.msra.mxu0 %v889
    %1499 = vmatprep.subr.bf16.mxu0 %v898
    %1500 = vmatpush1.bf16.msra.mxu0 %v897
    %1501 = vmatprep.subr.bf16.mxu0 %v906
    %1502 = vmatpush1.bf16.msra.mxu0 %v905
    %1503 = vmatprep.subr.bf16.mxu0 %v914
    %1504 = vmatpush1.bf16.msra.mxu0 %v913
    %1505 = vmatprep.subr.bf16.mxu0 %v922
    %1506 = vmatpush1.bf16.msra.mxu0 %v921
    %1507 = vmatprep.subr.bf16.mxu0 %v930
    %1508 = vmatpush1.bf16.msra.mxu0 %v929
    %1509 = vmatprep.subr.bf16.mxu0 %v938
    %1510 = vmatpush1.bf16.msra.mxu0 %v937
    %1511 = vmatprep.subr.bf16.mxu0 %v946
    %1512 = vmatpush1.bf16.msra.mxu0 %v945
    %1513 = vmatprep.subr.bf16.mxu0 %v954
    %1514 = vmatpush1.bf16.msra.mxu0 %v953
    %1515 = vmatprep.subr.bf16.mxu0 %v962
    %1516 = vmatpush1.bf16.msra.mxu0 %v961
    %1517 = vmatprep.subr.bf16.mxu0 %v970
    %1518 = vmatpush1.bf16.msra.mxu0 %v969
    %1519 = vmatprep.mubr.bf16.mxu0 %v398
    %1520 = vmatmul.mubr.bf16.gmra.mrb[0].mxu0 %v397
    %v1521 = vpop.f32.mrb[0].mxu0
    %v1522 = vadd.f32 %v280, %v1521
    %v1523 = vpop.f32.mrb[0].mxu0
    %v1524 = vadd.f32 %v284, %v1523
    %v1525 = vpop.f32.mrb[0].mxu0
    %v1526 = vadd.f32 %v280, %v1525
    %v1527 = vpop.f32.mrb[0].mxu0
    %v1528 = vadd.f32 %v284, %v1527
    %1529 = vmatprep.mubr.bf16.mxu0 %v400
    %1530 = vmatmul.mubr.bf16.gmra.mrb[0].mxu0 %v399
    %v1531 = vpop.f32.mrb[0].mxu0
    %v1532 = vadd.f32 %v280, %v1531
    %v1533 = vpop.f32.mrb[0].mxu0
    %v1534 = vadd.f32 %v284, %v1533
    %v1535 = vpop.f32.mrb[0].mxu0
    %v1536 = vadd.f32 %v280, %v1535
    %v1537 = vpop.f32.mrb[0].mxu0
    %v1538 = vadd.f32 %v284, %v1537
    %1539 = vmatprep.mubr.bf16.mxu0 %v402
    %1540 = vmatmul.mubr.bf16.gmra.mrb[0].mxu0 %v401
    %v1541 = vpop.f32.mrb[0].mxu0
    %v1542 = vadd.f32 %v280, %v1541
    %v1543 = vpop.f32.mrb[0].mxu0
    %v1544 = vadd.f32 %v284, %v1543
    %v1545 = vpop.f32.mrb[0].mxu0
    %v1546 = vadd.f32 %v280, %v1545
    %v1547 = vpop.f32.mrb[0].mxu0
    %v1548 = vadd.f32 %v284, %v1547
    %1549 = vmatprep.mubr.bf16.mxu0 %v404
    %1550 = vmatmul.mubr.bf16.gmra.mrb[0].mxu0 %v403
    %v1551 = vpop.f32.mrb[0].mxu0
    %v1552 = vadd.f32 %v280, %v1551
    %v1553 = vpop.f32.mrb[0].mxu0
    %v1554 = vadd.f32 %v284, %v1553
    %v1555 = vpop.f32.mrb[0].mxu0
    %v1556 = vadd.f32 %v280, %v1555
    %v1557 = vpop.f32.mrb[0].mxu0
    %v1558 = vadd.f32 %v284, %v1557
    %1559 = vmatprep.mubr.bf16.mxu0 %v406
    %1560 = vmatmul.mubr.bf16.gmra.mrb[0].mxu0 %v405
    %v1561 = vpop.f32.mrb[0].mxu0
    %v1562 = vadd.f32 %v280, %v1561
    %v1563 = vpop.f32.mrb[0].mxu0
    %v1564 = vadd.f32 %v284, %v1563
    %v1565 = vpop.f32.mrb[0].mxu0
    %v1566 = vadd.f32 %v280, %v1565
    %v1567 = vpop.f32.mrb[0].mxu0
    %v1568 = vadd.f32 %v284, %v1567
    %1569 = vmatprep.mubr.bf16.mxu0 %v408
    %1570 = vmatmul.mubr.bf16.gmra.mrb[0].mxu0 %v407
    %v1571 = vpop.f32.mrb[0].mxu0
    %v1572 = vadd.f32 %v280, %v1571
    %v1573 = vpop.f32.mrb[0].mxu0
    %v1574 = vadd.f32 %v284, %v1573
    %v1575 = vpop.f32.mrb[0].mxu0
    %v1576 = vadd.f32 %v280, %v1575
    %v1577 = vpop.f32.mrb[0].mxu0
    %v1578 = vadd.f32 %v284, %v1577
    %1579 = vmatprep.mubr.bf16.mxu0 %v410
    %1580 = vmatmul.mubr.bf16.gmra.mrb[0].mxu0 %v409
    %v1581 = vpop.f32.mrb[0].mxu0
    %v1582 = vadd.f32 %v280, %v1581
    %v1583 = vpop.f32.mrb[0].mxu0
    %v1584 = vadd.f32 %v284, %v1583
    %v1585 = vpop.f32.mrb[0].mxu0
    %v1586 = vadd.f32 %v280, %v1585
    %v1587 = vpop.f32.mrb[0].mxu0
    %v1588 = vadd.f32 %v284, %v1587
    %1589 = vmatprep.mubr.bf16.mxu0 %v412
    %1590 = vmatmul.mubr.bf16.gmra.mrb[0].mxu0 %v411
    %v1591 = vpop.f32.mrb[0].mxu0
    %v1592 = vadd.f32 %v280, %v1591
    %v1593 = vpop.f32.mrb[0].mxu0
    %v1594 = vadd.f32 %v284, %v1593
    %v1595 = vpop.f32.mrb[0].mxu0
    %v1596 = vadd.f32 %v280, %v1595
    %v1597 = vpop.f32.mrb[0].mxu0
    %v1598 = vadd.f32 %v284, %v1597
    %1599 = vmatprep.mubr.bf16.mxu0 %v414
    %1600 = vmatmul.mubr.bf16.gmra.mrb[0].mxu0 %v413
    %v1601 = vpop.f32.mrb[0].mxu0
    %v1602 = vadd.f32 %v280, %v1601
    %v1603 = vpop.f32.mrb[0].mxu0
    %v1604 = vadd.f32 %v284, %v1603
    %v1605 = vpop.f32.mrb[0].mxu0
    %v1606 = vadd.f32 %v280, %v1605
    %v1607 = vpop.f32.mrb[0].mxu0
    %v1608 = vadd.f32 %v284, %v1607
    %1609 = vmatprep.mubr.bf16.mxu0 %v416
    %1610 = vmatmul.mubr.bf16.gmra.mrb[0].mxu0 %v415
    %v1611 = vpop.f32.mrb[0].mxu0
    %v1612 = vadd.f32 %v280, %v1611
    %v1613 = vpop.f32.mrb[0].mxu0
    %v1614 = vadd.f32 %v284, %v1613
    %v1615 = vpop.f32.mrb[0].mxu0
    %v1616 = vadd.f32 %v280, %v1615
    %v1617 = vpop.f32.mrb[0].mxu0
    %v1618 = vadd.f32 %v284, %v1617
    %1619 = vmatprep.mubr.bf16.mxu0 %v418
    %1620 = vmatmul.mubr.bf16.gmra.mrb[0].mxu0 %v417
    %v1621 = vpop.f32.mrb[0].mxu0
    %v1622 = vadd.f32 %v280, %v1621
    %v1623 = vpop.f32.mrb[0].mxu0
    %v1624 = vadd.f32 %v284, %v1623
    %v1625 = vpop.f32.mrb[0].mxu0
    %v1626 = vadd.f32 %v280, %v1625
    %v1627 = vpop.f32.mrb[0].mxu0
    %v1628 = vadd.f32 %v284, %v1627
    %1629 = vmatprep.mubr.bf16.mxu0 %v420
    %1630 = vmatmul.mubr.bf16.gmra.mrb[0].mxu0 %v419
    %v1631 = vpop.f32.mrb[0].mxu0
    %v1632 = vadd.f32 %v280, %v1631
    %v1633 = vpop.f32.mrb[0].mxu0
    %v1634 = vadd.f32 %v284, %v1633
    %v1635 = vpop.f32.mrb[0].mxu0
    %v1636 = vadd.f32 %v280, %v1635
    %v1637 = vpop.f32.mrb[0].mxu0
    %v1638 = vadd.f32 %v284, %v1637
    %1639 = vmatprep.mubr.bf16.mxu0 %v422
    %1640 = vmatmul.mubr.bf16.gmra.mrb[0].mxu0 %v421
    %v1641 = vpop.f32.mrb[0].mxu0
    %v1642 = vadd.f32 %v280, %v1641
    %v1643 = vpop.f32.mrb[0].mxu0
    %v1644 = vadd.f32 %v284, %v1643
    %v1645 = vpop.f32.mrb[0].mxu0
    %v1646 = vadd.f32 %v280, %v1645
    %v1647 = vpop.f32.mrb[0].mxu0
    %v1648 = vadd.f32 %v284, %v1647
    %1649 = vmatprep.mubr.bf16.mxu0 %v424
    %1650 = vmatmul.mubr.bf16.gmra.mrb[0].mxu0 %v423
    %v1651 = vpop.f32.mrb[0].mxu0
    %v1652 = vadd.f32 %v280, %v1651
    %v1653 = vpop.f32.mrb[0].mxu0
    %v1654 = vadd.f32 %v284, %v1653
    %v1655 = vpop.f32.mrb[0].mxu0
    %v1656 = vadd.f32 %v280, %v1655
    %v1657 = vpop.f32.mrb[0].mxu0
    %v1658 = vadd.f32 %v284, %v1657
    %1659 = vmatprep.mubr.bf16.mxu0 %v426
    %1660 = vmatmul.mubr.bf16.gmra.mrb[0].mxu0 %v425
    %v1661 = vpop.f32.mrb[0].mxu0
    %v1662 = vadd.f32 %v280, %v1661
    %v1663 = vpop.f32.mrb[0].mxu0
    %v1664 = vadd.f32 %v284, %v1663
    %v1665 = vpop.f32.mrb[0].mxu0
    %v1666 = vadd.f32 %v280, %v1665
    %v1667 = vpop.f32.mrb[0].mxu0
    %v1668 = vadd.f32 %v284, %v1667
    %1669 = vmatprep.mubr.bf16.mxu0 %v428
    %1670 = vmatmul.mubr.bf16.gmra.mrb[0].mxu0 %v427
    %v1671 = vpop.f32.mrb[0].mxu0
    %v1672 = vadd.f32 %v280, %v1671
    %v1673 = vpop.f32.mrb[0].mxu0
    %v1674 = vadd.f32 %v284, %v1673
    %v1675 = vpop.f32.mrb[0].mxu0
    %v1676 = vadd.f32 %v280, %v1675
    %v1677 = vpop.f32.mrb[0].mxu0
    %v1678 = vadd.f32 %v284, %v1677
    %1679 = vdwg.mxu0
    %1680 = vmatprep.subr.bf16.mxu0 %v852
    %1681 = vmatpush1.bf16.msra.mxu0 %v851
    %1682 = vmatprep.subr.bf16.mxu0 %v860
    %1683 = vmatpush1.bf16.msra.mxu0 %v859
    %1684 = vmatprep.subr.bf16.mxu0 %v868
    %1685 = vmatpush1.bf16.msra.mxu0 %v867
    %1686 = vmatprep.subr.bf16.mxu0 %v876
    %1687 = vmatpush1.bf16.msra.mxu0 %v875
    %1688 = vmatprep.subr.bf16.mxu0 %v884
    %1689 = vmatpush1.bf16.msra.mxu0 %v883
    %1690 = vmatprep.subr.bf16.mxu0 %v892
    %1691 = vmatpush1.bf16.msra.mxu0 %v891
    %1692 = vmatprep.subr.bf16.mxu0 %v900
    %1693 = vmatpush1.bf16.msra.mxu0 %v899
    %1694 = vmatprep.subr.bf16.mxu0 %v908
    %1695 = vmatpush1.bf16.msra.mxu0 %v907
    %1696 = vmatprep.subr.bf16.mxu0 %v916
    %1697 = vmatpush1.bf16.msra.mxu0 %v915
    %1698 = vmatprep.subr.bf16.mxu0 %v924
    %1699 = vmatpush1.bf16.msra.mxu0 %v923
    %1700 = vmatprep.subr.bf16.mxu0 %v932
    %1701 = vmatpush1.bf16.msra.mxu0 %v931
    %1702 = vmatprep.subr.bf16.mxu0 %v940
    %1703 = vmatpush1.bf16.msra.mxu0 %v939
    %1704 = vmatprep.subr.bf16.mxu0 %v948
    %1705 = vmatpush1.bf16.msra.mxu0 %v947
    %1706 = vmatprep.subr.bf16.mxu0 %v956
    %1707 = vmatpush1.bf16.msra.mxu0 %v955
    %1708 = vmatprep.subr.bf16.mxu0 %v964
    %1709 = vmatpush1.bf16.msra.mxu0 %v963
    %1710 = vmatprep.subr.bf16.mxu0 %v972
    %1711 = vmatpush1.bf16.msra.mxu0 %v971
    %1712 = vmatprep.mubr.bf16.mxu0 %v398
    %1713 = vmatmul.mubr.bf16.gmra.mrb[0].mxu0 %v397
    %v1714 = vpop.f32.mrb[0].mxu0
    %v1715 = vadd.f32 %v288, %v1714
    %v1716 = vpop.f32.mrb[0].mxu0
    %v1717 = vadd.f32 %v292, %v1716
    %v1718 = vpop.f32.mrb[0].mxu0
    %v1719 = vadd.f32 %v288, %v1718
    %v1720 = vpop.f32.mrb[0].mxu0
    %v1721 = vadd.f32 %v292, %v1720
    %1722 = vmatprep.mubr.bf16.mxu0 %v400
    %1723 = vmatmul.mubr.bf16.gmra.mrb[0].mxu0 %v399
    %v1724 = vpop.f32.mrb[0].mxu0
    %v1725 = vadd.f32 %v288, %v1724
    %v1726 = vpop.f32.mrb[0].mxu0
    %v1727 = vadd.f32 %v292, %v1726
    %v1728 = vpop.f32.mrb[0].mxu0
    %v1729 = vadd.f32 %v288, %v1728
    %v1730 = vpop.f32.mrb[0].mxu0
    %v1731 = vadd.f32 %v292, %v1730
    %1732 = vmatprep.mubr.bf16.mxu0 %v402
    %1733 = vmatmul.mubr.bf16.gmra.mrb[0].mxu0 %v401
    %v1734 = vpop.f32.mrb[0].mxu0
    %v1735 = vadd.f32 %v288, %v1734
    %v1736 = vpop.f32.mrb[0].mxu0
    %v1737 = vadd.f32 %v292, %v1736
    %v1738 = vpop.f32.mrb[0].mxu0
    %v1739 = vadd.f32 %v288, %v1738
    %v1740 = vpop.f32.mrb[0].mxu0
    %v1741 = vadd.f32 %v292, %v1740
    %1742 = vmatprep.mubr.bf16.mxu0 %v404
    %1743 = vmatmul.mubr.bf16.gmra.mrb[0].mxu0 %v403
    %v1744 = vpop.f32.mrb[0].mxu0
    %v1745 = vadd.f32 %v288, %v1744
    %v1746 = vpop.f32.mrb[0].mxu0
    %v1747 = vadd.f32 %v292, %v1746
    %v1748 = vpop.f32.mrb[0].mxu0
    %v1749 = vadd.f32 %v288, %v1748
    %v1750 = vpop.f32.mrb[0].mxu0
    %v1751 = vadd.f32 %v292, %v1750
    %1752 = vmatprep.mubr.bf16.mxu0 %v406
    %1753 = vmatmul.mubr.bf16.gmra.mrb[0].mxu0 %v405
    %v1754 = vpop.f32.mrb[0].mxu0
    %v1755 = vadd.f32 %v288, %v1754
    %v1756 = vpop.f32.mrb[0].mxu0
    %v1757 = vadd.f32 %v292, %v1756
    %v1758 = vpop.f32.mrb[0].mxu0
    %v1759 = vadd.f32 %v288, %v1758
    %v1760 = vpop.f32.mrb[0].mxu0
    %v1761 = vadd.f32 %v292, %v1760
    %1762 = vmatprep.mubr.bf16.mxu0 %v408
    %1763 = vmatmul.mubr.bf16.gmra.mrb[0].mxu0 %v407
    %v1764 = vpop.f32.mrb[0].mxu0
    %v1765 = vadd.f32 %v288, %v1764
    %v1766 = vpop.f32.mrb[0].mxu0
    %v1767 = vadd.f32 %v292, %v1766
    %v1768 = vpop.f32.mrb[0].mxu0
    %v1769 = vadd.f32 %v288, %v1768
    %v1770 = vpop.f32.mrb[0].mxu0
    %v1771 = vadd.f32 %v292, %v1770
    %1772 = vmatprep.mubr.bf16.mxu0 %v410
    %1773 = vmatmul.mubr.bf16.gmra.mrb[0].mxu0 %v409
    %v1774 = vpop.f32.mrb[0].mxu0
    %v1775 = vadd.f32 %v288, %v1774
    %v1776 = vpop.f32.mrb[0].mxu0
    %v1777 = vadd.f32 %v292, %v1776
    %v1778 = vpop.f32.mrb[0].mxu0
    %v1779 = vadd.f32 %v288, %v1778
    %v1780 = vpop.f32.mrb[0].mxu0
    %v1781 = vadd.f32 %v292, %v1780
    %1782 = vmatprep.mubr.bf16.mxu0 %v412
    %1783 = vmatmul.mubr.bf16.gmra.mrb[0].mxu0 %v411
    %v1784 = vpop.f32.mrb[0].mxu0
    %v1785 = vadd.f32 %v288, %v1784
    %v1786 = vpop.f32.mrb[0].mxu0
    %v1787 = vadd.f32 %v292, %v1786
    %v1788 = vpop.f32.mrb[0].mxu0
    %v1789 = vadd.f32 %v288, %v1788
    %v1790 = vpop.f32.mrb[0].mxu0
    %v1791 = vadd.f32 %v292, %v1790
    %1792 = vmatprep.mubr.bf16.mxu0 %v414
    %1793 = vmatmul.mubr.bf16.gmra.mrb[0].mxu0 %v413
    %v1794 = vpop.f32.mrb[0].mxu0
    %v1795 = vadd.f32 %v288, %v1794
    %v1796 = vpop.f32.mrb[0].mxu0
    %v1797 = vadd.f32 %v292, %v1796
    %v1798 = vpop.f32.mrb[0].mxu0
    %v1799 = vadd.f32 %v288, %v1798
    %v1800 = vpop.f32.mrb[0].mxu0
    %v1801 = vadd.f32 %v292, %v1800
    %1802 = vmatprep.mubr.bf16.mxu0 %v416
    %1803 = vmatmul.mubr.bf16.gmra.mrb[0].mxu0 %v415
    %v1804 = vpop.f32.mrb[0].mxu0
    %v1805 = vadd.f32 %v288, %v1804
    %v1806 = vpop.f32.mrb[0].mxu0
    %v1807 = vadd.f32 %v292, %v1806
    %v1808 = vpop.f32.mrb[0].mxu0
    %v1809 = vadd.f32 %v288, %v1808
    %v1810 = vpop.f32.mrb[0].mxu0
    %v1811 = vadd.f32 %v292, %v1810
    %1812 = vmatprep.mubr.bf16.mxu0 %v418
    %1813 = vmatmul.mubr.bf16.gmra.mrb[0].mxu0 %v417
    %v1814 = vpop.f32.mrb[0].mxu0
    %v1815 = vadd.f32 %v288, %v1814
    %v1816 = vpop.f32.mrb[0].mxu0
    %v1817 = vadd.f32 %v292, %v1816
    %v1818 = vpop.f32.mrb[0].mxu0
    %v1819 = vadd.f32 %v288, %v1818
    %v1820 = vpop.f32.mrb[0].mxu0
    %v1821 = vadd.f32 %v292, %v1820
    %1822 = vmatprep.mubr.bf16.mxu0 %v420
    %1823 = vmatmul.mubr.bf16.gmra.mrb[0].mxu0 %v419
    %v1824 = vpop.f32.mrb[0].mxu0
    %v1825 = vadd.f32 %v288, %v1824
    %v1826 = vpop.f32.mrb[0].mxu0
    %v1827 = vadd.f32 %v292, %v1826
    %v1828 = vpop.f32.mrb[0].mxu0
    %v1829 = vadd.f32 %v288, %v1828
    %v1830 = vpop.f32.mrb[0].mxu0
    %v1831 = vadd.f32 %v292, %v1830
    %1832 = vmatprep.mubr.bf16.mxu0 %v422
    %1833 = vmatmul.mubr.bf16.gmra.mrb[0].mxu0 %v421
    %v1834 = vpop.f32.mrb[0].mxu0
    %v1835 = vadd.f32 %v288, %v1834
    %v1836 = vpop.f32.mrb[0].mxu0
    %v1837 = vadd.f32 %v292, %v1836
    %v1838 = vpop.f32.mrb[0].mxu0
    %v1839 = vadd.f32 %v288, %v1838
    %v1840 = vpop.f32.mrb[0].mxu0
    %v1841 = vadd.f32 %v292, %v1840
    %1842 = vmatprep.mubr.bf16.mxu0 %v424
    %1843 = vmatmul.mubr.bf16.gmra.mrb[0].mxu0 %v423
    %v1844 = vpop.f32.mrb[0].mxu0
    %v1845 = vadd.f32 %v288, %v1844
    %v1846 = vpop.f32.mrb[0].mxu0
    %v1847 = vadd.f32 %v292, %v1846
    %v1848 = vpop.f32.mrb[0].mxu0
    %v1849 = vadd.f32 %v288, %v1848
    %v1850 = vpop.f32.mrb[0].mxu0
    %v1851 = vadd.f32 %v292, %v1850
    %1852 = vmatprep.mubr.bf16.mxu0 %v426
    %1853 = vmatmul.mubr.bf16.gmra.mrb[0].mxu0 %v425
    %v1854 = vpop.f32.mrb[0].mxu0
    %v1855 = vadd.f32 %v288, %v1854
    %v1856 = vpop.f32.mrb[0].mxu0
    %v1857 = vadd.f32 %v292, %v1856
    %v1858 = vpop.f32.mrb[0].mxu0
    %v1859 = vadd.f32 %v288, %v1858
    %v1860 = vpop.f32.mrb[0].mxu0
    %v1861 = vadd.f32 %v292, %v1860
    %1862 = vmatprep.mubr.bf16.mxu0 %v428
    %1863 = vmatmul.mubr.bf16.gmra.mrb[0].mxu0 %v427
    %v1864 = vpop.f32.mrb[0].mxu0
    %v1865 = vadd.f32 %v288, %v1864
    %v1866 = vpop.f32.mrb[0].mxu0
    %v1867 = vadd.f32 %v292, %v1866
    %v1868 = vpop.f32.mrb[0].mxu0
    %v1869 = vadd.f32 %v288, %v1868
    %v1870 = vpop.f32.mrb[0].mxu0
    %v1871 = vadd.f32 %v292, %v1870
    %1872 = vdwg.mxu0
    %v1873 = vmax.f32 %v1136, 0.0
    %v1874 = vmax.f32 %v1138, 0.0
    %v1875 = vmax.f32 %v1329, 0.0
    %v1876 = vmax.f32 %v1331, 0.0
    %v1877 = vmax.f32 %v1522, 0.0
    %v1878 = vmax.f32 %v1524, 0.0
    %v1879 = vmax.f32 %v1715, 0.0
    %v1880 = vmax.f32 %v1717, 0.0
    %v1881 = vmax.f32 %v1140, 0.0
    %v1882 = vmax.f32 %v1142, 0.0
    %v1883 = vmax.f32 %v1333, 0.0
    %v1884 = vmax.f32 %v1335, 0.0
    %v1885 = vmax.f32 %v1526, 0.0
    %v1886 = vmax.f32 %v1528, 0.0
    %v1887 = vmax.f32 %v1719, 0.0
    %v1888 = vmax.f32 %v1721, 0.0
    %v1889 = vmax.f32 %v1146, 0.0
    %v1890 = vmax.f32 %v1148, 0.0
    %v1891 = vmax.f32 %v1339, 0.0
    %v1892 = vmax.f32 %v1341, 0.0
    %v1893 = vmax.f32 %v1532, 0.0
    %v1894 = vmax.f32 %v1534, 0.0
    %v1895 = vmax.f32 %v1725, 0.0
    %v1896 = vmax.f32 %v1727, 0.0
    %v1897 = vmax.f32 %v1150, 0.0
    %v1898 = vmax.f32 %v1152, 0.0
    %v1899 = vmax.f32 %v1343, 0.0
    %v1900 = vmax.f32 %v1345, 0.0
    %v1901 = vmax.f32 %v1536, 0.0
    %v1902 = vmax.f32 %v1538, 0.0
    %v1903 = vmax.f32 %v1729, 0.0
    %v1904 = vmax.f32 %v1731, 0.0
    %v1905 = vmax.f32 %v1156, 0.0
    %v1906 = vmax.f32 %v1158, 0.0
    %v1907 = vmax.f32 %v1349, 0.0
    %v1908 = vmax.f32 %v1351, 0.0
    %v1909 = vmax.f32 %v1542, 0.0
    %v1910 = vmax.f32 %v1544, 0.0
    %v1911 = vmax.f32 %v1735, 0.0
    %v1912 = vmax.f32 %v1737, 0.0
    %v1913 = vmax.f32 %v1160, 0.0
    %v1914 = vmax.f32 %v1162, 0.0
    %v1915 = vmax.f32 %v1353, 0.0
    %v1916 = vmax.f32 %v1355, 0.0
    %v1917 = vmax.f32 %v1546, 0.0
    %v1918 = vmax.f32 %v1548, 0.0
    %v1919 = vmax.f32 %v1739, 0.0
    %v1920 = vmax.f32 %v1741, 0.0
    %v1921 = vmax.f32 %v1166, 0.0
    %v1922 = vmax.f32 %v1168, 0.0
    %v1923 = vmax.f32 %v1359, 0.0
    %v1924 = vmax.f32 %v1361, 0.0
    %v1925 = vmax.f32 %v1552, 0.0
    %v1926 = vmax.f32 %v1554, 0.0
    %v1927 = vmax.f32 %v1745, 0.0
    %v1928 = vmax.f32 %v1747, 0.0
    %v1929 = vmax.f32 %v1170, 0.0
    %v1930 = vmax.f32 %v1172, 0.0
    %v1931 = vmax.f32 %v1363, 0.0
    %v1932 = vmax.f32 %v1365, 0.0
    %v1933 = vmax.f32 %v1556, 0.0
    %v1934 = vmax.f32 %v1558, 0.0
    %v1935 = vmax.f32 %v1749, 0.0
    %v1936 = vmax.f32 %v1751, 0.0
    %v1937 = vmax.f32 %v1176, 0.0
    %v1938 = vmax.f32 %v1178, 0.0
    %v1939 = vmax.f32 %v1369, 0.0
    %v1940 = vmax.f32 %v1371, 0.0
    %v1941 = vmax.f32 %v1562, 0.0
    %v1942 = vmax.f32 %v1564, 0.0
    %v1943 = vmax.f32 %v1755, 0.0
    %v1944 = vmax.f32 %v1757, 0.0
    %v1945 = vmax.f32 %v1180, 0.0
    %v1946 = vmax.f32 %v1182, 0.0
    %v1947 = vmax.f32 %v1373, 0.0
    %v1948 = vmax.f32 %v1375, 0.0
    %v1949 = vmax.f32 %v1566, 0.0
    %v1950 = vmax.f32 %v1568, 0.0
    %v1951 = vmax.f32 %v1759, 0.0
    %v1952 = vmax.f32 %v1761, 0.0
    %v1953 = vmax.f32 %v1186, 0.0
    %v1954 = vmax.f32 %v1188, 0.0
    %v1955 = vmax.f32 %v1379, 0.0
    %v1956 = vmax.f32 %v1381, 0.0
    %v1957 = vmax.f32 %v1572, 0.0
    %v1958 = vmax.f32 %v1574, 0.0
    %v1959 = vmax.f32 %v1765, 0.0
    %v1960 = vmax.f32 %v1767, 0.0
    %v1961 = vmax.f32 %v1190, 0.0
    %v1962 = vmax.f32 %v1192, 0.0
    %v1963 = vmax.f32 %v1383, 0.0
    %v1964 = vmax.f32 %v1385, 0.0
    %v1965 = vmax.f32 %v1576, 0.0
    %v1966 = vmax.f32 %v1578, 0.0
    %v1967 = vmax.f32 %v1769, 0.0
    %v1968 = vmax.f32 %v1771, 0.0
    %v1969 = vmax.f32 %v1196, 0.0
    %v1970 = vmax.f32 %v1198, 0.0
    %v1971 = vmax.f32 %v1389, 0.0
    %v1972 = vmax.f32 %v1391, 0.0
    %v1973 = vmax.f32 %v1582, 0.0
    %v1974 = vmax.f32 %v1584, 0.0
    %v1975 = vmax.f32 %v1775, 0.0
    %v1976 = vmax.f32 %v1777, 0.0
    %v1977 = vmax.f32 %v1200, 0.0
    %v1978 = vmax.f32 %v1202, 0.0
    %v1979 = vmax.f32 %v1393, 0.0
    %v1980 = vmax.f32 %v1395, 0.0
    %v1981 = vmax.f32 %v1586, 0.0
    %v1982 = vmax.f32 %v1588, 0.0
    %v1983 = vmax.f32 %v1779, 0.0
    %v1984 = vmax.f32 %v1781, 0.0
    %v1985 = vmax.f32 %v1206, 0.0
    %v1986 = vmax.f32 %v1208, 0.0
    %v1987 = vmax.f32 %v1399, 0.0
    %v1988 = vmax.f32 %v1401, 0.0
    %v1989 = vmax.f32 %v1592, 0.0
    %v1990 = vmax.f32 %v1594, 0.0
    %v1991 = vmax.f32 %v1785, 0.0
    %v1992 = vmax.f32 %v1787, 0.0
    %v1993 = vmax.f32 %v1210, 0.0
    %v1994 = vmax.f32 %v1212, 0.0
    %v1995 = vmax.f32 %v1403, 0.0
    %v1996 = vmax.f32 %v1405, 0.0
    %v1997 = vmax.f32 %v1596, 0.0
    %v1998 = vmax.f32 %v1598, 0.0
    %v1999 = vmax.f32 %v1789, 0.0
    %v2000 = vmax.f32 %v1791, 0.0
    %v2001 = vmax.f32 %v1216, 0.0
    %v2002 = vmax.f32 %v1218, 0.0
    %v2003 = vmax.f32 %v1409, 0.0
    %v2004 = vmax.f32 %v1411, 0.0
    %v2005 = vmax.f32 %v1602, 0.0
    %v2006 = vmax.f32 %v1604, 0.0
    %v2007 = vmax.f32 %v1795, 0.0
    %v2008 = vmax.f32 %v1797, 0.0
    %v2009 = vmax.f32 %v1220, 0.0
    %v2010 = vmax.f32 %v1222, 0.0
    %v2011 = vmax.f32 %v1413, 0.0
    %v2012 = vmax.f32 %v1415, 0.0
    %v2013 = vmax.f32 %v1606, 0.0
    %v2014 = vmax.f32 %v1608, 0.0
    %v2015 = vmax.f32 %v1799, 0.0
    %v2016 = vmax.f32 %v1801, 0.0
    %v2017 = vmax.f32 %v1226, 0.0
    %v2018 = vmax.f32 %v1228, 0.0
    %v2019 = vmax.f32 %v1419, 0.0
    %v2020 = vmax.f32 %v1421, 0.0
    %v2021 = vmax.f32 %v1612, 0.0
    %v2022 = vmax.f32 %v1614, 0.0
    %v2023 = vmax.f32 %v1805, 0.0
    %v2024 = vmax.f32 %v1807, 0.0
    %v2025 = vmax.f32 %v1230, 0.0
    %v2026 = vmax.f32 %v1232, 0.0
    %v2027 = vmax.f32 %v1423, 0.0
    %v2028 = vmax.f32 %v1425, 0.0
    %v2029 = vmax.f32 %v1616, 0.0
    %v2030 = vmax.f32 %v1618, 0.0
    %v2031 = vmax.f32 %v1809, 0.0
    %v2032 = vmax.f32 %v1811, 0.0
    %v2033 = vmax.f32 %v1236, 0.0
    %v2034 = vmax.f32 %v1238, 0.0
    %v2035 = vmax.f32 %v1429, 0.0
    %v2036 = vmax.f32 %v1431, 0.0
    %v2037 = vmax.f32 %v1622, 0.0
    %v2038 = vmax.f32 %v1624, 0.0
    %v2039 = vmax.f32 %v1815, 0.0
    %v2040 = vmax.f32 %v1817, 0.0
    %v2041 = vmax.f32 %v1240, 0.0
    %v2042 = vmax.f32 %v1242, 0.0
    %v2043 = vmax.f32 %v1433, 0.0
    %v2044 = vmax.f32 %v1435, 0.0
    %v2045 = vmax.f32 %v1626, 0.0
    %v2046 = vmax.f32 %v1628, 0.0
    %v2047 = vmax.f32 %v1819, 0.0
    %v2048 = vmax.f32 %v1821, 0.0
    %v2049 = vmax.f32 %v1246, 0.0
    %v2050 = vmax.f32 %v1248, 0.0
    %v2051 = vmax.f32 %v1439, 0.0
    %v2052 = vmax.f32 %v1441, 0.0
    %v2053 = vmax.f32 %v1632, 0.0
    %v2054 = vmax.f32 %v1634, 0.0
    %v2055 = vmax.f32 %v1825, 0.0
    %v2056 = vmax.f32 %v1827, 0.0
    %v2057 = vmax.f32 %v1250, 0.0
    %v2058 = vmax.f32 %v1252, 0.0
    %v2059 = vmax.f32 %v1443, 0.0
    %v2060 = vmax.f32 %v1445, 0.0
    %v2061 = vmax.f32 %v1636, 0.0
    %v2062 = vmax.f32 %v1638, 0.0
    %v2063 = vmax.f32 %v1829, 0.0
    %v2064 = vmax.f32 %v1831, 0.0
    %v2065 = vmax.f32 %v1256, 0.0
    %v2066 = vmax.f32 %v1258, 0.0
    %v2067 = vmax.f32 %v1449, 0.0
    %v2068 = vmax.f32 %v1451, 0.0
    %v2069 = vmax.f32 %v1642, 0.0
    %v2070 = vmax.f32 %v1644, 0.0
    %v2071 = vmax.f32 %v1835, 0.0
    %v2072 = vmax.f32 %v1837, 0.0
    %v2073 = vmax.f32 %v1260, 0.0
    %v2074 = vmax.f32 %v1262, 0.0
    %v2075 = vmax.f32 %v1453, 0.0
    %v2076 = vmax.f32 %v1455, 0.0
    %v2077 = vmax.f32 %v1646, 0.0
    %v2078 = vmax.f32 %v1648, 0.0
    %v2079 = vmax.f32 %v1839, 0.0
    %v2080 = vmax.f32 %v1841, 0.0
    %v2081 = vmax.f32 %v1266, 0.0
    %v2082 = vmax.f32 %v1268, 0.0
    %v2083 = vmax.f32 %v1459, 0.0
    %v2084 = vmax.f32 %v1461, 0.0
    %v2085 = vmax.f32 %v1652, 0.0
    %v2086 = vmax.f32 %v1654, 0.0
    %v2087 = vmax.f32 %v1845, 0.0
    %v2088 = vmax.f32 %v1847, 0.0
    %v2089 = vmax.f32 %v1270, 0.0
    %v2090 = vmax.f32 %v1272, 0.0
    %v2091 = vmax.f32 %v1463, 0.0
    %v2092 = vmax.f32 %v1465, 0.0
    %v2093 = vmax.f32 %v1656, 0.0
    %v2094 = vmax.f32 %v1658, 0.0
    %v2095 = vmax.f32 %v1849, 0.0
    %v2096 = vmax.f32 %v1851, 0.0
    %v2097 = vmax.f32 %v1276, 0.0
    %v2098 = vmax.f32 %v1278, 0.0
    %v2099 = vmax.f32 %v1469, 0.0
    %v2100 = vmax.f32 %v1471, 0.0
    %v2101 = vmax.f32 %v1662, 0.0
    %v2102 = vmax.f32 %v1664, 0.0
    %v2103 = vmax.f32 %v1855, 0.0
    %v2104 = vmax.f32 %v1857, 0.0
    %v2105 = vmax.f32 %v1280, 0.0
    %v2106 = vmax.f32 %v1282, 0.0
    %v2107 = vmax.f32 %v1473, 0.0
    %v2108 = vmax.f32 %v1475, 0.0
    %v2109 = vmax.f32 %v1666, 0.0
    %v2110 = vmax.f32 %v1668, 0.0
    %v2111 = vmax.f32 %v1859, 0.0
    %v2112 = vmax.f32 %v1861, 0.0
    %v2113 = vmax.f32 %v1286, 0.0
    %v2114 = vmax.f32 %v1288, 0.0
    %v2115 = vmax.f32 %v1479, 0.0
    %v2116 = vmax.f32 %v1481, 0.0
    %v2117 = vmax.f32 %v1672, 0.0
    %v2118 = vmax.f32 %v1674, 0.0
    %v2119 = vmax.f32 %v1865, 0.0
    %v2120 = vmax.f32 %v1867, 0.0
    %v2121 = vmax.f32 %v1290, 0.0
    %v2122 = vmax.f32 %v1292, 0.0
    %v2123 = vmax.f32 %v1483, 0.0
    %v2124 = vmax.f32 %v1485, 0.0
    %v2125 = vmax.f32 %v1676, 0.0
    %v2126 = vmax.f32 %v1678, 0.0
    %v2127 = vmax.f32 %v1869, 0.0
    %v2128 = vmax.f32 %v1871, 0.0
    %v2129 = vpack.c.bf16 %v1881, %v1873
    %v2130 = vpack.c.bf16 %v1882, %v1874
    %v2131 = vpack.c.bf16 %v1883, %v1875
    %v2132 = vpack.c.bf16 %v1884, %v1876
    %v2133 = vpack.c.bf16 %v1885, %v1877
    %v2134 = vpack.c.bf16 %v1886, %v1878
    %v2135 = vpack.c.bf16 %v1887, %v1879
    %v2136 = vpack.c.bf16 %v1888, %v1880
    %v2137 = vpack.c.bf16 %v1897, %v1889
    %v2138 = vpack.c.bf16 %v1898, %v1890
    %v2139 = vpack.c.bf16 %v1899, %v1891
    %v2140 = vpack.c.bf16 %v1900, %v1892
    %v2141 = vpack.c.bf16 %v1901, %v1893
    %v2142 = vpack.c.bf16 %v1902, %v1894
    %v2143 = vpack.c.bf16 %v1903, %v1895
    %v2144 = vpack.c.bf16 %v1904, %v1896
    %v2145 = vpack.c.bf16 %v1913, %v1905
    %v2146 = vpack.c.bf16 %v1914, %v1906
    %v2147 = vpack.c.bf16 %v1915, %v1907
    %v2148 = vpack.c.bf16 %v1916, %v1908
    %v2149 = vpack.c.bf16 %v1917, %v1909
    %v2150 = vpack.c.bf16 %v1918, %v1910
    %v2151 = vpack.c.bf16 %v1919, %v1911
    %v2152 = vpack.c.bf16 %v1920, %v1912
    %v2153 = vpack.c.bf16 %v1929, %v1921
    %v2154 = vpack.c.bf16 %v1930, %v1922
    %v2155 = vpack.c.bf16 %v1931, %v1923
    %v2156 = vpack.c.bf16 %v1932, %v1924
    %v2157 = vpack.c.bf16 %v1933, %v1925
    %v2158 = vpack.c.bf16 %v1934, %v1926
    %v2159 = vpack.c.bf16 %v1935, %v1927
    %v2160 = vpack.c.bf16 %v1936, %v1928
    %v2161 = vpack.c.bf16 %v1945, %v1937
    %v2162 = vpack.c.bf16 %v1946, %v1938
    %v2163 = vpack.c.bf16 %v1947, %v1939
    %v2164 = vpack.c.bf16 %v1948, %v1940
    %v2165 = vpack.c.bf16 %v1949, %v1941
    %v2166 = vpack.c.bf16 %v1950, %v1942
    %v2167 = vpack.c.bf16 %v1951, %v1943
    %v2168 = vpack.c.bf16 %v1952, %v1944
    %v2169 = vpack.c.bf16 %v1961, %v1953
    %v2170 = vpack.c.bf16 %v1962, %v1954
    %v2171 = vpack.c.bf16 %v1963, %v1955
    %v2172 = vpack.c.bf16 %v1964, %v1956
    %v2173 = vpack.c.bf16 %v1965, %v1957
    %v2174 = vpack.c.bf16 %v1966, %v1958
    %v2175 = vpack.c.bf16 %v1967, %v1959
    %v2176 = vpack.c.bf16 %v1968, %v1960
    %v2177 = vpack.c.bf16 %v1977, %v1969
    %v2178 = vpack.c.bf16 %v1978, %v1970
    %v2179 = vpack.c.bf16 %v1979, %v1971
    %v2180 = vpack.c.bf16 %v1980, %v1972
    %v2181 = vpack.c.bf16 %v1981, %v1973
    %v2182 = vpack.c.bf16 %v1982, %v1974
    %v2183 = vpack.c.bf16 %v1983, %v1975
    %v2184 = vpack.c.bf16 %v1984, %v1976
    %v2185 = vpack.c.bf16 %v1993, %v1985
    %v2186 = vpack.c.bf16 %v1994, %v1986
    %v2187 = vpack.c.bf16 %v1995, %v1987
    %v2188 = vpack.c.bf16 %v1996, %v1988
    %v2189 = vpack.c.bf16 %v1997, %v1989
    %v2190 = vpack.c.bf16 %v1998, %v1990
    %v2191 = vpack.c.bf16 %v1999, %v1991
    %v2192 = vpack.c.bf16 %v2000, %v1992
    %v2193 = vpack.c.bf16 %v2009, %v2001
    %v2194 = vpack.c.bf16 %v2010, %v2002
    %v2195 = vpack.c.bf16 %v2011, %v2003
    %v2196 = vpack.c.bf16 %v2012, %v2004
    %v2197 = vpack.c.bf16 %v2013, %v2005
    %v2198 = vpack.c.bf16 %v2014, %v2006
    %v2199 = vpack.c.bf16 %v2015, %v2007
    %v2200 = vpack.c.bf16 %v2016, %v2008
    %v2201 = vpack.c.bf16 %v2025, %v2017
    %v2202 = vpack.c.bf16 %v2026, %v2018
    %v2203 = vpack.c.bf16 %v2027, %v2019
    %v2204 = vpack.c.bf16 %v2028, %v2020
    %v2205 = vpack.c.bf16 %v2029, %v2021
    %v2206 = vpack.c.bf16 %v2030, %v2022
    %v2207 = vpack.c.bf16 %v2031, %v2023
    %v2208 = vpack.c.bf16 %v2032, %v2024
    %v2209 = vpack.c.bf16 %v2041, %v2033
    %v2210 = vpack.c.bf16 %v2042, %v2034
    %v2211 = vpack.c.bf16 %v2043, %v2035
    %v2212 = vpack.c.bf16 %v2044, %v2036
    %v2213 = vpack.c.bf16 %v2045, %v2037
    %v2214 = vpack.c.bf16 %v2046, %v2038
    %v2215 = vpack.c.bf16 %v2047, %v2039
    %v2216 = vpack.c.bf16 %v2048, %v2040
    %v2217 = vpack.c.bf16 %v2057, %v2049
    %v2218 = vpack.c.bf16 %v2058, %v2050
    %v2219 = vpack.c.bf16 %v2059, %v2051
    %v2220 = vpack.c.bf16 %v2060, %v2052
    %v2221 = vpack.c.bf16 %v2061, %v2053
    %v2222 = vpack.c.bf16 %v2062, %v2054
    %v2223 = vpack.c.bf16 %v2063, %v2055
    %v2224 = vpack.c.bf16 %v2064, %v2056
    %v2225 = vpack.c.bf16 %v2073, %v2065
    %v2226 = vpack.c.bf16 %v2074, %v2066
    %v2227 = vpack.c.bf16 %v2075, %v2067
    %v2228 = vpack.c.bf16 %v2076, %v2068
    %v2229 = vpack.c.bf16 %v2077, %v2069
    %v2230 = vpack.c.bf16 %v2078, %v2070
    %v2231 = vpack.c.bf16 %v2079, %v2071
    %v2232 = vpack.c.bf16 %v2080, %v2072
    %v2233 = vpack.c.bf16 %v2089, %v2081
    %v2234 = vpack.c.bf16 %v2090, %v2082
    %v2235 = vpack.c.bf16 %v2091, %v2083
    %v2236 = vpack.c.bf16 %v2092, %v2084
    %v2237 = vpack.c.bf16 %v2093, %v2085
    %v2238 = vpack.c.bf16 %v2094, %v2086
    %v2239 = vpack.c.bf16 %v2095, %v2087
    %v2240 = vpack.c.bf16 %v2096, %v2088
    %v2241 = vpack.c.bf16 %v2105, %v2097
    %v2242 = vpack.c.bf16 %v2106, %v2098
    %v2243 = vpack.c.bf16 %v2107, %v2099
    %v2244 = vpack.c.bf16 %v2108, %v2100
    %v2245 = vpack.c.bf16 %v2109, %v2101
    %v2246 = vpack.c.bf16 %v2110, %v2102
    %v2247 = vpack.c.bf16 %v2111, %v2103
    %v2248 = vpack.c.bf16 %v2112, %v2104
    %v2249 = vpack.c.bf16 %v2121, %v2113
    %v2250 = vpack.c.bf16 %v2122, %v2114
    %v2251 = vpack.c.bf16 %v2123, %v2115
    %v2252 = vpack.c.bf16 %v2124, %v2116
    %v2253 = vpack.c.bf16 %v2125, %v2117
    %v2254 = vpack.c.bf16 %v2126, %v2118
    %v2255 = vpack.c.bf16 %v2127, %v2119
    %v2256 = vpack.c.bf16 %v2128, %v2120
    %v2257 = vld [vmem:[#allocation4] sm:$0xff]
    %v2258 = vld [vmem:[#allocation4 + $0x8] sm:$0xff]
    %v2259 = vld [vmem:[#allocation4 + $0x10] sm:$0xff]
    %v2260 = vld [vmem:[#allocation4 + $0x18] sm:$0xff]
    %v2261 = vld [vmem:[#allocation4 + $0x20] sm:$0xff]
    %v2262 = vld [vmem:[#allocation4 + $0x28] sm:$0xff]
    %v2263 = vld [vmem:[#allocation4 + $0x30] sm:$0xff]
    %v2264 = vld [vmem:[#allocation4 + $0x38] sm:$0xff]
    %v2265 = vld [vmem:[#allocation4 + $0x40] sm:$0xff]
    %v2266 = vld [vmem:[#allocation4 + $0x48] sm:$0xff]
    %v2267 = vld [vmem:[#allocation4 + $0x50] sm:$0xff]
    %v2268 = vld [vmem:[#allocation4 + $0x58] sm:$0xff]
    %v2269 = vld [vmem:[#allocation4 + $0x60] sm:$0xff]
    %v2270 = vld [vmem:[#allocation4 + $0x68] sm:$0xff]
    %v2271 = vld [vmem:[#allocation4 + $0x70] sm:$0xff]
    %v2272 = vld [vmem:[#allocation4 + $0x78] sm:$0xff]
    %v2273 = vld [vmem:[#allocation4 + $0x80] sm:$0xff]
    %v2274 = vld [vmem:[#allocation4 + $0x88] sm:$0xff]
    %v2275 = vld [vmem:[#allocation4 + $0x90] sm:$0xff]
    %v2276 = vld [vmem:[#allocation4 + $0x98] sm:$0xff]
    %v2277 = vld [vmem:[#allocation4 + $0xa0] sm:$0xff]
    %v2278 = vld [vmem:[#allocation4 + $0xa8] sm:$0xff]
    %v2279 = vld [vmem:[#allocation4 + $0xb0] sm:$0xff]
    %v2280 = vld [vmem:[#allocation4 + $0xb8] sm:$0xff]
    %v2281 = vld [vmem:[#allocation4 + $0xc0] sm:$0xff]
    %v2282 = vld [vmem:[#allocation4 + $0xc8] sm:$0xff]
    %v2283 = vld [vmem:[#allocation4 + $0xd0] sm:$0xff]
    %v2284 = vld [vmem:[#allocation4 + $0xd8] sm:$0xff]
    %v2285 = vld [vmem:[#allocation4 + $0xe0] sm:$0xff]
    %v2286 = vld [vmem:[#allocation4 + $0xe8] sm:$0xff]
    %v2287 = vld [vmem:[#allocation4 + $0xf0] sm:$0xff]
    %v2288 = vld [vmem:[#allocation4 + $0xf8] sm:$0xff]
    %v2289 = vld [vmem:[#allocation4 + $0x100] sm:$0xff]
    %v2290 = vld [vmem:[#allocation4 + $0x108] sm:$0xff]
    %v2291 = vld [vmem:[#allocation4 + $0x110] sm:$0xff]
    %v2292 = vld [vmem:[#allocation4 + $0x118] sm:$0xff]
    %v2293 = vld [vmem:[#allocation4 + $0x120] sm:$0xff]
    %v2294 = vld [vmem:[#allocation4 + $0x128] sm:$0xff]
    %v2295 = vld [vmem:[#allocation4 + $0x130] sm:$0xff]
    %v2296 = vld [vmem:[#allocation4 + $0x138] sm:$0xff]
    %v2297 = vld [vmem:[#allocation4 + $0x140] sm:$0xff]
    %v2298 = vld [vmem:[#allocation4 + $0x148] sm:$0xff]
    %v2299 = vld [vmem:[#allocation4 + $0x150] sm:$0xff]
    %v2300 = vld [vmem:[#allocation4 + $0x158] sm:$0xff]
    %v2301 = vld [vmem:[#allocation4 + $0x160] sm:$0xff]
    %v2302 = vld [vmem:[#allocation4 + $0x168] sm:$0xff]
    %v2303 = vld [vmem:[#allocation4 + $0x170] sm:$0xff]
    %v2304 = vld [vmem:[#allocation4 + $0x178] sm:$0xff]
    %v2305 = vld [vmem:[#allocation4 + $0x180] sm:$0xff]
    %v2306 = vld [vmem:[#allocation4 + $0x188] sm:$0xff]
    %v2307 = vld [vmem:[#allocation4 + $0x190] sm:$0xff]
    %v2308 = vld [vmem:[#allocation4 + $0x198] sm:$0xff]
    %v2309 = vld [vmem:[#allocation4 + $0x1a0] sm:$0xff]
    %v2310 = vld [vmem:[#allocation4 + $0x1a8] sm:$0xff]
    %v2311 = vld [vmem:[#allocation4 + $0x1b0] sm:$0xff]
    %v2312 = vld [vmem:[#allocation4 + $0x1b8] sm:$0xff]
    %v2313 = vld [vmem:[#allocation4 + $0x1c0] sm:$0xff]
    %v2314 = vld [vmem:[#allocation4 + $0x1c8] sm:$0xff]
    %v2315 = vld [vmem:[#allocation4 + $0x1d0] sm:$0xff]
    %v2316 = vld [vmem:[#allocation4 + $0x1d8] sm:$0xff]
    %v2317 = vld [vmem:[#allocation4 + $0x1e0] sm:$0xff]
    %v2318 = vld [vmem:[#allocation4 + $0x1e8] sm:$0xff]
    %v2319 = vld [vmem:[#allocation4 + $0x1f0] sm:$0xff]
    %v2320 = vld [vmem:[#allocation4 + $0x1f8] sm:$0xff]
    %v2321 = vld [vmem:[#allocation4 + $0x200] sm:$0xff]
    %v2322 = vld [vmem:[#allocation4 + $0x208] sm:$0xff]
    %v2323 = vld [vmem:[#allocation4 + $0x210] sm:$0xff]
    %v2324 = vld [vmem:[#allocation4 + $0x218] sm:$0xff]
    %v2325 = vld [vmem:[#allocation4 + $0x220] sm:$0xff]
    %v2326 = vld [vmem:[#allocation4 + $0x228] sm:$0xff]
    %v2327 = vld [vmem:[#allocation4 + $0x230] sm:$0xff]
    %v2328 = vld [vmem:[#allocation4 + $0x238] sm:$0xff]
    %v2329 = vld [vmem:[#allocation4 + $0x240] sm:$0xff]
    %v2330 = vld [vmem:[#allocation4 + $0x248] sm:$0xff]
    %v2331 = vld [vmem:[#allocation4 + $0x250] sm:$0xff]
    %v2332 = vld [vmem:[#allocation4 + $0x258] sm:$0xff]
    %v2333 = vld [vmem:[#allocation4 + $0x260] sm:$0xff]
    %v2334 = vld [vmem:[#allocation4 + $0x268] sm:$0xff]
    %v2335 = vld [vmem:[#allocation4 + $0x270] sm:$0xff]
    %v2336 = vld [vmem:[#allocation4 + $0x278] sm:$0xff]
    %v2337 = vld [vmem:[#allocation4 + $0x280] sm:$0xff]
    %v2338 = vld [vmem:[#allocation4 + $0x288] sm:$0xff]
    %v2339 = vld [vmem:[#allocation4 + $0x290] sm:$0xff]
    %v2340 = vld [vmem:[#allocation4 + $0x298] sm:$0xff]
    %v2341 = vld [vmem:[#allocation4 + $0x2a0] sm:$0xff]
    %v2342 = vld [vmem:[#allocation4 + $0x2a8] sm:$0xff]
    %v2343 = vld [vmem:[#allocation4 + $0x2b0] sm:$0xff]
    %v2344 = vld [vmem:[#allocation4 + $0x2b8] sm:$0xff]
    %v2345 = vld [vmem:[#allocation4 + $0x2c0] sm:$0xff]
    %v2346 = vld [vmem:[#allocation4 + $0x2c8] sm:$0xff]
    %v2347 = vld [vmem:[#allocation4 + $0x2d0] sm:$0xff]
    %v2348 = vld [vmem:[#allocation4 + $0x2d8] sm:$0xff]
    %v2349 = vld [vmem:[#allocation4 + $0x2e0] sm:$0xff]
    %v2350 = vld [vmem:[#allocation4 + $0x2e8] sm:$0xff]
    %v2351 = vld [vmem:[#allocation4 + $0x2f0] sm:$0xff]
    %v2352 = vld [vmem:[#allocation4 + $0x2f8] sm:$0xff]
    %v2353 = vld [vmem:[#allocation4 + $0x300] sm:$0xff]
    %v2354 = vld [vmem:[#allocation4 + $0x308] sm:$0xff]
    %v2355 = vld [vmem:[#allocation4 + $0x310] sm:$0xff]
    %v2356 = vld [vmem:[#allocation4 + $0x318] sm:$0xff]
    %v2357 = vld [vmem:[#allocation4 + $0x320] sm:$0xff]
    %v2358 = vld [vmem:[#allocation4 + $0x328] sm:$0xff]
    %v2359 = vld [vmem:[#allocation4 + $0x330] sm:$0xff]
    %v2360 = vld [vmem:[#allocation4 + $0x338] sm:$0xff]
    %v2361 = vld [vmem:[#allocation4 + $0x340] sm:$0xff]
    %v2362 = vld [vmem:[#allocation4 + $0x348] sm:$0xff]
    %v2363 = vld [vmem:[#allocation4 + $0x350] sm:$0xff]
    %v2364 = vld [vmem:[#allocation4 + $0x358] sm:$0xff]
    %v2365 = vld [vmem:[#allocation4 + $0x360] sm:$0xff]
    %v2366 = vld [vmem:[#allocation4 + $0x368] sm:$0xff]
    %v2367 = vld [vmem:[#allocation4 + $0x370] sm:$0xff]
    %v2368 = vld [vmem:[#allocation4 + $0x378] sm:$0xff]
    %v2369 = vld [vmem:[#allocation4 + $0x380] sm:$0xff]
    %v2370 = vld [vmem:[#allocation4 + $0x388] sm:$0xff]
    %v2371 = vld [vmem:[#allocation4 + $0x390] sm:$0xff]
    %v2372 = vld [vmem:[#allocation4 + $0x398] sm:$0xff]
    %v2373 = vld [vmem:[#allocation4 + $0x3a0] sm:$0xff]
    %v2374 = vld [vmem:[#allocation4 + $0x3a8] sm:$0xff]
    %v2375 = vld [vmem:[#allocation4 + $0x3b0] sm:$0xff]
    %v2376 = vld [vmem:[#allocation4 + $0x3b8] sm:$0xff]
    %v2377 = vld [vmem:[#allocation4 + $0x3c0] sm:$0xff]
    %v2378 = vld [vmem:[#allocation4 + $0x3c8] sm:$0xff]
    %v2379 = vld [vmem:[#allocation4 + $0x3d0] sm:$0xff]
    %v2380 = vld [vmem:[#allocation4 + $0x3d8] sm:$0xff]
    %v2381 = vld [vmem:[#allocation4 + $0x3e0] sm:$0xff]
    %v2382 = vld [vmem:[#allocation4 + $0x3e8] sm:$0xff]
    %v2383 = vld [vmem:[#allocation4 + $0x3f0] sm:$0xff]
    %v2384 = vld [vmem:[#allocation4 + $0x3f8] sm:$0xff]
    %v2385 = vld [vmem:[#allocation4 + $0x400] sm:$0xff]
    %v2386 = vld [vmem:[#allocation4 + $0x408] sm:$0xff]
    %v2387 = vld [vmem:[#allocation4 + $0x410] sm:$0xff]
    %v2388 = vld [vmem:[#allocation4 + $0x418] sm:$0xff]
    %v2389 = vld [vmem:[#allocation4 + $0x420] sm:$0xff]
    %v2390 = vld [vmem:[#allocation4 + $0x428] sm:$0xff]
    %v2391 = vld [vmem:[#allocation4 + $0x430] sm:$0xff]
    %v2392 = vld [vmem:[#allocation4 + $0x438] sm:$0xff]
    %v2393 = vld [vmem:[#allocation4 + $0x440] sm:$0xff]
    %v2394 = vld [vmem:[#allocation4 + $0x448] sm:$0xff]
    %v2395 = vld [vmem:[#allocation4 + $0x450] sm:$0xff]
    %v2396 = vld [vmem:[#allocation4 + $0x458] sm:$0xff]
    %v2397 = vld [vmem:[#allocation4 + $0x460] sm:$0xff]
    %v2398 = vld [vmem:[#allocation4 + $0x468] sm:$0xff]
    %v2399 = vld [vmem:[#allocation4 + $0x470] sm:$0xff]
    %v2400 = vld [vmem:[#allocation4 + $0x478] sm:$0xff]
    %v2401 = vld [vmem:[#allocation4 + $0x480] sm:$0xff]
    %v2402 = vld [vmem:[#allocation4 + $0x488] sm:$0xff]
    %v2403 = vld [vmem:[#allocation4 + $0x490] sm:$0xff]
    %v2404 = vld [vmem:[#allocation4 + $0x498] sm:$0xff]
    %v2405 = vld [vmem:[#allocation4 + $0x4a0] sm:$0xff]
    %v2406 = vld [vmem:[#allocation4 + $0x4a8] sm:$0xff]
    %v2407 = vld [vmem:[#allocation4 + $0x4b0] sm:$0xff]
    %v2408 = vld [vmem:[#allocation4 + $0x4b8] sm:$0xff]
    %v2409 = vld [vmem:[#allocation4 + $0x4c0] sm:$0xff]
    %v2410 = vld [vmem:[#allocation4 + $0x4c8] sm:$0xff]
    %v2411 = vld [vmem:[#allocation4 + $0x4d0] sm:$0xff]
    %v2412 = vld [vmem:[#allocation4 + $0x4d8] sm:$0xff]
    %v2413 = vld [vmem:[#allocation4 + $0x4e0] sm:$0xff]
    %v2414 = vld [vmem:[#allocation4 + $0x4e8] sm:$0xff]
    %v2415 = vld [vmem:[#allocation4 + $0x4f0] sm:$0xff]
    %v2416 = vld [vmem:[#allocation4 + $0x4f8] sm:$0xff]
    %v2417 = vld [vmem:[#allocation4 + $0x500] sm:$0xff]
    %v2418 = vld [vmem:[#allocation4 + $0x508] sm:$0xff]
    %v2419 = vld [vmem:[#allocation4 + $0x510] sm:$0xff]
    %v2420 = vld [vmem:[#allocation4 + $0x518] sm:$0xff]
    %v2421 = vld [vmem:[#allocation4 + $0x520] sm:$0xff]
    %v2422 = vld [vmem:[#allocation4 + $0x528] sm:$0xff]
    %v2423 = vld [vmem:[#allocation4 + $0x530] sm:$0xff]
    %v2424 = vld [vmem:[#allocation4 + $0x538] sm:$0xff]
    %v2425 = vld [vmem:[#allocation4 + $0x540] sm:$0xff]
    %v2426 = vld [vmem:[#allocation4 + $0x548] sm:$0xff]
    %v2427 = vld [vmem:[#allocation4 + $0x550] sm:$0xff]
    %v2428 = vld [vmem:[#allocation4 + $0x558] sm:$0xff]
    %v2429 = vld [vmem:[#allocation4 + $0x560] sm:$0xff]
    %v2430 = vld [vmem:[#allocation4 + $0x568] sm:$0xff]
    %v2431 = vld [vmem:[#allocation4 + $0x570] sm:$0xff]
    %v2432 = vld [vmem:[#allocation4 + $0x578] sm:$0xff]
    %v2433 = vld [vmem:[#allocation4 + $0x580] sm:$0xff]
    %v2434 = vld [vmem:[#allocation4 + $0x588] sm:$0xff]
    %v2435 = vld [vmem:[#allocation4 + $0x590] sm:$0xff]
    %v2436 = vld [vmem:[#allocation4 + $0x598] sm:$0xff]
    %v2437 = vld [vmem:[#allocation4 + $0x5a0] sm:$0xff]
    %v2438 = vld [vmem:[#allocation4 + $0x5a8] sm:$0xff]
    %v2439 = vld [vmem:[#allocation4 + $0x5b0] sm:$0xff]
    %v2440 = vld [vmem:[#allocation4 + $0x5b8] sm:$0xff]
    %v2441 = vld [vmem:[#allocation4 + $0x5c0] sm:$0xff]
    %v2442 = vld [vmem:[#allocation4 + $0x5c8] sm:$0xff]
    %v2443 = vld [vmem:[#allocation4 + $0x5d0] sm:$0xff]
    %v2444 = vld [vmem:[#allocation4 + $0x5d8] sm:$0xff]
    %v2445 = vld [vmem:[#allocation4 + $0x5e0] sm:$0xff]
    %v2446 = vld [vmem:[#allocation4 + $0x5e8] sm:$0xff]
    %v2447 = vld [vmem:[#allocation4 + $0x5f0] sm:$0xff]
    %v2448 = vld [vmem:[#allocation4 + $0x5f8] sm:$0xff]
    %v2449 = vld [vmem:[#allocation4 + $0x600] sm:$0xff]
    %v2450 = vld [vmem:[#allocation4 + $0x608] sm:$0xff]
    %v2451 = vld [vmem:[#allocation4 + $0x610] sm:$0xff]
    %v2452 = vld [vmem:[#allocation4 + $0x618] sm:$0xff]
    %v2453 = vld [vmem:[#allocation4 + $0x620] sm:$0xff]
    %v2454 = vld [vmem:[#allocation4 + $0x628] sm:$0xff]
    %v2455 = vld [vmem:[#allocation4 + $0x630] sm:$0xff]
    %v2456 = vld [vmem:[#allocation4 + $0x638] sm:$0xff]
    %v2457 = vld [vmem:[#allocation4 + $0x640] sm:$0xff]
    %v2458 = vld [vmem:[#allocation4 + $0x648] sm:$0xff]
    %v2459 = vld [vmem:[#allocation4 + $0x650] sm:$0xff]
    %v2460 = vld [vmem:[#allocation4 + $0x658] sm:$0xff]
    %v2461 = vld [vmem:[#allocation4 + $0x660] sm:$0xff]
    %v2462 = vld [vmem:[#allocation4 + $0x668] sm:$0xff]
    %v2463 = vld [vmem:[#allocation4 + $0x670] sm:$0xff]
    %v2464 = vld [vmem:[#allocation4 + $0x678] sm:$0xff]
    %v2465 = vld [vmem:[#allocation4 + $0x680] sm:$0xff]
    %v2466 = vld [vmem:[#allocation4 + $0x688] sm:$0xff]
    %v2467 = vld [vmem:[#allocation4 + $0x690] sm:$0xff]
    %v2468 = vld [vmem:[#allocation4 + $0x698] sm:$0xff]
    %v2469 = vld [vmem:[#allocation4 + $0x6a0] sm:$0xff]
    %v2470 = vld [vmem:[#allocation4 + $0x6a8] sm:$0xff]
    %v2471 = vld [vmem:[#allocation4 + $0x6b0] sm:$0xff]
    %v2472 = vld [vmem:[#allocation4 + $0x6b8] sm:$0xff]
    %v2473 = vld [vmem:[#allocation4 + $0x6c0] sm:$0xff]
    %v2474 = vld [vmem:[#allocation4 + $0x6c8] sm:$0xff]
    %v2475 = vld [vmem:[#allocation4 + $0x6d0] sm:$0xff]
    %v2476 = vld [vmem:[#allocation4 + $0x6d8] sm:$0xff]
    %v2477 = vld [vmem:[#allocation4 + $0x6e0] sm:$0xff]
    %v2478 = vld [vmem:[#allocation4 + $0x6e8] sm:$0xff]
    %v2479 = vld [vmem:[#allocation4 + $0x6f0] sm:$0xff]
    %v2480 = vld [vmem:[#allocation4 + $0x6f8] sm:$0xff]
    %v2481 = vld [vmem:[#allocation4 + $0x700] sm:$0xff]
    %v2482 = vld [vmem:[#allocation4 + $0x708] sm:$0xff]
    %v2483 = vld [vmem:[#allocation4 + $0x710] sm:$0xff]
    %v2484 = vld [vmem:[#allocation4 + $0x718] sm:$0xff]
    %v2485 = vld [vmem:[#allocation4 + $0x720] sm:$0xff]
    %v2486 = vld [vmem:[#allocation4 + $0x728] sm:$0xff]
    %v2487 = vld [vmem:[#allocation4 + $0x730] sm:$0xff]
    %v2488 = vld [vmem:[#allocation4 + $0x738] sm:$0xff]
    %v2489 = vld [vmem:[#allocation4 + $0x740] sm:$0xff]
    %v2490 = vld [vmem:[#allocation4 + $0x748] sm:$0xff]
    %v2491 = vld [vmem:[#allocation4 + $0x750] sm:$0xff]
    %v2492 = vld [vmem:[#allocation4 + $0x758] sm:$0xff]
    %v2493 = vld [vmem:[#allocation4 + $0x760] sm:$0xff]
    %v2494 = vld [vmem:[#allocation4 + $0x768] sm:$0xff]
    %v2495 = vld [vmem:[#allocation4 + $0x770] sm:$0xff]
    %v2496 = vld [vmem:[#allocation4 + $0x778] sm:$0xff]
    %v2497 = vld [vmem:[#allocation4 + $0x780] sm:$0xff]
    %v2498 = vld [vmem:[#allocation4 + $0x788] sm:$0xff]
    %v2499 = vld [vmem:[#allocation4 + $0x790] sm:$0xff]
    %v2500 = vld [vmem:[#allocation4 + $0x798] sm:$0xff]
    %v2501 = vld [vmem:[#allocation4 + $0x7a0] sm:$0xff]
    %v2502 = vld [vmem:[#allocation4 + $0x7a8] sm:$0xff]
    %v2503 = vld [vmem:[#allocation4 + $0x7b0] sm:$0xff]
    %v2504 = vld [vmem:[#allocation4 + $0x7b8] sm:$0xff]
    %v2505 = vld [vmem:[#allocation4 + $0x7c0] sm:$0xff]
    %v2506 = vld [vmem:[#allocation4 + $0x7c8] sm:$0xff]
    %v2507 = vld [vmem:[#allocation4 + $0x7d0] sm:$0xff]
    %v2508 = vld [vmem:[#allocation4 + $0x7d8] sm:$0xff]
    %v2509 = vld [vmem:[#allocation4 + $0x7e0] sm:$0xff]
    %v2510 = vld [vmem:[#allocation4 + $0x7e8] sm:$0xff]
    %v2511 = vld [vmem:[#allocation4 + $0x7f0] sm:$0xff]
    %v2512 = vld [vmem:[#allocation4 + $0x7f8] sm:$0xff]
    %v2513 = vld [vmem:[%s5] sm:$0xff]
    %v2514 = vld [vmem:[%s5 + $0x8] sm:$0xff]
    %2516 = vset.pattern.permute.xlu0 0
    %2517 = vperm.xlu0 %2516, %v99
    %v2518 = vpop.permute.xlu0 %2517
    %2521 = vset.pattern.permute.xlu0 0
    %2522 = vperm.xlu0 %2521, %v100
    %v2523 = vpop.permute.xlu0 %2522
    %2526 = vset.pattern.permute.xlu0 0
    %2527 = vperm.xlu0 %2526, %v101
    %v2528 = vpop.permute.xlu0 %2527
    %2531 = vset.pattern.permute.xlu0 0
    %2532 = vperm.xlu0 %2531, %v102
    %v2533 = vpop.permute.xlu0 %2532
    %2536 = vset.pattern.permute.xlu0 0
    %2537 = vperm.xlu0 %2536, %v103
    %v2538 = vpop.permute.xlu0 %2537
    %2541 = vset.pattern.permute.xlu0 0
    %2542 = vperm.xlu0 %2541, %v104
    %v2543 = vpop.permute.xlu0 %2542
    %2546 = vset.pattern.permute.xlu0 0
    %2547 = vperm.xlu0 %2546, %v105
    %v2548 = vpop.permute.xlu0 %2547
    %2551 = vset.pattern.permute.xlu0 0
    %2552 = vperm.xlu0 %2551, %v106
    %v2553 = vpop.permute.xlu0 %2552
    %2556 = vset.pattern.permute.xlu0 0
    %2557 = vperm.xlu0 %2556, %v107
    %v2558 = vpop.permute.xlu0 %2557
    %2561 = vset.pattern.permute.xlu0 0
    %2562 = vperm.xlu0 %2561, %v108
    %v2563 = vpop.permute.xlu0 %2562
    %2566 = vset.pattern.permute.xlu0 0
    %2567 = vperm.xlu0 %2566, %v109
    %v2568 = vpop.permute.xlu0 %2567
    %2571 = vset.pattern.permute.xlu0 0
    %2572 = vperm.xlu0 %2571, %v110
    %v2573 = vpop.permute.xlu0 %2572
    %2576 = vset.pattern.permute.xlu0 0
    %2577 = vperm.xlu0 %2576, %v111
    %v2578 = vpop.permute.xlu0 %2577
    %2581 = vset.pattern.permute.xlu0 0
    %2582 = vperm.xlu0 %2581, %v112
    %v2583 = vpop.permute.xlu0 %2582
    %2586 = vset.pattern.permute.xlu0 0
    %2587 = vperm.xlu0 %2586, %v113
    %v2588 = vpop.permute.xlu0 %2587
    %2591 = vset.pattern.permute.xlu0 0
    %2592 = vperm.xlu0 %2591, %v114
    %v2593 = vpop.permute.xlu0 %2592
    %2596 = vset.pattern.permute.xlu0 0
    %2597 = vperm.xlu0 %2596, %v115
    %v2598 = vpop.permute.xlu0 %2597
    %2601 = vset.pattern.permute.xlu0 0
    %2602 = vperm.xlu0 %2601, %v116
    %v2603 = vpop.permute.xlu0 %2602
    %2606 = vset.pattern.permute.xlu0 0
    %2607 = vperm.xlu0 %2606, %v117
    %v2608 = vpop.permute.xlu0 %2607
    %2611 = vset.pattern.permute.xlu0 0
    %2612 = vperm.xlu0 %2611, %v118
    %v2613 = vpop.permute.xlu0 %2612
    %2616 = vset.pattern.permute.xlu0 0
    %2617 = vperm.xlu0 %2616, %v119
    %v2618 = vpop.permute.xlu0 %2617
    %2621 = vset.pattern.permute.xlu0 0
    %2622 = vperm.xlu0 %2621, %v120
    %v2623 = vpop.permute.xlu0 %2622
    %2626 = vset.pattern.permute.xlu0 0
    %2627 = vperm.xlu0 %2626, %v121
    %v2628 = vpop.permute.xlu0 %2627
    %2631 = vset.pattern.permute.xlu0 0
    %2632 = vperm.xlu0 %2631, %v122
    %v2633 = vpop.permute.xlu0 %2632
    %2636 = vset.pattern.permute.xlu0 0
    %2637 = vperm.xlu0 %2636, %v123
    %v2638 = vpop.permute.xlu0 %2637
    %2641 = vset.pattern.permute.xlu0 0
    %2642 = vperm.xlu0 %2641, %v124
    %v2643 = vpop.permute.xlu0 %2642
    %2646 = vset.pattern.permute.xlu0 0
    %2647 = vperm.xlu0 %2646, %v125
    %v2648 = vpop.permute.xlu0 %2647
    %2651 = vset.pattern.permute.xlu0 0
    %2652 = vperm.xlu0 %2651, %v126
    %v2653 = vpop.permute.xlu0 %2652
    %2656 = vset.pattern.permute.xlu0 0
    %2657 = vperm.xlu0 %2656, %v127
    %v2658 = vpop.permute.xlu0 %2657
    %2661 = vset.pattern.permute.xlu0 0
    %2662 = vperm.xlu0 %2661, %v128
    %v2663 = vpop.permute.xlu0 %2662
    %2666 = vset.pattern.permute.xlu0 0
    %2667 = vperm.xlu0 %2666, %v129
    %v2668 = vpop.permute.xlu0 %2667
    %2671 = vset.pattern.permute.xlu0 0
    %2672 = vperm.xlu0 %2671, %v130
    %v2673 = vpop.permute.xlu0 %2672
    %v2677 = vlaneseq
    %v2678 = vshrl.u32 %v2677, 7
    %v2679 = vsub.s32 0, %v2678
    %v2680 = vrot.slane %v2513, %v2679
    %v2681 = vlaneseq
    %v2682 = vshrl.u32 %v2681, 7
    %v2683 = vsub.s32 4, %v2682
    %v2684 = vrot.slane %v2513, %v2683
    %v2685 = vlaneseq
    %v2686 = vshrl.u32 %v2685, 7
    %v2687 = vsub.s32 0, %v2686
    %v2688 = vrot.slane %v2514, %v2687
    %v2689 = vlaneseq
    %v2690 = vshrl.u32 %v2689, 7
    %v2691 = vsub.s32 4, %v2690
    %v2692 = vrot.slane %v2514, %v2691
    %v2697 = vlaneseq
    %v2698 = vshrl.u32 %v2697, 7
    %v2699 = vsub.s32 0, %v2698
    %v2700 = vrot.slane %v2680, %v2699
    %v2701 = vlaneseq
    %v2702 = vshrl.u32 %v2701, 7
    %v2703 = vsub.s32 0, %v2702
    %v2704 = vrot.slane %v2684, %v2703
    %v2705 = vlaneseq
    %v2706 = vshrl.u32 %v2705, 7
    %v2707 = vsub.s32 0, %v2706
    %v2708 = vrot.slane %v2688, %v2707
    %v2709 = vlaneseq
    %v2710 = vshrl.u32 %v2709, 7
    %v2711 = vsub.s32 0, %v2710
    %v2712 = vrot.slane %v2692, %v2711
    %v2713 = vmul.f32 %v2518, %v2700
    %v2714 = vmul.f32 %v2518, %v2704
    %v2715 = vmul.f32 %v2518, %v2708
    %v2716 = vmul.f32 %v2518, %v2712
    %v2717 = vmul.f32 %v2523, %v2700
    %v2718 = vmul.f32 %v2523, %v2704
    %v2719 = vmul.f32 %v2523, %v2708
    %v2720 = vmul.f32 %v2523, %v2712
    %v2721 = vmul.f32 %v2528, %v2700
    %v2722 = vmul.f32 %v2528, %v2704
    %v2723 = vmul.f32 %v2528, %v2708
    %v2724 = vmul.f32 %v2528, %v2712
    %v2725 = vmul.f32 %v2533, %v2700
    %v2726 = vmul.f32 %v2533, %v2704
    %v2727 = vmul.f32 %v2533, %v2708
    %v2728 = vmul.f32 %v2533, %v2712
    %v2729 = vmul.f32 %v2538, %v2700
    %v2730 = vmul.f32 %v2538, %v2704
    %v2731 = vmul.f32 %v2538, %v2708
    %v2732 = vmul.f32 %v2538, %v2712
    %v2733 = vmul.f32 %v2543, %v2700
    %v2734 = vmul.f32 %v2543, %v2704
    %v2735 = vmul.f32 %v2543, %v2708
    %v2736 = vmul.f32 %v2543, %v2712
    %v2737 = vmul.f32 %v2548, %v2700
    %v2738 = vmul.f32 %v2548, %v2704
    %v2739 = vmul.f32 %v2548, %v2708
    %v2740 = vmul.f32 %v2548, %v2712
    %v2741 = vmul.f32 %v2553, %v2700
    %v2742 = vmul.f32 %v2553, %v2704
    %v2743 = vmul.f32 %v2553, %v2708
    %v2744 = vmul.f32 %v2553, %v2712
    %v2745 = vmul.f32 %v2558, %v2700
    %v2746 = vmul.f32 %v2558, %v2704
    %v2747 = vmul.f32 %v2558, %v2708
    %v2748 = vmul.f32 %v2558, %v2712
    %v2749 = vmul.f32 %v2563, %v2700
    %v2750 = vmul.f32 %v2563, %v2704
    %v2751 = vmul.f32 %v2563, %v2708
    %v2752 = vmul.f32 %v2563, %v2712
    %v2753 = vmul.f32 %v2568, %v2700
    %v2754 = vmul.f32 %v2568, %v2704
    %v2755 = vmul.f32 %v2568, %v2708
    %v2756 = vmul.f32 %v2568, %v2712
    %v2757 = vmul.f32 %v2573, %v2700
    %v2758 = vmul.f32 %v2573, %v2704
    %v2759 = vmul.f32 %v2573, %v2708
    %v2760 = vmul.f32 %v2573, %v2712
    %v2761 = vmul.f32 %v2578, %v2700
    %v2762 = vmul.f32 %v2578, %v2704
    %v2763 = vmul.f32 %v2578, %v2708
    %v2764 = vmul.f32 %v2578, %v2712
    %v2765 = vmul.f32 %v2583, %v2700
    %v2766 = vmul.f32 %v2583, %v2704
    %v2767 = vmul.f32 %v2583, %v2708
    %v2768 = vmul.f32 %v2583, %v2712
    %v2769 = vmul.f32 %v2588, %v2700
    %v2770 = vmul.f32 %v2588, %v2704
    %v2771 = vmul.f32 %v2588, %v2708
    %v2772 = vmul.f32 %v2588, %v2712
    %v2773 = vmul.f32 %v2593, %v2700
    %v2774 = vmul.f32 %v2593, %v2704
    %v2775 = vmul.f32 %v2593, %v2708
    %v2776 = vmul.f32 %v2593, %v2712
    %v2777 = vmul.f32 %v2598, %v2700
    %v2778 = vmul.f32 %v2598, %v2704
    %v2779 = vmul.f32 %v2598, %v2708
    %v2780 = vmul.f32 %v2598, %v2712
    %v2781 = vmul.f32 %v2603, %v2700
    %v2782 = vmul.f32 %v2603, %v2704
    %v2783 = vmul.f32 %v2603, %v2708
    %v2784 = vmul.f32 %v2603, %v2712
    %v2785 = vmul.f32 %v2608, %v2700
    %v2786 = vmul.f32 %v2608, %v2704
    %v2787 = vmul.f32 %v2608, %v2708
    %v2788 = vmul.f32 %v2608, %v2712
    %v2789 = vmul.f32 %v2613, %v2700
    %v2790 = vmul.f32 %v2613, %v2704
    %v2791 = vmul.f32 %v2613, %v2708
    %v2792 = vmul.f32 %v2613, %v2712
    %v2793 = vmul.f32 %v2618, %v2700
    %v2794 = vmul.f32 %v2618, %v2704
    %v2795 = vmul.f32 %v2618, %v2708
    %v2796 = vmul.f32 %v2618, %v2712
    %v2797 = vmul.f32 %v2623, %v2700
    %v2798 = vmul.f32 %v2623, %v2704
    %v2799 = vmul.f32 %v2623, %v2708
    %v2800 = vmul.f32 %v2623, %v2712
    %v2801 = vmul.f32 %v2628, %v2700
    %v2802 = vmul.f32 %v2628, %v2704
    %v2803 = vmul.f32 %v2628, %v2708
    %v2804 = vmul.f32 %v2628, %v2712
    %v2805 = vmul.f32 %v2633, %v2700
    %v2806 = vmul.f32 %v2633, %v2704
    %v2807 = vmul.f32 %v2633, %v2708
    %v2808 = vmul.f32 %v2633, %v2712
    %v2809 = vmul.f32 %v2638, %v2700
    %v2810 = vmul.f32 %v2638, %v2704
    %v2811 = vmul.f32 %v2638, %v2708
    %v2812 = vmul.f32 %v2638, %v2712
    %v2813 = vmul.f32 %v2643, %v2700
    %v2814 = vmul.f32 %v2643, %v2704
    %v2815 = vmul.f32 %v2643, %v2708
    %v2816 = vmul.f32 %v2643, %v2712
    %v2817 = vmul.f32 %v2648, %v2700
    %v2818 = vmul.f32 %v2648, %v2704
    %v2819 = vmul.f32 %v2648, %v2708
    %v2820 = vmul.f32 %v2648, %v2712
    %v2821 = vmul.f32 %v2653, %v2700
    %v2822 = vmul.f32 %v2653, %v2704
    %v2823 = vmul.f32 %v2653, %v2708
    %v2824 = vmul.f32 %v2653, %v2712
    %v2825 = vmul.f32 %v2658, %v2700
    %v2826 = vmul.f32 %v2658, %v2704
    %v2827 = vmul.f32 %v2658, %v2708
    %v2828 = vmul.f32 %v2658, %v2712
    %v2829 = vmul.f32 %v2663, %v2700
    %v2830 = vmul.f32 %v2663, %v2704
    %v2831 = vmul.f32 %v2663, %v2708
    %v2832 = vmul.f32 %v2663, %v2712
    %v2833 = vmul.f32 %v2668, %v2700
    %v2834 = vmul.f32 %v2668, %v2704
    %v2835 = vmul.f32 %v2668, %v2708
    %v2836 = vmul.f32 %v2668, %v2712
    %v2837 = vmul.f32 %v2673, %v2700
    %v2838 = vmul.f32 %v2673, %v2704
    %v2839 = vmul.f32 %v2673, %v2708
    %v2840 = vmul.f32 %v2673, %v2712
    %v3097 = vunpack.c.l.b16 %v2257
    %v3098 = vunpack.c.h.b16 %v2257
    %v3099 = vunpack.c.l.b16 %v2258
    %v3100 = vunpack.c.h.b16 %v2258
    %v3101 = vunpack.c.l.b16 %v2259
    %v3102 = vunpack.c.h.b16 %v2259
    %v3103 = vunpack.c.l.b16 %v2260
    %v3104 = vunpack.c.h.b16 %v2260
    %v3105 = vunpack.c.l.b16 %v2261
    %v3106 = vunpack.c.h.b16 %v2261
    %v3107 = vunpack.c.l.b16 %v2262
    %v3108 = vunpack.c.h.b16 %v2262
    %v3109 = vunpack.c.l.b16 %v2263
    %v3110 = vunpack.c.h.b16 %v2263
    %v3111 = vunpack.c.l.b16 %v2264
    %v3112 = vunpack.c.h.b16 %v2264
    %v3113 = vunpack.c.l.b16 %v2265
    %v3114 = vunpack.c.h.b16 %v2265
    %v3115 = vunpack.c.l.b16 %v2266
    %v3116 = vunpack.c.h.b16 %v2266
    %v3117 = vunpack.c.l.b16 %v2267
    %v3118 = vunpack.c.h.b16 %v2267
    %v3119 = vunpack.c.l.b16 %v2268
    %v3120 = vunpack.c.h.b16 %v2268
    %v3121 = vunpack.c.l.b16 %v2269
    %v3122 = vunpack.c.h.b16 %v2269
    %v3123 = vunpack.c.l.b16 %v2270
    %v3124 = vunpack.c.h.b16 %v2270
    %v3125 = vunpack.c.l.b16 %v2271
    %v3126 = vunpack.c.h.b16 %v2271
    %v3127 = vunpack.c.l.b16 %v2272
    %v3128 = vunpack.c.h.b16 %v2272
    %v3129 = vunpack.c.l.b16 %v2273
    %v3130 = vunpack.c.h.b16 %v2273
    %v3131 = vunpack.c.l.b16 %v2274
    %v3132 = vunpack.c.h.b16 %v2274
    %v3133 = vunpack.c.l.b16 %v2275
    %v3134 = vunpack.c.h.b16 %v2275
    %v3135 = vunpack.c.l.b16 %v2276
    %v3136 = vunpack.c.h.b16 %v2276
    %v3137 = vunpack.c.l.b16 %v2277
    %v3138 = vunpack.c.h.b16 %v2277
    %v3139 = vunpack.c.l.b16 %v2278
    %v3140 = vunpack.c.h.b16 %v2278
    %v3141 = vunpack.c.l.b16 %v2279
    %v3142 = vunpack.c.h.b16 %v2279
    %v3143 = vunpack.c.l.b16 %v2280
    %v3144 = vunpack.c.h.b16 %v2280
    %v3145 = vunpack.c.l.b16 %v2281
    %v3146 = vunpack.c.h.b16 %v2281
    %v3147 = vunpack.c.l.b16 %v2282
    %v3148 = vunpack.c.h.b16 %v2282
    %v3149 = vunpack.c.l.b16 %v2283
    %v3150 = vunpack.c.h.b16 %v2283
    %v3151 = vunpack.c.l.b16 %v2284
    %v3152 = vunpack.c.h.b16 %v2284
    %v3153 = vunpack.c.l.b16 %v2285
    %v3154 = vunpack.c.h.b16 %v2285
    %v3155 = vunpack.c.l.b16 %v2286
    %v3156 = vunpack.c.h.b16 %v2286
    %v3157 = vunpack.c.l.b16 %v2287
    %v3158 = vunpack.c.h.b16 %v2287
    %v3159 = vunpack.c.l.b16 %v2288
    %v3160 = vunpack.c.h.b16 %v2288
    %v3161 = vunpack.c.l.b16 %v2289
    %v3162 = vunpack.c.h.b16 %v2289
    %v3163 = vunpack.c.l.b16 %v2290
    %v3164 = vunpack.c.h.b16 %v2290
    %v3165 = vunpack.c.l.b16 %v2291
    %v3166 = vunpack.c.h.b16 %v2291
    %v3167 = vunpack.c.l.b16 %v2292
    %v3168 = vunpack.c.h.b16 %v2292
    %v3169 = vunpack.c.l.b16 %v2293
    %v3170 = vunpack.c.h.b16 %v2293
    %v3171 = vunpack.c.l.b16 %v2294
    %v3172 = vunpack.c.h.b16 %v2294
    %v3173 = vunpack.c.l.b16 %v2295
    %v3174 = vunpack.c.h.b16 %v2295
    %v3175 = vunpack.c.l.b16 %v2296
    %v3176 = vunpack.c.h.b16 %v2296
    %v3177 = vunpack.c.l.b16 %v2297
    %v3178 = vunpack.c.h.b16 %v2297
    %v3179 = vunpack.c.l.b16 %v2298
    %v3180 = vunpack.c.h.b16 %v2298
    %v3181 = vunpack.c.l.b16 %v2299
    %v3182 = vunpack.c.h.b16 %v2299
    %v3183 = vunpack.c.l.b16 %v2300
    %v3184 = vunpack.c.h.b16 %v2300
    %v3185 = vunpack.c.l.b16 %v2301
    %v3186 = vunpack.c.h.b16 %v2301
    %v3187 = vunpack.c.l.b16 %v2302
    %v3188 = vunpack.c.h.b16 %v2302
    %v3189 = vunpack.c.l.b16 %v2303
    %v3190 = vunpack.c.h.b16 %v2303
    %v3191 = vunpack.c.l.b16 %v2304
    %v3192 = vunpack.c.h.b16 %v2304
    %v3193 = vunpack.c.l.b16 %v2305
    %v3194 = vunpack.c.h.b16 %v2305
    %v3195 = vunpack.c.l.b16 %v2306
    %v3196 = vunpack.c.h.b16 %v2306
    %v3197 = vunpack.c.l.b16 %v2307
    %v3198 = vunpack.c.h.b16 %v2307
    %v3199 = vunpack.c.l.b16 %v2308
    %v3200 = vunpack.c.h.b16 %v2308
    %v3201 = vunpack.c.l.b16 %v2309
    %v3202 = vunpack.c.h.b16 %v2309
    %v3203 = vunpack.c.l.b16 %v2310
    %v3204 = vunpack.c.h.b16 %v2310
    %v3205 = vunpack.c.l.b16 %v2311
    %v3206 = vunpack.c.h.b16 %v2311
    %v3207 = vunpack.c.l.b16 %v2312
    %v3208 = vunpack.c.h.b16 %v2312
    %v3209 = vunpack.c.l.b16 %v2313
    %v3210 = vunpack.c.h.b16 %v2313
    %v3211 = vunpack.c.l.b16 %v2314
    %v3212 = vunpack.c.h.b16 %v2314
    %v3213 = vunpack.c.l.b16 %v2315
    %v3214 = vunpack.c.h.b16 %v2315
    %v3215 = vunpack.c.l.b16 %v2316
    %v3216 = vunpack.c.h.b16 %v2316
    %v3217 = vunpack.c.l.b16 %v2317
    %v3218 = vunpack.c.h.b16 %v2317
    %v3219 = vunpack.c.l.b16 %v2318
    %v3220 = vunpack.c.h.b16 %v2318
    %v3221 = vunpack.c.l.b16 %v2319
    %v3222 = vunpack.c.h.b16 %v2319
    %v3223 = vunpack.c.l.b16 %v2320
    %v3224 = vunpack.c.h.b16 %v2320
    %v3225 = vunpack.c.l.b16 %v2321
    %v3226 = vunpack.c.h.b16 %v2321
    %v3227 = vunpack.c.l.b16 %v2322
    %v3228 = vunpack.c.h.b16 %v2322
    %v3229 = vunpack.c.l.b16 %v2323
    %v3230 = vunpack.c.h.b16 %v2323
    %v3231 = vunpack.c.l.b16 %v2324
    %v3232 = vunpack.c.h.b16 %v2324
    %v3233 = vunpack.c.l.b16 %v2325
    %v3234 = vunpack.c.h.b16 %v2325
    %v3235 = vunpack.c.l.b16 %v2326
    %v3236 = vunpack.c.h.b16 %v2326
    %v3237 = vunpack.c.l.b16 %v2327
    %v3238 = vunpack.c.h.b16 %v2327
    %v3239 = vunpack.c.l.b16 %v2328
    %v3240 = vunpack.c.h.b16 %v2328
    %v3241 = vunpack.c.l.b16 %v2329
    %v3242 = vunpack.c.h.b16 %v2329
    %v3243 = vunpack.c.l.b16 %v2330
    %v3244 = vunpack.c.h.b16 %v2330
    %v3245 = vunpack.c.l.b16 %v2331
    %v3246 = vunpack.c.h.b16 %v2331
    %v3247 = vunpack.c.l.b16 %v2332
    %v3248 = vunpack.c.h.b16 %v2332
    %v3249 = vunpack.c.l.b16 %v2333
    %v3250 = vunpack.c.h.b16 %v2333
    %v3251 = vunpack.c.l.b16 %v2334
    %v3252 = vunpack.c.h.b16 %v2334
    %v3253 = vunpack.c.l.b16 %v2335
    %v3254 = vunpack.c.h.b16 %v2335
    %v3255 = vunpack.c.l.b16 %v2336
    %v3256 = vunpack.c.h.b16 %v2336
    %v3257 = vunpack.c.l.b16 %v2337
    %v3258 = vunpack.c.h.b16 %v2337
    %v3259 = vunpack.c.l.b16 %v2338
    %v3260 = vunpack.c.h.b16 %v2338
    %v3261 = vunpack.c.l.b16 %v2339
    %v3262 = vunpack.c.h.b16 %v2339
    %v3263 = vunpack.c.l.b16 %v2340
    %v3264 = vunpack.c.h.b16 %v2340
    %v3265 = vunpack.c.l.b16 %v2341
    %v3266 = vunpack.c.h.b16 %v2341
    %v3267 = vunpack.c.l.b16 %v2342
    %v3268 = vunpack.c.h.b16 %v2342
    %v3269 = vunpack.c.l.b16 %v2343
    %v3270 = vunpack.c.h.b16 %v2343
    %v3271 = vunpack.c.l.b16 %v2344
    %v3272 = vunpack.c.h.b16 %v2344
    %v3273 = vunpack.c.l.b16 %v2345
    %v3274 = vunpack.c.h.b16 %v2345
    %v3275 = vunpack.c.l.b16 %v2346
    %v3276 = vunpack.c.h.b16 %v2346
    %v3277 = vunpack.c.l.b16 %v2347
    %v3278 = vunpack.c.h.b16 %v2347
    %v3279 = vunpack.c.l.b16 %v2348
    %v3280 = vunpack.c.h.b16 %v2348
    %v3281 = vunpack.c.l.b16 %v2349
    %v3282 = vunpack.c.h.b16 %v2349
    %v3283 = vunpack.c.l.b16 %v2350
    %v3284 = vunpack.c.h.b16 %v2350
    %v3285 = vunpack.c.l.b16 %v2351
    %v3286 = vunpack.c.h.b16 %v2351
    %v3287 = vunpack.c.l.b16 %v2352
    %v3288 = vunpack.c.h.b16 %v2352
    %v3289 = vunpack.c.l.b16 %v2353
    %v3290 = vunpack.c.h.b16 %v2353
    %v3291 = vunpack.c.l.b16 %v2354
    %v3292 = vunpack.c.h.b16 %v2354
    %v3293 = vunpack.c.l.b16 %v2355
    %v3294 = vunpack.c.h.b16 %v2355
    %v3295 = vunpack.c.l.b16 %v2356
    %v3296 = vunpack.c.h.b16 %v2356
    %v3297 = vunpack.c.l.b16 %v2357
    %v3298 = vunpack.c.h.b16 %v2357
    %v3299 = vunpack.c.l.b16 %v2358
    %v3300 = vunpack.c.h.b16 %v2358
    %v3301 = vunpack.c.l.b16 %v2359
    %v3302 = vunpack.c.h.b16 %v2359
    %v3303 = vunpack.c.l.b16 %v2360
    %v3304 = vunpack.c.h.b16 %v2360
    %v3305 = vunpack.c.l.b16 %v2361
    %v3306 = vunpack.c.h.b16 %v2361
    %v3307 = vunpack.c.l.b16 %v2362
    %v3308 = vunpack.c.h.b16 %v2362
    %v3309 = vunpack.c.l.b16 %v2363
    %v3310 = vunpack.c.h.b16 %v2363
    %v3311 = vunpack.c.l.b16 %v2364
    %v3312 = vunpack.c.h.b16 %v2364
    %v3313 = vunpack.c.l.b16 %v2365
    %v3314 = vunpack.c.h.b16 %v2365
    %v3315 = vunpack.c.l.b16 %v2366
    %v3316 = vunpack.c.h.b16 %v2366
    %v3317 = vunpack.c.l.b16 %v2367
    %v3318 = vunpack.c.h.b16 %v2367
    %v3319 = vunpack.c.l.b16 %v2368
    %v3320 = vunpack.c.h.b16 %v2368
    %v3321 = vunpack.c.l.b16 %v2369
    %v3322 = vunpack.c.h.b16 %v2369
    %v3323 = vunpack.c.l.b16 %v2370
    %v3324 = vunpack.c.h.b16 %v2370
    %v3325 = vunpack.c.l.b16 %v2371
    %v3326 = vunpack.c.h.b16 %v2371
    %v3327 = vunpack.c.l.b16 %v2372
    %v3328 = vunpack.c.h.b16 %v2372
    %v3329 = vunpack.c.l.b16 %v2373
    %v3330 = vunpack.c.h.b16 %v2373
    %v3331 = vunpack.c.l.b16 %v2374
    %v3332 = vunpack.c.h.b16 %v2374
    %v3333 = vunpack.c.l.b16 %v2375
    %v3334 = vunpack.c.h.b16 %v2375
    %v3335 = vunpack.c.l.b16 %v2376
    %v3336 = vunpack.c.h.b16 %v2376
    %v3337 = vunpack.c.l.b16 %v2377
    %v3338 = vunpack.c.h.b16 %v2377
    %v3339 = vunpack.c.l.b16 %v2378
    %v3340 = vunpack.c.h.b16 %v2378
    %v3341 = vunpack.c.l.b16 %v2379
    %v3342 = vunpack.c.h.b16 %v2379
    %v3343 = vunpack.c.l.b16 %v2380
    %v3344 = vunpack.c.h.b16 %v2380
    %v3345 = vunpack.c.l.b16 %v2381
    %v3346 = vunpack.c.h.b16 %v2381
    %v3347 = vunpack.c.l.b16 %v2382
    %v3348 = vunpack.c.h.b16 %v2382
    %v3349 = vunpack.c.l.b16 %v2383
    %v3350 = vunpack.c.h.b16 %v2383
    %v3351 = vunpack.c.l.b16 %v2384
    %v3352 = vunpack.c.h.b16 %v2384
    %v3353 = vunpack.c.l.b16 %v2385
    %v3354 = vunpack.c.h.b16 %v2385
    %v3355 = vunpack.c.l.b16 %v2386
    %v3356 = vunpack.c.h.b16 %v2386
    %v3357 = vunpack.c.l.b16 %v2387
    %v3358 = vunpack.c.h.b16 %v2387
    %v3359 = vunpack.c.l.b16 %v2388
    %v3360 = vunpack.c.h.b16 %v2388
    %v3361 = vunpack.c.l.b16 %v2389
    %v3362 = vunpack.c.h.b16 %v2389
    %v3363 = vunpack.c.l.b16 %v2390
    %v3364 = vunpack.c.h.b16 %v2390
    %v3365 = vunpack.c.l.b16 %v2391
    %v3366 = vunpack.c.h.b16 %v2391
    %v3367 = vunpack.c.l.b16 %v2392
    %v3368 = vunpack.c.h.b16 %v2392
    %v3369 = vunpack.c.l.b16 %v2393
    %v3370 = vunpack.c.h.b16 %v2393
    %v3371 = vunpack.c.l.b16 %v2394
    %v3372 = vunpack.c.h.b16 %v2394
    %v3373 = vunpack.c.l.b16 %v2395
    %v3374 = vunpack.c.h.b16 %v2395
    %v3375 = vunpack.c.l.b16 %v2396
    %v3376 = vunpack.c.h.b16 %v2396
    %v3377 = vunpack.c.l.b16 %v2397
    %v3378 = vunpack.c.h.b16 %v2397
    %v3379 = vunpack.c.l.b16 %v2398
    %v3380 = vunpack.c.h.b16 %v2398
    %v3381 = vunpack.c.l.b16 %v2399
    %v3382 = vunpack.c.h.b16 %v2399
    %v3383 = vunpack.c.l.b16 %v2400
    %v3384 = vunpack.c.h.b16 %v2400
    %v3385 = vunpack.c.l.b16 %v2401
    %v3386 = vunpack.c.h.b16 %v2401
    %v3387 = vunpack.c.l.b16 %v2402
    %v3388 = vunpack.c.h.b16 %v2402
    %v3389 = vunpack.c.l.b16 %v2403
    %v3390 = vunpack.c.h.b16 %v2403
    %v3391 = vunpack.c.l.b16 %v2404
    %v3392 = vunpack.c.h.b16 %v2404
    %v3393 = vunpack.c.l.b16 %v2405
    %v3394 = vunpack.c.h.b16 %v2405
    %v3395 = vunpack.c.l.b16 %v2406
    %v3396 = vunpack.c.h.b16 %v2406
    %v3397 = vunpack.c.l.b16 %v2407
    %v3398 = vunpack.c.h.b16 %v2407
    %v3399 = vunpack.c.l.b16 %v2408
    %v3400 = vunpack.c.h.b16 %v2408
    %v3401 = vunpack.c.l.b16 %v2409
    %v3402 = vunpack.c.h.b16 %v2409
    %v3403 = vunpack.c.l.b16 %v2410
    %v3404 = vunpack.c.h.b16 %v2410
    %v3405 = vunpack.c.l.b16 %v2411
    %v3406 = vunpack.c.h.b16 %v2411
    %v3407 = vunpack.c.l.b16 %v2412
    %v3408 = vunpack.c.h.b16 %v2412
    %v3409 = vunpack.c.l.b16 %v2413
    %v3410 = vunpack.c.h.b16 %v2413
    %v3411 = vunpack.c.l.b16 %v2414
    %v3412 = vunpack.c.h.b16 %v2414
    %v3413 = vunpack.c.l.b16 %v2415
    %v3414 = vunpack.c.h.b16 %v2415
    %v3415 = vunpack.c.l.b16 %v2416
    %v3416 = vunpack.c.h.b16 %v2416
    %v3417 = vunpack.c.l.b16 %v2417
    %v3418 = vunpack.c.h.b16 %v2417
    %v3419 = vunpack.c.l.b16 %v2418
    %v3420 = vunpack.c.h.b16 %v2418
    %v3421 = vunpack.c.l.b16 %v2419
    %v3422 = vunpack.c.h.b16 %v2419
    %v3423 = vunpack.c.l.b16 %v2420
    %v3424 = vunpack.c.h.b16 %v2420
    %v3425 = vunpack.c.l.b16 %v2421
    %v3426 = vunpack.c.h.b16 %v2421
    %v3427 = vunpack.c.l.b16 %v2422
    %v3428 = vunpack.c.h.b16 %v2422
    %v3429 = vunpack.c.l.b16 %v2423
    %v3430 = vunpack.c.h.b16 %v2423
    %v3431 = vunpack.c.l.b16 %v2424
    %v3432 = vunpack.c.h.b16 %v2424
    %v3433 = vunpack.c.l.b16 %v2425
    %v3434 = vunpack.c.h.b16 %v2425
    %v3435 = vunpack.c.l.b16 %v2426
    %v3436 = vunpack.c.h.b16 %v2426
    %v3437 = vunpack.c.l.b16 %v2427
    %v3438 = vunpack.c.h.b16 %v2427
    %v3439 = vunpack.c.l.b16 %v2428
    %v3440 = vunpack.c.h.b16 %v2428
    %v3441 = vunpack.c.l.b16 %v2429
    %v3442 = vunpack.c.h.b16 %v2429
    %v3443 = vunpack.c.l.b16 %v2430
    %v3444 = vunpack.c.h.b16 %v2430
    %v3445 = vunpack.c.l.b16 %v2431
    %v3446 = vunpack.c.h.b16 %v2431
    %v3447 = vunpack.c.l.b16 %v2432
    %v3448 = vunpack.c.h.b16 %v2432
    %v3449 = vunpack.c.l.b16 %v2433
    %v3450 = vunpack.c.h.b16 %v2433
    %v3451 = vunpack.c.l.b16 %v2434
    %v3452 = vunpack.c.h.b16 %v2434
    %v3453 = vunpack.c.l.b16 %v2435
    %v3454 = vunpack.c.h.b16 %v2435
    %v3455 = vunpack.c.l.b16 %v2436
    %v3456 = vunpack.c.h.b16 %v2436
    %v3457 = vunpack.c.l.b16 %v2437
    %v3458 = vunpack.c.h.b16 %v2437
    %v3459 = vunpack.c.l.b16 %v2438
    %v3460 = vunpack.c.h.b16 %v2438
    %v3461 = vunpack.c.l.b16 %v2439
    %v3462 = vunpack.c.h.b16 %v2439
    %v3463 = vunpack.c.l.b16 %v2440
    %v3464 = vunpack.c.h.b16 %v2440
    %v3465 = vunpack.c.l.b16 %v2441
    %v3466 = vunpack.c.h.b16 %v2441
    %v3467 = vunpack.c.l.b16 %v2442
    %v3468 = vunpack.c.h.b16 %v2442
    %v3469 = vunpack.c.l.b16 %v2443
    %v3470 = vunpack.c.h.b16 %v2443
    %v3471 = vunpack.c.l.b16 %v2444
    %v3472 = vunpack.c.h.b16 %v2444
    %v3473 = vunpack.c.l.b16 %v2445
    %v3474 = vunpack.c.h.b16 %v2445
    %v3475 = vunpack.c.l.b16 %v2446
    %v3476 = vunpack.c.h.b16 %v2446
    %v3477 = vunpack.c.l.b16 %v2447
    %v3478 = vunpack.c.h.b16 %v2447
    %v3479 = vunpack.c.l.b16 %v2448
    %v3480 = vunpack.c.h.b16 %v2448
    %v3481 = vunpack.c.l.b16 %v2449
    %v3482 = vunpack.c.h.b16 %v2449
    %v3483 = vunpack.c.l.b16 %v2450
    %v3484 = vunpack.c.h.b16 %v2450
    %v3485 = vunpack.c.l.b16 %v2451
    %v3486 = vunpack.c.h.b16 %v2451
    %v3487 = vunpack.c.l.b16 %v2452
    %v3488 = vunpack.c.h.b16 %v2452
    %v3489 = vunpack.c.l.b16 %v2453
    %v3490 = vunpack.c.h.b16 %v2453
    %v3491 = vunpack.c.l.b16 %v2454
    %v3492 = vunpack.c.h.b16 %v2454
    %v3493 = vunpack.c.l.b16 %v2455
    %v3494 = vunpack.c.h.b16 %v2455
    %v3495 = vunpack.c.l.b16 %v2456
    %v3496 = vunpack.c.h.b16 %v2456
    %v3497 = vunpack.c.l.b16 %v2457
    %v3498 = vunpack.c.h.b16 %v2457
    %v3499 = vunpack.c.l.b16 %v2458
    %v3500 = vunpack.c.h.b16 %v2458
    %v3501 = vunpack.c.l.b16 %v2459
    %v3502 = vunpack.c.h.b16 %v2459
    %v3503 = vunpack.c.l.b16 %v2460
    %v3504 = vunpack.c.h.b16 %v2460
    %v3505 = vunpack.c.l.b16 %v2461
    %v3506 = vunpack.c.h.b16 %v2461
    %v3507 = vunpack.c.l.b16 %v2462
    %v3508 = vunpack.c.h.b16 %v2462
    %v3509 = vunpack.c.l.b16 %v2463
    %v3510 = vunpack.c.h.b16 %v2463
    %v3511 = vunpack.c.l.b16 %v2464
    %v3512 = vunpack.c.h.b16 %v2464
    %v3513 = vunpack.c.l.b16 %v2465
    %v3514 = vunpack.c.h.b16 %v2465
    %v3515 = vunpack.c.l.b16 %v2466
    %v3516 = vunpack.c.h.b16 %v2466
    %v3517 = vunpack.c.l.b16 %v2467
    %v3518 = vunpack.c.h.b16 %v2467
    %v3519 = vunpack.c.l.b16 %v2468
    %v3520 = vunpack.c.h.b16 %v2468
    %v3521 = vunpack.c.l.b16 %v2469
    %v3522 = vunpack.c.h.b16 %v2469
    %v3523 = vunpack.c.l.b16 %v2470
    %v3524 = vunpack.c.h.b16 %v2470
    %v3525 = vunpack.c.l.b16 %v2471
    %v3526 = vunpack.c.h.b16 %v2471
    %v3527 = vunpack.c.l.b16 %v2472
    %v3528 = vunpack.c.h.b16 %v2472
    %v3529 = vunpack.c.l.b16 %v2473
    %v3530 = vunpack.c.h.b16 %v2473
    %v3531 = vunpack.c.l.b16 %v2474
    %v3532 = vunpack.c.h.b16 %v2474
    %v3533 = vunpack.c.l.b16 %v2475
    %v3534 = vunpack.c.h.b16 %v2475
    %v3535 = vunpack.c.l.b16 %v2476
    %v3536 = vunpack.c.h.b16 %v2476
    %v3537 = vunpack.c.l.b16 %v2477
    %v3538 = vunpack.c.h.b16 %v2477
    %v3539 = vunpack.c.l.b16 %v2478
    %v3540 = vunpack.c.h.b16 %v2478
    %v3541 = vunpack.c.l.b16 %v2479
    %v3542 = vunpack.c.h.b16 %v2479
    %v3543 = vunpack.c.l.b16 %v2480
    %v3544 = vunpack.c.h.b16 %v2480
    %v3545 = vunpack.c.l.b16 %v2481
    %v3546 = vunpack.c.h.b16 %v2481
    %v3547 = vunpack.c.l.b16 %v2482
    %v3548 = vunpack.c.h.b16 %v2482
    %v3549 = vunpack.c.l.b16 %v2483
    %v3550 = vunpack.c.h.b16 %v2483
    %v3551 = vunpack.c.l.b16 %v2484
    %v3552 = vunpack.c.h.b16 %v2484
    %v3553 = vunpack.c.l.b16 %v2485
    %v3554 = vunpack.c.h.b16 %v2485
    %v3555 = vunpack.c.l.b16 %v2486
    %v3556 = vunpack.c.h.b16 %v2486
    %v3557 = vunpack.c.l.b16 %v2487
    %v3558 = vunpack.c.h.b16 %v2487
    %v3559 = vunpack.c.l.b16 %v2488
    %v3560 = vunpack.c.h.b16 %v2488
    %v3561 = vunpack.c.l.b16 %v2489
    %v3562 = vunpack.c.h.b16 %v2489
    %v3563 = vunpack.c.l.b16 %v2490
    %v3564 = vunpack.c.h.b16 %v2490
    %v3565 = vunpack.c.l.b16 %v2491
    %v3566 = vunpack.c.h.b16 %v2491
    %v3567 = vunpack.c.l.b16 %v2492
    %v3568 = vunpack.c.h.b16 %v2492
    %v3569 = vunpack.c.l.b16 %v2493
    %v3570 = vunpack.c.h.b16 %v2493
    %v3571 = vunpack.c.l.b16 %v2494
    %v3572 = vunpack.c.h.b16 %v2494
    %v3573 = vunpack.c.l.b16 %v2495
    %v3574 = vunpack.c.h.b16 %v2495
    %v3575 = vunpack.c.l.b16 %v2496
    %v3576 = vunpack.c.h.b16 %v2496
    %v3577 = vunpack.c.l.b16 %v2497
    %v3578 = vunpack.c.h.b16 %v2497
    %v3579 = vunpack.c.l.b16 %v2498
    %v3580 = vunpack.c.h.b16 %v2498
    %v3581 = vunpack.c.l.b16 %v2499
    %v3582 = vunpack.c.h.b16 %v2499
    %v3583 = vunpack.c.l.b16 %v2500
    %v3584 = vunpack.c.h.b16 %v2500
    %v3585 = vunpack.c.l.b16 %v2501
    %v3586 = vunpack.c.h.b16 %v2501
    %v3587 = vunpack.c.l.b16 %v2502
    %v3588 = vunpack.c.h.b16 %v2502
    %v3589 = vunpack.c.l.b16 %v2503
    %v3590 = vunpack.c.h.b16 %v2503
    %v3591 = vunpack.c.l.b16 %v2504
    %v3592 = vunpack.c.h.b16 %v2504
    %v3593 = vunpack.c.l.b16 %v2505
    %v3594 = vunpack.c.h.b16 %v2505
    %v3595 = vunpack.c.l.b16 %v2506
    %v3596 = vunpack.c.h.b16 %v2506
    %v3597 = vunpack.c.l.b16 %v2507
    %v3598 = vunpack.c.h.b16 %v2507
    %v3599 = vunpack.c.l.b16 %v2508
    %v3600 = vunpack.c.h.b16 %v2508
    %v3601 = vunpack.c.l.b16 %v2509
    %v3602 = vunpack.c.h.b16 %v2509
    %v3603 = vunpack.c.l.b16 %v2510
    %v3604 = vunpack.c.h.b16 %v2510
    %v3605 = vunpack.c.l.b16 %v2511
    %v3606 = vunpack.c.h.b16 %v2511
    %v3607 = vunpack.c.l.b16 %v2512
    %v3608 = vunpack.c.h.b16 %v2512
    %v3609 = vpack.c.b16 %v3101, %v3097
    %v3610 = vpack.c.b16 %v3102, %v3098
    %v3611 = vpack.c.b16 %v3103, %v3099
    %v3612 = vpack.c.b16 %v3104, %v3100
    %v3613 = vpack.c.b16 %v3109, %v3105
    %v3614 = vpack.c.b16 %v3110, %v3106
    %v3615 = vpack.c.b16 %v3111, %v3107
    %v3616 = vpack.c.b16 %v3112, %v3108
    %v3617 = vpack.c.b16 %v3117, %v3113
    %v3618 = vpack.c.b16 %v3118, %v3114
    %v3619 = vpack.c.b16 %v3119, %v3115
    %v3620 = vpack.c.b16 %v3120, %v3116
    %v3621 = vpack.c.b16 %v3125, %v3121
    %v3622 = vpack.c.b16 %v3126, %v3122
    %v3623 = vpack.c.b16 %v3127, %v3123
    %v3624 = vpack.c.b16 %v3128, %v3124
    %v3625 = vpack.c.b16 %v3133, %v3129
    %v3626 = vpack.c.b16 %v3134, %v3130
    %v3627 = vpack.c.b16 %v3135, %v3131
    %v3628 = vpack.c.b16 %v3136, %v3132
    %v3629 = vpack.c.b16 %v3141, %v3137
    %v3630 = vpack.c.b16 %v3142, %v3138
    %v3631 = vpack.c.b16 %v3143, %v3139
    %v3632 = vpack.c.b16 %v3144, %v3140
    %v3633 = vpack.c.b16 %v3149, %v3145
    %v3634 = vpack.c.b16 %v3150, %v3146
    %v3635 = vpack.c.b16 %v3151, %v3147
    %v3636 = vpack.c.b16 %v3152, %v3148
    %v3637 = vpack.c.b16 %v3157, %v3153
    %v3638 = vpack.c.b16 %v3158, %v3154
    %v3639 = vpack.c.b16 %v3159, %v3155
    %v3640 = vpack.c.b16 %v3160, %v3156
    %v3641 = vpack.c.b16 %v3165, %v3161
    %v3642 = vpack.c.b16 %v3166, %v3162
    %v3643 = vpack.c.b16 %v3167, %v3163
    %v3644 = vpack.c.b16 %v3168, %v3164
    %v3645 = vpack.c.b16 %v3173, %v3169
    %v3646 = vpack.c.b16 %v3174, %v3170
    %v3647 = vpack.c.b16 %v3175, %v3171
    %v3648 = vpack.c.b16 %v3176, %v3172
    %v3649 = vpack.c.b16 %v3181, %v3177
    %v3650 = vpack.c.b16 %v3182, %v3178
    %v3651 = vpack.c.b16 %v3183, %v3179
    %v3652 = vpack.c.b16 %v3184, %v3180
    %v3653 = vpack.c.b16 %v3189, %v3185
    %v3654 = vpack.c.b16 %v3190, %v3186
    %v3655 = vpack.c.b16 %v3191, %v3187
    %v3656 = vpack.c.b16 %v3192, %v3188
    %v3657 = vpack.c.b16 %v3197, %v3193
    %v3658 = vpack.c.b16 %v3198, %v3194
    %v3659 = vpack.c.b16 %v3199, %v3195
    %v3660 = vpack.c.b16 %v3200, %v3196
    %v3661 = vpack.c.b16 %v3205, %v3201
    %v3662 = vpack.c.b16 %v3206, %v3202
    %v3663 = vpack.c.b16 %v3207, %v3203
    %v3664 = vpack.c.b16 %v3208, %v3204
    %v3665 = vpack.c.b16 %v3213, %v3209
    %v3666 = vpack.c.b16 %v3214, %v3210
    %v3667 = vpack.c.b16 %v3215, %v3211
    %v3668 = vpack.c.b16 %v3216, %v3212
    %v3669 = vpack.c.b16 %v3221, %v3217
    %v3670 = vpack.c.b16 %v3222, %v3218
    %v3671 = vpack.c.b16 %v3223, %v3219
    %v3672 = vpack.c.b16 %v3224, %v3220
    %v3673 = vpack.c.b16 %v3229, %v3225
    %v3674 = vpack.c.b16 %v3230, %v3226
    %v3675 = vpack.c.b16 %v3231, %v3227
    %v3676 = vpack.c.b16 %v3232, %v3228
    %v3677 = vpack.c.b16 %v3237, %v3233
    %v3678 = vpack.c.b16 %v3238, %v3234
    %v3679 = vpack.c.b16 %v3239, %v3235
    %v3680 = vpack.c.b16 %v3240, %v3236
    %v3681 = vpack.c.b16 %v3245, %v3241
    %v3682 = vpack.c.b16 %v3246, %v3242
    %v3683 = vpack.c.b16 %v3247, %v3243
    %v3684 = vpack.c.b16 %v3248, %v3244
    %v3685 = vpack.c.b16 %v3253, %v3249
    %v3686 = vpack.c.b16 %v3254, %v3250
    %v3687 = vpack.c.b16 %v3255, %v3251
    %v3688 = vpack.c.b16 %v3256, %v3252
    %v3689 = vpack.c.b16 %v3261, %v3257
    %v3690 = vpack.c.b16 %v3262, %v3258
    %v3691 = vpack.c.b16 %v3263, %v3259
    %v3692 = vpack.c.b16 %v3264, %v3260
    %v3693 = vpack.c.b16 %v3269, %v3265
    %v3694 = vpack.c.b16 %v3270, %v3266
    %v3695 = vpack.c.b16 %v3271, %v3267
    %v3696 = vpack.c.b16 %v3272, %v3268
    %v3697 = vpack.c.b16 %v3277, %v3273
    %v3698 = vpack.c.b16 %v3278, %v3274
    %v3699 = vpack.c.b16 %v3279, %v3275
    %v3700 = vpack.c.b16 %v3280, %v3276
    %v3701 = vpack.c.b16 %v3285, %v3281
    %v3702 = vpack.c.b16 %v3286, %v3282
    %v3703 = vpack.c.b16 %v3287, %v3283
    %v3704 = vpack.c.b16 %v3288, %v3284
    %v3705 = vpack.c.b16 %v3293, %v3289
    %v3706 = vpack.c.b16 %v3294, %v3290
    %v3707 = vpack.c.b16 %v3295, %v3291
    %v3708 = vpack.c.b16 %v3296, %v3292
    %v3709 = vpack.c.b16 %v3301, %v3297
    %v3710 = vpack.c.b16 %v3302, %v3298
    %v3711 = vpack.c.b16 %v3303, %v3299
    %v3712 = vpack.c.b16 %v3304, %v3300
    %v3713 = vpack.c.b16 %v3309, %v3305
    %v3714 = vpack.c.b16 %v3310, %v3306
    %v3715 = vpack.c.b16 %v3311, %v3307
    %v3716 = vpack.c.b16 %v3312, %v3308
    %v3717 = vpack.c.b16 %v3317, %v3313
    %v3718 = vpack.c.b16 %v3318, %v3314
    %v3719 = vpack.c.b16 %v3319, %v3315
    %v3720 = vpack.c.b16 %v3320, %v3316
    %v3721 = vpack.c.b16 %v3325, %v3321
    %v3722 = vpack.c.b16 %v3326, %v3322
    %v3723 = vpack.c.b16 %v3327, %v3323
    %v3724 = vpack.c.b16 %v3328, %v3324
    %v3725 = vpack.c.b16 %v3333, %v3329
    %v3726 = vpack.c.b16 %v3334, %v3330
    %v3727 = vpack.c.b16 %v3335, %v3331
    %v3728 = vpack.c.b16 %v3336, %v3332
    %v3729 = vpack.c.b16 %v3341, %v3337
    %v3730 = vpack.c.b16 %v3342, %v3338
    %v3731 = vpack.c.b16 %v3343, %v3339
    %v3732 = vpack.c.b16 %v3344, %v3340
    %v3733 = vpack.c.b16 %v3349, %v3345
    %v3734 = vpack.c.b16 %v3350, %v3346
    %v3735 = vpack.c.b16 %v3351, %v3347
    %v3736 = vpack.c.b16 %v3352, %v3348
    %v3737 = vpack.c.b16 %v3357, %v3353
    %v3738 = vpack.c.b16 %v3358, %v3354
    %v3739 = vpack.c.b16 %v3359, %v3355
    %v3740 = vpack.c.b16 %v3360, %v3356
    %v3741 = vpack.c.b16 %v3365, %v3361
    %v3742 = vpack.c.b16 %v3366, %v3362
    %v3743 = vpack.c.b16 %v3367, %v3363
    %v3744 = vpack.c.b16 %v3368, %v3364
    %v3745 = vpack.c.b16 %v3373, %v3369
    %v3746 = vpack.c.b16 %v3374, %v3370
    %v3747 = vpack.c.b16 %v3375, %v3371
    %v3748 = vpack.c.b16 %v3376, %v3372
    %v3749 = vpack.c.b16 %v3381, %v3377
    %v3750 = vpack.c.b16 %v3382, %v3378
    %v3751 = vpack.c.b16 %v3383, %v3379
    %v3752 = vpack.c.b16 %v3384, %v3380
    %v3753 = vpack.c.b16 %v3389, %v3385
    %v3754 = vpack.c.b16 %v3390, %v3386
    %v3755 = vpack.c.b16 %v3391, %v3387
    %v3756 = vpack.c.b16 %v3392, %v3388
    %v3757 = vpack.c.b16 %v3397, %v3393
    %v3758 = vpack.c.b16 %v3398, %v3394
    %v3759 = vpack.c.b16 %v3399, %v3395
    %v3760 = vpack.c.b16 %v3400, %v3396
    %v3761 = vpack.c.b16 %v3405, %v3401
    %v3762 = vpack.c.b16 %v3406, %v3402
    %v3763 = vpack.c.b16 %v3407, %v3403
    %v3764 = vpack.c.b16 %v3408, %v3404
    %v3765 = vpack.c.b16 %v3413, %v3409
    %v3766 = vpack.c.b16 %v3414, %v3410
    %v3767 = vpack.c.b16 %v3415, %v3411
    %v3768 = vpack.c.b16 %v3416, %v3412
    %v3769 = vpack.c.b16 %v3421, %v3417
    %v3770 = vpack.c.b16 %v3422, %v3418
    %v3771 = vpack.c.b16 %v3423, %v3419
    %v3772 = vpack.c.b16 %v3424, %v3420
    %v3773 = vpack.c.b16 %v3429, %v3425
    %v3774 = vpack.c.b16 %v3430, %v3426
    %v3775 = vpack.c.b16 %v3431, %v3427
    %v3776 = vpack.c.b16 %v3432, %v3428
    %v3777 = vpack.c.b16 %v3437, %v3433
    %v3778 = vpack.c.b16 %v3438, %v3434
    %v3779 = vpack.c.b16 %v3439, %v3435
    %v3780 = vpack.c.b16 %v3440, %v3436
    %v3781 = vpack.c.b16 %v3445, %v3441
    %v3782 = vpack.c.b16 %v3446, %v3442
    %v3783 = vpack.c.b16 %v3447, %v3443
    %v3784 = vpack.c.b16 %v3448, %v3444
    %v3785 = vpack.c.b16 %v3453, %v3449
    %v3786 = vpack.c.b16 %v3454, %v3450
    %v3787 = vpack.c.b16 %v3455, %v3451
    %v3788 = vpack.c.b16 %v3456, %v3452
    %v3789 = vpack.c.b16 %v3461, %v3457
    %v3790 = vpack.c.b16 %v3462, %v3458
    %v3791 = vpack.c.b16 %v3463, %v3459
    %v3792 = vpack.c.b16 %v3464, %v3460
    %v3793 = vpack.c.b16 %v3469, %v3465
    %v3794 = vpack.c.b16 %v3470, %v3466
    %v3795 = vpack.c.b16 %v3471, %v3467
    %v3796 = vpack.c.b16 %v3472, %v3468
    %v3797 = vpack.c.b16 %v3477, %v3473
    %v3798 = vpack.c.b16 %v3478, %v3474
    %v3799 = vpack.c.b16 %v3479, %v3475
    %v3800 = vpack.c.b16 %v3480, %v3476
    %v3801 = vpack.c.b16 %v3485, %v3481
    %v3802 = vpack.c.b16 %v3486, %v3482
    %v3803 = vpack.c.b16 %v3487, %v3483
    %v3804 = vpack.c.b16 %v3488, %v3484
    %v3805 = vpack.c.b16 %v3493, %v3489
    %v3806 = vpack.c.b16 %v3494, %v3490
    %v3807 = vpack.c.b16 %v3495, %v3491
    %v3808 = vpack.c.b16 %v3496, %v3492
    %v3809 = vpack.c.b16 %v3501, %v3497
    %v3810 = vpack.c.b16 %v3502, %v3498
    %v3811 = vpack.c.b16 %v3503, %v3499
    %v3812 = vpack.c.b16 %v3504, %v3500
    %v3813 = vpack.c.b16 %v3509, %v3505
    %v3814 = vpack.c.b16 %v3510, %v3506
    %v3815 = vpack.c.b16 %v3511, %v3507
    %v3816 = vpack.c.b16 %v3512, %v3508
    %v3817 = vpack.c.b16 %v3517, %v3513
    %v3818 = vpack.c.b16 %v3518, %v3514
    %v3819 = vpack.c.b16 %v3519, %v3515
    %v3820 = vpack.c.b16 %v3520, %v3516
    %v3821 = vpack.c.b16 %v3525, %v3521
    %v3822 = vpack.c.b16 %v3526, %v3522
    %v3823 = vpack.c.b16 %v3527, %v3523
    %v3824 = vpack.c.b16 %v3528, %v3524
    %v3825 = vpack.c.b16 %v3533, %v3529
    %v3826 = vpack.c.b16 %v3534, %v3530
    %v3827 = vpack.c.b16 %v3535, %v3531
    %v3828 = vpack.c.b16 %v3536, %v3532
    %v3829 = vpack.c.b16 %v3541, %v3537
    %v3830 = vpack.c.b16 %v3542, %v3538
    %v3831 = vpack.c.b16 %v3543, %v3539
    %v3832 = vpack.c.b16 %v3544, %v3540
    %v3833 = vpack.c.b16 %v3549, %v3545
    %v3834 = vpack.c.b16 %v3550, %v3546
    %v3835 = vpack.c.b16 %v3551, %v3547
    %v3836 = vpack.c.b16 %v3552, %v3548
    %v3837 = vpack.c.b16 %v3557, %v3553
    %v3838 = vpack.c.b16 %v3558, %v3554
    %v3839 = vpack.c.b16 %v3559, %v3555
    %v3840 = vpack.c.b16 %v3560, %v3556
    %v3841 = vpack.c.b16 %v3565, %v3561
    %v3842 = vpack.c.b16 %v3566, %v3562
    %v3843 = vpack.c.b16 %v3567, %v3563
    %v3844 = vpack.c.b16 %v3568, %v3564
    %v3845 = vpack.c.b16 %v3573, %v3569
    %v3846 = vpack.c.b16 %v3574, %v3570
    %v3847 = vpack.c.b16 %v3575, %v3571
    %v3848 = vpack.c.b16 %v3576, %v3572
    %v3849 = vpack.c.b16 %v3581, %v3577
    %v3850 = vpack.c.b16 %v3582, %v3578
    %v3851 = vpack.c.b16 %v3583, %v3579
    %v3852 = vpack.c.b16 %v3584, %v3580
    %v3853 = vpack.c.b16 %v3589, %v3585
    %v3854 = vpack.c.b16 %v3590, %v3586
    %v3855 = vpack.c.b16 %v3591, %v3587
    %v3856 = vpack.c.b16 %v3592, %v3588
    %v3857 = vpack.c.b16 %v3597, %v3593
    %v3858 = vpack.c.b16 %v3598, %v3594
    %v3859 = vpack.c.b16 %v3599, %v3595
    %v3860 = vpack.c.b16 %v3600, %v3596
    %v3861 = vpack.c.b16 %v3605, %v3601
    %v3862 = vpack.c.b16 %v3606, %v3602
    %v3863 = vpack.c.b16 %v3607, %v3603
    %v3864 = vpack.c.b16 %v3608, %v3604
    %4121 = vmatprep.subr.bf16.mxu0 %v3610
    %4122 = vmatpush1.bf16.msra.mxu0 %v3609
    %4123 = vmatprep.subr.bf16.mxu0 %v3614
    %4124 = vmatpush1.bf16.msra.mxu0 %v3613
    %4125 = vmatprep.subr.bf16.mxu0 %v3618
    %4126 = vmatpush1.bf16.msra.mxu0 %v3617
    %4127 = vmatprep.subr.bf16.mxu0 %v3622
    %4128 = vmatpush1.bf16.msra.mxu0 %v3621
    %4129 = vmatprep.subr.bf16.mxu0 %v3626
    %4130 = vmatpush1.bf16.msra.mxu0 %v3625
    %4131 = vmatprep.subr.bf16.mxu0 %v3630
    %4132 = vmatpush1.bf16.msra.mxu0 %v3629
    %4133 = vmatprep.subr.bf16.mxu0 %v3634
    %4134 = vmatpush1.bf16.msra.mxu0 %v3633
    %4135 = vmatprep.subr.bf16.mxu0 %v3638
    %4136 = vmatpush1.bf16.msra.mxu0 %v3637
    %4137 = vmatprep.subr.bf16.mxu0 %v3642
    %4138 = vmatpush1.bf16.msra.mxu0 %v3641
    %4139 = vmatprep.subr.bf16.mxu0 %v3646
    %4140 = vmatpush1.bf16.msra.mxu0 %v3645
    %4141 = vmatprep.subr.bf16.mxu0 %v3650
    %4142 = vmatpush1.bf16.msra.mxu0 %v3649
    %4143 = vmatprep.subr.bf16.mxu0 %v3654
    %4144 = vmatpush1.bf16.msra.mxu0 %v3653
    %4145 = vmatprep.subr.bf16.mxu0 %v3658
    %4146 = vmatpush1.bf16.msra.mxu0 %v3657
    %4147 = vmatprep.subr.bf16.mxu0 %v3662
    %4148 = vmatpush1.bf16.msra.mxu0 %v3661
    %4149 = vmatprep.subr.bf16.mxu0 %v3666
    %4150 = vmatpush1.bf16.msra.mxu0 %v3665
    %4151 = vmatprep.subr.bf16.mxu0 %v3670
    %4152 = vmatpush1.bf16.msra.mxu0 %v3669
    %4153 = vmatprep.mubr.bf16.mxu0 %v2130
    %4154 = vmatmul.mubr.bf16.gmra.mrb[0].mxu0 %v2129
    %v4155 = vpop.f32.mrb[0].mxu0
    %v4156 = vadd.f32 %v2713, %v4155
    %v4157 = vpop.f32.mrb[0].mxu0
    %v4158 = vadd.f32 %v2714, %v4157
    %v4159 = vpop.f32.mrb[0].mxu0
    %v4160 = vadd.f32 %v2717, %v4159
    %v4161 = vpop.f32.mrb[0].mxu0
    %v4162 = vadd.f32 %v2718, %v4161
    %4163 = vmatprep.mubr.bf16.mxu0 %v2138
    %4164 = vmatmul.mubr.bf16.gmra.mrb[0].mxu0 %v2137
    %v4165 = vpop.f32.mrb[0].mxu0
    %v4166 = vadd.f32 %v2721, %v4165
    %v4167 = vpop.f32.mrb[0].mxu0
    %v4168 = vadd.f32 %v2722, %v4167
    %v4169 = vpop.f32.mrb[0].mxu0
    %v4170 = vadd.f32 %v2725, %v4169
    %v4171 = vpop.f32.mrb[0].mxu0
    %v4172 = vadd.f32 %v2726, %v4171
    %4173 = vmatprep.mubr.bf16.mxu0 %v2146
    %4174 = vmatmul.mubr.bf16.gmra.mrb[0].mxu0 %v2145
    %v4175 = vpop.f32.mrb[0].mxu0
    %v4176 = vadd.f32 %v2729, %v4175
    %v4177 = vpop.f32.mrb[0].mxu0
    %v4178 = vadd.f32 %v2730, %v4177
    %v4179 = vpop.f32.mrb[0].mxu0
    %v4180 = vadd.f32 %v2733, %v4179
    %v4181 = vpop.f32.mrb[0].mxu0
    %v4182 = vadd.f32 %v2734, %v4181
    %4183 = vmatprep.mubr.bf16.mxu0 %v2154
    %4184 = vmatmul.mubr.bf16.gmra.mrb[0].mxu0 %v2153
    %v4185 = vpop.f32.mrb[0].mxu0
    %v4186 = vadd.f32 %v2737, %v4185
    %v4187 = vpop.f32.mrb[0].mxu0
    %v4188 = vadd.f32 %v2738, %v4187
    %v4189 = vpop.f32.mrb[0].mxu0
    %v4190 = vadd.f32 %v2741, %v4189
    %v4191 = vpop.f32.mrb[0].mxu0
    %v4192 = vadd.f32 %v2742, %v4191
    %4193 = vmatprep.mubr.bf16.mxu0 %v2162
    %4194 = vmatmul.mubr.bf16.gmra.mrb[0].mxu0 %v2161
    %v4195 = vpop.f32.mrb[0].mxu0
    %v4196 = vadd.f32 %v2745, %v4195
    %v4197 = vpop.f32.mrb[0].mxu0
    %v4198 = vadd.f32 %v2746, %v4197
    %v4199 = vpop.f32.mrb[0].mxu0
    %v4200 = vadd.f32 %v2749, %v4199
    %v4201 = vpop.f32.mrb[0].mxu0
    %v4202 = vadd.f32 %v2750, %v4201
    %4203 = vmatprep.mubr.bf16.mxu0 %v2170
    %4204 = vmatmul.mubr.bf16.gmra.mrb[0].mxu0 %v2169
    %v4205 = vpop.f32.mrb[0].mxu0
    %v4206 = vadd.f32 %v2753, %v4205
    %v4207 = vpop.f32.mrb[0].mxu0
    %v4208 = vadd.f32 %v2754, %v4207
    %v4209 = vpop.f32.mrb[0].mxu0
    %v4210 = vadd.f32 %v2757, %v4209
    %v4211 = vpop.f32.mrb[0].mxu0
    %v4212 = vadd.f32 %v2758, %v4211
    %4213 = vmatprep.mubr.bf16.mxu0 %v2178
    %4214 = vmatmul.mubr.bf16.gmra.mrb[0].mxu0 %v2177
    %v4215 = vpop.f32.mrb[0].mxu0
    %v4216 = vadd.f32 %v2761, %v4215
    %v4217 = vpop.f32.mrb[0].mxu0
    %v4218 = vadd.f32 %v2762, %v4217
    %v4219 = vpop.f32.mrb[0].mxu0
    %v4220 = vadd.f32 %v2765, %v4219
    %v4221 = vpop.f32.mrb[0].mxu0
    %v4222 = vadd.f32 %v2766, %v4221
    %4223 = vmatprep.mubr.bf16.mxu0 %v2186
    %4224 = vmatmul.mubr.bf16.gmra.mrb[0].mxu0 %v2185
    %v4225 = vpop.f32.mrb[0].mxu0
    %v4226 = vadd.f32 %v2769, %v4225
    %v4227 = vpop.f32.mrb[0].mxu0
    %v4228 = vadd.f32 %v2770, %v4227
    %v4229 = vpop.f32.mrb[0].mxu0
    %v4230 = vadd.f32 %v2773, %v4229
    %v4231 = vpop.f32.mrb[0].mxu0
    %v4232 = vadd.f32 %v2774, %v4231
    %4233 = vmatprep.mubr.bf16.mxu0 %v2194
    %4234 = vmatmul.mubr.bf16.gmra.mrb[0].mxu0 %v2193
    %v4235 = vpop.f32.mrb[0].mxu0
    %v4236 = vadd.f32 %v2777, %v4235
    %v4237 = vpop.f32.mrb[0].mxu0
    %v4238 = vadd.f32 %v2778, %v4237
    %v4239 = vpop.f32.mrb[0].mxu0
    %v4240 = vadd.f32 %v2781, %v4239
    %v4241 = vpop.f32.mrb[0].mxu0
    %v4242 = vadd.f32 %v2782, %v4241
    %4243 = vmatprep.mubr.bf16.mxu0 %v2202
    %4244 = vmatmul.mubr.bf16.gmra.mrb[0].mxu0 %v2201
    %v4245 = vpop.f32.mrb[0].mxu0
    %v4246 = vadd.f32 %v2785, %v4245
    %v4247 = vpop.f32.mrb[0].mxu0
    %v4248 = vadd.f32 %v2786, %v4247
    %v4249 = vpop.f32.mrb[0].mxu0
    %v4250 = vadd.f32 %v2789, %v4249
    %v4251 = vpop.f32.mrb[0].mxu0
    %v4252 = vadd.f32 %v2790, %v4251
    %4253 = vmatprep.mubr.bf16.mxu0 %v2210
    %4254 = vmatmul.mubr.bf16.gmra.mrb[0].mxu0 %v2209
    %v4255 = vpop.f32.mrb[0].mxu0
    %v4256 = vadd.f32 %v2793, %v4255
    %v4257 = vpop.f32.mrb[0].mxu0
    %v4258 = vadd.f32 %v2794, %v4257
    %v4259 = vpop.f32.mrb[0].mxu0
    %v4260 = vadd.f32 %v2797, %v4259
    %v4261 = vpop.f32.mrb[0].mxu0
    %v4262 = vadd.f32 %v2798, %v4261
    %4263 = vmatprep.mubr.bf16.mxu0 %v2218
    %4264 = vmatmul.mubr.bf16.gmra.mrb[0].mxu0 %v2217
    %v4265 = vpop.f32.mrb[0].mxu0
    %v4266 = vadd.f32 %v2801, %v4265
    %v4267 = vpop.f32.mrb[0].mxu0
    %v4268 = vadd.f32 %v2802, %v4267
    %v4269 = vpop.f32.mrb[0].mxu0
    %v4270 = vadd.f32 %v2805, %v4269
    %v4271 = vpop.f32.mrb[0].mxu0
    %v4272 = vadd.f32 %v2806, %v4271
    %4273 = vmatprep.mubr.bf16.mxu0 %v2226
    %4274 = vmatmul.mubr.bf16.gmra.mrb[0].mxu0 %v2225
    %v4275 = vpop.f32.mrb[0].mxu0
    %v4276 = vadd.f32 %v2809, %v4275
    %v4277 = vpop.f32.mrb[0].mxu0
    %v4278 = vadd.f32 %v2810, %v4277
    %v4279 = vpop.f32.mrb[0].mxu0
    %v4280 = vadd.f32 %v2813, %v4279
    %v4281 = vpop.f32.mrb[0].mxu0
    %v4282 = vadd.f32 %v2814, %v4281
    %4283 = vmatprep.mubr.bf16.mxu0 %v2234
    %4284 = vmatmul.mubr.bf16.gmra.mrb[0].mxu0 %v2233
    %v4285 = vpop.f32.mrb[0].mxu0
    %v4286 = vadd.f32 %v2817, %v4285
    %v4287 = vpop.f32.mrb[0].mxu0
    %v4288 = vadd.f32 %v2818, %v4287
    %v4289 = vpop.f32.mrb[0].mxu0
    %v4290 = vadd.f32 %v2821, %v4289
    %v4291 = vpop.f32.mrb[0].mxu0
    %v4292 = vadd.f32 %v2822, %v4291
    %4293 = vmatprep.mubr.bf16.mxu0 %v2242
    %4294 = vmatmul.mubr.bf16.gmra.mrb[0].mxu0 %v2241
    %v4295 = vpop.f32.mrb[0].mxu0
    %v4296 = vadd.f32 %v2825, %v4295
    %v4297 = vpop.f32.mrb[0].mxu0
    %v4298 = vadd.f32 %v2826, %v4297
    %v4299 = vpop.f32.mrb[0].mxu0
    %v4300 = vadd.f32 %v2829, %v4299
    %v4301 = vpop.f32.mrb[0].mxu0
    %v4302 = vadd.f32 %v2830, %v4301
    %4303 = vmatprep.mubr.bf16.mxu0 %v2250
    %4304 = vmatmul.mubr.bf16.gmra.mrb[0].mxu0 %v2249
    %v4305 = vpop.f32.mrb[0].mxu0
    %v4306 = vadd.f32 %v2833, %v4305
    %v4307 = vpop.f32.mrb[0].mxu0
    %v4308 = vadd.f32 %v2834, %v4307
    %v4309 = vpop.f32.mrb[0].mxu0
    %v4310 = vadd.f32 %v2837, %v4309
    %v4311 = vpop.f32.mrb[0].mxu0
    %v4312 = vadd.f32 %v2838, %v4311
    %4313 = vdwg.mxu0
    %4314 = vmatprep.subr.bf16.mxu0 %v3674
    %4315 = vmatpush1.bf16.msra.mxu0 %v3673
    %4316 = vmatprep.subr.bf16.mxu0 %v3678
    %4317 = vmatpush1.bf16.msra.mxu0 %v3677
    %4318 = vmatprep.subr.bf16.mxu0 %v3682
    %4319 = vmatpush1.bf16.msra.mxu0 %v3681
    %4320 = vmatprep.subr.bf16.mxu0 %v3686
    %4321 = vmatpush1.bf16.msra.mxu0 %v3685
    %4322 = vmatprep.subr.bf16.mxu0 %v3690
    %4323 = vmatpush1.bf16.msra.mxu0 %v3689
    %4324 = vmatprep.subr.bf16.mxu0 %v3694
    %4325 = vmatpush1.bf16.msra.mxu0 %v3693
    %4326 = vmatprep.subr.bf16.mxu0 %v3698
    %4327 = vmatpush1.bf16.msra.mxu0 %v3697
    %4328 = vmatprep.subr.bf16.mxu0 %v3702
    %4329 = vmatpush1.bf16.msra.mxu0 %v3701
    %4330 = vmatprep.subr.bf16.mxu0 %v3706
    %4331 = vmatpush1.bf16.msra.mxu0 %v3705
    %4332 = vmatprep.subr.bf16.mxu0 %v3710
    %4333 = vmatpush1.bf16.msra.mxu0 %v3709
    %4334 = vmatprep.subr.bf16.mxu0 %v3714
    %4335 = vmatpush1.bf16.msra.mxu0 %v3713
    %4336 = vmatprep.subr.bf16.mxu0 %v3718
    %4337 = vmatpush1.bf16.msra.mxu0 %v3717
    %4338 = vmatprep.subr.bf16.mxu0 %v3722
    %4339 = vmatpush1.bf16.msra.mxu0 %v3721
    %4340 = vmatprep.subr.bf16.mxu0 %v3726
    %4341 = vmatpush1.bf16.msra.mxu0 %v3725
    %4342 = vmatprep.subr.bf16.mxu0 %v3730
    %4343 = vmatpush1.bf16.msra.mxu0 %v3729
    %4344 = vmatprep.subr.bf16.mxu0 %v3734
    %4345 = vmatpush1.bf16.msra.mxu0 %v3733
    %4346 = vmatprep.mubr.bf16.mxu0 %v2132
    %4347 = vmatmul.mubr.bf16.gmra.mrb[0].mxu0 %v2131
    %v4348 = vpop.f32.mrb[0].mxu0
    %v4349 = vadd.f32 %v4156, %v4348
    %v4350 = vpop.f32.mrb[0].mxu0
    %v4351 = vadd.f32 %v4158, %v4350
    %v4352 = vpop.f32.mrb[0].mxu0
    %v4353 = vadd.f32 %v4160, %v4352
    %v4354 = vpop.f32.mrb[0].mxu0
    %v4355 = vadd.f32 %v4162, %v4354
    %4356 = vmatprep.mubr.bf16.mxu0 %v2140
    %4357 = vmatmul.mubr.bf16.gmra.mrb[0].mxu0 %v2139
    %v4358 = vpop.f32.mrb[0].mxu0
    %v4359 = vadd.f32 %v4166, %v4358
    %v4360 = vpop.f32.mrb[0].mxu0
    %v4361 = vadd.f32 %v4168, %v4360
    %v4362 = vpop.f32.mrb[0].mxu0
    %v4363 = vadd.f32 %v4170, %v4362
    %v4364 = vpop.f32.mrb[0].mxu0
    %v4365 = vadd.f32 %v4172, %v4364
    %4366 = vmatprep.mubr.bf16.mxu0 %v2148
    %4367 = vmatmul.mubr.bf16.gmra.mrb[0].mxu0 %v2147
    %v4368 = vpop.f32.mrb[0].mxu0
    %v4369 = vadd.f32 %v4176, %v4368
    %v4370 = vpop.f32.mrb[0].mxu0
    %v4371 = vadd.f32 %v4178, %v4370
    %v4372 = vpop.f32.mrb[0].mxu0
    %v4373 = vadd.f32 %v4180, %v4372
    %v4374 = vpop.f32.mrb[0].mxu0
    %v4375 = vadd.f32 %v4182, %v4374
    %4376 = vmatprep.mubr.bf16.mxu0 %v2156
    %4377 = vmatmul.mubr.bf16.gmra.mrb[0].mxu0 %v2155
    %v4378 = vpop.f32.mrb[0].mxu0
    %v4379 = vadd.f32 %v4186, %v4378
    %v4380 = vpop.f32.mrb[0].mxu0
    %v4381 = vadd.f32 %v4188, %v4380
    %v4382 = vpop.f32.mrb[0].mxu0
    %v4383 = vadd.f32 %v4190, %v4382
    %v4384 = vpop.f32.mrb[0].mxu0
    %v4385 = vadd.f32 %v4192, %v4384
    %4386 = vmatprep.mubr.bf16.mxu0 %v2164
    %4387 = vmatmul.mubr.bf16.gmra.mrb[0].mxu0 %v2163
    %v4388 = vpop.f32.mrb[0].mxu0
    %v4389 = vadd.f32 %v4196, %v4388
    %v4390 = vpop.f32.mrb[0].mxu0
    %v4391 = vadd.f32 %v4198, %v4390
    %v4392 = vpop.f32.mrb[0].mxu0
    %v4393 = vadd.f32 %v4200, %v4392
    %v4394 = vpop.f32.mrb[0].mxu0
    %v4395 = vadd.f32 %v4202, %v4394
    %4396 = vmatprep.mubr.bf16.mxu0 %v2172
    %4397 = vmatmul.mubr.bf16.gmra.mrb[0].mxu0 %v2171
    %v4398 = vpop.f32.mrb[0].mxu0
    %v4399 = vadd.f32 %v4206, %v4398
    %v4400 = vpop.f32.mrb[0].mxu0
    %v4401 = vadd.f32 %v4208, %v4400
    %v4402 = vpop.f32.mrb[0].mxu0
    %v4403 = vadd.f32 %v4210, %v4402
    %v4404 = vpop.f32.mrb[0].mxu0
    %v4405 = vadd.f32 %v4212, %v4404
    %4406 = vmatprep.mubr.bf16.mxu0 %v2180
    %4407 = vmatmul.mubr.bf16.gmra.mrb[0].mxu0 %v2179
    %v4408 = vpop.f32.mrb[0].mxu0
    %v4409 = vadd.f32 %v4216, %v4408
    %v4410 = vpop.f32.mrb[0].mxu0
    %v4411 = vadd.f32 %v4218, %v4410
    %v4412 = vpop.f32.mrb[0].mxu0
    %v4413 = vadd.f32 %v4220, %v4412
    %v4414 = vpop.f32.mrb[0].mxu0
    %v4415 = vadd.f32 %v4222, %v4414
    %4416 = vmatprep.mubr.bf16.mxu0 %v2188
    %4417 = vmatmul.mubr.bf16.gmra.mrb[0].mxu0 %v2187
    %v4418 = vpop.f32.mrb[0].mxu0
    %v4419 = vadd.f32 %v4226, %v4418
    %v4420 = vpop.f32.mrb[0].mxu0
    %v4421 = vadd.f32 %v4228, %v4420
    %v4422 = vpop.f32.mrb[0].mxu0
    %v4423 = vadd.f32 %v4230, %v4422
    %v4424 = vpop.f32.mrb[0].mxu0
    %v4425 = vadd.f32 %v4232, %v4424
    %4426 = vmatprep.mubr.bf16.mxu0 %v2196
    %4427 = vmatmul.mubr.bf16.gmra.mrb[0].mxu0 %v2195
    %v4428 = vpop.f32.mrb[0].mxu0
    %v4429 = vadd.f32 %v4236, %v4428
    %v4430 = vpop.f32.mrb[0].mxu0
    %v4431 = vadd.f32 %v4238, %v4430
    %v4432 = vpop.f32.mrb[0].mxu0
    %v4433 = vadd.f32 %v4240, %v4432
    %v4434 = vpop.f32.mrb[0].mxu0
    %v4435 = vadd.f32 %v4242, %v4434
    %4436 = vmatprep.mubr.bf16.mxu0 %v2204
    %4437 = vmatmul.mubr.bf16.gmra.mrb[0].mxu0 %v2203
    %v4438 = vpop.f32.mrb[0].mxu0
    %v4439 = vadd.f32 %v4246, %v4438
    %v4440 = vpop.f32.mrb[0].mxu0
    %v4441 = vadd.f32 %v4248, %v4440
    %v4442 = vpop.f32.mrb[0].mxu0
    %v4443 = vadd.f32 %v4250, %v4442
    %v4444 = vpop.f32.mrb[0].mxu0
    %v4445 = vadd.f32 %v4252, %v4444
    %4446 = vmatprep.mubr.bf16.mxu0 %v2212
    %4447 = vmatmul.mubr.bf16.gmra.mrb[0].mxu0 %v2211
    %v4448 = vpop.f32.mrb[0].mxu0
    %v4449 = vadd.f32 %v4256, %v4448
    %v4450 = vpop.f32.mrb[0].mxu0
    %v4451 = vadd.f32 %v4258, %v4450
    %v4452 = vpop.f32.mrb[0].mxu0
    %v4453 = vadd.f32 %v4260, %v4452
    %v4454 = vpop.f32.mrb[0].mxu0
    %v4455 = vadd.f32 %v4262, %v4454
    %4456 = vmatprep.mubr.bf16.mxu0 %v2220
    %4457 = vmatmul.mubr.bf16.gmra.mrb[0].mxu0 %v2219
    %v4458 = vpop.f32.mrb[0].mxu0
    %v4459 = vadd.f32 %v4266, %v4458
    %v4460 = vpop.f32.mrb[0].mxu0
    %v4461 = vadd.f32 %v4268, %v4460
    %v4462 = vpop.f32.mrb[0].mxu0
    %v4463 = vadd.f32 %v4270, %v4462
    %v4464 = vpop.f32.mrb[0].mxu0
    %v4465 = vadd.f32 %v4272, %v4464
    %4466 = vmatprep.mubr.bf16.mxu0 %v2228
    %4467 = vmatmul.mubr.bf16.gmra.mrb[0].mxu0 %v2227
    %v4468 = vpop.f32.mrb[0].mxu0
    %v4469 = vadd.f32 %v4276, %v4468
    %v4470 = vpop.f32.mrb[0].mxu0
    %v4471 = vadd.f32 %v4278, %v4470
    %v4472 = vpop.f32.mrb[0].mxu0
    %v4473 = vadd.f32 %v4280, %v4472
    %v4474 = vpop.f32.mrb[0].mxu0
    %v4475 = vadd.f32 %v4282, %v4474
    %4476 = vmatprep.mubr.bf16.mxu0 %v2236
    %4477 = vmatmul.mubr.bf16.gmra.mrb[0].mxu0 %v2235
    %v4478 = vpop.f32.mrb[0].mxu0
    %v4479 = vadd.f32 %v4286, %v4478
    %v4480 = vpop.f32.mrb[0].mxu0
    %v4481 = vadd.f32 %v4288, %v4480
    %v4482 = vpop.f32.mrb[0].mxu0
    %v4483 = vadd.f32 %v4290, %v4482
    %v4484 = vpop.f32.mrb[0].mxu0
    %v4485 = vadd.f32 %v4292, %v4484
    %4486 = vmatprep.mubr.bf16.mxu0 %v2244
    %4487 = vmatmul.mubr.bf16.gmra.mrb[0].mxu0 %v2243
    %v4488 = vpop.f32.mrb[0].mxu0
    %v4489 = vadd.f32 %v4296, %v4488
    %v4490 = vpop.f32.mrb[0].mxu0
    %v4491 = vadd.f32 %v4298, %v4490
    %v4492 = vpop.f32.mrb[0].mxu0
    %v4493 = vadd.f32 %v4300, %v4492
    %v4494 = vpop.f32.mrb[0].mxu0
    %v4495 = vadd.f32 %v4302, %v4494
    %4496 = vmatprep.mubr.bf16.mxu0 %v2252
    %4497 = vmatmul.mubr.bf16.gmra.mrb[0].mxu0 %v2251
    %v4498 = vpop.f32.mrb[0].mxu0
    %v4499 = vadd.f32 %v4306, %v4498
    %v4500 = vpop.f32.mrb[0].mxu0
    %v4501 = vadd.f32 %v4308, %v4500
    %v4502 = vpop.f32.mrb[0].mxu0
    %v4503 = vadd.f32 %v4310, %v4502
    %v4504 = vpop.f32.mrb[0].mxu0
    %v4505 = vadd.f32 %v4312, %v4504
    %4506 = vdwg.mxu0
    %4507 = vmatprep.subr.bf16.mxu0 %v3738
    %4508 = vmatpush1.bf16.msra.mxu0 %v3737
    %4509 = vmatprep.subr.bf16.mxu0 %v3742
    %4510 = vmatpush1.bf16.msra.mxu0 %v3741
    %4511 = vmatprep.subr.bf16.mxu0 %v3746
    %4512 = vmatpush1.bf16.msra.mxu0 %v3745
    %4513 = vmatprep.subr.bf16.mxu0 %v3750
    %4514 = vmatpush1.bf16.msra.mxu0 %v3749
    %4515 = vmatprep.subr.bf16.mxu0 %v3754
    %4516 = vmatpush1.bf16.msra.mxu0 %v3753
    %4517 = vmatprep.subr.bf16.mxu0 %v3758
    %4518 = vmatpush1.bf16.msra.mxu0 %v3757
    %4519 = vmatprep.subr.bf16.mxu0 %v3762
    %4520 = vmatpush1.bf16.msra.mxu0 %v3761
    %4521 = vmatprep.subr.bf16.mxu0 %v3766
    %4522 = vmatpush1.bf16.msra.mxu0 %v3765
    %4523 = vmatprep.subr.bf16.mxu0 %v3770
    %4524 = vmatpush1.bf16.msra.mxu0 %v3769
    %4525 = vmatprep.subr.bf16.mxu0 %v3774
    %4526 = vmatpush1.bf16.msra.mxu0 %v3773
    %4527 = vmatprep.subr.bf16.mxu0 %v3778
    %4528 = vmatpush1.bf16.msra.mxu0 %v3777
    %4529 = vmatprep.subr.bf16.mxu0 %v3782
    %4530 = vmatpush1.bf16.msra.mxu0 %v3781
    %4531 = vmatprep.subr.bf16.mxu0 %v3786
    %4532 = vmatpush1.bf16.msra.mxu0 %v3785
    %4533 = vmatprep.subr.bf16.mxu0 %v3790
    %4534 = vmatpush1.bf16.msra.mxu0 %v3789
    %4535 = vmatprep.subr.bf16.mxu0 %v3794
    %4536 = vmatpush1.bf16.msra.mxu0 %v3793
    %4537 = vmatprep.subr.bf16.mxu0 %v3798
    %4538 = vmatpush1.bf16.msra.mxu0 %v3797
    %4539 = vmatprep.mubr.bf16.mxu0 %v2134
    %4540 = vmatmul.mubr.bf16.gmra.mrb[0].mxu0 %v2133
    %v4541 = vpop.f32.mrb[0].mxu0
    %v4542 = vadd.f32 %v4349, %v4541
    %v4543 = vpop.f32.mrb[0].mxu0
    %v4544 = vadd.f32 %v4351, %v4543
    %v4545 = vpop.f32.mrb[0].mxu0
    %v4546 = vadd.f32 %v4353, %v4545
    %v4547 = vpop.f32.mrb[0].mxu0
    %v4548 = vadd.f32 %v4355, %v4547
    %4549 = vmatprep.mubr.bf16.mxu0 %v2142
    %4550 = vmatmul.mubr.bf16.gmra.mrb[0].mxu0 %v2141
    %v4551 = vpop.f32.mrb[0].mxu0
    %v4552 = vadd.f32 %v4359, %v4551
    %v4553 = vpop.f32.mrb[0].mxu0
    %v4554 = vadd.f32 %v4361, %v4553
    %v4555 = vpop.f32.mrb[0].mxu0
    %v4556 = vadd.f32 %v4363, %v4555
    %v4557 = vpop.f32.mrb[0].mxu0
    %v4558 = vadd.f32 %v4365, %v4557
    %4559 = vmatprep.mubr.bf16.mxu0 %v2150
    %4560 = vmatmul.mubr.bf16.gmra.mrb[0].mxu0 %v2149
    %v4561 = vpop.f32.mrb[0].mxu0
    %v4562 = vadd.f32 %v4369, %v4561
    %v4563 = vpop.f32.mrb[0].mxu0
    %v4564 = vadd.f32 %v4371, %v4563
    %v4565 = vpop.f32.mrb[0].mxu0
    %v4566 = vadd.f32 %v4373, %v4565
    %v4567 = vpop.f32.mrb[0].mxu0
    %v4568 = vadd.f32 %v4375, %v4567
    %4569 = vmatprep.mubr.bf16.mxu0 %v2158
    %4570 = vmatmul.mubr.bf16.gmra.mrb[0].mxu0 %v2157
    %v4571 = vpop.f32.mrb[0].mxu0
    %v4572 = vadd.f32 %v4379, %v4571
    %v4573 = vpop.f32.mrb[0].mxu0
    %v4574 = vadd.f32 %v4381, %v4573
    %v4575 = vpop.f32.mrb[0].mxu0
    %v4576 = vadd.f32 %v4383, %v4575
    %v4577 = vpop.f32.mrb[0].mxu0
    %v4578 = vadd.f32 %v4385, %v4577
    %4579 = vmatprep.mubr.bf16.mxu0 %v2166
    %4580 = vmatmul.mubr.bf16.gmra.mrb[0].mxu0 %v2165
    %v4581 = vpop.f32.mrb[0].mxu0
    %v4582 = vadd.f32 %v4389, %v4581
    %v4583 = vpop.f32.mrb[0].mxu0
    %v4584 = vadd.f32 %v4391, %v4583
    %v4585 = vpop.f32.mrb[0].mxu0
    %v4586 = vadd.f32 %v4393, %v4585
    %v4587 = vpop.f32.mrb[0].mxu0
    %v4588 = vadd.f32 %v4395, %v4587
    %4589 = vmatprep.mubr.bf16.mxu0 %v2174
    %4590 = vmatmul.mubr.bf16.gmra.mrb[0].mxu0 %v2173
    %v4591 = vpop.f32.mrb[0].mxu0
    %v4592 = vadd.f32 %v4399, %v4591
    %v4593 = vpop.f32.mrb[0].mxu0
    %v4594 = vadd.f32 %v4401, %v4593
    %v4595 = vpop.f32.mrb[0].mxu0
    %v4596 = vadd.f32 %v4403, %v4595
    %v4597 = vpop.f32.mrb[0].mxu0
    %v4598 = vadd.f32 %v4405, %v4597
    %4599 = vmatprep.mubr.bf16.mxu0 %v2182
    %4600 = vmatmul.mubr.bf16.gmra.mrb[0].mxu0 %v2181
    %v4601 = vpop.f32.mrb[0].mxu0
    %v4602 = vadd.f32 %v4409, %v4601
    %v4603 = vpop.f32.mrb[0].mxu0
    %v4604 = vadd.f32 %v4411, %v4603
    %v4605 = vpop.f32.mrb[0].mxu0
    %v4606 = vadd.f32 %v4413, %v4605
    %v4607 = vpop.f32.mrb[0].mxu0
    %v4608 = vadd.f32 %v4415, %v4607
    %4609 = vmatprep.mubr.bf16.mxu0 %v2190
    %4610 = vmatmul.mubr.bf16.gmra.mrb[0].mxu0 %v2189
    %v4611 = vpop.f32.mrb[0].mxu0
    %v4612 = vadd.f32 %v4419, %v4611
    %v4613 = vpop.f32.mrb[0].mxu0
    %v4614 = vadd.f32 %v4421, %v4613
    %v4615 = vpop.f32.mrb[0].mxu0
    %v4616 = vadd.f32 %v4423, %v4615
    %v4617 = vpop.f32.mrb[0].mxu0
    %v4618 = vadd.f32 %v4425, %v4617
    %4619 = vmatprep.mubr.bf16.mxu0 %v2198
    %4620 = vmatmul.mubr.bf16.gmra.mrb[0].mxu0 %v2197
    %v4621 = vpop.f32.mrb[0].mxu0
    %v4622 = vadd.f32 %v4429, %v4621
    %v4623 = vpop.f32.mrb[0].mxu0
    %v4624 = vadd.f32 %v4431, %v4623
    %v4625 = vpop.f32.mrb[0].mxu0
    %v4626 = vadd.f32 %v4433, %v4625
    %v4627 = vpop.f32.mrb[0].mxu0
    %v4628 = vadd.f32 %v4435, %v4627
    %4629 = vmatprep.mubr.bf16.mxu0 %v2206
    %4630 = vmatmul.mubr.bf16.gmra.mrb[0].mxu0 %v2205
    %v4631 = vpop.f32.mrb[0].mxu0
    %v4632 = vadd.f32 %v4439, %v4631
    %v4633 = vpop.f32.mrb[0].mxu0
    %v4634 = vadd.f32 %v4441, %v4633
    %v4635 = vpop.f32.mrb[0].mxu0
    %v4636 = vadd.f32 %v4443, %v4635
    %v4637 = vpop.f32.mrb[0].mxu0
    %v4638 = vadd.f32 %v4445, %v4637
    %4639 = vmatprep.mubr.bf16.mxu0 %v2214
    %4640 = vmatmul.mubr.bf16.gmra.mrb[0].mxu0 %v2213
    %v4641 = vpop.f32.mrb[0].mxu0
    %v4642 = vadd.f32 %v4449, %v4641
    %v4643 = vpop.f32.mrb[0].mxu0
    %v4644 = vadd.f32 %v4451, %v4643
    %v4645 = vpop.f32.mrb[0].mxu0
    %v4646 = vadd.f32 %v4453, %v4645
    %v4647 = vpop.f32.mrb[0].mxu0
    %v4648 = vadd.f32 %v4455, %v4647
    %4649 = vmatprep.mubr.bf16.mxu0 %v2222
    %4650 = vmatmul.mubr.bf16.gmra.mrb[0].mxu0 %v2221
    %v4651 = vpop.f32.mrb[0].mxu0
    %v4652 = vadd.f32 %v4459, %v4651
    %v4653 = vpop.f32.mrb[0].mxu0
    %v4654 = vadd.f32 %v4461, %v4653
    %v4655 = vpop.f32.mrb[0].mxu0
    %v4656 = vadd.f32 %v4463, %v4655
    %v4657 = vpop.f32.mrb[0].mxu0
    %v4658 = vadd.f32 %v4465, %v4657
    %4659 = vmatprep.mubr.bf16.mxu0 %v2230
    %4660 = vmatmul.mubr.bf16.gmra.mrb[0].mxu0 %v2229
    %v4661 = vpop.f32.mrb[0].mxu0
    %v4662 = vadd.f32 %v4469, %v4661
    %v4663 = vpop.f32.mrb[0].mxu0
    %v4664 = vadd.f32 %v4471, %v4663
    %v4665 = vpop.f32.mrb[0].mxu0
    %v4666 = vadd.f32 %v4473, %v4665
    %v4667 = vpop.f32.mrb[0].mxu0
    %v4668 = vadd.f32 %v4475, %v4667
    %4669 = vmatprep.mubr.bf16.mxu0 %v2238
    %4670 = vmatmul.mubr.bf16.gmra.mrb[0].mxu0 %v2237
    %v4671 = vpop.f32.mrb[0].mxu0
    %v4672 = vadd.f32 %v4479, %v4671
    %v4673 = vpop.f32.mrb[0].mxu0
    %v4674 = vadd.f32 %v4481, %v4673
    %v4675 = vpop.f32.mrb[0].mxu0
    %v4676 = vadd.f32 %v4483, %v4675
    %v4677 = vpop.f32.mrb[0].mxu0
    %v4678 = vadd.f32 %v4485, %v4677
    %4679 = vmatprep.mubr.bf16.mxu0 %v2246
    %4680 = vmatmul.mubr.bf16.gmra.mrb[0].mxu0 %v2245
    %v4681 = vpop.f32.mrb[0].mxu0
    %v4682 = vadd.f32 %v4489, %v4681
    %v4683 = vpop.f32.mrb[0].mxu0
    %v4684 = vadd.f32 %v4491, %v4683
    %v4685 = vpop.f32.mrb[0].mxu0
    %v4686 = vadd.f32 %v4493, %v4685
    %v4687 = vpop.f32.mrb[0].mxu0
    %v4688 = vadd.f32 %v4495, %v4687
    %4689 = vmatprep.mubr.bf16.mxu0 %v2254
    %4690 = vmatmul.mubr.bf16.gmra.mrb[0].mxu0 %v2253
    %v4691 = vpop.f32.mrb[0].mxu0
    %v4692 = vadd.f32 %v4499, %v4691
    %v4693 = vpop.f32.mrb[0].mxu0
    %v4694 = vadd.f32 %v4501, %v4693
    %v4695 = vpop.f32.mrb[0].mxu0
    %v4696 = vadd.f32 %v4503, %v4695
    %v4697 = vpop.f32.mrb[0].mxu0
    %v4698 = vadd.f32 %v4505, %v4697
    %4699 = vdwg.mxu0
    %4700 = vmatprep.subr.bf16.mxu0 %v3802
    %4701 = vmatpush1.bf16.msra.mxu0 %v3801
    %4702 = vmatprep.subr.bf16.mxu0 %v3806
    %4703 = vmatpush1.bf16.msra.mxu0 %v3805
    %4704 = vmatprep.subr.bf16.mxu0 %v3810
    %4705 = vmatpush1.bf16.msra.mxu0 %v3809
    %4706 = vmatprep.subr.bf16.mxu0 %v3814
    %4707 = vmatpush1.bf16.msra.mxu0 %v3813
    %4708 = vmatprep.subr.bf16.mxu0 %v3818
    %4709 = vmatpush1.bf16.msra.mxu0 %v3817
    %4710 = vmatprep.subr.bf16.mxu0 %v3822
    %4711 = vmatpush1.bf16.msra.mxu0 %v3821
    %4712 = vmatprep.subr.bf16.mxu0 %v3826
    %4713 = vmatpush1.bf16.msra.mxu0 %v3825
    %4714 = vmatprep.subr.bf16.mxu0 %v3830
    %4715 = vmatpush1.bf16.msra.mxu0 %v3829
    %4716 = vmatprep.subr.bf16.mxu0 %v3834
    %4717 = vmatpush1.bf16.msra.mxu0 %v3833
    %4718 = vmatprep.subr.bf16.mxu0 %v3838
    %4719 = vmatpush1.bf16.msra.mxu0 %v3837
    %4720 = vmatprep.subr.bf16.mxu0 %v3842
    %4721 = vmatpush1.bf16.msra.mxu0 %v3841
    %4722 = vmatprep.subr.bf16.mxu0 %v3846
    %4723 = vmatpush1.bf16.msra.mxu0 %v3845
    %4724 = vmatprep.subr.bf16.mxu0 %v3850
    %4725 = vmatpush1.bf16.msra.mxu0 %v3849
    %4726 = vmatprep.subr.bf16.mxu0 %v3854
    %4727 = vmatpush1.bf16.msra.mxu0 %v3853
    %4728 = vmatprep.subr.bf16.mxu0 %v3858
    %4729 = vmatpush1.bf16.msra.mxu0 %v3857
    %4730 = vmatprep.subr.bf16.mxu0 %v3862
    %4731 = vmatpush1.bf16.msra.mxu0 %v3861
    %4732 = vmatprep.mubr.bf16.mxu0 %v2136
    %4733 = vmatmul.mubr.bf16.gmra.mrb[0].mxu0 %v2135
    %v4734 = vpop.f32.mrb[0].mxu0
    %v4735 = vadd.f32 %v4542, %v4734
    %v4736 = vpop.f32.mrb[0].mxu0
    %v4737 = vadd.f32 %v4544, %v4736
    %v4738 = vpop.f32.mrb[0].mxu0
    %v4739 = vadd.f32 %v4546, %v4738
    %v4740 = vpop.f32.mrb[0].mxu0
    %v4741 = vadd.f32 %v4548, %v4740
    %4742 = vmatprep.mubr.bf16.mxu0 %v2144
    %4743 = vmatmul.mubr.bf16.gmra.mrb[0].mxu0 %v2143
    %v4744 = vpop.f32.mrb[0].mxu0
    %v4745 = vadd.f32 %v4552, %v4744
    %v4746 = vpop.f32.mrb[0].mxu0
    %v4747 = vadd.f32 %v4554, %v4746
    %v4748 = vpop.f32.mrb[0].mxu0
    %v4749 = vadd.f32 %v4556, %v4748
    %v4750 = vpop.f32.mrb[0].mxu0
    %v4751 = vadd.f32 %v4558, %v4750
    %4752 = vmatprep.mubr.bf16.mxu0 %v2152
    %4753 = vmatmul.mubr.bf16.gmra.mrb[0].mxu0 %v2151
    %v4754 = vpop.f32.mrb[0].mxu0
    %v4755 = vadd.f32 %v4562, %v4754
    %v4756 = vpop.f32.mrb[0].mxu0
    %v4757 = vadd.f32 %v4564, %v4756
    %v4758 = vpop.f32.mrb[0].mxu0
    %v4759 = vadd.f32 %v4566, %v4758
    %v4760 = vpop.f32.mrb[0].mxu0
    %v4761 = vadd.f32 %v4568, %v4760
    %4762 = vmatprep.mubr.bf16.mxu0 %v2160
    %4763 = vmatmul.mubr.bf16.gmra.mrb[0].mxu0 %v2159
    %v4764 = vpop.f32.mrb[0].mxu0
    %v4765 = vadd.f32 %v4572, %v4764
    %v4766 = vpop.f32.mrb[0].mxu0
    %v4767 = vadd.f32 %v4574, %v4766
    %v4768 = vpop.f32.mrb[0].mxu0
    %v4769 = vadd.f32 %v4576, %v4768
    %v4770 = vpop.f32.mrb[0].mxu0
    %v4771 = vadd.f32 %v4578, %v4770
    %4772 = vmatprep.mubr.bf16.mxu0 %v2168
    %4773 = vmatmul.mubr.bf16.gmra.mrb[0].mxu0 %v2167
    %v4774 = vpop.f32.mrb[0].mxu0
    %v4775 = vadd.f32 %v4582, %v4774
    %v4776 = vpop.f32.mrb[0].mxu0
    %v4777 = vadd.f32 %v4584, %v4776
    %v4778 = vpop.f32.mrb[0].mxu0
    %v4779 = vadd.f32 %v4586, %v4778
    %v4780 = vpop.f32.mrb[0].mxu0
    %v4781 = vadd.f32 %v4588, %v4780
    %4782 = vmatprep.mubr.bf16.mxu0 %v2176
    %4783 = vmatmul.mubr.bf16.gmra.mrb[0].mxu0 %v2175
    %v4784 = vpop.f32.mrb[0].mxu0
    %v4785 = vadd.f32 %v4592, %v4784
    %v4786 = vpop.f32.mrb[0].mxu0
    %v4787 = vadd.f32 %v4594, %v4786
    %v4788 = vpop.f32.mrb[0].mxu0
    %v4789 = vadd.f32 %v4596, %v4788
    %v4790 = vpop.f32.mrb[0].mxu0
    %v4791 = vadd.f32 %v4598, %v4790
    %4792 = vmatprep.mubr.bf16.mxu0 %v2184
    %4793 = vmatmul.mubr.bf16.gmra.mrb[0].mxu0 %v2183
    %v4794 = vpop.f32.mrb[0].mxu0
    %v4795 = vadd.f32 %v4602, %v4794
    %v4796 = vpop.f32.mrb[0].mxu0
    %v4797 = vadd.f32 %v4604, %v4796
    %v4798 = vpop.f32.mrb[0].mxu0
    %v4799 = vadd.f32 %v4606, %v4798
    %v4800 = vpop.f32.mrb[0].mxu0
    %v4801 = vadd.f32 %v4608, %v4800
    %4802 = vmatprep.mubr.bf16.mxu0 %v2192
    %4803 = vmatmul.mubr.bf16.gmra.mrb[0].mxu0 %v2191
    %v4804 = vpop.f32.mrb[0].mxu0
    %v4805 = vadd.f32 %v4612, %v4804
    %v4806 = vpop.f32.mrb[0].mxu0
    %v4807 = vadd.f32 %v4614, %v4806
    %v4808 = vpop.f32.mrb[0].mxu0
    %v4809 = vadd.f32 %v4616, %v4808
    %v4810 = vpop.f32.mrb[0].mxu0
    %v4811 = vadd.f32 %v4618, %v4810
    %4812 = vmatprep.mubr.bf16.mxu0 %v2200
    %4813 = vmatmul.mubr.bf16.gmra.mrb[0].mxu0 %v2199
    %v4814 = vpop.f32.mrb[0].mxu0
    %v4815 = vadd.f32 %v4622, %v4814
    %v4816 = vpop.f32.mrb[0].mxu0
    %v4817 = vadd.f32 %v4624, %v4816
    %v4818 = vpop.f32.mrb[0].mxu0
    %v4819 = vadd.f32 %v4626, %v4818
    %v4820 = vpop.f32.mrb[0].mxu0
    %v4821 = vadd.f32 %v4628, %v4820
    %4822 = vmatprep.mubr.bf16.mxu0 %v2208
    %4823 = vmatmul.mubr.bf16.gmra.mrb[0].mxu0 %v2207
    %v4824 = vpop.f32.mrb[0].mxu0
    %v4825 = vadd.f32 %v4632, %v4824
    %v4826 = vpop.f32.mrb[0].mxu0
    %v4827 = vadd.f32 %v4634, %v4826
    %v4828 = vpop.f32.mrb[0].mxu0
    %v4829 = vadd.f32 %v4636, %v4828
    %v4830 = vpop.f32.mrb[0].mxu0
    %v4831 = vadd.f32 %v4638, %v4830
    %4832 = vmatprep.mubr.bf16.mxu0 %v2216
    %4833 = vmatmul.mubr.bf16.gmra.mrb[0].mxu0 %v2215
    %v4834 = vpop.f32.mrb[0].mxu0
    %v4835 = vadd.f32 %v4642, %v4834
    %v4836 = vpop.f32.mrb[0].mxu0
    %v4837 = vadd.f32 %v4644, %v4836
    %v4838 = vpop.f32.mrb[0].mxu0
    %v4839 = vadd.f32 %v4646, %v4838
    %v4840 = vpop.f32.mrb[0].mxu0
    %v4841 = vadd.f32 %v4648, %v4840
    %4842 = vmatprep.mubr.bf16.mxu0 %v2224
    %4843 = vmatmul.mubr.bf16.gmra.mrb[0].mxu0 %v2223
    %v4844 = vpop.f32.mrb[0].mxu0
    %v4845 = vadd.f32 %v4652, %v4844
    %v4846 = vpop.f32.mrb[0].mxu0
    %v4847 = vadd.f32 %v4654, %v4846
    %v4848 = vpop.f32.mrb[0].mxu0
    %v4849 = vadd.f32 %v4656, %v4848
    %v4850 = vpop.f32.mrb[0].mxu0
    %v4851 = vadd.f32 %v4658, %v4850
    %4852 = vmatprep.mubr.bf16.mxu0 %v2232
    %4853 = vmatmul.mubr.bf16.gmra.mrb[0].mxu0 %v2231
    %v4854 = vpop.f32.mrb[0].mxu0
    %v4855 = vadd.f32 %v4662, %v4854
    %v4856 = vpop.f32.mrb[0].mxu0
    %v4857 = vadd.f32 %v4664, %v4856
    %v4858 = vpop.f32.mrb[0].mxu0
    %v4859 = vadd.f32 %v4666, %v4858
    %v4860 = vpop.f32.mrb[0].mxu0
    %v4861 = vadd.f32 %v4668, %v4860
    %4862 = vmatprep.mubr.bf16.mxu0 %v2240
    %4863 = vmatmul.mubr.bf16.gmra.mrb[0].mxu0 %v2239
    %v4864 = vpop.f32.mrb[0].mxu0
    %v4865 = vadd.f32 %v4672, %v4864
    %v4866 = vpop.f32.mrb[0].mxu0
    %v4867 = vadd.f32 %v4674, %v4866
    %v4868 = vpop.f32.mrb[0].mxu0
    %v4869 = vadd.f32 %v4676, %v4868
    %v4870 = vpop.f32.mrb[0].mxu0
    %v4871 = vadd.f32 %v4678, %v4870
    %4872 = vmatprep.mubr.bf16.mxu0 %v2248
    %4873 = vmatmul.mubr.bf16.gmra.mrb[0].mxu0 %v2247
    %v4874 = vpop.f32.mrb[0].mxu0
    %v4875 = vadd.f32 %v4682, %v4874
    %v4876 = vpop.f32.mrb[0].mxu0
    %v4877 = vadd.f32 %v4684, %v4876
    %v4878 = vpop.f32.mrb[0].mxu0
    %v4879 = vadd.f32 %v4686, %v4878
    %v4880 = vpop.f32.mrb[0].mxu0
    %v4881 = vadd.f32 %v4688, %v4880
    %4882 = vmatprep.mubr.bf16.mxu0 %v2256
    %4883 = vmatmul.mubr.bf16.gmra.mrb[0].mxu0 %v2255
    %v4884 = vpop.f32.mrb[0].mxu0
    %v4885 = vadd.f32 %v4692, %v4884
    %v4886 = vpop.f32.mrb[0].mxu0
    %v4887 = vadd.f32 %v4694, %v4886
    %v4888 = vpop.f32.mrb[0].mxu0
    %v4889 = vadd.f32 %v4696, %v4888
    %v4890 = vpop.f32.mrb[0].mxu0
    %v4891 = vadd.f32 %v4698, %v4890
    %4892 = vdwg.mxu0
    %4893 = vmatprep.subr.bf16.mxu0 %v3612
    %4894 = vmatpush1.bf16.msra.mxu0 %v3611
    %4895 = vmatprep.subr.bf16.mxu0 %v3616
    %4896 = vmatpush1.bf16.msra.mxu0 %v3615
    %4897 = vmatprep.subr.bf16.mxu0 %v3620
    %4898 = vmatpush1.bf16.msra.mxu0 %v3619
    %4899 = vmatprep.subr.bf16.mxu0 %v3624
    %4900 = vmatpush1.bf16.msra.mxu0 %v3623
    %4901 = vmatprep.subr.bf16.mxu0 %v3628
    %4902 = vmatpush1.bf16.msra.mxu0 %v3627
    %4903 = vmatprep.subr.bf16.mxu0 %v3632
    %4904 = vmatpush1.bf16.msra.mxu0 %v3631
    %4905 = vmatprep.subr.bf16.mxu0 %v3636
    %4906 = vmatpush1.bf16.msra.mxu0 %v3635
    %4907 = vmatprep.subr.bf16.mxu0 %v3640
    %4908 = vmatpush1.bf16.msra.mxu0 %v3639
    %4909 = vmatprep.subr.bf16.mxu0 %v3644
    %4910 = vmatpush1.bf16.msra.mxu0 %v3643
    %4911 = vmatprep.subr.bf16.mxu0 %v3648
    %4912 = vmatpush1.bf16.msra.mxu0 %v3647
    %4913 = vmatprep.subr.bf16.mxu0 %v3652
    %4914 = vmatpush1.bf16.msra.mxu0 %v3651
    %4915 = vmatprep.subr.bf16.mxu0 %v3656
    %4916 = vmatpush1.bf16.msra.mxu0 %v3655
    %4917 = vmatprep.subr.bf16.mxu0 %v3660
    %4918 = vmatpush1.bf16.msra.mxu0 %v3659
    %4919 = vmatprep.subr.bf16.mxu0 %v3664
    %4920 = vmatpush1.bf16.msra.mxu0 %v3663
    %4921 = vmatprep.subr.bf16.mxu0 %v3668
    %4922 = vmatpush1.bf16.msra.mxu0 %v3667
    %4923 = vmatprep.subr.bf16.mxu0 %v3672
    %4924 = vmatpush1.bf16.msra.mxu0 %v3671
    %4925 = vmatprep.mubr.bf16.mxu0 %v2130
    %4926 = vmatmul.mubr.bf16.gmra.mrb[0].mxu0 %v2129
    %v4927 = vpop.f32.mrb[0].mxu0
    %v4928 = vadd.f32 %v2715, %v4927
    %v4929 = vpop.f32.mrb[0].mxu0
    %v4930 = vadd.f32 %v2716, %v4929
    %v4931 = vpop.f32.mrb[0].mxu0
    %v4932 = vadd.f32 %v2719, %v4931
    %v4933 = vpop.f32.mrb[0].mxu0
    %v4934 = vadd.f32 %v2720, %v4933
    %4935 = vmatprep.mubr.bf16.mxu0 %v2138
    %4936 = vmatmul.mubr.bf16.gmra.mrb[0].mxu0 %v2137
    %v4937 = vpop.f32.mrb[0].mxu0
    %v4938 = vadd.f32 %v2723, %v4937
    %v4939 = vpop.f32.mrb[0].mxu0
    %v4940 = vadd.f32 %v2724, %v4939
    %v4941 = vpop.f32.mrb[0].mxu0
    %v4942 = vadd.f32 %v2727, %v4941
    %v4943 = vpop.f32.mrb[0].mxu0
    %v4944 = vadd.f32 %v2728, %v4943
    %4945 = vmatprep.mubr.bf16.mxu0 %v2146
    %4946 = vmatmul.mubr.bf16.gmra.mrb[0].mxu0 %v2145
    %v4947 = vpop.f32.mrb[0].mxu0
    %v4948 = vadd.f32 %v2731, %v4947
    %v4949 = vpop.f32.mrb[0].mxu0
    %v4950 = vadd.f32 %v2732, %v4949
    %v4951 = vpop.f32.mrb[0].mxu0
    %v4952 = vadd.f32 %v2735, %v4951
    %v4953 = vpop.f32.mrb[0].mxu0
    %v4954 = vadd.f32 %v2736, %v4953
    %4955 = vmatprep.mubr.bf16.mxu0 %v2154
    %4956 = vmatmul.mubr.bf16.gmra.mrb[0].mxu0 %v2153
    %v4957 = vpop.f32.mrb[0].mxu0
    %v4958 = vadd.f32 %v2739, %v4957
    %v4959 = vpop.f32.mrb[0].mxu0
    %v4960 = vadd.f32 %v2740, %v4959
    %v4961 = vpop.f32.mrb[0].mxu0
    %v4962 = vadd.f32 %v2743, %v4961
    %v4963 = vpop.f32.mrb[0].mxu0
    %v4964 = vadd.f32 %v2744, %v4963
    %4965 = vmatprep.mubr.bf16.mxu0 %v2162
    %4966 = vmatmul.mubr.bf16.gmra.mrb[0].mxu0 %v2161
    %v4967 = vpop.f32.mrb[0].mxu0
    %v4968 = vadd.f32 %v2747, %v4967
    %v4969 = vpop.f32.mrb[0].mxu0
    %v4970 = vadd.f32 %v2748, %v4969
    %v4971 = vpop.f32.mrb[0].mxu0
    %v4972 = vadd.f32 %v2751, %v4971
    %v4973 = vpop.f32.mrb[0].mxu0
    %v4974 = vadd.f32 %v2752, %v4973
    %4975 = vmatprep.mubr.bf16.mxu0 %v2170
    %4976 = vmatmul.mubr.bf16.gmra.mrb[0].mxu0 %v2169
    %v4977 = vpop.f32.mrb[0].mxu0
    %v4978 = vadd.f32 %v2755, %v4977
    %v4979 = vpop.f32.mrb[0].mxu0
    %v4980 = vadd.f32 %v2756, %v4979
    %v4981 = vpop.f32.mrb[0].mxu0
    %v4982 = vadd.f32 %v2759, %v4981
    %v4983 = vpop.f32.mrb[0].mxu0
    %v4984 = vadd.f32 %v2760, %v4983
    %4985 = vmatprep.mubr.bf16.mxu0 %v2178
    %4986 = vmatmul.mubr.bf16.gmra.mrb[0].mxu0 %v2177
    %v4987 = vpop.f32.mrb[0].mxu0
    %v4988 = vadd.f32 %v2763, %v4987
    %v4989 = vpop.f32.mrb[0].mxu0
    %v4990 = vadd.f32 %v2764, %v4989
    %v4991 = vpop.f32.mrb[0].mxu0
    %v4992 = vadd.f32 %v2767, %v4991
    %v4993 = vpop.f32.mrb[0].mxu0
    %v4994 = vadd.f32 %v2768, %v4993
    %4995 = vmatprep.mubr.bf16.mxu0 %v2186
    %4996 = vmatmul.mubr.bf16.gmra.mrb[0].mxu0 %v2185
    %v4997 = vpop.f32.mrb[0].mxu0
    %v4998 = vadd.f32 %v2771, %v4997
    %v4999 = vpop.f32.mrb[0].mxu0
    %v5000 = vadd.f32 %v2772, %v4999
    %v5001 = vpop.f32.mrb[0].mxu0
    %v5002 = vadd.f32 %v2775, %v5001
    %v5003 = vpop.f32.mrb[0].mxu0
    %v5004 = vadd.f32 %v2776, %v5003
    %5005 = vmatprep.mubr.bf16.mxu0 %v2194
    %5006 = vmatmul.mubr.bf16.gmra.mrb[0].mxu0 %v2193
    %v5007 = vpop.f32.mrb[0].mxu0
    %v5008 = vadd.f32 %v2779, %v5007
    %v5009 = vpop.f32.mrb[0].mxu0
    %v5010 = vadd.f32 %v2780, %v5009
    %v5011 = vpop.f32.mrb[0].mxu0
    %v5012 = vadd.f32 %v2783, %v5011
    %v5013 = vpop.f32.mrb[0].mxu0
    %v5014 = vadd.f32 %v2784, %v5013
    %5015 = vmatprep.mubr.bf16.mxu0 %v2202
    %5016 = vmatmul.mubr.bf16.gmra.mrb[0].mxu0 %v2201
    %v5017 = vpop.f32.mrb[0].mxu0
    %v5018 = vadd.f32 %v2787, %v5017
    %v5019 = vpop.f32.mrb[0].mxu0
    %v5020 = vadd.f32 %v2788, %v5019
    %v5021 = vpop.f32.mrb[0].mxu0
    %v5022 = vadd.f32 %v2791, %v5021
    %v5023 = vpop.f32.mrb[0].mxu0
    %v5024 = vadd.f32 %v2792, %v5023
    %5025 = vmatprep.mubr.bf16.mxu0 %v2210
    %5026 = vmatmul.mubr.bf16.gmra.mrb[0].mxu0 %v2209
    %v5027 = vpop.f32.mrb[0].mxu0
    %v5028 = vadd.f32 %v2795, %v5027
    %v5029 = vpop.f32.mrb[0].mxu0
    %v5030 = vadd.f32 %v2796, %v5029
    %v5031 = vpop.f32.mrb[0].mxu0
    %v5032 = vadd.f32 %v2799, %v5031
    %v5033 = vpop.f32.mrb[0].mxu0
    %v5034 = vadd.f32 %v2800, %v5033
    %5035 = vmatprep.mubr.bf16.mxu0 %v2218
    %5036 = vmatmul.mubr.bf16.gmra.mrb[0].mxu0 %v2217
    %v5037 = vpop.f32.mrb[0].mxu0
    %v5038 = vadd.f32 %v2803, %v5037
    %v5039 = vpop.f32.mrb[0].mxu0
    %v5040 = vadd.f32 %v2804, %v5039
    %v5041 = vpop.f32.mrb[0].mxu0
    %v5042 = vadd.f32 %v2807, %v5041
    %v5043 = vpop.f32.mrb[0].mxu0
    %v5044 = vadd.f32 %v2808, %v5043
    %5045 = vmatprep.mubr.bf16.mxu0 %v2226
    %5046 = vmatmul.mubr.bf16.gmra.mrb[0].mxu0 %v2225
    %v5047 = vpop.f32.mrb[0].mxu0
    %v5048 = vadd.f32 %v2811, %v5047
    %v5049 = vpop.f32.mrb[0].mxu0
    %v5050 = vadd.f32 %v2812, %v5049
    %v5051 = vpop.f32.mrb[0].mxu0
    %v5052 = vadd.f32 %v2815, %v5051
    %v5053 = vpop.f32.mrb[0].mxu0
    %v5054 = vadd.f32 %v2816, %v5053
    %5055 = vmatprep.mubr.bf16.mxu0 %v2234
    %5056 = vmatmul.mubr.bf16.gmra.mrb[0].mxu0 %v2233
    %v5057 = vpop.f32.mrb[0].mxu0
    %v5058 = vadd.f32 %v2819, %v5057
    %v5059 = vpop.f32.mrb[0].mxu0
    %v5060 = vadd.f32 %v2820, %v5059
    %v5061 = vpop.f32.mrb[0].mxu0
    %v5062 = vadd.f32 %v2823, %v5061
    %v5063 = vpop.f32.mrb[0].mxu0
    %v5064 = vadd.f32 %v2824, %v5063
    %5065 = vmatprep.mubr.bf16.mxu0 %v2242
    %5066 = vmatmul.mubr.bf16.gmra.mrb[0].mxu0 %v2241
    %v5067 = vpop.f32.mrb[0].mxu0
    %v5068 = vadd.f32 %v2827, %v5067
    %v5069 = vpop.f32.mrb[0].mxu0
    %v5070 = vadd.f32 %v2828, %v5069
    %v5071 = vpop.f32.mrb[0].mxu0
    %v5072 = vadd.f32 %v2831, %v5071
    %v5073 = vpop.f32.mrb[0].mxu0
    %v5074 = vadd.f32 %v2832, %v5073
    %5075 = vmatprep.mubr.bf16.mxu0 %v2250
    %5076 = vmatmul.mubr.bf16.gmra.mrb[0].mxu0 %v2249
    %v5077 = vpop.f32.mrb[0].mxu0
    %v5078 = vadd.f32 %v2835, %v5077
    %v5079 = vpop.f32.mrb[0].mxu0
    %v5080 = vadd.f32 %v2836, %v5079
    %v5081 = vpop.f32.mrb[0].mxu0
    %v5082 = vadd.f32 %v2839, %v5081
    %v5083 = vpop.f32.mrb[0].mxu0
    %v5084 = vadd.f32 %v2840, %v5083
    %5085 = vdwg.mxu0
    %5086 = vmatprep.subr.bf16.mxu0 %v3676
    %5087 = vmatpush1.bf16.msra.mxu0 %v3675
    %5088 = vmatprep.subr.bf16.mxu0 %v3680
    %5089 = vmatpush1.bf16.msra.mxu0 %v3679
    %5090 = vmatprep.subr.bf16.mxu0 %v3684
    %5091 = vmatpush1.bf16.msra.mxu0 %v3683
    %5092 = vmatprep.subr.bf16.mxu0 %v3688
    %5093 = vmatpush1.bf16.msra.mxu0 %v3687
    %5094 = vmatprep.subr.bf16.mxu0 %v3692
    %5095 = vmatpush1.bf16.msra.mxu0 %v3691
    %5096 = vmatprep.subr.bf16.mxu0 %v3696
    %5097 = vmatpush1.bf16.msra.mxu0 %v3695
    %5098 = vmatprep.subr.bf16.mxu0 %v3700
    %5099 = vmatpush1.bf16.msra.mxu0 %v3699
    %5100 = vmatprep.subr.bf16.mxu0 %v3704
    %5101 = vmatpush1.bf16.msra.mxu0 %v3703
    %5102 = vmatprep.subr.bf16.mxu0 %v3708
    %5103 = vmatpush1.bf16.msra.mxu0 %v3707
    %5104 = vmatprep.subr.bf16.mxu0 %v3712
    %5105 = vmatpush1.bf16.msra.mxu0 %v3711
    %5106 = vmatprep.subr.bf16.mxu0 %v3716
    %5107 = vmatpush1.bf16.msra.mxu0 %v3715
    %5108 = vmatprep.subr.bf16.mxu0 %v3720
    %5109 = vmatpush1.bf16.msra.mxu0 %v3719
    %5110 = vmatprep.subr.bf16.mxu0 %v3724
    %5111 = vmatpush1.bf16.msra.mxu0 %v3723
    %5112 = vmatprep.subr.bf16.mxu0 %v3728
    %5113 = vmatpush1.bf16.msra.mxu0 %v3727
    %5114 = vmatprep.subr.bf16.mxu0 %v3732
    %5115 = vmatpush1.bf16.msra.mxu0 %v3731
    %5116 = vmatprep.subr.bf16.mxu0 %v3736
    %5117 = vmatpush1.bf16.msra.mxu0 %v3735
    %5118 = vmatprep.mubr.bf16.mxu0 %v2132
    %5119 = vmatmul.mubr.bf16.gmra.mrb[0].mxu0 %v2131
    %v5120 = vpop.f32.mrb[0].mxu0
    %v5121 = vadd.f32 %v4928, %v5120
    %v5122 = vpop.f32.mrb[0].mxu0
    %v5123 = vadd.f32 %v4930, %v5122
    %v5124 = vpop.f32.mrb[0].mxu0
    %v5125 = vadd.f32 %v4932, %v5124
    %v5126 = vpop.f32.mrb[0].mxu0
    %v5127 = vadd.f32 %v4934, %v5126
    %5128 = vmatprep.mubr.bf16.mxu0 %v2140
    %5129 = vmatmul.mubr.bf16.gmra.mrb[0].mxu0 %v2139
    %v5130 = vpop.f32.mrb[0].mxu0
    %v5131 = vadd.f32 %v4938, %v5130
    %v5132 = vpop.f32.mrb[0].mxu0
    %v5133 = vadd.f32 %v4940, %v5132
    %v5134 = vpop.f32.mrb[0].mxu0
    %v5135 = vadd.f32 %v4942, %v5134
    %v5136 = vpop.f32.mrb[0].mxu0
    %v5137 = vadd.f32 %v4944, %v5136
    %5138 = vmatprep.mubr.bf16.mxu0 %v2148
    %5139 = vmatmul.mubr.bf16.gmra.mrb[0].mxu0 %v2147
    %v5140 = vpop.f32.mrb[0].mxu0
    %v5141 = vadd.f32 %v4948, %v5140
    %v5142 = vpop.f32.mrb[0].mxu0
    %v5143 = vadd.f32 %v4950, %v5142
    %v5144 = vpop.f32.mrb[0].mxu0
    %v5145 = vadd.f32 %v4952, %v5144
    %v5146 = vpop.f32.mrb[0].mxu0
    %v5147 = vadd.f32 %v4954, %v5146
    %5148 = vmatprep.mubr.bf16.mxu0 %v2156
    %5149 = vmatmul.mubr.bf16.gmra.mrb[0].mxu0 %v2155
    %v5150 = vpop.f32.mrb[0].mxu0
    %v5151 = vadd.f32 %v4958, %v5150
    %v5152 = vpop.f32.mrb[0].mxu0
    %v5153 = vadd.f32 %v4960, %v5152
    %v5154 = vpop.f32.mrb[0].mxu0
    %v5155 = vadd.f32 %v4962, %v5154
    %v5156 = vpop.f32.mrb[0].mxu0
    %v5157 = vadd.f32 %v4964, %v5156
    %5158 = vmatprep.mubr.bf16.mxu0 %v2164
    %5159 = vmatmul.mubr.bf16.gmra.mrb[0].mxu0 %v2163
    %v5160 = vpop.f32.mrb[0].mxu0
    %v5161 = vadd.f32 %v4968, %v5160
    %v5162 = vpop.f32.mrb[0].mxu0
    %v5163 = vadd.f32 %v4970, %v5162
    %v5164 = vpop.f32.mrb[0].mxu0
    %v5165 = vadd.f32 %v4972, %v5164
    %v5166 = vpop.f32.mrb[0].mxu0
    %v5167 = vadd.f32 %v4974, %v5166
    %5168 = vmatprep.mubr.bf16.mxu0 %v2172
    %5169 = vmatmul.mubr.bf16.gmra.mrb[0].mxu0 %v2171
    %v5170 = vpop.f32.mrb[0].mxu0
    %v5171 = vadd.f32 %v4978, %v5170
    %v5172 = vpop.f32.mrb[0].mxu0
    %v5173 = vadd.f32 %v4980, %v5172
    %v5174 = vpop.f32.mrb[0].mxu0
    %v5175 = vadd.f32 %v4982, %v5174
    %v5176 = vpop.f32.mrb[0].mxu0
    %v5177 = vadd.f32 %v4984, %v5176
    %5178 = vmatprep.mubr.bf16.mxu0 %v2180
    %5179 = vmatmul.mubr.bf16.gmra.mrb[0].mxu0 %v2179
    %v5180 = vpop.f32.mrb[0].mxu0
    %v5181 = vadd.f32 %v4988, %v5180
    %v5182 = vpop.f32.mrb[0].mxu0
    %v5183 = vadd.f32 %v4990, %v5182
    %v5184 = vpop.f32.mrb[0].mxu0
    %v5185 = vadd.f32 %v4992, %v5184
    %v5186 = vpop.f32.mrb[0].mxu0
    %v5187 = vadd.f32 %v4994, %v5186
    %5188 = vmatprep.mubr.bf16.mxu0 %v2188
    %5189 = vmatmul.mubr.bf16.gmra.mrb[0].mxu0 %v2187
    %v5190 = vpop.f32.mrb[0].mxu0
    %v5191 = vadd.f32 %v4998, %v5190
    %v5192 = vpop.f32.mrb[0].mxu0
    %v5193 = vadd.f32 %v5000, %v5192
    %v5194 = vpop.f32.mrb[0].mxu0
    %v5195 = vadd.f32 %v5002, %v5194
    %v5196 = vpop.f32.mrb[0].mxu0
    %v5197 = vadd.f32 %v5004, %v5196
    %5198 = vmatprep.mubr.bf16.mxu0 %v2196
    %5199 = vmatmul.mubr.bf16.gmra.mrb[0].mxu0 %v2195
    %v5200 = vpop.f32.mrb[0].mxu0
    %v5201 = vadd.f32 %v5008, %v5200
    %v5202 = vpop.f32.mrb[0].mxu0
    %v5203 = vadd.f32 %v5010, %v5202
    %v5204 = vpop.f32.mrb[0].mxu0
    %v5205 = vadd.f32 %v5012, %v5204
    %v5206 = vpop.f32.mrb[0].mxu0
    %v5207 = vadd.f32 %v5014, %v5206
    %5208 = vmatprep.mubr.bf16.mxu0 %v2204
    %5209 = vmatmul.mubr.bf16.gmra.mrb[0].mxu0 %v2203
    %v5210 = vpop.f32.mrb[0].mxu0
    %v5211 = vadd.f32 %v5018, %v5210
    %v5212 = vpop.f32.mrb[0].mxu0
    %v5213 = vadd.f32 %v5020, %v5212
    %v5214 = vpop.f32.mrb[0].mxu0
    %v5215 = vadd.f32 %v5022, %v5214
    %v5216 = vpop.f32.mrb[0].mxu0
    %v5217 = vadd.f32 %v5024, %v5216
    %5218 = vmatprep.mubr.bf16.mxu0 %v2212
    %5219 = vmatmul.mubr.bf16.gmra.mrb[0].mxu0 %v2211
    %v5220 = vpop.f32.mrb[0].mxu0
    %v5221 = vadd.f32 %v5028, %v5220
    %v5222 = vpop.f32.mrb[0].mxu0
    %v5223 = vadd.f32 %v5030, %v5222
    %v5224 = vpop.f32.mrb[0].mxu0
    %v5225 = vadd.f32 %v5032, %v5224
    %v5226 = vpop.f32.mrb[0].mxu0
    %v5227 = vadd.f32 %v5034, %v5226
    %5228 = vmatprep.mubr.bf16.mxu0 %v2220
    %5229 = vmatmul.mubr.bf16.gmra.mrb[0].mxu0 %v2219
    %v5230 = vpop.f32.mrb[0].mxu0
    %v5231 = vadd.f32 %v5038, %v5230
    %v5232 = vpop.f32.mrb[0].mxu0
    %v5233 = vadd.f32 %v5040, %v5232
    %v5234 = vpop.f32.mrb[0].mxu0
    %v5235 = vadd.f32 %v5042, %v5234
    %v5236 = vpop.f32.mrb[0].mxu0
    %v5237 = vadd.f32 %v5044, %v5236
    %5238 = vmatprep.mubr.bf16.mxu0 %v2228
    %5239 = vmatmul.mubr.bf16.gmra.mrb[0].mxu0 %v2227
    %v5240 = vpop.f32.mrb[0].mxu0
    %v5241 = vadd.f32 %v5048, %v5240
    %v5242 = vpop.f32.mrb[0].mxu0
    %v5243 = vadd.f32 %v5050, %v5242
    %v5244 = vpop.f32.mrb[0].mxu0
    %v5245 = vadd.f32 %v5052, %v5244
    %v5246 = vpop.f32.mrb[0].mxu0
    %v5247 = vadd.f32 %v5054, %v5246
    %5248 = vmatprep.mubr.bf16.mxu0 %v2236
    %5249 = vmatmul.mubr.bf16.gmra.mrb[0].mxu0 %v2235
    %v5250 = vpop.f32.mrb[0].mxu0
    %v5251 = vadd.f32 %v5058, %v5250
    %v5252 = vpop.f32.mrb[0].mxu0
    %v5253 = vadd.f32 %v5060, %v5252
    %v5254 = vpop.f32.mrb[0].mxu0
    %v5255 = vadd.f32 %v5062, %v5254
    %v5256 = vpop.f32.mrb[0].mxu0
    %v5257 = vadd.f32 %v5064, %v5256
    %5258 = vmatprep.mubr.bf16.mxu0 %v2244
    %5259 = vmatmul.mubr.bf16.gmra.mrb[0].mxu0 %v2243
    %v5260 = vpop.f32.mrb[0].mxu0
    %v5261 = vadd.f32 %v5068, %v5260
    %v5262 = vpop.f32.mrb[0].mxu0
    %v5263 = vadd.f32 %v5070, %v5262
    %v5264 = vpop.f32.mrb[0].mxu0
    %v5265 = vadd.f32 %v5072, %v5264
    %v5266 = vpop.f32.mrb[0].mxu0
    %v5267 = vadd.f32 %v5074, %v5266
    %5268 = vmatprep.mubr.bf16.mxu0 %v2252
    %5269 = vmatmul.mubr.bf16.gmra.mrb[0].mxu0 %v2251
    %v5270 = vpop.f32.mrb[0].mxu0
    %v5271 = vadd.f32 %v5078, %v5270
    %v5272 = vpop.f32.mrb[0].mxu0
    %v5273 = vadd.f32 %v5080, %v5272
    %v5274 = vpop.f32.mrb[0].mxu0
    %v5275 = vadd.f32 %v5082, %v5274
    %v5276 = vpop.f32.mrb[0].mxu0
    %v5277 = vadd.f32 %v5084, %v5276
    %5278 = vdwg.mxu0
    %5279 = vmatprep.subr.bf16.mxu0 %v3740
    %5280 = vmatpush1.bf16.msra.mxu0 %v3739
    %5281 = vmatprep.subr.bf16.mxu0 %v3744
    %5282 = vmatpush1.bf16.msra.mxu0 %v3743
    %5283 = vmatprep.subr.bf16.mxu0 %v3748
    %5284 = vmatpush1.bf16.msra.mxu0 %v3747
    %5285 = vmatprep.subr.bf16.mxu0 %v3752
    %5286 = vmatpush1.bf16.msra.mxu0 %v3751
    %5287 = vmatprep.subr.bf16.mxu0 %v3756
    %5288 = vmatpush1.bf16.msra.mxu0 %v3755
    %5289 = vmatprep.subr.bf16.mxu0 %v3760
    %5290 = vmatpush1.bf16.msra.mxu0 %v3759
    %5291 = vmatprep.subr.bf16.mxu0 %v3764
    %5292 = vmatpush1.bf16.msra.mxu0 %v3763
    %5293 = vmatprep.subr.bf16.mxu0 %v3768
    %5294 = vmatpush1.bf16.msra.mxu0 %v3767
    %5295 = vmatprep.subr.bf16.mxu0 %v3772
    %5296 = vmatpush1.bf16.msra.mxu0 %v3771
    %5297 = vmatprep.subr.bf16.mxu0 %v3776
    %5298 = vmatpush1.bf16.msra.mxu0 %v3775
    %5299 = vmatprep.subr.bf16.mxu0 %v3780
    %5300 = vmatpush1.bf16.msra.mxu0 %v3779
    %5301 = vmatprep.subr.bf16.mxu0 %v3784
    %5302 = vmatpush1.bf16.msra.mxu0 %v3783
    %5303 = vmatprep.subr.bf16.mxu0 %v3788
    %5304 = vmatpush1.bf16.msra.mxu0 %v3787
    %5305 = vmatprep.subr.bf16.mxu0 %v3792
    %5306 = vmatpush1.bf16.msra.mxu0 %v3791
    %5307 = vmatprep.subr.bf16.mxu0 %v3796
    %5308 = vmatpush1.bf16.msra.mxu0 %v3795
    %5309 = vmatprep.subr.bf16.mxu0 %v3800
    %5310 = vmatpush1.bf16.msra.mxu0 %v3799
    %5311 = vmatprep.mubr.bf16.mxu0 %v2134
    %5312 = vmatmul.mubr.bf16.gmra.mrb[0].mxu0 %v2133
    %v5313 = vpop.f32.mrb[0].mxu0
    %v5314 = vadd.f32 %v5121, %v5313
    %v5315 = vpop.f32.mrb[0].mxu0
    %v5316 = vadd.f32 %v5123, %v5315
    %v5317 = vpop.f32.mrb[0].mxu0
    %v5318 = vadd.f32 %v5125, %v5317
    %v5319 = vpop.f32.mrb[0].mxu0
    %v5320 = vadd.f32 %v5127, %v5319
    %5321 = vmatprep.mubr.bf16.mxu0 %v2142
    %5322 = vmatmul.mubr.bf16.gmra.mrb[0].mxu0 %v2141
    %v5323 = vpop.f32.mrb[0].mxu0
    %v5324 = vadd.f32 %v5131, %v5323
    %v5325 = vpop.f32.mrb[0].mxu0
    %v5326 = vadd.f32 %v5133, %v5325
    %v5327 = vpop.f32.mrb[0].mxu0
    %v5328 = vadd.f32 %v5135, %v5327
    %v5329 = vpop.f32.mrb[0].mxu0
    %v5330 = vadd.f32 %v5137, %v5329
    %5331 = vmatprep.mubr.bf16.mxu0 %v2150
    %5332 = vmatmul.mubr.bf16.gmra.mrb[0].mxu0 %v2149
    %v5333 = vpop.f32.mrb[0].mxu0
    %v5334 = vadd.f32 %v5141, %v5333
    %v5335 = vpop.f32.mrb[0].mxu0
    %v5336 = vadd.f32 %v5143, %v5335
    %v5337 = vpop.f32.mrb[0].mxu0
    %v5338 = vadd.f32 %v5145, %v5337
    %v5339 = vpop.f32.mrb[0].mxu0
    %v5340 = vadd.f32 %v5147, %v5339
    %5341 = vmatprep.mubr.bf16.mxu0 %v2158
    %5342 = vmatmul.mubr.bf16.gmra.mrb[0].mxu0 %v2157
    %v5343 = vpop.f32.mrb[0].mxu0
    %v5344 = vadd.f32 %v5151, %v5343
    %v5345 = vpop.f32.mrb[0].mxu0
    %v5346 = vadd.f32 %v5153, %v5345
    %v5347 = vpop.f32.mrb[0].mxu0
    %v5348 = vadd.f32 %v5155, %v5347
    %v5349 = vpop.f32.mrb[0].mxu0
    %v5350 = vadd.f32 %v5157, %v5349
    %5351 = vmatprep.mubr.bf16.mxu0 %v2166
    %5352 = vmatmul.mubr.bf16.gmra.mrb[0].mxu0 %v2165
    %v5353 = vpop.f32.mrb[0].mxu0
    %v5354 = vadd.f32 %v5161, %v5353
    %v5355 = vpop.f32.mrb[0].mxu0
    %v5356 = vadd.f32 %v5163, %v5355
    %v5357 = vpop.f32.mrb[0].mxu0
    %v5358 = vadd.f32 %v5165, %v5357
    %v5359 = vpop.f32.mrb[0].mxu0
    %v5360 = vadd.f32 %v5167, %v5359
    %5361 = vmatprep.mubr.bf16.mxu0 %v2174
    %5362 = vmatmul.mubr.bf16.gmra.mrb[0].mxu0 %v2173
    %v5363 = vpop.f32.mrb[0].mxu0
    %v5364 = vadd.f32 %v5171, %v5363
    %v5365 = vpop.f32.mrb[0].mxu0
    %v5366 = vadd.f32 %v5173, %v5365
    %v5367 = vpop.f32.mrb[0].mxu0
    %v5368 = vadd.f32 %v5175, %v5367
    %v5369 = vpop.f32.mrb[0].mxu0
    %v5370 = vadd.f32 %v5177, %v5369
    %5371 = vmatprep.mubr.bf16.mxu0 %v2182
    %5372 = vmatmul.mubr.bf16.gmra.mrb[0].mxu0 %v2181
    %v5373 = vpop.f32.mrb[0].mxu0
    %v5374 = vadd.f32 %v5181, %v5373
    %v5375 = vpop.f32.mrb[0].mxu0
    %v5376 = vadd.f32 %v5183, %v5375
    %v5377 = vpop.f32.mrb[0].mxu0
    %v5378 = vadd.f32 %v5185, %v5377
    %v5379 = vpop.f32.mrb[0].mxu0
    %v5380 = vadd.f32 %v5187, %v5379
    %5381 = vmatprep.mubr.bf16.mxu0 %v2190
    %5382 = vmatmul.mubr.bf16.gmra.mrb[0].mxu0 %v2189
    %v5383 = vpop.f32.mrb[0].mxu0
    %v5384 = vadd.f32 %v5191, %v5383
    %v5385 = vpop.f32.mrb[0].mxu0
    %v5386 = vadd.f32 %v5193, %v5385
    %v5387 = vpop.f32.mrb[0].mxu0
    %v5388 = vadd.f32 %v5195, %v5387
    %v5389 = vpop.f32.mrb[0].mxu0
    %v5390 = vadd.f32 %v5197, %v5389
    %5391 = vmatprep.mubr.bf16.mxu0 %v2198
    %5392 = vmatmul.mubr.bf16.gmra.mrb[0].mxu0 %v2197
    %v5393 = vpop.f32.mrb[0].mxu0
    %v5394 = vadd.f32 %v5201, %v5393
    %v5395 = vpop.f32.mrb[0].mxu0
    %v5396 = vadd.f32 %v5203, %v5395
    %v5397 = vpop.f32.mrb[0].mxu0
    %v5398 = vadd.f32 %v5205, %v5397
    %v5399 = vpop.f32.mrb[0].mxu0
    %v5400 = vadd.f32 %v5207, %v5399
    %5401 = vmatprep.mubr.bf16.mxu0 %v2206
    %5402 = vmatmul.mubr.bf16.gmra.mrb[0].mxu0 %v2205
    %v5403 = vpop.f32.mrb[0].mxu0
    %v5404 = vadd.f32 %v5211, %v5403
    %v5405 = vpop.f32.mrb[0].mxu0
    %v5406 = vadd.f32 %v5213, %v5405
    %v5407 = vpop.f32.mrb[0].mxu0
    %v5408 = vadd.f32 %v5215, %v5407
    %v5409 = vpop.f32.mrb[0].mxu0
    %v5410 = vadd.f32 %v5217, %v5409
    %5411 = vmatprep.mubr.bf16.mxu0 %v2214
    %5412 = vmatmul.mubr.bf16.gmra.mrb[0].mxu0 %v2213
    %v5413 = vpop.f32.mrb[0].mxu0
    %v5414 = vadd.f32 %v5221, %v5413
    %v5415 = vpop.f32.mrb[0].mxu0
    %v5416 = vadd.f32 %v5223, %v5415
    %v5417 = vpop.f32.mrb[0].mxu0
    %v5418 = vadd.f32 %v5225, %v5417
    %v5419 = vpop.f32.mrb[0].mxu0
    %v5420 = vadd.f32 %v5227, %v5419
    %5421 = vmatprep.mubr.bf16.mxu0 %v2222
    %5422 = vmatmul.mubr.bf16.gmra.mrb[0].mxu0 %v2221
    %v5423 = vpop.f32.mrb[0].mxu0
    %v5424 = vadd.f32 %v5231, %v5423
    %v5425 = vpop.f32.mrb[0].mxu0
    %v5426 = vadd.f32 %v5233, %v5425
    %v5427 = vpop.f32.mrb[0].mxu0
    %v5428 = vadd.f32 %v5235, %v5427
    %v5429 = vpop.f32.mrb[0].mxu0
    %v5430 = vadd.f32 %v5237, %v5429
    %5431 = vmatprep.mubr.bf16.mxu0 %v2230
    %5432 = vmatmul.mubr.bf16.gmra.mrb[0].mxu0 %v2229
    %v5433 = vpop.f32.mrb[0].mxu0
    %v5434 = vadd.f32 %v5241, %v5433
    %v5435 = vpop.f32.mrb[0].mxu0
    %v5436 = vadd.f32 %v5243, %v5435
    %v5437 = vpop.f32.mrb[0].mxu0
    %v5438 = vadd.f32 %v5245, %v5437
    %v5439 = vpop.f32.mrb[0].mxu0
    %v5440 = vadd.f32 %v5247, %v5439
    %5441 = vmatprep.mubr.bf16.mxu0 %v2238
    %5442 = vmatmul.mubr.bf16.gmra.mrb[0].mxu0 %v2237
    %v5443 = vpop.f32.mrb[0].mxu0
    %v5444 = vadd.f32 %v5251, %v5443
    %v5445 = vpop.f32.mrb[0].mxu0
    %v5446 = vadd.f32 %v5253, %v5445
    %v5447 = vpop.f32.mrb[0].mxu0
    %v5448 = vadd.f32 %v5255, %v5447
    %v5449 = vpop.f32.mrb[0].mxu0
    %v5450 = vadd.f32 %v5257, %v5449
    %5451 = vmatprep.mubr.bf16.mxu0 %v2246
    %5452 = vmatmul.mubr.bf16.gmra.mrb[0].mxu0 %v2245
    %v5453 = vpop.f32.mrb[0].mxu0
    %v5454 = vadd.f32 %v5261, %v5453
    %v5455 = vpop.f32.mrb[0].mxu0
    %v5456 = vadd.f32 %v5263, %v5455
    %v5457 = vpop.f32.mrb[0].mxu0
    %v5458 = vadd.f32 %v5265, %v5457
    %v5459 = vpop.f32.mrb[0].mxu0
    %v5460 = vadd.f32 %v5267, %v5459
    %5461 = vmatprep.mubr.bf16.mxu0 %v2254
    %5462 = vmatmul.mubr.bf16.gmra.mrb[0].mxu0 %v2253
    %v5463 = vpop.f32.mrb[0].mxu0
    %v5464 = vadd.f32 %v5271, %v5463
    %v5465 = vpop.f32.mrb[0].mxu0
    %v5466 = vadd.f32 %v5273, %v5465
    %v5467 = vpop.f32.mrb[0].mxu0
    %v5468 = vadd.f32 %v5275, %v5467
    %v5469 = vpop.f32.mrb[0].mxu0
    %v5470 = vadd.f32 %v5277, %v5469
    %5471 = vdwg.mxu0
    %5472 = vmatprep.subr.bf16.mxu0 %v3804
    %5473 = vmatpush1.bf16.msra.mxu0 %v3803
    %5474 = vmatprep.subr.bf16.mxu0 %v3808
    %5475 = vmatpush1.bf16.msra.mxu0 %v3807
    %5476 = vmatprep.subr.bf16.mxu0 %v3812
    %5477 = vmatpush1.bf16.msra.mxu0 %v3811
    %5478 = vmatprep.subr.bf16.mxu0 %v3816
    %5479 = vmatpush1.bf16.msra.mxu0 %v3815
    %5480 = vmatprep.subr.bf16.mxu0 %v3820
    %5481 = vmatpush1.bf16.msra.mxu0 %v3819
    %5482 = vmatprep.subr.bf16.mxu0 %v3824
    %5483 = vmatpush1.bf16.msra.mxu0 %v3823
    %5484 = vmatprep.subr.bf16.mxu0 %v3828
    %5485 = vmatpush1.bf16.msra.mxu0 %v3827
    %5486 = vmatprep.subr.bf16.mxu0 %v3832
    %5487 = vmatpush1.bf16.msra.mxu0 %v3831
    %5488 = vmatprep.subr.bf16.mxu0 %v3836
    %5489 = vmatpush1.bf16.msra.mxu0 %v3835
    %5490 = vmatprep.subr.bf16.mxu0 %v3840
    %5491 = vmatpush1.bf16.msra.mxu0 %v3839
    %5492 = vmatprep.subr.bf16.mxu0 %v3844
    %5493 = vmatpush1.bf16.msra.mxu0 %v3843
    %5494 = vmatprep.subr.bf16.mxu0 %v3848
    %5495 = vmatpush1.bf16.msra.mxu0 %v3847
    %5496 = vmatprep.subr.bf16.mxu0 %v3852
    %5497 = vmatpush1.bf16.msra.mxu0 %v3851
    %5498 = vmatprep.subr.bf16.mxu0 %v3856
    %5499 = vmatpush1.bf16.msra.mxu0 %v3855
    %5500 = vmatprep.subr.bf16.mxu0 %v3860
    %5501 = vmatpush1.bf16.msra.mxu0 %v3859
    %5502 = vmatprep.subr.bf16.mxu0 %v3864
    %5503 = vmatpush1.bf16.msra.mxu0 %v3863
    %5504 = vmatprep.mubr.bf16.mxu0 %v2136
    %5505 = vmatmul.mubr.bf16.gmra.mrb[0].mxu0 %v2135
    %v5506 = vpop.f32.mrb[0].mxu0
    %v5507 = vadd.f32 %v5314, %v5506
    %v5508 = vpop.f32.mrb[0].mxu0
    %v5509 = vadd.f32 %v5316, %v5508
    %v5510 = vpop.f32.mrb[0].mxu0
    %v5511 = vadd.f32 %v5318, %v5510
    %v5512 = vpop.f32.mrb[0].mxu0
    %v5513 = vadd.f32 %v5320, %v5512
    %5514 = vmatprep.mubr.bf16.mxu0 %v2144
    %5515 = vmatmul.mubr.bf16.gmra.mrb[0].mxu0 %v2143
    %v5516 = vpop.f32.mrb[0].mxu0
    %v5517 = vadd.f32 %v5324, %v5516
    %v5518 = vpop.f32.mrb[0].mxu0
    %v5519 = vadd.f32 %v5326, %v5518
    %v5520 = vpop.f32.mrb[0].mxu0
    %v5521 = vadd.f32 %v5328, %v5520
    %v5522 = vpop.f32.mrb[0].mxu0
    %v5523 = vadd.f32 %v5330, %v5522
    %5524 = vmatprep.mubr.bf16.mxu0 %v2152
    %5525 = vmatmul.mubr.bf16.gmra.mrb[0].mxu0 %v2151
    %v5526 = vpop.f32.mrb[0].mxu0
    %v5527 = vadd.f32 %v5334, %v5526
    %v5528 = vpop.f32.mrb[0].mxu0
    %v5529 = vadd.f32 %v5336, %v5528
    %v5530 = vpop.f32.mrb[0].mxu0
    %v5531 = vadd.f32 %v5338, %v5530
    %v5532 = vpop.f32.mrb[0].mxu0
    %v5533 = vadd.f32 %v5340, %v5532
    %5534 = vmatprep.mubr.bf16.mxu0 %v2160
    %5535 = vmatmul.mubr.bf16.gmra.mrb[0].mxu0 %v2159
    %v5536 = vpop.f32.mrb[0].mxu0
    %v5537 = vadd.f32 %v5344, %v5536
    %v5538 = vpop.f32.mrb[0].mxu0
    %v5539 = vadd.f32 %v5346, %v5538
    %v5540 = vpop.f32.mrb[0].mxu0
    %v5541 = vadd.f32 %v5348, %v5540
    %v5542 = vpop.f32.mrb[0].mxu0
    %v5543 = vadd.f32 %v5350, %v5542
    %5544 = vmatprep.mubr.bf16.mxu0 %v2168
    %5545 = vmatmul.mubr.bf16.gmra.mrb[0].mxu0 %v2167
    %v5546 = vpop.f32.mrb[0].mxu0
    %v5547 = vadd.f32 %v5354, %v5546
    %v5548 = vpop.f32.mrb[0].mxu0
    %v5549 = vadd.f32 %v5356, %v5548
    %v5550 = vpop.f32.mrb[0].mxu0
    %v5551 = vadd.f32 %v5358, %v5550
    %v5552 = vpop.f32.mrb[0].mxu0
    %v5553 = vadd.f32 %v5360, %v5552
    %5554 = vmatprep.mubr.bf16.mxu0 %v2176
    %5555 = vmatmul.mubr.bf16.gmra.mrb[0].mxu0 %v2175
    %v5556 = vpop.f32.mrb[0].mxu0
    %v5557 = vadd.f32 %v5364, %v5556
    %v5558 = vpop.f32.mrb[0].mxu0
    %v5559 = vadd.f32 %v5366, %v5558
    %v5560 = vpop.f32.mrb[0].mxu0
    %v5561 = vadd.f32 %v5368, %v5560
    %v5562 = vpop.f32.mrb[0].mxu0
    %v5563 = vadd.f32 %v5370, %v5562
    %5564 = vmatprep.mubr.bf16.mxu0 %v2184
    %5565 = vmatmul.mubr.bf16.gmra.mrb[0].mxu0 %v2183
    %v5566 = vpop.f32.mrb[0].mxu0
    %v5567 = vadd.f32 %v5374, %v5566
    %v5568 = vpop.f32.mrb[0].mxu0
    %v5569 = vadd.f32 %v5376, %v5568
    %v5570 = vpop.f32.mrb[0].mxu0
    %v5571 = vadd.f32 %v5378, %v5570
    %v5572 = vpop.f32.mrb[0].mxu0
    %v5573 = vadd.f32 %v5380, %v5572
    %5574 = vmatprep.mubr.bf16.mxu0 %v2192
    %5575 = vmatmul.mubr.bf16.gmra.mrb[0].mxu0 %v2191
    %v5576 = vpop.f32.mrb[0].mxu0
    %v5577 = vadd.f32 %v5384, %v5576
    %v5578 = vpop.f32.mrb[0].mxu0
    %v5579 = vadd.f32 %v5386, %v5578
    %v5580 = vpop.f32.mrb[0].mxu0
    %v5581 = vadd.f32 %v5388, %v5580
    %v5582 = vpop.f32.mrb[0].mxu0
    %v5583 = vadd.f32 %v5390, %v5582
    %5584 = vmatprep.mubr.bf16.mxu0 %v2200
    %5585 = vmatmul.mubr.bf16.gmra.mrb[0].mxu0 %v2199
    %v5586 = vpop.f32.mrb[0].mxu0
    %v5587 = vadd.f32 %v5394, %v5586
    %v5588 = vpop.f32.mrb[0].mxu0
    %v5589 = vadd.f32 %v5396, %v5588
    %v5590 = vpop.f32.mrb[0].mxu0
    %v5591 = vadd.f32 %v5398, %v5590
    %v5592 = vpop.f32.mrb[0].mxu0
    %v5593 = vadd.f32 %v5400, %v5592
    %5594 = vmatprep.mubr.bf16.mxu0 %v2208
    %5595 = vmatmul.mubr.bf16.gmra.mrb[0].mxu0 %v2207
    %v5596 = vpop.f32.mrb[0].mxu0
    %v5597 = vadd.f32 %v5404, %v5596
    %v5598 = vpop.f32.mrb[0].mxu0
    %v5599 = vadd.f32 %v5406, %v5598
    %v5600 = vpop.f32.mrb[0].mxu0
    %v5601 = vadd.f32 %v5408, %v5600
    %v5602 = vpop.f32.mrb[0].mxu0
    %v5603 = vadd.f32 %v5410, %v5602
    %5604 = vmatprep.mubr.bf16.mxu0 %v2216
    %5605 = vmatmul.mubr.bf16.gmra.mrb[0].mxu0 %v2215
    %v5606 = vpop.f32.mrb[0].mxu0
    %v5607 = vadd.f32 %v5414, %v5606
    %v5608 = vpop.f32.mrb[0].mxu0
    %v5609 = vadd.f32 %v5416, %v5608
    %v5610 = vpop.f32.mrb[0].mxu0
    %v5611 = vadd.f32 %v5418, %v5610
    %v5612 = vpop.f32.mrb[0].mxu0
    %v5613 = vadd.f32 %v5420, %v5612
    %5614 = vmatprep.mubr.bf16.mxu0 %v2224
    %5615 = vmatmul.mubr.bf16.gmra.mrb[0].mxu0 %v2223
    %v5616 = vpop.f32.mrb[0].mxu0
    %v5617 = vadd.f32 %v5424, %v5616
    %v5618 = vpop.f32.mrb[0].mxu0
    %v5619 = vadd.f32 %v5426, %v5618
    %v5620 = vpop.f32.mrb[0].mxu0
    %v5621 = vadd.f32 %v5428, %v5620
    %v5622 = vpop.f32.mrb[0].mxu0
    %v5623 = vadd.f32 %v5430, %v5622
    %5624 = vmatprep.mubr.bf16.mxu0 %v2232
    %5625 = vmatmul.mubr.bf16.gmra.mrb[0].mxu0 %v2231
    %v5626 = vpop.f32.mrb[0].mxu0
    %v5627 = vadd.f32 %v5434, %v5626
    %v5628 = vpop.f32.mrb[0].mxu0
    %v5629 = vadd.f32 %v5436, %v5628
    %v5630 = vpop.f32.mrb[0].mxu0
    %v5631 = vadd.f32 %v5438, %v5630
    %v5632 = vpop.f32.mrb[0].mxu0
    %v5633 = vadd.f32 %v5440, %v5632
    %5634 = vmatprep.mubr.bf16.mxu0 %v2240
    %5635 = vmatmul.mubr.bf16.gmra.mrb[0].mxu0 %v2239
    %v5636 = vpop.f32.mrb[0].mxu0
    %v5637 = vadd.f32 %v5444, %v5636
    %v5638 = vpop.f32.mrb[0].mxu0
    %v5639 = vadd.f32 %v5446, %v5638
    %v5640 = vpop.f32.mrb[0].mxu0
    %v5641 = vadd.f32 %v5448, %v5640
    %v5642 = vpop.f32.mrb[0].mxu0
    %v5643 = vadd.f32 %v5450, %v5642
    %5644 = vmatprep.mubr.bf16.mxu0 %v2248
    %5645 = vmatmul.mubr.bf16.gmra.mrb[0].mxu0 %v2247
    %v5646 = vpop.f32.mrb[0].mxu0
    %v5647 = vadd.f32 %v5454, %v5646
    %v5648 = vpop.f32.mrb[0].mxu0
    %v5649 = vadd.f32 %v5456, %v5648
    %v5650 = vpop.f32.mrb[0].mxu0
    %v5651 = vadd.f32 %v5458, %v5650
    %v5652 = vpop.f32.mrb[0].mxu0
    %v5653 = vadd.f32 %v5460, %v5652
    %5654 = vmatprep.mubr.bf16.mxu0 %v2256
    %5655 = vmatmul.mubr.bf16.gmra.mrb[0].mxu0 %v2255
    %v5656 = vpop.f32.mrb[0].mxu0
    %v5657 = vadd.f32 %v5464, %v5656
    %v5658 = vpop.f32.mrb[0].mxu0
    %v5659 = vadd.f32 %v5466, %v5658
    %v5660 = vpop.f32.mrb[0].mxu0
    %v5661 = vadd.f32 %v5468, %v5660
    %v5662 = vpop.f32.mrb[0].mxu0
    %v5663 = vadd.f32 %v5470, %v5662
    %5664 = vdwg.mxu0
    %5665 = vset.pattern.permute.xlu0 1
    %5666 = vperm.xlu0 %5665, %v99
    %v5667 = vpop.permute.xlu0 %5666
    %5669 = vset.pattern.permute.xlu0 1
    %5670 = vperm.xlu0 %5669, %v100
    %v5671 = vpop.permute.xlu0 %5670
    %5673 = vset.pattern.permute.xlu0 1
    %5674 = vperm.xlu0 %5673, %v101
    %v5675 = vpop.permute.xlu0 %5674
    %5677 = vset.pattern.permute.xlu0 1
    %5678 = vperm.xlu0 %5677, %v102
    %v5679 = vpop.permute.xlu0 %5678
    %5681 = vset.pattern.permute.xlu0 1
    %5682 = vperm.xlu0 %5681, %v103
    %v5683 = vpop.permute.xlu0 %5682
    %5685 = vset.pattern.permute.xlu0 1
    %5686 = vperm.xlu0 %5685, %v104
    %v5687 = vpop.permute.xlu0 %5686
    %5689 = vset.pattern.permute.xlu0 1
    %5690 = vperm.xlu0 %5689, %v105
    %v5691 = vpop.permute.xlu0 %5690
    %5693 = vset.pattern.permute.xlu0 1
    %5694 = vperm.xlu0 %5693, %v106
    %v5695 = vpop.permute.xlu0 %5694
    %5697 = vset.pattern.permute.xlu0 1
    %5698 = vperm.xlu0 %5697, %v107
    %v5699 = vpop.permute.xlu0 %5698
    %5701 = vset.pattern.permute.xlu0 1
    %5702 = vperm.xlu0 %5701, %v108
    %v5703 = vpop.permute.xlu0 %5702
    %5705 = vset.pattern.permute.xlu0 1
    %5706 = vperm.xlu0 %5705, %v109
    %v5707 = vpop.permute.xlu0 %5706
    %5709 = vset.pattern.permute.xlu0 1
    %5710 = vperm.xlu0 %5709, %v110
    %v5711 = vpop.permute.xlu0 %5710
    %5713 = vset.pattern.permute.xlu0 1
    %5714 = vperm.xlu0 %5713, %v111
    %v5715 = vpop.permute.xlu0 %5714
    %5717 = vset.pattern.permute.xlu0 1
    %5718 = vperm.xlu0 %5717, %v112
    %v5719 = vpop.permute.xlu0 %5718
    %5721 = vset.pattern.permute.xlu0 1
    %5722 = vperm.xlu0 %5721, %v113
    %v5723 = vpop.permute.xlu0 %5722
    %5725 = vset.pattern.permute.xlu0 1
    %5726 = vperm.xlu0 %5725, %v114
    %v5727 = vpop.permute.xlu0 %5726
    %5729 = vset.pattern.permute.xlu0 1
    %5730 = vperm.xlu0 %5729, %v115
    %v5731 = vpop.permute.xlu0 %5730
    %5733 = vset.pattern.permute.xlu0 1
    %5734 = vperm.xlu0 %5733, %v116
    %v5735 = vpop.permute.xlu0 %5734
    %5737 = vset.pattern.permute.xlu0 1
    %5738 = vperm.xlu0 %5737, %v117
    %v5739 = vpop.permute.xlu0 %5738
    %5741 = vset.pattern.permute.xlu0 1
    %5742 = vperm.xlu0 %5741, %v118
    %v5743 = vpop.permute.xlu0 %5742
    %5745 = vset.pattern.permute.xlu0 1
    %5746 = vperm.xlu0 %5745, %v119
    %v5747 = vpop.permute.xlu0 %5746
    %5749 = vset.pattern.permute.xlu0 1
    %5750 = vperm.xlu0 %5749, %v120
    %v5751 = vpop.permute.xlu0 %5750
    %5753 = vset.pattern.permute.xlu0 1
    %5754 = vperm.xlu0 %5753, %v121
    %v5755 = vpop.permute.xlu0 %5754
    %5757 = vset.pattern.permute.xlu0 1
    %5758 = vperm.xlu0 %5757, %v122
    %v5759 = vpop.permute.xlu0 %5758
    %5761 = vset.pattern.permute.xlu0 1
    %5762 = vperm.xlu0 %5761, %v123
    %v5763 = vpop.permute.xlu0 %5762
    %5765 = vset.pattern.permute.xlu0 1
    %5766 = vperm.xlu0 %5765, %v124
    %v5767 = vpop.permute.xlu0 %5766
    %5769 = vset.pattern.permute.xlu0 1
    %5770 = vperm.xlu0 %5769, %v125
    %v5771 = vpop.permute.xlu0 %5770
    %5773 = vset.pattern.permute.xlu0 1
    %5774 = vperm.xlu0 %5773, %v126
    %v5775 = vpop.permute.xlu0 %5774
    %5777 = vset.pattern.permute.xlu0 1
    %5778 = vperm.xlu0 %5777, %v127
    %v5779 = vpop.permute.xlu0 %5778
    %5781 = vset.pattern.permute.xlu0 1
    %5782 = vperm.xlu0 %5781, %v128
    %v5783 = vpop.permute.xlu0 %5782
    %5785 = vset.pattern.permute.xlu0 1
    %5786 = vperm.xlu0 %5785, %v129
    %v5787 = vpop.permute.xlu0 %5786
    %5789 = vset.pattern.permute.xlu0 1
    %5790 = vperm.xlu0 %5789, %v130
    %v5791 = vpop.permute.xlu0 %5790
    %v5793 = vlaneseq
    %v5794 = vshrl.u32 %v5793, 7
    %v5795 = vsub.s32 1, %v5794
    %v5796 = vrot.slane %v2513, %v5795
    %v5797 = vlaneseq
    %v5798 = vshrl.u32 %v5797, 7
    %v5799 = vsub.s32 5, %v5798
    %v5800 = vrot.slane %v2513, %v5799
    %v5801 = vlaneseq
    %v5802 = vshrl.u32 %v5801, 7
    %v5803 = vsub.s32 1, %v5802
    %v5804 = vrot.slane %v2514, %v5803
    %v5805 = vlaneseq
    %v5806 = vshrl.u32 %v5805, 7
    %v5807 = vsub.s32 5, %v5806
    %v5808 = vrot.slane %v2514, %v5807
    %v5813 = vlaneseq
    %v5814 = vshrl.u32 %v5813, 7
    %v5815 = vsub.s32 1, %v5814
    %v5816 = vrot.slane %v5796, %v5815
    %v5817 = vlaneseq
    %v5818 = vshrl.u32 %v5817, 7
    %v5819 = vsub.s32 1, %v5818
    %v5820 = vrot.slane %v5800, %v5819
    %v5821 = vlaneseq
    %v5822 = vshrl.u32 %v5821, 7
    %v5823 = vsub.s32 1, %v5822
    %v5824 = vrot.slane %v5804, %v5823
    %v5825 = vlaneseq
    %v5826 = vshrl.u32 %v5825, 7
    %v5827 = vsub.s32 1, %v5826
    %v5828 = vrot.slane %v5808, %v5827
    %v5829 = vmul.f32 %v5667, %v5816
    %v5830 = vmul.f32 %v5667, %v5820
    %v5831 = vmul.f32 %v5667, %v5824
    %v5832 = vmul.f32 %v5667, %v5828
    %v5833 = vmul.f32 %v5671, %v5816
    %v5834 = vmul.f32 %v5671, %v5820
    %v5835 = vmul.f32 %v5671, %v5824
    %v5836 = vmul.f32 %v5671, %v5828
    %v5837 = vmul.f32 %v5675, %v5816
    %v5838 = vmul.f32 %v5675, %v5820
    %v5839 = vmul.f32 %v5675, %v5824
    %v5840 = vmul.f32 %v5675, %v5828
    %v5841 = vmul.f32 %v5679, %v5816
    %v5842 = vmul.f32 %v5679, %v5820
    %v5843 = vmul.f32 %v5679, %v5824
    %v5844 = vmul.f32 %v5679, %v5828
    %v5845 = vmul.f32 %v5683, %v5816
    %v5846 = vmul.f32 %v5683, %v5820
    %v5847 = vmul.f32 %v5683, %v5824
    %v5848 = vmul.f32 %v5683, %v5828
    %v5849 = vmul.f32 %v5687, %v5816
    %v5850 = vmul.f32 %v5687, %v5820
    %v5851 = vmul.f32 %v5687, %v5824
    %v5852 = vmul.f32 %v5687, %v5828
    %v5853 = vmul.f32 %v5691, %v5816
    %v5854 = vmul.f32 %v5691, %v5820
    %v5855 = vmul.f32 %v5691, %v5824
    %v5856 = vmul.f32 %v5691, %v5828
    %v5857 = vmul.f32 %v5695, %v5816
    %v5858 = vmul.f32 %v5695, %v5820
    %v5859 = vmul.f32 %v5695, %v5824
    %v5860 = vmul.f32 %v5695, %v5828
    %v5861 = vmul.f32 %v5699, %v5816
    %v5862 = vmul.f32 %v5699, %v5820
    %v5863 = vmul.f32 %v5699, %v5824
    %v5864 = vmul.f32 %v5699, %v5828
    %v5865 = vmul.f32 %v5703, %v5816
    %v5866 = vmul.f32 %v5703, %v5820
    %v5867 = vmul.f32 %v5703, %v5824
    %v5868 = vmul.f32 %v5703, %v5828
    %v5869 = vmul.f32 %v5707, %v5816
    %v5870 = vmul.f32 %v5707, %v5820
    %v5871 = vmul.f32 %v5707, %v5824
    %v5872 = vmul.f32 %v5707, %v5828
    %v5873 = vmul.f32 %v5711, %v5816
    %v5874 = vmul.f32 %v5711, %v5820
    %v5875 = vmul.f32 %v5711, %v5824
    %v5876 = vmul.f32 %v5711, %v5828
    %v5877 = vmul.f32 %v5715, %v5816
    %v5878 = vmul.f32 %v5715, %v5820
    %v5879 = vmul.f32 %v5715, %v5824
    %v5880 = vmul.f32 %v5715, %v5828
    %v5881 = vmul.f32 %v5719, %v5816
    %v5882 = vmul.f32 %v5719, %v5820
    %v5883 = vmul.f32 %v5719, %v5824
    %v5884 = vmul.f32 %v5719, %v5828
    %v5885 = vmul.f32 %v5723, %v5816
    %v5886 = vmul.f32 %v5723, %v5820
    %v5887 = vmul.f32 %v5723, %v5824
    %v5888 = vmul.f32 %v5723, %v5828
    %v5889 = vmul.f32 %v5727, %v5816
    %v5890 = vmul.f32 %v5727, %v5820
    %v5891 = vmul.f32 %v5727, %v5824
    %v5892 = vmul.f32 %v5727, %v5828
    %v5893 = vmul.f32 %v5731, %v5816
    %v5894 = vmul.f32 %v5731, %v5820
    %v5895 = vmul.f32 %v5731, %v5824
    %v5896 = vmul.f32 %v5731, %v5828
    %v5897 = vmul.f32 %v5735, %v5816
    %v5898 = vmul.f32 %v5735, %v5820
    %v5899 = vmul.f32 %v5735, %v5824
    %v5900 = vmul.f32 %v5735, %v5828
    %v5901 = vmul.f32 %v5739, %v5816
    %v5902 = vmul.f32 %v5739, %v5820
    %v5903 = vmul.f32 %v5739, %v5824
    %v5904 = vmul.f32 %v5739, %v5828
    %v5905 = vmul.f32 %v5743, %v5816
    %v5906 = vmul.f32 %v5743, %v5820
    %v5907 = vmul.f32 %v5743, %v5824
    %v5908 = vmul.f32 %v5743, %v5828
    %v5909 = vmul.f32 %v5747, %v5816
    %v5910 = vmul.f32 %v5747, %v5820
    %v5911 = vmul.f32 %v5747, %v5824
    %v5912 = vmul.f32 %v5747, %v5828
    %v5913 = vmul.f32 %v5751, %v5816
    %v5914 = vmul.f32 %v5751, %v5820
    %v5915 = vmul.f32 %v5751, %v5824
    %v5916 = vmul.f32 %v5751, %v5828
    %v5917 = vmul.f32 %v5755, %v5816
    %v5918 = vmul.f32 %v5755, %v5820
    %v5919 = vmul.f32 %v5755, %v5824
    %v5920 = vmul.f32 %v5755, %v5828
    %v5921 = vmul.f32 %v5759, %v5816
    %v5922 = vmul.f32 %v5759, %v5820
    %v5923 = vmul.f32 %v5759, %v5824
    %v5924 = vmul.f32 %v5759, %v5828
    %v5925 = vmul.f32 %v5763, %v5816
    %v5926 = vmul.f32 %v5763, %v5820
    %v5927 = vmul.f32 %v5763, %v5824
    %v5928 = vmul.f32 %v5763, %v5828
    %v5929 = vmul.f32 %v5767, %v5816
    %v5930 = vmul.f32 %v5767, %v5820
    %v5931 = vmul.f32 %v5767, %v5824
    %v5932 = vmul.f32 %v5767, %v5828
    %v5933 = vmul.f32 %v5771, %v5816
    %v5934 = vmul.f32 %v5771, %v5820
    %v5935 = vmul.f32 %v5771, %v5824
    %v5936 = vmul.f32 %v5771, %v5828
    %v5937 = vmul.f32 %v5775, %v5816
    %v5938 = vmul.f32 %v5775, %v5820
    %v5939 = vmul.f32 %v5775, %v5824
    %v5940 = vmul.f32 %v5775, %v5828
    %v5941 = vmul.f32 %v5779, %v5816
    %v5942 = vmul.f32 %v5779, %v5820
    %v5943 = vmul.f32 %v5779, %v5824
    %v5944 = vmul.f32 %v5779, %v5828
    %v5945 = vmul.f32 %v5783, %v5816
    %v5946 = vmul.f32 %v5783, %v5820
    %v5947 = vmul.f32 %v5783, %v5824
    %v5948 = vmul.f32 %v5783, %v5828
    %v5949 = vmul.f32 %v5787, %v5816
    %v5950 = vmul.f32 %v5787, %v5820
    %v5951 = vmul.f32 %v5787, %v5824
    %v5952 = vmul.f32 %v5787, %v5828
    %v5953 = vmul.f32 %v5791, %v5816
    %v5954 = vmul.f32 %v5791, %v5820
    %v5955 = vmul.f32 %v5791, %v5824
    %v5956 = vmul.f32 %v5791, %v5828
    %v5957 = vadd.f32 %v4735, %v5829
    %v5958 = vadd.f32 %v4737, %v5830
    %v5959 = vadd.f32 %v5507, %v5831
    %v5960 = vadd.f32 %v5509, %v5832
    %v5961 = vadd.f32 %v4739, %v5833
    %v5962 = vadd.f32 %v4741, %v5834
    %v5963 = vadd.f32 %v5511, %v5835
    %v5964 = vadd.f32 %v5513, %v5836
    %v5965 = vadd.f32 %v4745, %v5837
    %v5966 = vadd.f32 %v4747, %v5838
    %v5967 = vadd.f32 %v5517, %v5839
    %v5968 = vadd.f32 %v5519, %v5840
    %v5969 = vadd.f32 %v4749, %v5841
    %v5970 = vadd.f32 %v4751, %v5842
    %v5971 = vadd.f32 %v5521, %v5843
    %v5972 = vadd.f32 %v5523, %v5844
    %v5973 = vadd.f32 %v4755, %v5845
    %v5974 = vadd.f32 %v4757, %v5846
    %v5975 = vadd.f32 %v5527, %v5847
    %v5976 = vadd.f32 %v5529, %v5848
    %v5977 = vadd.f32 %v4759, %v5849
    %v5978 = vadd.f32 %v4761, %v5850
    %v5979 = vadd.f32 %v5531, %v5851
    %v5980 = vadd.f32 %v5533, %v5852
    %v5981 = vadd.f32 %v4765, %v5853
    %v5982 = vadd.f32 %v4767, %v5854
    %v5983 = vadd.f32 %v5537, %v5855
    %v5984 = vadd.f32 %v5539, %v5856
    %v5985 = vadd.f32 %v4769, %v5857
    %v5986 = vadd.f32 %v4771, %v5858
    %v5987 = vadd.f32 %v5541, %v5859
    %v5988 = vadd.f32 %v5543, %v5860
    %v5989 = vadd.f32 %v4775, %v5861
    %v5990 = vadd.f32 %v4777, %v5862
    %v5991 = vadd.f32 %v5547, %v5863
    %v5992 = vadd.f32 %v5549, %v5864
    %v5993 = vadd.f32 %v4779, %v5865
    %v5994 = vadd.f32 %v4781, %v5866
    %v5995 = vadd.f32 %v5551, %v5867
    %v5996 = vadd.f32 %v5553, %v5868
    %v5997 = vadd.f32 %v4785, %v5869
    %v5998 = vadd.f32 %v4787, %v5870
    %v5999 = vadd.f32 %v5557, %v5871
    %v6000 = vadd.f32 %v5559, %v5872
    %v6001 = vadd.f32 %v4789, %v5873
    %v6002 = vadd.f32 %v4791, %v5874
    %v6003 = vadd.f32 %v5561, %v5875
    %v6004 = vadd.f32 %v5563, %v5876
    %v6005 = vadd.f32 %v4795, %v5877
    %v6006 = vadd.f32 %v4797, %v5878
    %v6007 = vadd.f32 %v5567, %v5879
    %v6008 = vadd.f32 %v5569, %v5880
    %v6009 = vadd.f32 %v4799, %v5881
    %v6010 = vadd.f32 %v4801, %v5882
    %v6011 = vadd.f32 %v5571, %v5883
    %v6012 = vadd.f32 %v5573, %v5884
    %v6013 = vadd.f32 %v4805, %v5885
    %v6014 = vadd.f32 %v4807, %v5886
    %v6015 = vadd.f32 %v5577, %v5887
    %v6016 = vadd.f32 %v5579, %v5888
    %v6017 = vadd.f32 %v4809, %v5889
    %v6018 = vadd.f32 %v4811, %v5890
    %v6019 = vadd.f32 %v5581, %v5891
    %v6020 = vadd.f32 %v5583, %v5892
    %v6021 = vadd.f32 %v4815, %v5893
    %v6022 = vadd.f32 %v4817, %v5894
    %v6023 = vadd.f32 %v5587, %v5895
    %v6024 = vadd.f32 %v5589, %v5896
    %v6025 = vadd.f32 %v4819, %v5897
    %v6026 = vadd.f32 %v4821, %v5898
    %v6027 = vadd.f32 %v5591, %v5899
    %v6028 = vadd.f32 %v5593, %v5900
    %v6029 = vadd.f32 %v4825, %v5901
    %v6030 = vadd.f32 %v4827, %v5902
    %v6031 = vadd.f32 %v5597, %v5903
    %v6032 = vadd.f32 %v5599, %v5904
    %v6033 = vadd.f32 %v4829, %v5905
    %v6034 = vadd.f32 %v4831, %v5906
    %v6035 = vadd.f32 %v5601, %v5907
    %v6036 = vadd.f32 %v5603, %v5908
    %v6037 = vadd.f32 %v4835, %v5909
    %v6038 = vadd.f32 %v4837, %v5910
    %v6039 = vadd.f32 %v5607, %v5911
    %v6040 = vadd.f32 %v5609, %v5912
    %v6041 = vadd.f32 %v4839, %v5913
    %v6042 = vadd.f32 %v4841, %v5914
    %v6043 = vadd.f32 %v5611, %v5915
    %v6044 = vadd.f32 %v5613, %v5916
    %v6045 = vadd.f32 %v4845, %v5917
    %v6046 = vadd.f32 %v4847, %v5918
    %v6047 = vadd.f32 %v5617, %v5919
    %v6048 = vadd.f32 %v5619, %v5920
    %v6049 = vadd.f32 %v4849, %v5921
    %v6050 = vadd.f32 %v4851, %v5922
    %v6051 = vadd.f32 %v5621, %v5923
    %v6052 = vadd.f32 %v5623, %v5924
    %v6053 = vadd.f32 %v4855, %v5925
    %v6054 = vadd.f32 %v4857, %v5926
    %v6055 = vadd.f32 %v5627, %v5927
    %v6056 = vadd.f32 %v5629, %v5928
    %v6057 = vadd.f32 %v4859, %v5929
    %v6058 = vadd.f32 %v4861, %v5930
    %v6059 = vadd.f32 %v5631, %v5931
    %v6060 = vadd.f32 %v5633, %v5932
    %v6061 = vadd.f32 %v4865, %v5933
    %v6062 = vadd.f32 %v4867, %v5934
    %v6063 = vadd.f32 %v5637, %v5935
    %v6064 = vadd.f32 %v5639, %v5936
    %v6065 = vadd.f32 %v4869, %v5937
    %v6066 = vadd.f32 %v4871, %v5938
    %v6067 = vadd.f32 %v5641, %v5939
    %v6068 = vadd.f32 %v5643, %v5940
    %v6069 = vadd.f32 %v4875, %v5941
    %v6070 = vadd.f32 %v4877, %v5942
    %v6071 = vadd.f32 %v5647, %v5943
    %v6072 = vadd.f32 %v5649, %v5944
    %v6073 = vadd.f32 %v4879, %v5945
    %v6074 = vadd.f32 %v4881, %v5946
    %v6075 = vadd.f32 %v5651, %v5947
    %v6076 = vadd.f32 %v5653, %v5948
    %v6077 = vadd.f32 %v4885, %v5949
    %v6078 = vadd.f32 %v4887, %v5950
    %v6079 = vadd.f32 %v5657, %v5951
    %v6080 = vadd.f32 %v5659, %v5952
    %v6081 = vadd.f32 %v4889, %v5953
    %v6082 = vadd.f32 %v4891, %v5954
    %v6083 = vadd.f32 %v5661, %v5955
    %v6084 = vadd.f32 %v5663, %v5956
    %6085 = vset.pattern.permute.xlu0 2
    %6086 = vperm.xlu0 %6085, %v99
    %v6087 = vpop.permute.xlu0 %6086
    %6089 = vset.pattern.permute.xlu0 2
    %6090 = vperm.xlu0 %6089, %v100
    %v6091 = vpop.permute.xlu0 %6090
    %6093 = vset.pattern.permute.xlu0 2
    %6094 = vperm.xlu0 %6093, %v101
    %v6095 = vpop.permute.xlu0 %6094
    %6097 = vset.pattern.permute.xlu0 2
    %6098 = vperm.xlu0 %6097, %v102
    %v6099 = vpop.permute.xlu0 %6098
    %6101 = vset.pattern.permute.xlu0 2
    %6102 = vperm.xlu0 %6101, %v103
    %v6103 = vpop.permute.xlu0 %6102
    %6105 = vset.pattern.permute.xlu0 2
    %6106 = vperm.xlu0 %6105, %v104
    %v6107 = vpop.permute.xlu0 %6106
    %6109 = vset.pattern.permute.xlu0 2
    %6110 = vperm.xlu0 %6109, %v105
    %v6111 = vpop.permute.xlu0 %6110
    %6113 = vset.pattern.permute.xlu0 2
    %6114 = vperm.xlu0 %6113, %v106
    %v6115 = vpop.permute.xlu0 %6114
    %6117 = vset.pattern.permute.xlu0 2
    %6118 = vperm.xlu0 %6117, %v107
    %v6119 = vpop.permute.xlu0 %6118
    %6121 = vset.pattern.permute.xlu0 2
    %6122 = vperm.xlu0 %6121, %v108
    %v6123 = vpop.permute.xlu0 %6122
    %6125 = vset.pattern.permute.xlu0 2
    %6126 = vperm.xlu0 %6125, %v109
    %v6127 = vpop.permute.xlu0 %6126
    %6129 = vset.pattern.permute.xlu0 2
    %6130 = vperm.xlu0 %6129, %v110
    %v6131 = vpop.permute.xlu0 %6130
    %6133 = vset.pattern.permute.xlu0 2
    %6134 = vperm.xlu0 %6133, %v111
    %v6135 = vpop.permute.xlu0 %6134
    %6137 = vset.pattern.permute.xlu0 2
    %6138 = vperm.xlu0 %6137, %v112
    %v6139 = vpop.permute.xlu0 %6138
    %6141 = vset.pattern.permute.xlu0 2
    %6142 = vperm.xlu0 %6141, %v113
    %v6143 = vpop.permute.xlu0 %6142
    %6145 = vset.pattern.permute.xlu0 2
    %6146 = vperm.xlu0 %6145, %v114
    %v6147 = vpop.permute.xlu0 %6146
    %6149 = vset.pattern.permute.xlu0 2
    %6150 = vperm.xlu0 %6149, %v115
    %v6151 = vpop.permute.xlu0 %6150
    %6153 = vset.pattern.permute.xlu0 2
    %6154 = vperm.xlu0 %6153, %v116
    %v6155 = vpop.permute.xlu0 %6154
    %6157 = vset.pattern.permute.xlu0 2
    %6158 = vperm.xlu0 %6157, %v117
    %v6159 = vpop.permute.xlu0 %6158
    %6161 = vset.pattern.permute.xlu0 2
    %6162 = vperm.xlu0 %6161, %v118
    %v6163 = vpop.permute.xlu0 %6162
    %6165 = vset.pattern.permute.xlu0 2
    %6166 = vperm.xlu0 %6165, %v119
    %v6167 = vpop.permute.xlu0 %6166
    %6169 = vset.pattern.permute.xlu0 2
    %6170 = vperm.xlu0 %6169, %v120
    %v6171 = vpop.permute.xlu0 %6170
    %6173 = vset.pattern.permute.xlu0 2
    %6174 = vperm.xlu0 %6173, %v121
    %v6175 = vpop.permute.xlu0 %6174
    %6177 = vset.pattern.permute.xlu0 2
    %6178 = vperm.xlu0 %6177, %v122
    %v6179 = vpop.permute.xlu0 %6178
    %6181 = vset.pattern.permute.xlu0 2
    %6182 = vperm.xlu0 %6181, %v123
    %v6183 = vpop.permute.xlu0 %6182
    %6185 = vset.pattern.permute.xlu0 2
    %6186 = vperm.xlu0 %6185, %v124
    %v6187 = vpop.permute.xlu0 %6186
    %6189 = vset.pattern.permute.xlu0 2
    %6190 = vperm.xlu0 %6189, %v125
    %v6191 = vpop.permute.xlu0 %6190
    %6193 = vset.pattern.permute.xlu0 2
    %6194 = vperm.xlu0 %6193, %v126
    %v6195 = vpop.permute.xlu0 %6194
    %6197 = vset.pattern.permute.xlu0 2
    %6198 = vperm.xlu0 %6197, %v127
    %v6199 = vpop.permute.xlu0 %6198
    %6201 = vset.pattern.permute.xlu0 2
    %6202 = vperm.xlu0 %6201, %v128
    %v6203 = vpop.permute.xlu0 %6202
    %6205 = vset.pattern.permute.xlu0 2
    %6206 = vperm.xlu0 %6205, %v129
    %v6207 = vpop.permute.xlu0 %6206
    %6209 = vset.pattern.permute.xlu0 2
    %6210 = vperm.xlu0 %6209, %v130
    %v6211 = vpop.permute.xlu0 %6210
    %v6213 = vlaneseq
    %v6214 = vshrl.u32 %v6213, 7
    %v6215 = vsub.s32 2, %v6214
    %v6216 = vrot.slane %v2513, %v6215
    %v6217 = vlaneseq
    %v6218 = vshrl.u32 %v6217, 7
    %v6219 = vsub.s32 6, %v6218
    %v6220 = vrot.slane %v2513, %v6219
    %v6221 = vlaneseq
    %v6222 = vshrl.u32 %v6221, 7
    %v6223 = vsub.s32 2, %v6222
    %v6224 = vrot.slane %v2514, %v6223
    %v6225 = vlaneseq
    %v6226 = vshrl.u32 %v6225, 7
    %v6227 = vsub.s32 6, %v6226
    %v6228 = vrot.slane %v2514, %v6227
    %v6233 = vlaneseq
    %v6234 = vshrl.u32 %v6233, 7
    %v6235 = vsub.s32 2, %v6234
    %v6236 = vrot.slane %v6216, %v6235
    %v6237 = vlaneseq
    %v6238 = vshrl.u32 %v6237, 7
    %v6239 = vsub.s32 2, %v6238
    %v6240 = vrot.slane %v6220, %v6239
    %v6241 = vlaneseq
    %v6242 = vshrl.u32 %v6241, 7
    %v6243 = vsub.s32 2, %v6242
    %v6244 = vrot.slane %v6224, %v6243
    %v6245 = vlaneseq
    %v6246 = vshrl.u32 %v6245, 7
    %v6247 = vsub.s32 2, %v6246
    %v6248 = vrot.slane %v6228, %v6247
    %v6249 = vmul.f32 %v6087, %v6236
    %v6250 = vmul.f32 %v6087, %v6240
    %v6251 = vmul.f32 %v6087, %v6244
    %v6252 = vmul.f32 %v6087, %v6248
    %v6253 = vmul.f32 %v6091, %v6236
    %v6254 = vmul.f32 %v6091, %v6240
    %v6255 = vmul.f32 %v6091, %v6244
    %v6256 = vmul.f32 %v6091, %v6248
    %v6257 = vmul.f32 %v6095, %v6236
    %v6258 = vmul.f32 %v6095, %v6240
    %v6259 = vmul.f32 %v6095, %v6244
    %v6260 = vmul.f32 %v6095, %v6248
    %v6261 = vmul.f32 %v6099, %v6236
    %v6262 = vmul.f32 %v6099, %v6240
    %v6263 = vmul.f32 %v6099, %v6244
    %v6264 = vmul.f32 %v6099, %v6248
    %v6265 = vmul.f32 %v6103, %v6236
    %v6266 = vmul.f32 %v6103, %v6240
    %v6267 = vmul.f32 %v6103, %v6244
    %v6268 = vmul.f32 %v6103, %v6248
    %v6269 = vmul.f32 %v6107, %v6236
    %v6270 = vmul.f32 %v6107, %v6240
    %v6271 = vmul.f32 %v6107, %v6244
    %v6272 = vmul.f32 %v6107, %v6248
    %v6273 = vmul.f32 %v6111, %v6236
    %v6274 = vmul.f32 %v6111, %v6240
    %v6275 = vmul.f32 %v6111, %v6244
    %v6276 = vmul.f32 %v6111, %v6248
    %v6277 = vmul.f32 %v6115, %v6236
    %v6278 = vmul.f32 %v6115, %v6240
    %v6279 = vmul.f32 %v6115, %v6244
    %v6280 = vmul.f32 %v6115, %v6248
    %v6281 = vmul.f32 %v6119, %v6236
    %v6282 = vmul.f32 %v6119, %v6240
    %v6283 = vmul.f32 %v6119, %v6244
    %v6284 = vmul.f32 %v6119, %v6248
    %v6285 = vmul.f32 %v6123, %v6236
    %v6286 = vmul.f32 %v6123, %v6240
    %v6287 = vmul.f32 %v6123, %v6244
    %v6288 = vmul.f32 %v6123, %v6248
    %v6289 = vmul.f32 %v6127, %v6236
    %v6290 = vmul.f32 %v6127, %v6240
    %v6291 = vmul.f32 %v6127, %v6244
    %v6292 = vmul.f32 %v6127, %v6248
    %v6293 = vmul.f32 %v6131, %v6236
    %v6294 = vmul.f32 %v6131, %v6240
    %v6295 = vmul.f32 %v6131, %v6244
    %v6296 = vmul.f32 %v6131, %v6248
    %v6297 = vmul.f32 %v6135, %v6236
    %v6298 = vmul.f32 %v6135, %v6240
    %v6299 = vmul.f32 %v6135, %v6244
    %v6300 = vmul.f32 %v6135, %v6248
    %v6301 = vmul.f32 %v6139, %v6236
    %v6302 = vmul.f32 %v6139, %v6240
    %v6303 = vmul.f32 %v6139, %v6244
    %v6304 = vmul.f32 %v6139, %v6248
    %v6305 = vmul.f32 %v6143, %v6236
    %v6306 = vmul.f32 %v6143, %v6240
    %v6307 = vmul.f32 %v6143, %v6244
    %v6308 = vmul.f32 %v6143, %v6248
    %v6309 = vmul.f32 %v6147, %v6236
    %v6310 = vmul.f32 %v6147, %v6240
    %v6311 = vmul.f32 %v6147, %v6244
    %v6312 = vmul.f32 %v6147, %v6248
    %v6313 = vmul.f32 %v6151, %v6236
    %v6314 = vmul.f32 %v6151, %v6240
    %v6315 = vmul.f32 %v6151, %v6244
    %v6316 = vmul.f32 %v6151, %v6248
    %v6317 = vmul.f32 %v6155, %v6236
    %v6318 = vmul.f32 %v6155, %v6240
    %v6319 = vmul.f32 %v6155, %v6244
    %v6320 = vmul.f32 %v6155, %v6248
    %v6321 = vmul.f32 %v6159, %v6236
    %v6322 = vmul.f32 %v6159, %v6240
    %v6323 = vmul.f32 %v6159, %v6244
    %v6324 = vmul.f32 %v6159, %v6248
    %v6325 = vmul.f32 %v6163, %v6236
    %v6326 = vmul.f32 %v6163, %v6240
    %v6327 = vmul.f32 %v6163, %v6244
    %v6328 = vmul.f32 %v6163, %v6248
    %v6329 = vmul.f32 %v6167, %v6236
    %v6330 = vmul.f32 %v6167, %v6240
    %v6331 = vmul.f32 %v6167, %v6244
    %v6332 = vmul.f32 %v6167, %v6248
    %v6333 = vmul.f32 %v6171, %v6236
    %v6334 = vmul.f32 %v6171, %v6240
    %v6335 = vmul.f32 %v6171, %v6244
    %v6336 = vmul.f32 %v6171, %v6248
    %v6337 = vmul.f32 %v6175, %v6236
    %v6338 = vmul.f32 %v6175, %v6240
    %v6339 = vmul.f32 %v6175, %v6244
    %v6340 = vmul.f32 %v6175, %v6248
    %v6341 = vmul.f32 %v6179, %v6236
    %v6342 = vmul.f32 %v6179, %v6240
    %v6343 = vmul.f32 %v6179, %v6244
    %v6344 = vmul.f32 %v6179, %v6248
    %v6345 = vmul.f32 %v6183, %v6236
    %v6346 = vmul.f32 %v6183, %v6240
    %v6347 = vmul.f32 %v6183, %v6244
    %v6348 = vmul.f32 %v6183, %v6248
    %v6349 = vmul.f32 %v6187, %v6236
    %v6350 = vmul.f32 %v6187, %v6240
    %v6351 = vmul.f32 %v6187, %v6244
    %v6352 = vmul.f32 %v6187, %v6248
    %v6353 = vmul.f32 %v6191, %v6236
    %v6354 = vmul.f32 %v6191, %v6240
    %v6355 = vmul.f32 %v6191, %v6244
    %v6356 = vmul.f32 %v6191, %v6248
    %v6357 = vmul.f32 %v6195, %v6236
    %v6358 = vmul.f32 %v6195, %v6240
    %v6359 = vmul.f32 %v6195, %v6244
    %v6360 = vmul.f32 %v6195, %v6248
    %v6361 = vmul.f32 %v6199, %v6236
    %v6362 = vmul.f32 %v6199, %v6240
    %v6363 = vmul.f32 %v6199, %v6244
    %v6364 = vmul.f32 %v6199, %v6248
    %v6365 = vmul.f32 %v6203, %v6236
    %v6366 = vmul.f32 %v6203, %v6240
    %v6367 = vmul.f32 %v6203, %v6244
    %v6368 = vmul.f32 %v6203, %v6248
    %v6369 = vmul.f32 %v6207, %v6236
    %v6370 = vmul.f32 %v6207, %v6240
    %v6371 = vmul.f32 %v6207, %v6244
    %v6372 = vmul.f32 %v6207, %v6248
    %v6373 = vmul.f32 %v6211, %v6236
    %v6374 = vmul.f32 %v6211, %v6240
    %v6375 = vmul.f32 %v6211, %v6244
    %v6376 = vmul.f32 %v6211, %v6248
    %v6377 = vadd.f32 %v5957, %v6249
    %v6378 = vadd.f32 %v5958, %v6250
    %v6379 = vadd.f32 %v5959, %v6251
    %v6380 = vadd.f32 %v5960, %v6252
    %v6381 = vadd.f32 %v5961, %v6253
    %v6382 = vadd.f32 %v5962, %v6254
    %v6383 = vadd.f32 %v5963, %v6255
    %v6384 = vadd.f32 %v5964, %v6256
    %v6385 = vadd.f32 %v5965, %v6257
    %v6386 = vadd.f32 %v5966, %v6258
    %v6387 = vadd.f32 %v5967, %v6259
    %v6388 = vadd.f32 %v5968, %v6260
    %v6389 = vadd.f32 %v5969, %v6261
    %v6390 = vadd.f32 %v5970, %v6262
    %v6391 = vadd.f32 %v5971, %v6263
    %v6392 = vadd.f32 %v5972, %v6264
    %v6393 = vadd.f32 %v5973, %v6265
    %v6394 = vadd.f32 %v5974, %v6266
    %v6395 = vadd.f32 %v5975, %v6267
    %v6396 = vadd.f32 %v5976, %v6268
    %v6397 = vadd.f32 %v5977, %v6269
    %v6398 = vadd.f32 %v5978, %v6270
    %v6399 = vadd.f32 %v5979, %v6271
    %v6400 = vadd.f32 %v5980, %v6272
    %v6401 = vadd.f32 %v5981, %v6273
    %v6402 = vadd.f32 %v5982, %v6274
    %v6403 = vadd.f32 %v5983, %v6275
    %v6404 = vadd.f32 %v5984, %v6276
    %v6405 = vadd.f32 %v5985, %v6277
    %v6406 = vadd.f32 %v5986, %v6278
    %v6407 = vadd.f32 %v5987, %v6279
    %v6408 = vadd.f32 %v5988, %v6280
    %v6409 = vadd.f32 %v5989, %v6281
    %v6410 = vadd.f32 %v5990, %v6282
    %v6411 = vadd.f32 %v5991, %v6283
    %v6412 = vadd.f32 %v5992, %v6284
    %v6413 = vadd.f32 %v5993, %v6285
    %v6414 = vadd.f32 %v5994, %v6286
    %v6415 = vadd.f32 %v5995, %v6287
    %v6416 = vadd.f32 %v5996, %v6288
    %v6417 = vadd.f32 %v5997, %v6289
    %v6418 = vadd.f32 %v5998, %v6290
    %v6419 = vadd.f32 %v5999, %v6291
    %v6420 = vadd.f32 %v6000, %v6292
    %v6421 = vadd.f32 %v6001, %v6293
    %v6422 = vadd.f32 %v6002, %v6294
    %v6423 = vadd.f32 %v6003, %v6295
    %v6424 = vadd.f32 %v6004, %v6296
    %v6425 = vadd.f32 %v6005, %v6297
    %v6426 = vadd.f32 %v6006, %v6298
    %v6427 = vadd.f32 %v6007, %v6299
    %v6428 = vadd.f32 %v6008, %v6300
    %v6429 = vadd.f32 %v6009, %v6301
    %v6430 = vadd.f32 %v6010, %v6302
    %v6431 = vadd.f32 %v6011, %v6303
    %v6432 = vadd.f32 %v6012, %v6304
    %v6433 = vadd.f32 %v6013, %v6305
    %v6434 = vadd.f32 %v6014, %v6306
    %v6435 = vadd.f32 %v6015, %v6307
    %v6436 = vadd.f32 %v6016, %v6308
    %v6437 = vadd.f32 %v6017, %v6309
    %v6438 = vadd.f32 %v6018, %v6310
    %v6439 = vadd.f32 %v6019, %v6311
    %v6440 = vadd.f32 %v6020, %v6312
    %v6441 = vadd.f32 %v6021, %v6313
    %v6442 = vadd.f32 %v6022, %v6314
    %v6443 = vadd.f32 %v6023, %v6315
    %v6444 = vadd.f32 %v6024, %v6316
    %v6445 = vadd.f32 %v6025, %v6317
    %v6446 = vadd.f32 %v6026, %v6318
    %v6447 = vadd.f32 %v6027, %v6319
    %v6448 = vadd.f32 %v6028, %v6320
    %v6449 = vadd.f32 %v6029, %v6321
    %v6450 = vadd.f32 %v6030, %v6322
    %v6451 = vadd.f32 %v6031, %v6323
    %v6452 = vadd.f32 %v6032, %v6324
    %v6453 = vadd.f32 %v6033, %v6325
    %v6454 = vadd.f32 %v6034, %v6326
    %v6455 = vadd.f32 %v6035, %v6327
    %v6456 = vadd.f32 %v6036, %v6328
    %v6457 = vadd.f32 %v6037, %v6329
    %v6458 = vadd.f32 %v6038, %v6330
    %v6459 = vadd.f32 %v6039, %v6331
    %v6460 = vadd.f32 %v6040, %v6332
    %v6461 = vadd.f32 %v6041, %v6333
    %v6462 = vadd.f32 %v6042, %v6334
    %v6463 = vadd.f32 %v6043, %v6335
    %v6464 = vadd.f32 %v6044, %v6336
    %v6465 = vadd.f32 %v6045, %v6337
    %v6466 = vadd.f32 %v6046, %v6338
    %v6467 = vadd.f32 %v6047, %v6339
    %v6468 = vadd.f32 %v6048, %v6340
    %v6469 = vadd.f32 %v6049, %v6341
    %v6470 = vadd.f32 %v6050, %v6342
    %v6471 = vadd.f32 %v6051, %v6343
    %v6472 = vadd.f32 %v6052, %v6344
    %v6473 = vadd.f32 %v6053, %v6345
    %v6474 = vadd.f32 %v6054, %v6346
    %v6475 = vadd.f32 %v6055, %v6347
    %v6476 = vadd.f32 %v6056, %v6348
    %v6477 = vadd.f32 %v6057, %v6349
    %v6478 = vadd.f32 %v6058, %v6350
    %v6479 = vadd.f32 %v6059, %v6351
    %v6480 = vadd.f32 %v6060, %v6352
    %v6481 = vadd.f32 %v6061, %v6353
    %v6482 = vadd.f32 %v6062, %v6354
    %v6483 = vadd.f32 %v6063, %v6355
    %v6484 = vadd.f32 %v6064, %v6356
    %v6485 = vadd.f32 %v6065, %v6357
    %v6486 = vadd.f32 %v6066, %v6358
    %v6487 = vadd.f32 %v6067, %v6359
    %v6488 = vadd.f32 %v6068, %v6360
    %v6489 = vadd.f32 %v6069, %v6361
    %v6490 = vadd.f32 %v6070, %v6362
    %v6491 = vadd.f32 %v6071, %v6363
    %v6492 = vadd.f32 %v6072, %v6364
    %v6493 = vadd.f32 %v6073, %v6365
    %v6494 = vadd.f32 %v6074, %v6366
    %v6495 = vadd.f32 %v6075, %v6367
    %v6496 = vadd.f32 %v6076, %v6368
    %v6497 = vadd.f32 %v6077, %v6369
    %v6498 = vadd.f32 %v6078, %v6370
    %v6499 = vadd.f32 %v6079, %v6371
    %v6500 = vadd.f32 %v6080, %v6372
    %v6501 = vadd.f32 %v6081, %v6373
    %v6502 = vadd.f32 %v6082, %v6374
    %v6503 = vadd.f32 %v6083, %v6375
    %v6504 = vadd.f32 %v6084, %v6376
    %6505 = vset.pattern.permute.xlu0 3
    %6506 = vperm.xlu0 %6505, %v99
    %v6507 = vpop.permute.xlu0 %6506
    %6509 = vset.pattern.permute.xlu0 3
    %6510 = vperm.xlu0 %6509, %v100
    %v6511 = vpop.permute.xlu0 %6510
    %6513 = vset.pattern.permute.xlu0 3
    %6514 = vperm.xlu0 %6513, %v101
    %v6515 = vpop.permute.xlu0 %6514
    %6517 = vset.pattern.permute.xlu0 3
    %6518 = vperm.xlu0 %6517, %v102
    %v6519 = vpop.permute.xlu0 %6518
    %6521 = vset.pattern.permute.xlu0 3
    %6522 = vperm.xlu0 %6521, %v103
    %v6523 = vpop.permute.xlu0 %6522
    %6525 = vset.pattern.permute.xlu0 3
    %6526 = vperm.xlu0 %6525, %v104
    %v6527 = vpop.permute.xlu0 %6526
    %6529 = vset.pattern.permute.xlu0 3
    %6530 = vperm.xlu0 %6529, %v105
    %v6531 = vpop.permute.xlu0 %6530
    %6533 = vset.pattern.permute.xlu0 3
    %6534 = vperm.xlu0 %6533, %v106
    %v6535 = vpop.permute.xlu0 %6534
    %6537 = vset.pattern.permute.xlu0 3
    %6538 = vperm.xlu0 %6537, %v107
    %v6539 = vpop.permute.xlu0 %6538
    %6541 = vset.pattern.permute.xlu0 3
    %6542 = vperm.xlu0 %6541, %v108
    %v6543 = vpop.permute.xlu0 %6542
    %6545 = vset.pattern.permute.xlu0 3
    %6546 = vperm.xlu0 %6545, %v109
    %v6547 = vpop.permute.xlu0 %6546
    %6549 = vset.pattern.permute.xlu0 3
    %6550 = vperm.xlu0 %6549, %v110
    %v6551 = vpop.permute.xlu0 %6550
    %6553 = vset.pattern.permute.xlu0 3
    %6554 = vperm.xlu0 %6553, %v111
    %v6555 = vpop.permute.xlu0 %6554
    %6557 = vset.pattern.permute.xlu0 3
    %6558 = vperm.xlu0 %6557, %v112
    %v6559 = vpop.permute.xlu0 %6558
    %6561 = vset.pattern.permute.xlu0 3
    %6562 = vperm.xlu0 %6561, %v113
    %v6563 = vpop.permute.xlu0 %6562
    %6565 = vset.pattern.permute.xlu0 3
    %6566 = vperm.xlu0 %6565, %v114
    %v6567 = vpop.permute.xlu0 %6566
    %6569 = vset.pattern.permute.xlu0 3
    %6570 = vperm.xlu0 %6569, %v115
    %v6571 = vpop.permute.xlu0 %6570
    %6573 = vset.pattern.permute.xlu0 3
    %6574 = vperm.xlu0 %6573, %v116
    %v6575 = vpop.permute.xlu0 %6574
    %6577 = vset.pattern.permute.xlu0 3
    %6578 = vperm.xlu0 %6577, %v117
    %v6579 = vpop.permute.xlu0 %6578
    %6581 = vset.pattern.permute.xlu0 3
    %6582 = vperm.xlu0 %6581, %v118
    %v6583 = vpop.permute.xlu0 %6582
    %6585 = vset.pattern.permute.xlu0 3
    %6586 = vperm.xlu0 %6585, %v119
    %v6587 = vpop.permute.xlu0 %6586
    %6589 = vset.pattern.permute.xlu0 3
    %6590 = vperm.xlu0 %6589, %v120
    %v6591 = vpop.permute.xlu0 %6590
    %6593 = vset.pattern.permute.xlu0 3
    %6594 = vperm.xlu0 %6593, %v121
    %v6595 = vpop.permute.xlu0 %6594
    %6597 = vset.pattern.permute.xlu0 3
    %6598 = vperm.xlu0 %6597, %v122
    %v6599 = vpop.permute.xlu0 %6598
    %6601 = vset.pattern.permute.xlu0 3
    %6602 = vperm.xlu0 %6601, %v123
    %v6603 = vpop.permute.xlu0 %6602
    %6605 = vset.pattern.permute.xlu0 3
    %6606 = vperm.xlu0 %6605, %v124
    %v6607 = vpop.permute.xlu0 %6606
    %6609 = vset.pattern.permute.xlu0 3
    %6610 = vperm.xlu0 %6609, %v125
    %v6611 = vpop.permute.xlu0 %6610
    %6613 = vset.pattern.permute.xlu0 3
    %6614 = vperm.xlu0 %6613, %v126
    %v6615 = vpop.permute.xlu0 %6614
    %6617 = vset.pattern.permute.xlu0 3
    %6618 = vperm.xlu0 %6617, %v127
    %v6619 = vpop.permute.xlu0 %6618
    %6621 = vset.pattern.permute.xlu0 3
    %6622 = vperm.xlu0 %6621, %v128
    %v6623 = vpop.permute.xlu0 %6622
    %6625 = vset.pattern.permute.xlu0 3
    %6626 = vperm.xlu0 %6625, %v129
    %v6627 = vpop.permute.xlu0 %6626
    %6629 = vset.pattern.permute.xlu0 3
    %6630 = vperm.xlu0 %6629, %v130
    %v6631 = vpop.permute.xlu0 %6630
    %v6633 = vlaneseq
    %v6634 = vshrl.u32 %v6633, 7
    %v6635 = vsub.s32 3, %v6634
    %v6636 = vrot.slane %v2513, %v6635
    %v6637 = vlaneseq
    %v6638 = vshrl.u32 %v6637, 7
    %v6639 = vsub.s32 7, %v6638
    %v6640 = vrot.slane %v2513, %v6639
    %v6641 = vlaneseq
    %v6642 = vshrl.u32 %v6641, 7
    %v6643 = vsub.s32 3, %v6642
    %v6644 = vrot.slane %v2514, %v6643
    %v6645 = vlaneseq
    %v6646 = vshrl.u32 %v6645, 7
    %v6647 = vsub.s32 7, %v6646
    %v6648 = vrot.slane %v2514, %v6647
    %v6653 = vlaneseq
    %v6654 = vshrl.u32 %v6653, 7
    %v6655 = vsub.s32 3, %v6654
    %v6656 = vrot.slane %v6636, %v6655
    %v6657 = vlaneseq
    %v6658 = vshrl.u32 %v6657, 7
    %v6659 = vsub.s32 3, %v6658
    %v6660 = vrot.slane %v6640, %v6659
    %v6661 = vlaneseq
    %v6662 = vshrl.u32 %v6661, 7
    %v6663 = vsub.s32 3, %v6662
    %v6664 = vrot.slane %v6644, %v6663
    %v6665 = vlaneseq
    %v6666 = vshrl.u32 %v6665, 7
    %v6667 = vsub.s32 3, %v6666
    %v6668 = vrot.slane %v6648, %v6667
    %v6669 = vmul.f32 %v6507, %v6656
    %v6670 = vmul.f32 %v6507, %v6660
    %v6671 = vmul.f32 %v6507, %v6664
    %v6672 = vmul.f32 %v6507, %v6668
    %v6673 = vmul.f32 %v6511, %v6656
    %v6674 = vmul.f32 %v6511, %v6660
    %v6675 = vmul.f32 %v6511, %v6664
    %v6676 = vmul.f32 %v6511, %v6668
    %v6677 = vmul.f32 %v6515, %v6656
    %v6678 = vmul.f32 %v6515, %v6660
    %v6679 = vmul.f32 %v6515, %v6664
    %v6680 = vmul.f32 %v6515, %v6668
    %v6681 = vmul.f32 %v6519, %v6656
    %v6682 = vmul.f32 %v6519, %v6660
    %v6683 = vmul.f32 %v6519, %v6664
    %v6684 = vmul.f32 %v6519, %v6668
    %v6685 = vmul.f32 %v6523, %v6656
    %v6686 = vmul.f32 %v6523, %v6660
    %v6687 = vmul.f32 %v6523, %v6664
    %v6688 = vmul.f32 %v6523, %v6668
    %v6689 = vmul.f32 %v6527, %v6656
    %v6690 = vmul.f32 %v6527, %v6660
    %v6691 = vmul.f32 %v6527, %v6664
    %v6692 = vmul.f32 %v6527, %v6668
    %v6693 = vmul.f32 %v6531, %v6656
    %v6694 = vmul.f32 %v6531, %v6660
    %v6695 = vmul.f32 %v6531, %v6664
    %v6696 = vmul.f32 %v6531, %v6668
    %v6697 = vmul.f32 %v6535, %v6656
    %v6698 = vmul.f32 %v6535, %v6660
    %v6699 = vmul.f32 %v6535, %v6664
    %v6700 = vmul.f32 %v6535, %v6668
    %v6701 = vmul.f32 %v6539, %v6656
    %v6702 = vmul.f32 %v6539, %v6660
    %v6703 = vmul.f32 %v6539, %v6664
    %v6704 = vmul.f32 %v6539, %v6668
    %v6705 = vmul.f32 %v6543, %v6656
    %v6706 = vmul.f32 %v6543, %v6660
    %v6707 = vmul.f32 %v6543, %v6664
    %v6708 = vmul.f32 %v6543, %v6668
    %v6709 = vmul.f32 %v6547, %v6656
    %v6710 = vmul.f32 %v6547, %v6660
    %v6711 = vmul.f32 %v6547, %v6664
    %v6712 = vmul.f32 %v6547, %v6668
    %v6713 = vmul.f32 %v6551, %v6656
    %v6714 = vmul.f32 %v6551, %v6660
    %v6715 = vmul.f32 %v6551, %v6664
    %v6716 = vmul.f32 %v6551, %v6668
    %v6717 = vmul.f32 %v6555, %v6656
    %v6718 = vmul.f32 %v6555, %v6660
    %v6719 = vmul.f32 %v6555, %v6664
    %v6720 = vmul.f32 %v6555, %v6668
    %v6721 = vmul.f32 %v6559, %v6656
    %v6722 = vmul.f32 %v6559, %v6660
    %v6723 = vmul.f32 %v6559, %v6664
    %v6724 = vmul.f32 %v6559, %v6668
    %v6725 = vmul.f32 %v6563, %v6656
    %v6726 = vmul.f32 %v6563, %v6660
    %v6727 = vmul.f32 %v6563, %v6664
    %v6728 = vmul.f32 %v6563, %v6668
    %v6729 = vmul.f32 %v6567, %v6656
    %v6730 = vmul.f32 %v6567, %v6660
    %v6731 = vmul.f32 %v6567, %v6664
    %v6732 = vmul.f32 %v6567, %v6668
    %v6733 = vmul.f32 %v6571, %v6656
    %v6734 = vmul.f32 %v6571, %v6660
    %v6735 = vmul.f32 %v6571, %v6664
    %v6736 = vmul.f32 %v6571, %v6668
    %v6737 = vmul.f32 %v6575, %v6656
    %v6738 = vmul.f32 %v6575, %v6660
    %v6739 = vmul.f32 %v6575, %v6664
    %v6740 = vmul.f32 %v6575, %v6668
    %v6741 = vmul.f32 %v6579, %v6656
    %v6742 = vmul.f32 %v6579, %v6660
    %v6743 = vmul.f32 %v6579, %v6664
    %v6744 = vmul.f32 %v6579, %v6668
    %v6745 = vmul.f32 %v6583, %v6656
    %v6746 = vmul.f32 %v6583, %v6660
    %v6747 = vmul.f32 %v6583, %v6664
    %v6748 = vmul.f32 %v6583, %v6668
    %v6749 = vmul.f32 %v6587, %v6656
    %v6750 = vmul.f32 %v6587, %v6660
    %v6751 = vmul.f32 %v6587, %v6664
    %v6752 = vmul.f32 %v6587, %v6668
    %v6753 = vmul.f32 %v6591, %v6656
    %v6754 = vmul.f32 %v6591, %v6660
    %v6755 = vmul.f32 %v6591, %v6664
    %v6756 = vmul.f32 %v6591, %v6668
    %v6757 = vmul.f32 %v6595, %v6656
    %v6758 = vmul.f32 %v6595, %v6660
    %v6759 = vmul.f32 %v6595, %v6664
    %v6760 = vmul.f32 %v6595, %v6668
    %v6761 = vmul.f32 %v6599, %v6656
    %v6762 = vmul.f32 %v6599, %v6660
    %v6763 = vmul.f32 %v6599, %v6664
    %v6764 = vmul.f32 %v6599, %v6668
    %v6765 = vmul.f32 %v6603, %v6656
    %v6766 = vmul.f32 %v6603, %v6660
    %v6767 = vmul.f32 %v6603, %v6664
    %v6768 = vmul.f32 %v6603, %v6668
    %v6769 = vmul.f32 %v6607, %v6656
    %v6770 = vmul.f32 %v6607, %v6660
    %v6771 = vmul.f32 %v6607, %v6664
    %v6772 = vmul.f32 %v6607, %v6668
    %v6773 = vmul.f32 %v6611, %v6656
    %v6774 = vmul.f32 %v6611, %v6660
    %v6775 = vmul.f32 %v6611, %v6664
    %v6776 = vmul.f32 %v6611, %v6668
    %v6777 = vmul.f32 %v6615, %v6656
    %v6778 = vmul.f32 %v6615, %v6660
    %v6779 = vmul.f32 %v6615, %v6664
    %v6780 = vmul.f32 %v6615, %v6668
    %v6781 = vmul.f32 %v6619, %v6656
    %v6782 = vmul.f32 %v6619, %v6660
    %v6783 = vmul.f32 %v6619, %v6664
    %v6784 = vmul.f32 %v6619, %v6668
    %v6785 = vmul.f32 %v6623, %v6656
    %v6786 = vmul.f32 %v6623, %v6660
    %v6787 = vmul.f32 %v6623, %v6664
    %v6788 = vmul.f32 %v6623, %v6668
    %v6789 = vmul.f32 %v6627, %v6656
    %v6790 = vmul.f32 %v6627, %v6660
    %v6791 = vmul.f32 %v6627, %v6664
    %v6792 = vmul.f32 %v6627, %v6668
    %v6793 = vmul.f32 %v6631, %v6656
    %v6794 = vmul.f32 %v6631, %v6660
    %v6795 = vmul.f32 %v6631, %v6664
    %v6796 = vmul.f32 %v6631, %v6668
    %v6797 = vadd.f32 %v6377, %v6669
    %v6798 = vadd.f32 %v6378, %v6670
    %v6799 = vadd.f32 %v6379, %v6671
    %v6800 = vadd.f32 %v6380, %v6672
    %v6801 = vadd.f32 %v6381, %v6673
    %v6802 = vadd.f32 %v6382, %v6674
    %v6803 = vadd.f32 %v6383, %v6675
    %v6804 = vadd.f32 %v6384, %v6676
    %v6805 = vadd.f32 %v6385, %v6677
    %v6806 = vadd.f32 %v6386, %v6678
    %v6807 = vadd.f32 %v6387, %v6679
    %v6808 = vadd.f32 %v6388, %v6680
    %v6809 = vadd.f32 %v6389, %v6681
    %v6810 = vadd.f32 %v6390, %v6682
    %v6811 = vadd.f32 %v6391, %v6683
    %v6812 = vadd.f32 %v6392, %v6684
    %v6813 = vadd.f32 %v6393, %v6685
    %v6814 = vadd.f32 %v6394, %v6686
    %v6815 = vadd.f32 %v6395, %v6687
    %v6816 = vadd.f32 %v6396, %v6688
    %v6817 = vadd.f32 %v6397, %v6689
    %v6818 = vadd.f32 %v6398, %v6690
    %v6819 = vadd.f32 %v6399, %v6691
    %v6820 = vadd.f32 %v6400, %v6692
    %v6821 = vadd.f32 %v6401, %v6693
    %v6822 = vadd.f32 %v6402, %v6694
    %v6823 = vadd.f32 %v6403, %v6695
    %v6824 = vadd.f32 %v6404, %v6696
    %v6825 = vadd.f32 %v6405, %v6697
    %v6826 = vadd.f32 %v6406, %v6698
    %v6827 = vadd.f32 %v6407, %v6699
    %v6828 = vadd.f32 %v6408, %v6700
    %v6829 = vadd.f32 %v6409, %v6701
    %v6830 = vadd.f32 %v6410, %v6702
    %v6831 = vadd.f32 %v6411, %v6703
    %v6832 = vadd.f32 %v6412, %v6704
    %v6833 = vadd.f32 %v6413, %v6705
    %v6834 = vadd.f32 %v6414, %v6706
    %v6835 = vadd.f32 %v6415, %v6707
    %v6836 = vadd.f32 %v6416, %v6708
    %v6837 = vadd.f32 %v6417, %v6709
    %v6838 = vadd.f32 %v6418, %v6710
    %v6839 = vadd.f32 %v6419, %v6711
    %v6840 = vadd.f32 %v6420, %v6712
    %v6841 = vadd.f32 %v6421, %v6713
    %v6842 = vadd.f32 %v6422, %v6714
    %v6843 = vadd.f32 %v6423, %v6715
    %v6844 = vadd.f32 %v6424, %v6716
    %v6845 = vadd.f32 %v6425, %v6717
    %v6846 = vadd.f32 %v6426, %v6718
    %v6847 = vadd.f32 %v6427, %v6719
    %v6848 = vadd.f32 %v6428, %v6720
    %v6849 = vadd.f32 %v6429, %v6721
    %v6850 = vadd.f32 %v6430, %v6722
    %v6851 = vadd.f32 %v6431, %v6723
    %v6852 = vadd.f32 %v6432, %v6724
    %v6853 = vadd.f32 %v6433, %v6725
    %v6854 = vadd.f32 %v6434, %v6726
    %v6855 = vadd.f32 %v6435, %v6727
    %v6856 = vadd.f32 %v6436, %v6728
    %v6857 = vadd.f32 %v6437, %v6729
    %v6858 = vadd.f32 %v6438, %v6730
    %v6859 = vadd.f32 %v6439, %v6731
    %v6860 = vadd.f32 %v6440, %v6732
    %v6861 = vadd.f32 %v6441, %v6733
    %v6862 = vadd.f32 %v6442, %v6734
    %v6863 = vadd.f32 %v6443, %v6735
    %v6864 = vadd.f32 %v6444, %v6736
    %v6865 = vadd.f32 %v6445, %v6737
    %v6866 = vadd.f32 %v6446, %v6738
    %v6867 = vadd.f32 %v6447, %v6739
    %v6868 = vadd.f32 %v6448, %v6740
    %v6869 = vadd.f32 %v6449, %v6741
    %v6870 = vadd.f32 %v6450, %v6742
    %v6871 = vadd.f32 %v6451, %v6743
    %v6872 = vadd.f32 %v6452, %v6744
    %v6873 = vadd.f32 %v6453, %v6745
    %v6874 = vadd.f32 %v6454, %v6746
    %v6875 = vadd.f32 %v6455, %v6747
    %v6876 = vadd.f32 %v6456, %v6748
    %v6877 = vadd.f32 %v6457, %v6749
    %v6878 = vadd.f32 %v6458, %v6750
    %v6879 = vadd.f32 %v6459, %v6751
    %v6880 = vadd.f32 %v6460, %v6752
    %v6881 = vadd.f32 %v6461, %v6753
    %v6882 = vadd.f32 %v6462, %v6754
    %v6883 = vadd.f32 %v6463, %v6755
    %v6884 = vadd.f32 %v6464, %v6756
    %v6885 = vadd.f32 %v6465, %v6757
    %v6886 = vadd.f32 %v6466, %v6758
    %v6887 = vadd.f32 %v6467, %v6759
    %v6888 = vadd.f32 %v6468, %v6760
    %v6889 = vadd.f32 %v6469, %v6761
    %v6890 = vadd.f32 %v6470, %v6762
    %v6891 = vadd.f32 %v6471, %v6763
    %v6892 = vadd.f32 %v6472, %v6764
    %v6893 = vadd.f32 %v6473, %v6765
    %v6894 = vadd.f32 %v6474, %v6766
    %v6895 = vadd.f32 %v6475, %v6767
    %v6896 = vadd.f32 %v6476, %v6768
    %v6897 = vadd.f32 %v6477, %v6769
    %v6898 = vadd.f32 %v6478, %v6770
    %v6899 = vadd.f32 %v6479, %v6771
    %v6900 = vadd.f32 %v6480, %v6772
    %v6901 = vadd.f32 %v6481, %v6773
    %v6902 = vadd.f32 %v6482, %v6774
    %v6903 = vadd.f32 %v6483, %v6775
    %v6904 = vadd.f32 %v6484, %v6776
    %v6905 = vadd.f32 %v6485, %v6777
    %v6906 = vadd.f32 %v6486, %v6778
    %v6907 = vadd.f32 %v6487, %v6779
    %v6908 = vadd.f32 %v6488, %v6780
    %v6909 = vadd.f32 %v6489, %v6781
    %v6910 = vadd.f32 %v6490, %v6782
    %v6911 = vadd.f32 %v6491, %v6783
    %v6912 = vadd.f32 %v6492, %v6784
    %v6913 = vadd.f32 %v6493, %v6785
    %v6914 = vadd.f32 %v6494, %v6786
    %v6915 = vadd.f32 %v6495, %v6787
    %v6916 = vadd.f32 %v6496, %v6788
    %v6917 = vadd.f32 %v6497, %v6789
    %v6918 = vadd.f32 %v6498, %v6790
    %v6919 = vadd.f32 %v6499, %v6791
    %v6920 = vadd.f32 %v6500, %v6792
    %v6921 = vadd.f32 %v6501, %v6793
    %v6922 = vadd.f32 %v6502, %v6794
    %v6923 = vadd.f32 %v6503, %v6795
    %v6924 = vadd.f32 %v6504, %v6796
    %v6925 = vld [vmem:[%s6] sm:$0xf]
    %v6927 = vlaneseq
    %v6928 = vshrl.u32 %v6927, 7
    %v6929 = vsub.s32 0, %v6928
    %v6930 = vrot.slane %v6925, %v6929
    %v6931 = vlaneseq
    %v6932 = vshrl.u32 %v6931, 7
    %v6933 = vsub.s32 1, %v6932
    %v6934 = vrot.slane %v6925, %v6933
    %v6935 = vlaneseq
    %v6936 = vshrl.u32 %v6935, 7
    %v6937 = vsub.s32 2, %v6936
    %v6938 = vrot.slane %v6925, %v6937
    %v6939 = vlaneseq
    %v6940 = vshrl.u32 %v6939, 7
    %v6941 = vsub.s32 3, %v6940
    %v6942 = vrot.slane %v6925, %v6941
    %v6947 = vadd.f32 %v6797, %v6930
    %v6948 = vadd.f32 %v6798, %v6934
    %v6949 = vadd.f32 %v6799, %v6938
    %v6950 = vadd.f32 %v6800, %v6942
    %v6951 = vadd.f32 %v6801, %v6930
    %v6952 = vadd.f32 %v6802, %v6934
    %v6953 = vadd.f32 %v6803, %v6938
    %v6954 = vadd.f32 %v6804, %v6942
    %v6955 = vadd.f32 %v6805, %v6930
    %v6956 = vadd.f32 %v6806, %v6934
    %v6957 = vadd.f32 %v6807, %v6938
    %v6958 = vadd.f32 %v6808, %v6942
    %v6959 = vadd.f32 %v6809, %v6930
    %v6960 = vadd.f32 %v6810, %v6934
    %v6961 = vadd.f32 %v6811, %v6938
    %v6962 = vadd.f32 %v6812, %v6942
    %v6963 = vadd.f32 %v6813, %v6930
    %v6964 = vadd.f32 %v6814, %v6934
    %v6965 = vadd.f32 %v6815, %v6938
    %v6966 = vadd.f32 %v6816, %v6942
    %v6967 = vadd.f32 %v6817, %v6930
    %v6968 = vadd.f32 %v6818, %v6934
    %v6969 = vadd.f32 %v6819, %v6938
    %v6970 = vadd.f32 %v6820, %v6942
    %v6971 = vadd.f32 %v6821, %v6930
    %v6972 = vadd.f32 %v6822, %v6934
    %v6973 = vadd.f32 %v6823, %v6938
    %v6974 = vadd.f32 %v6824, %v6942
    %v6975 = vadd.f32 %v6825, %v6930
    %v6976 = vadd.f32 %v6826, %v6934
    %v6977 = vadd.f32 %v6827, %v6938
    %v6978 = vadd.f32 %v6828, %v6942
    %v6979 = vadd.f32 %v6829, %v6930
    %v6980 = vadd.f32 %v6830, %v6934
    %v6981 = vadd.f32 %v6831, %v6938
    %v6982 = vadd.f32 %v6832, %v6942
    %v6983 = vadd.f32 %v6833, %v6930
    %v6984 = vadd.f32 %v6834, %v6934
    %v6985 = vadd.f32 %v6835, %v6938
    %v6986 = vadd.f32 %v6836, %v6942
    %v6987 = vadd.f32 %v6837, %v6930
    %v6988 = vadd.f32 %v6838, %v6934
    %v6989 = vadd.f32 %v6839, %v6938
    %v6990 = vadd.f32 %v6840, %v6942
    %v6991 = vadd.f32 %v6841, %v6930
    %v6992 = vadd.f32 %v6842, %v6934
    %v6993 = vadd.f32 %v6843, %v6938
    %v6994 = vadd.f32 %v6844, %v6942
    %v6995 = vadd.f32 %v6845, %v6930
    %v6996 = vadd.f32 %v6846, %v6934
    %v6997 = vadd.f32 %v6847, %v6938
    %v6998 = vadd.f32 %v6848, %v6942
    %v6999 = vadd.f32 %v6849, %v6930
    %v7000 = vadd.f32 %v6850, %v6934
    %v7001 = vadd.f32 %v6851, %v6938
    %v7002 = vadd.f32 %v6852, %v6942
    %v7003 = vadd.f32 %v6853, %v6930
    %v7004 = vadd.f32 %v6854, %v6934
    %v7005 = vadd.f32 %v6855, %v6938
    %v7006 = vadd.f32 %v6856, %v6942
    %v7007 = vadd.f32 %v6857, %v6930
    %v7008 = vadd.f32 %v6858, %v6934
    %v7009 = vadd.f32 %v6859, %v6938
    %v7010 = vadd.f32 %v6860, %v6942
    %v7011 = vadd.f32 %v6861, %v6930
    %v7012 = vadd.f32 %v6862, %v6934
    %v7013 = vadd.f32 %v6863, %v6938
    %v7014 = vadd.f32 %v6864, %v6942
    %v7015 = vadd.f32 %v6865, %v6930
    %v7016 = vadd.f32 %v6866, %v6934
    %v7017 = vadd.f32 %v6867, %v6938
    %v7018 = vadd.f32 %v6868, %v6942
    %v7019 = vadd.f32 %v6869, %v6930
    %v7020 = vadd.f32 %v6870, %v6934
    %v7021 = vadd.f32 %v6871, %v6938
    %v7022 = vadd.f32 %v6872, %v6942
    %v7023 = vadd.f32 %v6873, %v6930
    %v7024 = vadd.f32 %v6874, %v6934
    %v7025 = vadd.f32 %v6875, %v6938
    %v7026 = vadd.f32 %v6876, %v6942
    %v7027 = vadd.f32 %v6877, %v6930
    %v7028 = vadd.f32 %v6878, %v6934
    %v7029 = vadd.f32 %v6879, %v6938
    %v7030 = vadd.f32 %v6880, %v6942
    %v7031 = vadd.f32 %v6881, %v6930
    %v7032 = vadd.f32 %v6882, %v6934
    %v7033 = vadd.f32 %v6883, %v6938
    %v7034 = vadd.f32 %v6884, %v6942
    %v7035 = vadd.f32 %v6885, %v6930
    %v7036 = vadd.f32 %v6886, %v6934
    %v7037 = vadd.f32 %v6887, %v6938
    %v7038 = vadd.f32 %v6888, %v6942
    %v7039 = vadd.f32 %v6889, %v6930
    %v7040 = vadd.f32 %v6890, %v6934
    %v7041 = vadd.f32 %v6891, %v6938
    %v7042 = vadd.f32 %v6892, %v6942
    %v7043 = vadd.f32 %v6893, %v6930
    %v7044 = vadd.f32 %v6894, %v6934
    %v7045 = vadd.f32 %v6895, %v6938
    %v7046 = vadd.f32 %v6896, %v6942
    %v7047 = vadd.f32 %v6897, %v6930
    %v7048 = vadd.f32 %v6898, %v6934
    %v7049 = vadd.f32 %v6899, %v6938
    %v7050 = vadd.f32 %v6900, %v6942
    %v7051 = vadd.f32 %v6901, %v6930
    %v7052 = vadd.f32 %v6902, %v6934
    %v7053 = vadd.f32 %v6903, %v6938
    %v7054 = vadd.f32 %v6904, %v6942
    %v7055 = vadd.f32 %v6905, %v6930
    %v7056 = vadd.f32 %v6906, %v6934
    %v7057 = vadd.f32 %v6907, %v6938
    %v7058 = vadd.f32 %v6908, %v6942
    %v7059 = vadd.f32 %v6909, %v6930
    %v7060 = vadd.f32 %v6910, %v6934
    %v7061 = vadd.f32 %v6911, %v6938
    %v7062 = vadd.f32 %v6912, %v6942
    %v7063 = vadd.f32 %v6913, %v6930
    %v7064 = vadd.f32 %v6914, %v6934
    %v7065 = vadd.f32 %v6915, %v6938
    %v7066 = vadd.f32 %v6916, %v6942
    %v7067 = vadd.f32 %v6917, %v6930
    %v7068 = vadd.f32 %v6918, %v6934
    %v7069 = vadd.f32 %v6919, %v6938
    %v7070 = vadd.f32 %v6920, %v6942
    %v7071 = vadd.f32 %v6921, %v6930
    %v7072 = vadd.f32 %v6922, %v6934
    %v7073 = vadd.f32 %v6923, %v6938
    %v7074 = vadd.f32 %v6924, %v6942
    %v7075 = vmax.f32 %v6947, 0.0
    %v7076 = vmax.f32 %v6948, 0.0
    %v7077 = vmax.f32 %v6949, 0.0
    %v7078 = vmax.f32 %v6950, 0.0
    %v7079 = vmax.f32 %v6951, 0.0
    %v7080 = vmax.f32 %v6952, 0.0
    %v7081 = vmax.f32 %v6953, 0.0
    %v7082 = vmax.f32 %v6954, 0.0
    %v7083 = vmax.f32 %v6955, 0.0
    %v7084 = vmax.f32 %v6956, 0.0
    %v7085 = vmax.f32 %v6957, 0.0
    %v7086 = vmax.f32 %v6958, 0.0
    %v7087 = vmax.f32 %v6959, 0.0
    %v7088 = vmax.f32 %v6960, 0.0
    %v7089 = vmax.f32 %v6961, 0.0
    %v7090 = vmax.f32 %v6962, 0.0
    %v7091 = vmax.f32 %v6963, 0.0
    %v7092 = vmax.f32 %v6964, 0.0
    %v7093 = vmax.f32 %v6965, 0.0
    %v7094 = vmax.f32 %v6966, 0.0
    %v7095 = vmax.f32 %v6967, 0.0
    %v7096 = vmax.f32 %v6968, 0.0
    %v7097 = vmax.f32 %v6969, 0.0
    %v7098 = vmax.f32 %v6970, 0.0
    %v7099 = vmax.f32 %v6971, 0.0
    %v7100 = vmax.f32 %v6972, 0.0
    %v7101 = vmax.f32 %v6973, 0.0
    %v7102 = vmax.f32 %v6974, 0.0
    %v7103 = vmax.f32 %v6975, 0.0
    %v7104 = vmax.f32 %v6976, 0.0
    %v7105 = vmax.f32 %v6977, 0.0
    %v7106 = vmax.f32 %v6978, 0.0
    %v7107 = vmax.f32 %v6979, 0.0
    %v7108 = vmax.f32 %v6980, 0.0
    %v7109 = vmax.f32 %v6981, 0.0
    %v7110 = vmax.f32 %v6982, 0.0
    %v7111 = vmax.f32 %v6983, 0.0
    %v7112 = vmax.f32 %v6984, 0.0
    %v7113 = vmax.f32 %v6985, 0.0
    %v7114 = vmax.f32 %v6986, 0.0
    %v7115 = vmax.f32 %v6987, 0.0
    %v7116 = vmax.f32 %v6988, 0.0
    %v7117 = vmax.f32 %v6989, 0.0
    %v7118 = vmax.f32 %v6990, 0.0
    %v7119 = vmax.f32 %v6991, 0.0
    %v7120 = vmax.f32 %v6992, 0.0
    %v7121 = vmax.f32 %v6993, 0.0
    %v7122 = vmax.f32 %v6994, 0.0
    %v7123 = vmax.f32 %v6995, 0.0
    %v7124 = vmax.f32 %v6996, 0.0
    %v7125 = vmax.f32 %v6997, 0.0
    %v7126 = vmax.f32 %v6998, 0.0
    %v7127 = vmax.f32 %v6999, 0.0
    %v7128 = vmax.f32 %v7000, 0.0
    %v7129 = vmax.f32 %v7001, 0.0
    %v7130 = vmax.f32 %v7002, 0.0
    %v7131 = vmax.f32 %v7003, 0.0
    %v7132 = vmax.f32 %v7004, 0.0
    %v7133 = vmax.f32 %v7005, 0.0
    %v7134 = vmax.f32 %v7006, 0.0
    %v7135 = vmax.f32 %v7007, 0.0
    %v7136 = vmax.f32 %v7008, 0.0
    %v7137 = vmax.f32 %v7009, 0.0
    %v7138 = vmax.f32 %v7010, 0.0
    %v7139 = vmax.f32 %v7011, 0.0
    %v7140 = vmax.f32 %v7012, 0.0
    %v7141 = vmax.f32 %v7013, 0.0
    %v7142 = vmax.f32 %v7014, 0.0
    %v7143 = vmax.f32 %v7015, 0.0
    %v7144 = vmax.f32 %v7016, 0.0
    %v7145 = vmax.f32 %v7017, 0.0
    %v7146 = vmax.f32 %v7018, 0.0
    %v7147 = vmax.f32 %v7019, 0.0
    %v7148 = vmax.f32 %v7020, 0.0
    %v7149 = vmax.f32 %v7021, 0.0
    %v7150 = vmax.f32 %v7022, 0.0
    %v7151 = vmax.f32 %v7023, 0.0
    %v7152 = vmax.f32 %v7024, 0.0
    %v7153 = vmax.f32 %v7025, 0.0
    %v7154 = vmax.f32 %v7026, 0.0
    %v7155 = vmax.f32 %v7027, 0.0
    %v7156 = vmax.f32 %v7028, 0.0
    %v7157 = vmax.f32 %v7029, 0.0
    %v7158 = vmax.f32 %v7030, 0.0
    %v7159 = vmax.f32 %v7031, 0.0
    %v7160 = vmax.f32 %v7032, 0.0
    %v7161 = vmax.f32 %v7033, 0.0
    %v7162 = vmax.f32 %v7034, 0.0
    %v7163 = vmax.f32 %v7035, 0.0
    %v7164 = vmax.f32 %v7036, 0.0
    %v7165 = vmax.f32 %v7037, 0.0
    %v7166 = vmax.f32 %v7038, 0.0
    %v7167 = vmax.f32 %v7039, 0.0
    %v7168 = vmax.f32 %v7040, 0.0
    %v7169 = vmax.f32 %v7041, 0.0
    %v7170 = vmax.f32 %v7042, 0.0
    %v7171 = vmax.f32 %v7043, 0.0
    %v7172 = vmax.f32 %v7044, 0.0
    %v7173 = vmax.f32 %v7045, 0.0
    %v7174 = vmax.f32 %v7046, 0.0
    %v7175 = vmax.f32 %v7047, 0.0
    %v7176 = vmax.f32 %v7048, 0.0
    %v7177 = vmax.f32 %v7049, 0.0
    %v7178 = vmax.f32 %v7050, 0.0
    %v7179 = vmax.f32 %v7051, 0.0
    %v7180 = vmax.f32 %v7052, 0.0
    %v7181 = vmax.f32 %v7053, 0.0
    %v7182 = vmax.f32 %v7054, 0.0
    %v7183 = vmax.f32 %v7055, 0.0
    %v7184 = vmax.f32 %v7056, 0.0
    %v7185 = vmax.f32 %v7057, 0.0
    %v7186 = vmax.f32 %v7058, 0.0
    %v7187 = vmax.f32 %v7059, 0.0
    %v7188 = vmax.f32 %v7060, 0.0
    %v7189 = vmax.f32 %v7061, 0.0
    %v7190 = vmax.f32 %v7062, 0.0
    %v7191 = vmax.f32 %v7063, 0.0
    %v7192 = vmax.f32 %v7064, 0.0
    %v7193 = vmax.f32 %v7065, 0.0
    %v7194 = vmax.f32 %v7066, 0.0
    %v7195 = vmax.f32 %v7067, 0.0
    %v7196 = vmax.f32 %v7068, 0.0
    %v7197 = vmax.f32 %v7069, 0.0
    %v7198 = vmax.f32 %v7070, 0.0
    %v7199 = vmax.f32 %v7071, 0.0
    %v7200 = vmax.f32 %v7072, 0.0
    %v7201 = vmax.f32 %v7073, 0.0
    %v7202 = vmax.f32 %v7074, 0.0
    %v7203 = vpack.c.bf16 %v7079, %v7075
    %v7204 = vpack.c.bf16 %v7080, %v7076
    %v7205 = vpack.c.bf16 %v7081, %v7077
    %v7206 = vpack.c.bf16 %v7082, %v7078
    %v7207 = vpack.c.bf16 %v7087, %v7083
    %v7208 = vpack.c.bf16 %v7088, %v7084
    %v7209 = vpack.c.bf16 %v7089, %v7085
    %v7210 = vpack.c.bf16 %v7090, %v7086
    %v7211 = vpack.c.bf16 %v7095, %v7091
    %v7212 = vpack.c.bf16 %v7096, %v7092
    %v7213 = vpack.c.bf16 %v7097, %v7093
    %v7214 = vpack.c.bf16 %v7098, %v7094
    %v7215 = vpack.c.bf16 %v7103, %v7099
    %v7216 = vpack.c.bf16 %v7104, %v7100
    %v7217 = vpack.c.bf16 %v7105, %v7101
    %v7218 = vpack.c.bf16 %v7106, %v7102
    %v7219 = vpack.c.bf16 %v7111, %v7107
    %v7220 = vpack.c.bf16 %v7112, %v7108
    %v7221 = vpack.c.bf16 %v7113, %v7109
    %v7222 = vpack.c.bf16 %v7114, %v7110
    %v7223 = vpack.c.bf16 %v7119, %v7115
    %v7224 = vpack.c.bf16 %v7120, %v7116
    %v7225 = vpack.c.bf16 %v7121, %v7117
    %v7226 = vpack.c.bf16 %v7122, %v7118
    %v7227 = vpack.c.bf16 %v7127, %v7123
    %v7228 = vpack.c.bf16 %v7128, %v7124
    %v7229 = vpack.c.bf16 %v7129, %v7125
    %v7230 = vpack.c.bf16 %v7130, %v7126
    %v7231 = vpack.c.bf16 %v7135, %v7131
    %v7232 = vpack.c.bf16 %v7136, %v7132
    %v7233 = vpack.c.bf16 %v7137, %v7133
    %v7234 = vpack.c.bf16 %v7138, %v7134
    %v7235 = vpack.c.bf16 %v7143, %v7139
    %v7236 = vpack.c.bf16 %v7144, %v7140
    %v7237 = vpack.c.bf16 %v7145, %v7141
    %v7238 = vpack.c.bf16 %v7146, %v7142
    %v7239 = vpack.c.bf16 %v7151, %v7147
    %v7240 = vpack.c.bf16 %v7152, %v7148
    %v7241 = vpack.c.bf16 %v7153, %v7149
    %v7242 = vpack.c.bf16 %v7154, %v7150
    %v7243 = vpack.c.bf16 %v7159, %v7155
    %v7244 = vpack.c.bf16 %v7160, %v7156
    %v7245 = vpack.c.bf16 %v7161, %v7157
    %v7246 = vpack.c.bf16 %v7162, %v7158
    %v7247 = vpack.c.bf16 %v7167, %v7163
    %v7248 = vpack.c.bf16 %v7168, %v7164
    %v7249 = vpack.c.bf16 %v7169, %v7165
    %v7250 = vpack.c.bf16 %v7170, %v7166
    %v7251 = vpack.c.bf16 %v7175, %v7171
    %v7252 = vpack.c.bf16 %v7176, %v7172
    %v7253 = vpack.c.bf16 %v7177, %v7173
    %v7254 = vpack.c.bf16 %v7178, %v7174
    %v7255 = vpack.c.bf16 %v7183, %v7179
    %v7256 = vpack.c.bf16 %v7184, %v7180
    %v7257 = vpack.c.bf16 %v7185, %v7181
    %v7258 = vpack.c.bf16 %v7186, %v7182
    %v7259 = vpack.c.bf16 %v7191, %v7187
    %v7260 = vpack.c.bf16 %v7192, %v7188
    %v7261 = vpack.c.bf16 %v7193, %v7189
    %v7262 = vpack.c.bf16 %v7194, %v7190
    %v7263 = vpack.c.bf16 %v7199, %v7195
    %v7264 = vpack.c.bf16 %v7200, %v7196
    %v7265 = vpack.c.bf16 %v7201, %v7197
    %v7266 = vpack.c.bf16 %v7202, %v7198
    %v7267 = vld [vmem:[%s7] sm:$0xf]
    %v7268 = vld [vmem:[%s7 + $0x4] sm:$0xf]
    %v7269 = vld [vmem:[%s7 + $0x8] sm:$0xf]
    %v7270 = vld [vmem:[%s7 + $0xc] sm:$0xf]
    %v7271 = vld [vmem:[%s7 + $0x10] sm:$0xf]
    %v7272 = vld [vmem:[%s7 + $0x14] sm:$0xf]
    %v7273 = vld [vmem:[%s7 + $0x18] sm:$0xf]
    %v7274 = vld [vmem:[%s7 + $0x1c] sm:$0xf]
    %v7275 = vld [vmem:[%s7 + $0x20] sm:$0xf]
    %v7276 = vld [vmem:[%s7 + $0x24] sm:$0xf]
    %v7277 = vld [vmem:[%s7 + $0x28] sm:$0xf]
    %v7278 = vld [vmem:[%s7 + $0x2c] sm:$0xf]
    %v7279 = vld [vmem:[%s7 + $0x30] sm:$0xf]
    %v7280 = vld [vmem:[%s7 + $0x34] sm:$0xf]
    %v7281 = vld [vmem:[%s7 + $0x38] sm:$0xf]
    %v7282 = vld [vmem:[%s7 + $0x3c] sm:$0xf]
    %v7283 = vld [vmem:[%s7 + $0x40] sm:$0xf]
    %v7284 = vld [vmem:[%s7 + $0x44] sm:$0xf]
    %v7285 = vld [vmem:[%s7 + $0x48] sm:$0xf]
    %v7286 = vld [vmem:[%s7 + $0x4c] sm:$0xf]
    %v7287 = vld [vmem:[%s7 + $0x50] sm:$0xf]
    %v7288 = vld [vmem:[%s7 + $0x54] sm:$0xf]
    %v7289 = vld [vmem:[%s7 + $0x58] sm:$0xf]
    %v7290 = vld [vmem:[%s7 + $0x5c] sm:$0xf]
    %v7291 = vld [vmem:[%s7 + $0x60] sm:$0xf]
    %v7292 = vld [vmem:[%s7 + $0x64] sm:$0xf]
    %v7293 = vld [vmem:[%s7 + $0x68] sm:$0xf]
    %v7294 = vld [vmem:[%s7 + $0x6c] sm:$0xf]
    %v7295 = vld [vmem:[%s7 + $0x70] sm:$0xf]
    %v7296 = vld [vmem:[%s7 + $0x74] sm:$0xf]
    %v7297 = vld [vmem:[%s7 + $0x78] sm:$0xf]
    %v7298 = vld [vmem:[%s7 + $0x7c] sm:$0xf]
    %v7299 = vld [vmem:[%s7 + $0x80] sm:$0xf]
    %v7300 = vld [vmem:[%s7 + $0x84] sm:$0xf]
    %v7301 = vld [vmem:[%s7 + $0x88] sm:$0xf]
    %v7302 = vld [vmem:[%s7 + $0x8c] sm:$0xf]
    %v7303 = vld [vmem:[%s7 + $0x90] sm:$0xf]
    %v7304 = vld [vmem:[%s7 + $0x94] sm:$0xf]
    %v7305 = vld [vmem:[%s7 + $0x98] sm:$0xf]
    %v7306 = vld [vmem:[%s7 + $0x9c] sm:$0xf]
    %v7307 = vld [vmem:[%s7 + $0xa0] sm:$0xf]
    %v7308 = vld [vmem:[%s7 + $0xa4] sm:$0xf]
    %v7309 = vld [vmem:[%s7 + $0xa8] sm:$0xf]
    %v7310 = vld [vmem:[%s7 + $0xac] sm:$0xf]
    %v7311 = vld [vmem:[%s7 + $0xb0] sm:$0xf]
    %v7312 = vld [vmem:[%s7 + $0xb4] sm:$0xf]
    %v7313 = vld [vmem:[%s7 + $0xb8] sm:$0xf]
    %v7314 = vld [vmem:[%s7 + $0xbc] sm:$0xf]
    %v7315 = vld [vmem:[%s7 + $0xc0] sm:$0xf]
    %v7316 = vld [vmem:[%s7 + $0xc4] sm:$0xf]
    %v7317 = vld [vmem:[%s7 + $0xc8] sm:$0xf]
    %v7318 = vld [vmem:[%s7 + $0xcc] sm:$0xf]
    %v7319 = vld [vmem:[%s7 + $0xd0] sm:$0xf]
    %v7320 = vld [vmem:[%s7 + $0xd4] sm:$0xf]
    %v7321 = vld [vmem:[%s7 + $0xd8] sm:$0xf]
    %v7322 = vld [vmem:[%s7 + $0xdc] sm:$0xf]
    %v7323 = vld [vmem:[%s7 + $0xe0] sm:$0xf]
    %v7324 = vld [vmem:[%s7 + $0xe4] sm:$0xf]
    %v7325 = vld [vmem:[%s7 + $0xe8] sm:$0xf]
    %v7326 = vld [vmem:[%s7 + $0xec] sm:$0xf]
    %v7327 = vld [vmem:[%s7 + $0xf0] sm:$0xf]
    %v7328 = vld [vmem:[%s7 + $0xf4] sm:$0xf]
    %v7329 = vld [vmem:[%s7 + $0xf8] sm:$0xf]
    %v7330 = vld [vmem:[%s7 + $0xfc] sm:$0xf]
    %v7331 = vld [vmem:[%s8] sm:$0x1]
    %v7333 = vlaneseq
    %v7334 = vshrl.u32 %v7333, 7
    %v7335 = vsub.s32 0, %v7334
    %v7336 = vrot.slane %v7331, %v7335
    %v7402 = vunpack.c.l.b16 %v7267
    %v7403 = vunpack.c.l.b16 %v7268
    %v7404 = vunpack.c.l.b16 %v7269
    %v7405 = vunpack.c.l.b16 %v7270
    %v7406 = vunpack.c.l.b16 %v7271
    %v7407 = vunpack.c.l.b16 %v7272
    %v7408 = vunpack.c.l.b16 %v7273
    %v7409 = vunpack.c.l.b16 %v7274
    %v7410 = vunpack.c.l.b16 %v7275
    %v7411 = vunpack.c.l.b16 %v7276
    %v7412 = vunpack.c.l.b16 %v7277
    %v7413 = vunpack.c.l.b16 %v7278
    %v7414 = vunpack.c.l.b16 %v7279
    %v7415 = vunpack.c.l.b16 %v7280
    %v7416 = vunpack.c.l.b16 %v7281
    %v7417 = vunpack.c.l.b16 %v7282
    %v7418 = vunpack.c.l.b16 %v7283
    %v7419 = vunpack.c.l.b16 %v7284
    %v7420 = vunpack.c.l.b16 %v7285
    %v7421 = vunpack.c.l.b16 %v7286
    %v7422 = vunpack.c.l.b16 %v7287
    %v7423 = vunpack.c.l.b16 %v7288
    %v7424 = vunpack.c.l.b16 %v7289
    %v7425 = vunpack.c.l.b16 %v7290
    %v7426 = vunpack.c.l.b16 %v7291
    %v7427 = vunpack.c.l.b16 %v7292
    %v7428 = vunpack.c.l.b16 %v7293
    %v7429 = vunpack.c.l.b16 %v7294
    %v7430 = vunpack.c.l.b16 %v7295
    %v7431 = vunpack.c.l.b16 %v7296
    %v7432 = vunpack.c.l.b16 %v7297
    %v7433 = vunpack.c.l.b16 %v7298
    %v7434 = vunpack.c.l.b16 %v7299
    %v7435 = vunpack.c.l.b16 %v7300
    %v7436 = vunpack.c.l.b16 %v7301
    %v7437 = vunpack.c.l.b16 %v7302
    %v7438 = vunpack.c.l.b16 %v7303
    %v7439 = vunpack.c.l.b16 %v7304
    %v7440 = vunpack.c.l.b16 %v7305
    %v7441 = vunpack.c.l.b16 %v7306
    %v7442 = vunpack.c.l.b16 %v7307
    %v7443 = vunpack.c.l.b16 %v7308
    %v7444 = vunpack.c.l.b16 %v7309
    %v7445 = vunpack.c.l.b16 %v7310
    %v7446 = vunpack.c.l.b16 %v7311
    %v7447 = vunpack.c.l.b16 %v7312
    %v7448 = vunpack.c.l.b16 %v7313
    %v7449 = vunpack.c.l.b16 %v7314
    %v7450 = vunpack.c.l.b16 %v7315
    %v7451 = vunpack.c.l.b16 %v7316
    %v7452 = vunpack.c.l.b16 %v7317
    %v7453 = vunpack.c.l.b16 %v7318
    %v7454 = vunpack.c.l.b16 %v7319
    %v7455 = vunpack.c.l.b16 %v7320
    %v7456 = vunpack.c.l.b16 %v7321
    %v7457 = vunpack.c.l.b16 %v7322
    %v7458 = vunpack.c.l.b16 %v7323
    %v7459 = vunpack.c.l.b16 %v7324
    %v7460 = vunpack.c.l.b16 %v7325
    %v7461 = vunpack.c.l.b16 %v7326
    %v7462 = vunpack.c.l.b16 %v7327
    %v7463 = vunpack.c.l.b16 %v7328
    %v7464 = vunpack.c.l.b16 %v7329
    %v7465 = vunpack.c.l.b16 %v7330
    %v7466 = vpack.c.b16 %v7403, %v7402
    %v7467 = vpack.c.b16 %v7405, %v7404
    %v7468 = vpack.c.b16 %v7407, %v7406
    %v7469 = vpack.c.b16 %v7409, %v7408
    %v7470 = vpack.c.b16 %v7411, %v7410
    %v7471 = vpack.c.b16 %v7413, %v7412
    %v7472 = vpack.c.b16 %v7415, %v7414
    %v7473 = vpack.c.b16 %v7417, %v7416
    %v7474 = vpack.c.b16 %v7419, %v7418
    %v7475 = vpack.c.b16 %v7421, %v7420
    %v7476 = vpack.c.b16 %v7423, %v7422
    %v7477 = vpack.c.b16 %v7425, %v7424
    %v7478 = vpack.c.b16 %v7427, %v7426
    %v7479 = vpack.c.b16 %v7429, %v7428
    %v7480 = vpack.c.b16 %v7431, %v7430
    %v7481 = vpack.c.b16 %v7433, %v7432
    %v7482 = vpack.c.b16 %v7435, %v7434
    %v7483 = vpack.c.b16 %v7437, %v7436
    %v7484 = vpack.c.b16 %v7439, %v7438
    %v7485 = vpack.c.b16 %v7441, %v7440
    %v7486 = vpack.c.b16 %v7443, %v7442
    %v7487 = vpack.c.b16 %v7445, %v7444
    %v7488 = vpack.c.b16 %v7447, %v7446
    %v7489 = vpack.c.b16 %v7449, %v7448
    %v7490 = vpack.c.b16 %v7451, %v7450
    %v7491 = vpack.c.b16 %v7453, %v7452
    %v7492 = vpack.c.b16 %v7455, %v7454
    %v7493 = vpack.c.b16 %v7457, %v7456
    %v7494 = vpack.c.b16 %v7459, %v7458
    %v7495 = vpack.c.b16 %v7461, %v7460
    %v7496 = vpack.c.b16 %v7463, %v7462
    %v7497 = vpack.c.b16 %v7465, %v7464
    %7530 = vmatprep.subr.bf16.mxu0 0
    %7531 = vmatpush1.bf16.msra.mxu0 %v7466
    %7532 = vmatprep.subr.bf16.mxu0 0
    %7533 = vmatpush1.bf16.msra.mxu0 %v7467
    %7534 = vmatprep.subr.bf16.mxu0 0
    %7535 = vmatpush1.bf16.msra.mxu0 %v7468
    %7536 = vmatprep.subr.bf16.mxu0 0
    %7537 = vmatpush1.bf16.msra.mxu0 %v7469
    %7538 = vmatprep.subr.bf16.mxu0 0
    %7539 = vmatpush1.bf16.msra.mxu0 %v7470
    %7540 = vmatprep.subr.bf16.mxu0 0
    %7541 = vmatpush1.bf16.msra.mxu0 %v7471
    %7542 = vmatprep.subr.bf16.mxu0 0
    %7543 = vmatpush1.bf16.msra.mxu0 %v7472
    %7544 = vmatprep.subr.bf16.mxu0 0
    %7545 = vmatpush1.bf16.msra.mxu0 %v7473
    %7546 = vmatprep.subr.bf16.mxu0 0
    %7547 = vmatpush1.bf16.msra.mxu0 %v7474
    %7548 = vmatprep.subr.bf16.mxu0 0
    %7549 = vmatpush1.bf16.msra.mxu0 %v7475
    %7550 = vmatprep.subr.bf16.mxu0 0
    %7551 = vmatpush1.bf16.msra.mxu0 %v7476
    %7552 = vmatprep.subr.bf16.mxu0 0
    %7553 = vmatpush1.bf16.msra.mxu0 %v7477
    %7554 = vmatprep.subr.bf16.mxu0 0
    %7555 = vmatpush1.bf16.msra.mxu0 %v7478
    %7556 = vmatprep.subr.bf16.mxu0 0
    %7557 = vmatpush1.bf16.msra.mxu0 %v7479
    %7558 = vmatprep.subr.bf16.mxu0 0
    %7559 = vmatpush1.bf16.msra.mxu0 %v7480
    %7560 = vmatprep.subr.bf16.mxu0 0
    %7561 = vmatpush1.bf16.msra.mxu0 %v7481
    %7562 = vmatprep.mubr.bf16.mxu0 %v7204
    %7563 = vmatmul.mubr.bf16.gmra.mrb[0].mxu0 %v7203
    %v7564 = vpop.f32.mrb[0].mxu0
    %v7565 = vadd.f32 %v7336, %v7564
    %v7566 = vpop.f32.mrb[0].mxu0
    %v7567 = vpop.f32.mrb[0].mxu0
    %v7568 = vadd.f32 %v7336, %v7567
    %v7569 = vpop.f32.mrb[0].mxu0
    %7570 = vmatprep.mubr.bf16.mxu0 %v7208
    %7571 = vmatmul.mubr.bf16.gmra.mrb[0].mxu0 %v7207
    %v7572 = vpop.f32.mrb[0].mxu0
    %v7573 = vadd.f32 %v7336, %v7572
    %v7574 = vpop.f32.mrb[0].mxu0
    %v7575 = vpop.f32.mrb[0].mxu0
    %v7576 = vadd.f32 %v7336, %v7575
    %v7577 = vpop.f32.mrb[0].mxu0
    %7578 = vmatprep.mubr.bf16.mxu0 %v7212
    %7579 = vmatmul.mubr.bf16.gmra.mrb[0].mxu0 %v7211
    %v7580 = vpop.f32.mrb[0].mxu0
    %v7581 = vadd.f32 %v7336, %v7580
    %v7582 = vpop.f32.mrb[0].mxu0
    %v7583 = vpop.f32.mrb[0].mxu0
    %v7584 = vadd.f32 %v7336, %v7583
    %v7585 = vpop.f32.mrb[0].mxu0
    %7586 = vmatprep.mubr.bf16.mxu0 %v7216
    %7587 = vmatmul.mubr.bf16.gmra.mrb[0].mxu0 %v7215
    %v7588 = vpop.f32.mrb[0].mxu0
    %v7589 = vadd.f32 %v7336, %v7588
    %v7590 = vpop.f32.mrb[0].mxu0
    %v7591 = vpop.f32.mrb[0].mxu0
    %v7592 = vadd.f32 %v7336, %v7591
    %v7593 = vpop.f32.mrb[0].mxu0
    %7594 = vmatprep.mubr.bf16.mxu0 %v7220
    %7595 = vmatmul.mubr.bf16.gmra.mrb[0].mxu0 %v7219
    %v7596 = vpop.f32.mrb[0].mxu0
    %v7597 = vadd.f32 %v7336, %v7596
    %v7598 = vpop.f32.mrb[0].mxu0
    %v7599 = vpop.f32.mrb[0].mxu0
    %v7600 = vadd.f32 %v7336, %v7599
    %v7601 = vpop.f32.mrb[0].mxu0
    %7602 = vmatprep.mubr.bf16.mxu0 %v7224
    %7603 = vmatmul.mubr.bf16.gmra.mrb[0].mxu0 %v7223
    %v7604 = vpop.f32.mrb[0].mxu0
    %v7605 = vadd.f32 %v7336, %v7604
    %v7606 = vpop.f32.mrb[0].mxu0
    %v7607 = vpop.f32.mrb[0].mxu0
    %v7608 = vadd.f32 %v7336, %v7607
    %v7609 = vpop.f32.mrb[0].mxu0
    %7610 = vmatprep.mubr.bf16.mxu0 %v7228
    %7611 = vmatmul.mubr.bf16.gmra.mrb[0].mxu0 %v7227
    %v7612 = vpop.f32.mrb[0].mxu0
    %v7613 = vadd.f32 %v7336, %v7612
    %v7614 = vpop.f32.mrb[0].mxu0
    %v7615 = vpop.f32.mrb[0].mxu0
    %v7616 = vadd.f32 %v7336, %v7615
    %v7617 = vpop.f32.mrb[0].mxu0
    %7618 = vmatprep.mubr.bf16.mxu0 %v7232
    %7619 = vmatmul.mubr.bf16.gmra.mrb[0].mxu0 %v7231
    %v7620 = vpop.f32.mrb[0].mxu0
    %v7621 = vadd.f32 %v7336, %v7620
    %v7622 = vpop.f32.mrb[0].mxu0
    %v7623 = vpop.f32.mrb[0].mxu0
    %v7624 = vadd.f32 %v7336, %v7623
    %v7625 = vpop.f32.mrb[0].mxu0
    %7626 = vmatprep.mubr.bf16.mxu0 %v7236
    %7627 = vmatmul.mubr.bf16.gmra.mrb[0].mxu0 %v7235
    %v7628 = vpop.f32.mrb[0].mxu0
    %v7629 = vadd.f32 %v7336, %v7628
    %v7630 = vpop.f32.mrb[0].mxu0
    %v7631 = vpop.f32.mrb[0].mxu0
    %v7632 = vadd.f32 %v7336, %v7631
    %v7633 = vpop.f32.mrb[0].mxu0
    %7634 = vmatprep.mubr.bf16.mxu0 %v7240
    %7635 = vmatmul.mubr.bf16.gmra.mrb[0].mxu0 %v7239
    %v7636 = vpop.f32.mrb[0].mxu0
    %v7637 = vadd.f32 %v7336, %v7636
    %v7638 = vpop.f32.mrb[0].mxu0
    %v7639 = vpop.f32.mrb[0].mxu0
    %v7640 = vadd.f32 %v7336, %v7639
    %v7641 = vpop.f32.mrb[0].mxu0
    %7642 = vmatprep.mubr.bf16.mxu0 %v7244
    %7643 = vmatmul.mubr.bf16.gmra.mrb[0].mxu0 %v7243
    %v7644 = vpop.f32.mrb[0].mxu0
    %v7645 = vadd.f32 %v7336, %v7644
    %v7646 = vpop.f32.mrb[0].mxu0
    %v7647 = vpop.f32.mrb[0].mxu0
    %v7648 = vadd.f32 %v7336, %v7647
    %v7649 = vpop.f32.mrb[0].mxu0
    %7650 = vmatprep.mubr.bf16.mxu0 %v7248
    %7651 = vmatmul.mubr.bf16.gmra.mrb[0].mxu0 %v7247
    %v7652 = vpop.f32.mrb[0].mxu0
    %v7653 = vadd.f32 %v7336, %v7652
    %v7654 = vpop.f32.mrb[0].mxu0
    %v7655 = vpop.f32.mrb[0].mxu0
    %v7656 = vadd.f32 %v7336, %v7655
    %v7657 = vpop.f32.mrb[0].mxu0
    %7658 = vmatprep.mubr.bf16.mxu0 %v7252
    %7659 = vmatmul.mubr.bf16.gmra.mrb[0].mxu0 %v7251
    %v7660 = vpop.f32.mrb[0].mxu0
    %v7661 = vadd.f32 %v7336, %v7660
    %v7662 = vpop.f32.mrb[0].mxu0
    %v7663 = vpop.f32.mrb[0].mxu0
    %v7664 = vadd.f32 %v7336, %v7663
    %v7665 = vpop.f32.mrb[0].mxu0
    %7666 = vmatprep.mubr.bf16.mxu0 %v7256
    %7667 = vmatmul.mubr.bf16.gmra.mrb[0].mxu0 %v7255
    %v7668 = vpop.f32.mrb[0].mxu0
    %v7669 = vadd.f32 %v7336, %v7668
    %v7670 = vpop.f32.mrb[0].mxu0
    %v7671 = vpop.f32.mrb[0].mxu0
    %v7672 = vadd.f32 %v7336, %v7671
    %v7673 = vpop.f32.mrb[0].mxu0
    %7674 = vmatprep.mubr.bf16.mxu0 %v7260
    %7675 = vmatmul.mubr.bf16.gmra.mrb[0].mxu0 %v7259
    %v7676 = vpop.f32.mrb[0].mxu0
    %v7677 = vadd.f32 %v7336, %v7676
    %v7678 = vpop.f32.mrb[0].mxu0
    %v7679 = vpop.f32.mrb[0].mxu0
    %v7680 = vadd.f32 %v7336, %v7679
    %v7681 = vpop.f32.mrb[0].mxu0
    %7682 = vmatprep.mubr.bf16.mxu0 %v7264
    %7683 = vmatmul.mubr.bf16.gmra.mrb[0].mxu0 %v7263
    %v7684 = vpop.f32.mrb[0].mxu0
    %v7685 = vadd.f32 %v7336, %v7684
    %v7686 = vpop.f32.mrb[0].mxu0
    %v7687 = vpop.f32.mrb[0].mxu0
    %v7688 = vadd.f32 %v7336, %v7687
    %v7689 = vpop.f32.mrb[0].mxu0
    %7690 = vdwg.mxu0
    %7691 = vmatprep.subr.bf16.mxu0 0
    %7692 = vmatpush1.bf16.msra.mxu0 %v7482
    %7693 = vmatprep.subr.bf16.mxu0 0
    %7694 = vmatpush1.bf16.msra.mxu0 %v7483
    %7695 = vmatprep.subr.bf16.mxu0 0
    %7696 = vmatpush1.bf16.msra.mxu0 %v7484
    %7697 = vmatprep.subr.bf16.mxu0 0
    %7698 = vmatpush1.bf16.msra.mxu0 %v7485
    %7699 = vmatprep.subr.bf16.mxu0 0
    %7700 = vmatpush1.bf16.msra.mxu0 %v7486
    %7701 = vmatprep.subr.bf16.mxu0 0
    %7702 = vmatpush1.bf16.msra.mxu0 %v7487
    %7703 = vmatprep.subr.bf16.mxu0 0
    %7704 = vmatpush1.bf16.msra.mxu0 %v7488
    %7705 = vmatprep.subr.bf16.mxu0 0
    %7706 = vmatpush1.bf16.msra.mxu0 %v7489
    %7707 = vmatprep.subr.bf16.mxu0 0
    %7708 = vmatpush1.bf16.msra.mxu0 %v7490
    %7709 = vmatprep.subr.bf16.mxu0 0
    %7710 = vmatpush1.bf16.msra.mxu0 %v7491
    %7711 = vmatprep.subr.bf16.mxu0 0
    %7712 = vmatpush1.bf16.msra.mxu0 %v7492
    %7713 = vmatprep.subr.bf16.mxu0 0
    %7714 = vmatpush1.bf16.msra.mxu0 %v7493
    %7715 = vmatprep.subr.bf16.mxu0 0
    %7716 = vmatpush1.bf16.msra.mxu0 %v7494
    %7717 = vmatprep.subr.bf16.mxu0 0
    %7718 = vmatpush1.bf16.msra.mxu0 %v7495
    %7719 = vmatprep.subr.bf16.mxu0 0
    %7720 = vmatpush1.bf16.msra.mxu0 %v7496
    %7721 = vmatprep.subr.bf16.mxu0 0
    %7722 = vmatpush1.bf16.msra.mxu0 %v7497
    %7723 = vmatprep.mubr.bf16.mxu0 %v7206
    %7724 = vmatmul.mubr.bf16.gmra.mrb[0].mxu0 %v7205
    %v7725 = vpop.f32.mrb[0].mxu0
    %v7726 = vadd.f32 %v7565, %v7725
    %v7727 = vpop.f32.mrb[0].mxu0
    %v7728 = vpop.f32.mrb[0].mxu0
    %v7729 = vadd.f32 %v7568, %v7728
    %v7730 = vpop.f32.mrb[0].mxu0
    %7731 = vmatprep.mubr.bf16.mxu0 %v7210
    %7732 = vmatmul.mubr.bf16.gmra.mrb[0].mxu0 %v7209
    %v7733 = vpop.f32.mrb[0].mxu0
    %v7734 = vadd.f32 %v7573, %v7733
    %v7735 = vpop.f32.mrb[0].mxu0
    %v7736 = vpop.f32.mrb[0].mxu0
    %v7737 = vadd.f32 %v7576, %v7736
    %v7738 = vpop.f32.mrb[0].mxu0
    %7739 = vmatprep.mubr.bf16.mxu0 %v7214
    %7740 = vmatmul.mubr.bf16.gmra.mrb[0].mxu0 %v7213
    %v7741 = vpop.f32.mrb[0].mxu0
    %v7742 = vadd.f32 %v7581, %v7741
    %v7743 = vpop.f32.mrb[0].mxu0
    %v7744 = vpop.f32.mrb[0].mxu0
    %v7745 = vadd.f32 %v7584, %v7744
    %v7746 = vpop.f32.mrb[0].mxu0
    %7747 = vmatprep.mubr.bf16.mxu0 %v7218
    %7748 = vmatmul.mubr.bf16.gmra.mrb[0].mxu0 %v7217
    %v7749 = vpop.f32.mrb[0].mxu0
    %v7750 = vadd.f32 %v7589, %v7749
    %v7751 = vpop.f32.mrb[0].mxu0
    %v7752 = vpop.f32.mrb[0].mxu0
    %v7753 = vadd.f32 %v7592, %v7752
    %v7754 = vpop.f32.mrb[0].mxu0
    %7755 = vmatprep.mubr.bf16.mxu0 %v7222
    %7756 = vmatmul.mubr.bf16.gmra.mrb[0].mxu0 %v7221
    %v7757 = vpop.f32.mrb[0].mxu0
    %v7758 = vadd.f32 %v7597, %v7757
    %v7759 = vpop.f32.mrb[0].mxu0
    %v7760 = vpop.f32.mrb[0].mxu0
    %v7761 = vadd.f32 %v7600, %v7760
    %v7762 = vpop.f32.mrb[0].mxu0
    %7763 = vmatprep.mubr.bf16.mxu0 %v7226
    %7764 = vmatmul.mubr.bf16.gmra.mrb[0].mxu0 %v7225
    %v7765 = vpop.f32.mrb[0].mxu0
    %v7766 = vadd.f32 %v7605, %v7765
    %v7767 = vpop.f32.mrb[0].mxu0
    %v7768 = vpop.f32.mrb[0].mxu0
    %v7769 = vadd.f32 %v7608, %v7768
    %v7770 = vpop.f32.mrb[0].mxu0
    %7771 = vmatprep.mubr.bf16.mxu0 %v7230
    %7772 = vmatmul.mubr.bf16.gmra.mrb[0].mxu0 %v7229
    %v7773 = vpop.f32.mrb[0].mxu0
    %v7774 = vadd.f32 %v7613, %v7773
    %v7775 = vpop.f32.mrb[0].mxu0
    %v7776 = vpop.f32.mrb[0].mxu0
    %v7777 = vadd.f32 %v7616, %v7776
    %v7778 = vpop.f32.mrb[0].mxu0
    %7779 = vmatprep.mubr.bf16.mxu0 %v7234
    %7780 = vmatmul.mubr.bf16.gmra.mrb[0].mxu0 %v7233
    %v7781 = vpop.f32.mrb[0].mxu0
    %v7782 = vadd.f32 %v7621, %v7781
    %v7783 = vpop.f32.mrb[0].mxu0
    %v7784 = vpop.f32.mrb[0].mxu0
    %v7785 = vadd.f32 %v7624, %v7784
    %v7786 = vpop.f32.mrb[0].mxu0
    %7787 = vmatprep.mubr.bf16.mxu0 %v7238
    %7788 = vmatmul.mubr.bf16.gmra.mrb[0].mxu0 %v7237
    %v7789 = vpop.f32.mrb[0].mxu0
    %v7790 = vadd.f32 %v7629, %v7789
    %v7791 = vpop.f32.mrb[0].mxu0
    %v7792 = vpop.f32.mrb[0].mxu0
    %v7793 = vadd.f32 %v7632, %v7792
    %v7794 = vpop.f32.mrb[0].mxu0
    %7795 = vmatprep.mubr.bf16.mxu0 %v7242
    %7796 = vmatmul.mubr.bf16.gmra.mrb[0].mxu0 %v7241
    %v7797 = vpop.f32.mrb[0].mxu0
    %v7798 = vadd.f32 %v7637, %v7797
    %v7799 = vpop.f32.mrb[0].mxu0
    %v7800 = vpop.f32.mrb[0].mxu0
    %v7801 = vadd.f32 %v7640, %v7800
    %v7802 = vpop.f32.mrb[0].mxu0
    %7803 = vmatprep.mubr.bf16.mxu0 %v7246
    %7804 = vmatmul.mubr.bf16.gmra.mrb[0].mxu0 %v7245
    %v7805 = vpop.f32.mrb[0].mxu0
    %v7806 = vadd.f32 %v7645, %v7805
    %v7807 = vpop.f32.mrb[0].mxu0
    %v7808 = vpop.f32.mrb[0].mxu0
    %v7809 = vadd.f32 %v7648, %v7808
    %v7810 = vpop.f32.mrb[0].mxu0
    %7811 = vmatprep.mubr.bf16.mxu0 %v7250
    %7812 = vmatmul.mubr.bf16.gmra.mrb[0].mxu0 %v7249
    %v7813 = vpop.f32.mrb[0].mxu0
    %v7814 = vadd.f32 %v7653, %v7813
    %v7815 = vpop.f32.mrb[0].mxu0
    %v7816 = vpop.f32.mrb[0].mxu0
    %v7817 = vadd.f32 %v7656, %v7816
    %v7818 = vpop.f32.mrb[0].mxu0
    %7819 = vmatprep.mubr.bf16.mxu0 %v7254
    %7820 = vmatmul.mubr.bf16.gmra.mrb[0].mxu0 %v7253
    %v7821 = vpop.f32.mrb[0].mxu0
    %v7822 = vadd.f32 %v7661, %v7821
    %v7823 = vpop.f32.mrb[0].mxu0
    %v7824 = vpop.f32.mrb[0].mxu0
    %v7825 = vadd.f32 %v7664, %v7824
    %v7826 = vpop.f32.mrb[0].mxu0
    %7827 = vmatprep.mubr.bf16.mxu0 %v7258
    %7828 = vmatmul.mubr.bf16.gmra.mrb[0].mxu0 %v7257
    %v7829 = vpop.f32.mrb[0].mxu0
    %v7830 = vadd.f32 %v7669, %v7829
    %v7831 = vpop.f32.mrb[0].mxu0
    %v7832 = vpop.f32.mrb[0].mxu0
    %v7833 = vadd.f32 %v7672, %v7832
    %v7834 = vpop.f32.mrb[0].mxu0
    %7835 = vmatprep.mubr.bf16.mxu0 %v7262
    %7836 = vmatmul.mubr.bf16.gmra.mrb[0].mxu0 %v7261
    %v7837 = vpop.f32.mrb[0].mxu0
    %v7838 = vadd.f32 %v7677, %v7837
    %v7839 = vpop.f32.mrb[0].mxu0
    %v7840 = vpop.f32.mrb[0].mxu0
    %v7841 = vadd.f32 %v7680, %v7840
    %v7842 = vpop.f32.mrb[0].mxu0
    %7843 = vmatprep.mubr.bf16.mxu0 %v7266
    %7844 = vmatmul.mubr.bf16.gmra.mrb[0].mxu0 %v7265
    %v7845 = vpop.f32.mrb[0].mxu0
    %v7846 = vadd.f32 %v7685, %v7845
    %v7847 = vpop.f32.mrb[0].mxu0
    %v7848 = vpop.f32.mrb[0].mxu0
    %v7849 = vadd.f32 %v7688, %v7848
    %v7850 = vpop.f32.mrb[0].mxu0
    %7851 = vdwg.mxu0
    %v7852 = vmax.f32 %v7726, 0.0
    %v7853 = vmax.f32 %v7729, 0.0
    %v7854 = vmax.f32 %v7734, 0.0
    %v7855 = vmax.f32 %v7737, 0.0
    %v7856 = vmax.f32 %v7742, 0.0
    %v7857 = vmax.f32 %v7745, 0.0
    %v7858 = vmax.f32 %v7750, 0.0
    %v7859 = vmax.f32 %v7753, 0.0
    %v7860 = vmax.f32 %v7758, 0.0
    %v7861 = vmax.f32 %v7761, 0.0
    %v7862 = vmax.f32 %v7766, 0.0
    %v7863 = vmax.f32 %v7769, 0.0
    %v7864 = vmax.f32 %v7774, 0.0
    %v7865 = vmax.f32 %v7777, 0.0
    %v7866 = vmax.f32 %v7782, 0.0
    %v7867 = vmax.f32 %v7785, 0.0
    %v7868 = vmax.f32 %v7790, 0.0
    %v7869 = vmax.f32 %v7793, 0.0
    %v7870 = vmax.f32 %v7798, 0.0
    %v7871 = vmax.f32 %v7801, 0.0
    %v7872 = vmax.f32 %v7806, 0.0
    %v7873 = vmax.f32 %v7809, 0.0
    %v7874 = vmax.f32 %v7814, 0.0
    %v7875 = vmax.f32 %v7817, 0.0
    %v7876 = vmax.f32 %v7822, 0.0
    %v7877 = vmax.f32 %v7825, 0.0
    %v7878 = vmax.f32 %v7830, 0.0
    %v7879 = vmax.f32 %v7833, 0.0
    %v7880 = vmax.f32 %v7838, 0.0
    %v7881 = vmax.f32 %v7841, 0.0
    %v7882 = vmax.f32 %v7846, 0.0
    %v7883 = vmax.f32 %v7849, 0.0
    %v7884 = vpack.c.bf16 %v7853, %v7852
    %v7885 = vpack.c.bf16 %v7855, %v7854
    %v7886 = vpack.c.bf16 %v7857, %v7856
    %v7887 = vpack.c.bf16 %v7859, %v7858
    %v7888 = vpack.c.bf16 %v7861, %v7860
    %v7889 = vpack.c.bf16 %v7863, %v7862
    %v7890 = vpack.c.bf16 %v7865, %v7864
    %v7891 = vpack.c.bf16 %v7867, %v7866
    %v7892 = vpack.c.bf16 %v7869, %v7868
    %v7893 = vpack.c.bf16 %v7871, %v7870
    %v7894 = vpack.c.bf16 %v7873, %v7872
    %v7895 = vpack.c.bf16 %v7875, %v7874
    %v7896 = vpack.c.bf16 %v7877, %v7876
    %v7897 = vpack.c.bf16 %v7879, %v7878
    %v7898 = vpack.c.bf16 %v7881, %v7880
    %v7899 = vpack.c.bf16 %v7883, %v7882
    %v7900 = vld [vmem:[%s9] sm:$0xf]
    %v7901 = vld [vmem:[%s9 + $0x4] sm:$0xf]
    %v7902 = vld [vmem:[%s9 + $0x8] sm:$0xf]
    %v7903 = vld [vmem:[%s9 + $0xc] sm:$0xf]
    %v7904 = vld [vmem:[%s9 + $0x10] sm:$0xf]
    %v7905 = vld [vmem:[%s9 + $0x14] sm:$0xf]
    %v7906 = vld [vmem:[%s9 + $0x18] sm:$0xf]
    %v7907 = vld [vmem:[%s9 + $0x1c] sm:$0xf]
    %v7908 = vld [vmem:[%s9 + $0x20] sm:$0xf]
    %v7909 = vld [vmem:[%s9 + $0x24] sm:$0xf]
    %v7910 = vld [vmem:[%s9 + $0x28] sm:$0xf]
    %v7911 = vld [vmem:[%s9 + $0x2c] sm:$0xf]
    %v7912 = vld [vmem:[%s9 + $0x30] sm:$0xf]
    %v7913 = vld [vmem:[%s9 + $0x34] sm:$0xf]
    %v7914 = vld [vmem:[%s9 + $0x38] sm:$0xf]
    %v7915 = vld [vmem:[%s9 + $0x3c] sm:$0xf]
    %v7916 = vld [vmem:[%s10] sm:$0x1]
    %v7918 = vlaneseq
    %v7919 = vshrl.u32 %v7918, 7
    %v7920 = vsub.s32 0, %v7919
    %v7921 = vrot.slane %v7916, %v7920
    %v7939 = vunpack.c.l.b16 %v7900
    %v7940 = vunpack.c.l.b16 %v7901
    %v7941 = vunpack.c.l.b16 %v7902
    %v7942 = vunpack.c.l.b16 %v7903
    %v7943 = vunpack.c.l.b16 %v7904
    %v7944 = vunpack.c.l.b16 %v7905
    %v7945 = vunpack.c.l.b16 %v7906
    %v7946 = vunpack.c.l.b16 %v7907
    %v7947 = vunpack.c.l.b16 %v7908
    %v7948 = vunpack.c.l.b16 %v7909
    %v7949 = vunpack.c.l.b16 %v7910
    %v7950 = vunpack.c.l.b16 %v7911
    %v7951 = vunpack.c.l.b16 %v7912
    %v7952 = vunpack.c.l.b16 %v7913
    %v7953 = vunpack.c.l.b16 %v7914
    %v7954 = vunpack.c.l.b16 %v7915
    %v7955 = vpack.c.b16 %v7940, %v7939
    %v7956 = vpack.c.b16 %v7942, %v7941
    %v7957 = vpack.c.b16 %v7944, %v7943
    %v7958 = vpack.c.b16 %v7946, %v7945
    %v7959 = vpack.c.b16 %v7948, %v7947
    %v7960 = vpack.c.b16 %v7950, %v7949
    %v7961 = vpack.c.b16 %v7952, %v7951
    %v7962 = vpack.c.b16 %v7954, %v7953
    %7971 = vmatprep.subr.bf16.mxu0 0
    %7972 = vmatpush1.bf16.msra.mxu0 %v7955
    %7973 = vmatprep.subr.bf16.mxu0 0
    %7974 = vmatpush1.bf16.msra.mxu0 %v7956
    %7975 = vmatprep.subr.bf16.mxu0 0
    %7976 = vmatpush1.bf16.msra.mxu0 %v7957
    %7977 = vmatprep.subr.bf16.mxu0 0
    %7978 = vmatpush1.bf16.msra.mxu0 %v7958
    %7979 = vmatprep.subr.bf16.mxu0 0
    %7980 = vmatpush1.bf16.msra.mxu0 %v7959
    %7981 = vmatprep.subr.bf16.mxu0 0
    %7982 = vmatpush1.bf16.msra.mxu0 %v7960
    %7983 = vmatprep.subr.bf16.mxu0 0
    %7984 = vmatpush1.bf16.msra.mxu0 %v7961
    %7985 = vmatprep.subr.bf16.mxu0 0
    %7986 = vmatpush1.bf16.msra.mxu0 %v7962
    %7987 = vmatprep.subr.bf16.mxu0 0
    %7988 = vmatpush1.bf16.msra.mxu0 0
    %7989 = vmatprep.subr.bf16.mxu0 0
    %7990 = vmatpush1.bf16.msra.mxu0 0
    %7991 = vmatprep.subr.bf16.mxu0 0
    %7992 = vmatpush1.bf16.msra.mxu0 0
    %7993 = vmatprep.subr.bf16.mxu0 0
    %7994 = vmatpush1.bf16.msra.mxu0 0
    %7995 = vmatprep.subr.bf16.mxu0 0
    %7996 = vmatpush1.bf16.msra.mxu0 0
    %7997 = vmatprep.subr.bf16.mxu0 0
    %7998 = vmatpush1.bf16.msra.mxu0 0
    %7999 = vmatprep.subr.bf16.mxu0 0
    %8000 = vmatpush1.bf16.msra.mxu0 0
    %8001 = vmatprep.subr.bf16.mxu0 0
    %8002 = vmatpush1.bf16.msra.mxu0 0
    %8003 = vmatprep.mubr.bf16.mxu0 0
    %8004 = vmatmul.mubr.bf16.gmra.mrb[0].mxu0 %v7884
    %v8005 = vpop.f32.mrb[0].mxu0
    %v8006 = vadd.f32 %v7921, %v8005
    %v8007 = vpop.f32.mrb[0].mxu0
    %v8008 = vpop.f32.mrb[0].mxu0
    %v8009 = vadd.f32 %v7921, %v8008
    %v8010 = vpop.f32.mrb[0].mxu0
    %8011 = vmatprep.mubr.bf16.mxu0 0
    %8012 = vmatmul.mubr.bf16.gmra.mrb[0].mxu0 %v7885
    %v8013 = vpop.f32.mrb[0].mxu0
    %v8014 = vadd.f32 %v7921, %v8013
    %v8015 = vpop.f32.mrb[0].mxu0
    %v8016 = vpop.f32.mrb[0].mxu0
    %v8017 = vadd.f32 %v7921, %v8016
    %v8018 = vpop.f32.mrb[0].mxu0
    %8019 = vmatprep.mubr.bf16.mxu0 0
    %8020 = vmatmul.mubr.bf16.gmra.mrb[0].mxu0 %v7886
    %v8021 = vpop.f32.mrb[0].mxu0
    %v8022 = vadd.f32 %v7921, %v8021
    %v8023 = vpop.f32.mrb[0].mxu0
    %v8024 = vpop.f32.mrb[0].mxu0
    %v8025 = vadd.f32 %v7921, %v8024
    %v8026 = vpop.f32.mrb[0].mxu0
    %8027 = vmatprep.mubr.bf16.mxu0 0
    %8028 = vmatmul.mubr.bf16.gmra.mrb[0].mxu0 %v7887
    %v8029 = vpop.f32.mrb[0].mxu0
    %v8030 = vadd.f32 %v7921, %v8029
    %v8031 = vpop.f32.mrb[0].mxu0
    %v8032 = vpop.f32.mrb[0].mxu0
    %v8033 = vadd.f32 %v7921, %v8032
    %v8034 = vpop.f32.mrb[0].mxu0
    %8035 = vmatprep.mubr.bf16.mxu0 0
    %8036 = vmatmul.mubr.bf16.gmra.mrb[0].mxu0 %v7888
    %v8037 = vpop.f32.mrb[0].mxu0
    %v8038 = vadd.f32 %v7921, %v8037
    %v8039 = vpop.f32.mrb[0].mxu0
    %v8040 = vpop.f32.mrb[0].mxu0
    %v8041 = vadd.f32 %v7921, %v8040
    %v8042 = vpop.f32.mrb[0].mxu0
    %8043 = vmatprep.mubr.bf16.mxu0 0
    %8044 = vmatmul.mubr.bf16.gmra.mrb[0].mxu0 %v7889
    %v8045 = vpop.f32.mrb[0].mxu0
    %v8046 = vadd.f32 %v7921, %v8045
    %v8047 = vpop.f32.mrb[0].mxu0
    %v8048 = vpop.f32.mrb[0].mxu0
    %v8049 = vadd.f32 %v7921, %v8048
    %v8050 = vpop.f32.mrb[0].mxu0
    %8051 = vmatprep.mubr.bf16.mxu0 0
    %8052 = vmatmul.mubr.bf16.gmra.mrb[0].mxu0 %v7890
    %v8053 = vpop.f32.mrb[0].mxu0
    %v8054 = vadd.f32 %v7921, %v8053
    %v8055 = vpop.f32.mrb[0].mxu0
    %v8056 = vpop.f32.mrb[0].mxu0
    %v8057 = vadd.f32 %v7921, %v8056
    %v8058 = vpop.f32.mrb[0].mxu0
    %8059 = vmatprep.mubr.bf16.mxu0 0
    %8060 = vmatmul.mubr.bf16.gmra.mrb[0].mxu0 %v7891
    %v8061 = vpop.f32.mrb[0].mxu0
    %v8062 = vadd.f32 %v7921, %v8061
    %v8063 = vpop.f32.mrb[0].mxu0
    %v8064 = vpop.f32.mrb[0].mxu0
    %v8065 = vadd.f32 %v7921, %v8064
    %v8066 = vpop.f32.mrb[0].mxu0
    %8067 = vmatprep.mubr.bf16.mxu0 0
    %8068 = vmatmul.mubr.bf16.gmra.mrb[0].mxu0 %v7892
    %v8069 = vpop.f32.mrb[0].mxu0
    %v8070 = vadd.f32 %v7921, %v8069
    %v8071 = vpop.f32.mrb[0].mxu0
    %v8072 = vpop.f32.mrb[0].mxu0
    %v8073 = vadd.f32 %v7921, %v8072
    %v8074 = vpop.f32.mrb[0].mxu0
    %8075 = vmatprep.mubr.bf16.mxu0 0
    %8076 = vmatmul.mubr.bf16.gmra.mrb[0].mxu0 %v7893
    %v8077 = vpop.f32.mrb[0].mxu0
    %v8078 = vadd.f32 %v7921, %v8077
    %v8079 = vpop.f32.mrb[0].mxu0
    %v8080 = vpop.f32.mrb[0].mxu0
    %v8081 = vadd.f32 %v7921, %v8080
    %v8082 = vpop.f32.mrb[0].mxu0
    %8083 = vmatprep.mubr.bf16.mxu0 0
    %8084 = vmatmul.mubr.bf16.gmra.mrb[0].mxu0 %v7894
    %v8085 = vpop.f32.mrb[0].mxu0
    %v8086 = vadd.f32 %v7921, %v8085
    %v8087 = vpop.f32.mrb[0].mxu0
    %v8088 = vpop.f32.mrb[0].mxu0
    %v8089 = vadd.f32 %v7921, %v8088
    %v8090 = vpop.f32.mrb[0].mxu0
    %8091 = vmatprep.mubr.bf16.mxu0 0
    %8092 = vmatmul.mubr.bf16.gmra.mrb[0].mxu0 %v7895
    %v8093 = vpop.f32.mrb[0].mxu0
    %v8094 = vadd.f32 %v7921, %v8093
    %v8095 = vpop.f32.mrb[0].mxu0
    %v8096 = vpop.f32.mrb[0].mxu0
    %v8097 = vadd.f32 %v7921, %v8096
    %v8098 = vpop.f32.mrb[0].mxu0
    %8099 = vmatprep.mubr.bf16.mxu0 0
    %8100 = vmatmul.mubr.bf16.gmra.mrb[0].mxu0 %v7896
    %v8101 = vpop.f32.mrb[0].mxu0
    %v8102 = vadd.f32 %v7921, %v8101
    %v8103 = vpop.f32.mrb[0].mxu0
    %v8104 = vpop.f32.mrb[0].mxu0
    %v8105 = vadd.f32 %v7921, %v8104
    %v8106 = vpop.f32.mrb[0].mxu0
    %8107 = vmatprep.mubr.bf16.mxu0 0
    %8108 = vmatmul.mubr.bf16.gmra.mrb[0].mxu0 %v7897
    %v8109 = vpop.f32.mrb[0].mxu0
    %v8110 = vadd.f32 %v7921, %v8109
    %v8111 = vpop.f32.mrb[0].mxu0
    %v8112 = vpop.f32.mrb[0].mxu0
    %v8113 = vadd.f32 %v7921, %v8112
    %v8114 = vpop.f32.mrb[0].mxu0
    %8115 = vmatprep.mubr.bf16.mxu0 0
    %8116 = vmatmul.mubr.bf16.gmra.mrb[0].mxu0 %v7898
    %v8117 = vpop.f32.mrb[0].mxu0
    %v8118 = vadd.f32 %v7921, %v8117
    %v8119 = vpop.f32.mrb[0].mxu0
    %v8120 = vpop.f32.mrb[0].mxu0
    %v8121 = vadd.f32 %v7921, %v8120
    %v8122 = vpop.f32.mrb[0].mxu0
    %8123 = vmatprep.mubr.bf16.mxu0 0
    %8124 = vmatmul.mubr.bf16.gmra.mrb[0].mxu0 %v7899
    %v8125 = vpop.f32.mrb[0].mxu0
    %v8126 = vadd.f32 %v7921, %v8125
    %v8127 = vpop.f32.mrb[0].mxu0
    %v8128 = vpop.f32.mrb[0].mxu0
    %v8129 = vadd.f32 %v7921, %v8128
    %v8130 = vpop.f32.mrb[0].mxu0
    %8131 = vdwg.mxu0
    %8132 = vst [vmem:[%s11] sm:$0xff] %v8006
    %8133 = vst [vmem:[%s11 + $0x8] sm:$0xff] %v8009
    %8134 = vst [vmem:[%s11 + $0x10] sm:$0xff] %v8014
    %8135 = vst [vmem:[%s11 + $0x18] sm:$0xff] %v8017
    %8136 = vst [vmem:[%s11 + $0x20] sm:$0xff] %v8022
    %8137 = vst [vmem:[%s11 + $0x28] sm:$0xff] %v8025
    %8138 = vst [vmem:[%s11 + $0x30] sm:$0xff] %v8030
    %8139 = vst [vmem:[%s11 + $0x38] sm:$0xff] %v8033
    %8140 = vst [vmem:[%s11 + $0x40] sm:$0xff] %v8038
    %8141 = vst [vmem:[%s11 + $0x48] sm:$0xff] %v8041
    %8142 = vst [vmem:[%s11 + $0x50] sm:$0xff] %v8046
    %8143 = vst [vmem:[%s11 + $0x58] sm:$0xff] %v8049
    %8144 = vst [vmem:[%s11 + $0x60] sm:$0xff] %v8054
    %8145 = vst [vmem:[%s11 + $0x68] sm:$0xff] %v8057
    %8146 = vst [vmem:[%s11 + $0x70] sm:$0xff] %v8062
    %8147 = vst [vmem:[%s11 + $0x78] sm:$0xff] %v8065
    %8148 = vst [vmem:[%s11 + $0x80] sm:$0xff] %v8070
    %8149 = vst [vmem:[%s11 + $0x88] sm:$0xff] %v8073
    %8150 = vst [vmem:[%s11 + $0x90] sm:$0xff] %v8078
    %8151 = vst [vmem:[%s11 + $0x98] sm:$0xff] %v8081
    %8152 = vst [vmem:[%s11 + $0xa0] sm:$0xff] %v8086
    %8153 = vst [vmem:[%s11 + $0xa8] sm:$0xff] %v8089
    %8154 = vst [vmem:[%s11 + $0xb0] sm:$0xff] %v8094
    %8155 = vst [vmem:[%s11 + $0xb8] sm:$0xff] %v8097
    %8156 = vst [vmem:[%s11 + $0xc0] sm:$0xff] %v8102
    %8157 = vst [vmem:[%s11 + $0xc8] sm:$0xff] %v8105
    %8158 = vst [vmem:[%s11 + $0xd0] sm:$0xff] %v8110
    %8159 = vst [vmem:[%s11 + $0xd8] sm:$0xff] %v8113
    %8160 = vst [vmem:[%s11 + $0xe0] sm:$0xff] %v8118
    %8161 = vst [vmem:[%s11 + $0xe8] sm:$0xff] %v8121
    %8162 = vst [vmem:[%s11 + $0xf0] sm:$0xff] %v8126
    %8163 = vst [vmem:[%s11 + $0xf8] sm:$0xff] %v8129
    // Predicated region
    $region54: #{survnet_2_4_forward.1} parent=1 // pred_check
      _
    $region55: #{survnet_2_4_forward.1} parent=1 // pred_check_branch
      %8165 = sbr.rel (0) target = $region57
    $region56: #{survnet_2_4_forward.1} parent=1 // pred_region
      _
    $region57: #{survnet_2_4_forward.1} parent=1 // pred_fallthru
      _
    // Predicated region
    $region58: #{survnet_2_4_forward.1} parent=1 // pred_check
      _
    $region59: #{survnet_2_4_forward.1} parent=1 // pred_check_branch
      %8167 = sbr.rel (0) target = $region61
    $region60: #{survnet_2_4_forward.1} parent=1 // pred_region
      _
    $region61: #{survnet_2_4_forward.1} parent=1 // pred_fallthru
      _
    %8168 = vsyncpa [#allocation3], 1
    %8169 = vsyncpa [#allocation5], 1

</llo_original>
